<compile_context>
chip_gen: v7x
topology: tpu7x:2x2x1
jax: 0.10.0
libtpu: 0.0.40
codegen_flags: <defaults>
</compile_context>

<pallas_src>
import functools

import jax
import jax.numpy as jnp
from jax.experimental import pallas as pl
from jax.experimental.pallas import tpu as pltpu


# ----------------------------- activations (traced inside kernels) ------------

def _act_identity(x):
    return x


def _act_relu(x):
    return jnp.maximum(x, 0.0)


def _act_leaky_relu(x):
    return jnp.where(x >= 0, x, 0.01 * x)        # torch F.leaky_relu default slope


def _make_act_fun(tmin, tmax):
    scale = (tmax - tmin) / 2.0

    def f(x):
        return (jnp.tanh(x) + 1.0) * scale + tmin

    return f


# ----------------------------- kernel bodies ----------------------------------

def _residual_fc3_body(x_ref, w13_ref, b13_ref, w2_ref, b2_ref, o_ref, *, mid, act):
    x = x_ref[...]
    # fc1 and fc3 share the same LHS -> single fused MXU matmul.
    h = jnp.dot(x, w13_ref[...], preferred_element_type=jnp.float32) + b13_ref[...]
    y = jnp.maximum(h[:, :mid], 0.0)          # relu(fc1(x))   (mid is a multiple of 128)
    skip = h[:, mid:]                         # fc3(x)
    y = jnp.dot(y, w2_ref[...], preferred_element_type=jnp.float32) + b2_ref[...]
    o_ref[...] = act(jnp.maximum(y + skip, 0.0)).astype(o_ref.dtype)


def _residual_nofc3_body(x_ref, w1_ref, b1_ref, w2_ref, b2_ref, o_ref, *, act):
    x = x_ref[...]
    y = jnp.maximum(
        jnp.dot(x, w1_ref[...], preferred_element_type=jnp.float32) + b1_ref[...], 0.0)
    y = jnp.dot(y, w2_ref[...], preferred_element_type=jnp.float32) + b2_ref[...]
    o_ref[...] = act(jnp.maximum(y + x, 0.0)).astype(o_ref.dtype)


def _linear_body(x_ref, w_ref, b_ref, o_ref, *, act):
    y = jnp.dot(x_ref[...], w_ref[...], preferred_element_type=jnp.float32) + b_ref[...]
    o_ref[...] = act(y).astype(o_ref.dtype)


def _linear_nk_body(x_ref, w_ref, b_ref, n_ref, k_ref):
    # Final n_net linear fused with both Act_fun heads (n: [1,4], k: [0,0.5]).
    z = jnp.dot(x_ref[...], w_ref[...], preferred_element_type=jnp.float32) + b_ref[...]
    t = jnp.tanh(z) + 1.0
    n_ref[...] = (t * 1.5 + 1.0).astype(n_ref.dtype)   # Act_fun(1, 4)
    k_ref[...] = (t * 0.25).astype(k_ref.dtype)        # Act_fun(0, 0.5)


# ----------------------------- generic batch-gridded launcher -----------------

def _round_up(v, m):
    return -(-v // m) * m


def _pallas_rowwise(body, x, params, out_dims, tb=128):
    """Run a row-wise fused kernel over a batch grid.

    x        : (B, In) activations; tiled over the batch (TB rows per grid step).
    params   : 2-D weights / (1, N) biases, full-array blocks with constant
               index maps so they stay VMEM-resident across grid steps.
    out_dims : list of output feature widths (one entry per kernel output).
    """
    B, in_dim = x.shape
    tb = max(8, _round_up(min(tb, _round_up(B, 8)), 8))   # sublane-aligned tile
    bp = _round_up(B, tb)
    xp = x if bp == B else jnp.pad(x, ((0, bp - B), (0, 0)))
    grid = (bp // tb,)

    row_map = lambda i: (i, 0)      # batch-tiled blocks
    const_map = lambda i: (0, 0)    # weights resident across grid steps

    in_specs = [pl.BlockSpec((tb, in_dim), row_map)]
    in_specs += [pl.BlockSpec(p.shape, const_map) for p in params]

    out_specs = tuple(pl.BlockSpec((tb, d), row_map) for d in out_dims)
    out_shape = tuple(jax.ShapeDtypeStruct((bp, d), x.dtype) for d in out_dims)
    single = len(out_dims) == 1
    if single:
        out_specs, out_shape = out_specs[0], out_shape[0]

    outs = pl.pallas_call(
        body,
        grid=grid,
        in_specs=in_specs,
        out_specs=out_specs,
        out_shape=out_shape,
        compiler_params=pltpu.CompilerParams(
            dimension_semantics=("parallel",)),   # batch axis -> both TCs on v7x
    )(xp, *params)

    if single:
        outs = (outs,)
    if bp != B:
        outs = tuple(o[:B] for o in outs)
    return outs[0] if single else outs


# ----------------------------- layer wrappers ----------------------------------

def residual_forward(p, x, act=_act_identity, tb=128):
    (w1, b1), (w2, b2) = p["fc1"], p["fc2"]
    if p["fc3"] is not None:
        w3, b3 = p["fc3"]
        mid = w1.shape[1]
        w13 = jnp.concatenate([w1, w3], axis=1)      # (In, Mid+Out) fused weight
        b13 = jnp.concatenate([b1, b3], axis=1)      # (1, Mid+Out)  fused bias
        body = functools.partial(_residual_fc3_body, mid=mid, act=act)
        return _pallas_rowwise(body, x, [w13, b13, w2, b2], [w2.shape[1]], tb)
    body = functools.partial(_residual_nofc3_body, act=act)
    return _pallas_rowwise(body, x, [w1, b1, w2, b2], [w2.shape[1]], tb)


def linear_forward(p, x, act=_act_identity, tb=128):
    w, b = p
    body = functools.partial(_linear_body, act=act)
    return _pallas_rowwise(body, x, [w, b], [w.shape[1]], tb)


# ----------------------------- parameter construction --------------------------

def _init_linear(key, fan_in, fan_out, scale=0.05):
    kw, kb = jax.random.split(key)
    # Stored pre-transposed: (in, out) weight and (1, out) bias row.
    w = jax.random.normal(kw, (fan_in, fan_out), jnp.float32) * scale
    b = jax.random.normal(kb, (1, fan_out), jnp.float32) * scale
    return w, b


def _init_residual(key, fin, mid, fout, use_fc):
    k1, k2, k3 = jax.random.split(key, 3)
    return {
        "fc1": _init_linear(k1, fin, mid),
        "fc2": _init_linear(k2, mid, fout),
        "fc3": _init_linear(k3, fin, fout) if use_fc else None,
    }


def init_generator1(key, input_dim, num_of_layer, middle=256, output=128):
    ks = jax.random.split(key, 14)
    return {
        "rs1": _init_residual(ks[0], input_dim, middle, output, True),
        "rs2": _init_residual(ks[1], output, middle, output, False),
        "rs3": _init_residual(ks[2], output, middle, output, False),
        "rs4": _init_residual(ks[3], output, middle, output, False),
        "t_net": {
            "res1": _init_residual(ks[4], output, 256, 256, True),
            "res2": _init_residual(ks[5], 256, 128, 512, True),
            "lin1": _init_linear(ks[6], 512, 256),
            "lin2": _init_linear(ks[7], 256, num_of_layer),
        },
        "n_net": {
            "res1": _init_residual(ks[8], output, 256, 512, True),
            "res2": _init_residual(ks[9], 512, 256, 512, False),
            "res3": _init_residual(ks[10], 512, 128, 256, True),
            "lin1": _init_linear(ks[11], 256, 512),
            "lin2": _init_linear(ks[12], 512, 128),
            "lin3": _init_linear(ks[13], 128, num_of_layer),
        },
        # k_net / nk_net / bn1 / bn2 exist in the PyTorch module but are never
        # used in Generator1.forward -> intentionally omitted.
    }


# ----------------------------- full Generator1 forward -------------------------

def generator1_forward(params, x, t_lim, tb=128):
    out = residual_forward(params["rs1"], x, act=_act_leaky_relu, tb=tb)
    out = residual_forward(params["rs2"], out, act=_act_relu, tb=tb)
    out = residual_forward(params["rs3"], out, act=_act_relu, tb=tb)
    out = residual_forward(params["rs4"], out, act=_act_relu, tb=tb)

    # t_net + Act_fun(t_lim) fused into the final linear's epilogue.
    tn = params["t_net"]
    h = residual_forward(tn["res1"], out, act=_act_relu, tb=tb)
    h = residual_forward(tn["res2"], h, act=_act_relu, tb=tb)
    h = linear_forward(tn["lin1"], h, act=_act_relu, tb=tb)
    t = linear_forward(tn["lin2"], h, act=_make_act_fun(t_lim[0], t_lim[1]), tb=tb)

    # n_net; the PyTorch forward evaluates n_net twice (for n and k) -> identical
    # deterministic output, so run it once and fuse both Act_fun heads.
    nn_p = params["n_net"]
    h = residual_forward(nn_p["res1"], out, act=_act_relu, tb=tb)
    h = residual_forward(nn_p["res2"], h, act=_act_relu, tb=tb)
    h = residual_forward(nn_p["res3"], h, act=_act_relu, tb=tb)
    h = linear_forward(nn_p["lin1"], h, act=_act_relu, tb=tb)
    h = linear_forward(nn_p["lin2"], h, act=_act_relu, tb=tb)
    w, b = nn_p["lin3"]
    n, k = _pallas_rowwise(_linear_nk_body, h, [w, b], [w.shape[1], w.shape[1]], tb)

    # TODO(synk): complex dtype is not supported inside Pallas TPU kernels;
    # assemble n + 1j*k in plain JAX.
    out_nk = n + 1j * k
    return t, out_nk


# ----------------------------- pure-JAX reference ------------------------------

def _ref_linear(p, x):
    w, b = p
    return jnp.dot(x, w, precision=jax.lax.Precision.HIGHEST) + b


def _ref_residual(p, x):
    y = jax.nn.relu(_ref_linear(p["fc1"], x))
    y = _ref_linear(p["fc2"], y)
    if p["fc3"] is not None:
        x = _ref_linear(p["fc3"], x)
    return jax.nn.relu(y + x)


def generator1_reference(params, x, t_lim):
    def act_fun(tmin, tmax, z):
        return (jnp.tanh(z) + 1.0) * ((tmax - tmin) / 2.0) + tmin

    out = jax.nn.leaky_relu(_ref_residual(params["rs1"], x))
    out = jax.nn.relu(_ref_residual(params["rs2"], out))
    out = jax.nn.relu(_ref_residual(params["rs3"], out))
    out = jax.nn.relu(_ref_residual(params["rs4"], out))

    tn = params["t_net"]
    h = jax.nn.relu(_ref_residual(tn["res1"], out))
    h = jax.nn.relu(_ref_residual(tn["res2"], h))
    h = jax.nn.relu(_ref_linear(tn["lin1"], h))
    t = act_fun(t_lim[0], t_lim[1], _ref_linear(tn["lin2"], h))

    nn_p = params["n_net"]
    h = jax.nn.relu(_ref_residual(nn_p["res1"], out))
    h = jax.nn.relu(_ref_residual(nn_p["res2"], h))
    h = jax.nn.relu(_ref_residual(nn_p["res3"], h))
    h = jax.nn.relu(_ref_linear(nn_p["lin1"], h))
    h = jax.nn.relu(_ref_linear(nn_p["lin2"], h))
    z = _ref_linear(nn_p["lin3"], h)
    n = act_fun(1.0, 4.0, z)
    k = act_fun(0.0, 0.5, z)
    return t, n + 1j * k


# ----------------------------- test harness ------------------------------------

if __name__ == "__main__":
    key = jax.random.PRNGKey(0)
    k_param, k_x = jax.random.split(key)

    B = 32                 # batch gets tiled by the grid (TB=16 -> grid (2,))
    input_dim = 16
    num_of_layer = 4
    t_lim = (0.0, 10.0)

    params = init_generator1(k_param, input_dim, num_of_layer, middle=256, output=128)
    x = jax.random.normal(k_x, (B, input_dim), dtype=jnp.float32)

    fwd = jax.jit(functools.partial(generator1_forward, t_lim=t_lim, tb=16))
    t, out_nk = fwd(params, x)
    t = jax.block_until_ready(t)
    out_nk = jax.block_until_ready(out_nk)

    t_ref, nk_ref = generator1_reference(params, x, t_lim)

    assert t.shape == (B, num_of_layer)
    assert out_nk.shape == (B, num_of_layer)
    assert jnp.iscomplexobj(out_nk)
    assert jnp.allclose(t, t_ref, atol=1e-4, rtol=1e-4), "t mismatch vs reference"
    assert jnp.allclose(out_nk.real, nk_ref.real, atol=1e-4, rtol=1e-4), "n mismatch"
    assert jnp.allclose(out_nk.imag, nk_ref.imag, atol=1e-4, rtol=1e-4), "k mismatch"

    print("KERNEL_OK")
</pallas_src>

<mosaic_0001>
module attributes {stable_mosaic.version = 11 : i64} {
  func.func @_residual_fc3_body(%arg0: i32, %arg1: memref<16x16xf32, #tpu.memory_space<vmem>>, %arg2: memref<16x384xf32, #tpu.memory_space<vmem>>, %arg3: memref<1x384xf32, #tpu.memory_space<vmem>>, %arg4: memref<256x128xf32, #tpu.memory_space<vmem>>, %arg5: memref<1x128xf32, #tpu.memory_space<vmem>>, %arg6: memref<16x128xf32, #tpu.memory_space<vmem>>) attributes {dimension_semantics = [#tpu.dimension_semantics<parallel>], iteration_bounds = array<i64: 2>, scalar_prefetch = 0 : i64, scratch_operands = 0 : i64, tpu.core_type = #tpu.core_type<tc>, window_params = [{transform_indices = @transform_0, window_bounds = array<i64: 16, 16>}, {pipeline_mode = #tpu.pipeline_mode<synchronous>, transform_indices = @transform_1, window_bounds = array<i64: 16, 384>}, {pipeline_mode = #tpu.pipeline_mode<synchronous>, transform_indices = @transform_2, window_bounds = array<i64: 1, 384>}, {pipeline_mode = #tpu.pipeline_mode<synchronous>, transform_indices = @transform_3, window_bounds = array<i64: 256, 128>}, {pipeline_mode = #tpu.pipeline_mode<synchronous>, transform_indices = @transform_4, window_bounds = array<i64: 1, 128>}, {transform_indices = @transform_5, window_bounds = array<i64: 16, 128>}]} {
    %c0 = arith.constant 0 : index
    %c0_0 = arith.constant 0 : index
    %0 = vector.load %arg1[%c0, %c0_0] : memref<16x16xf32, #tpu.memory_space<vmem>>, vector<16x16xf32>
    %c0_1 = arith.constant 0 : index
    %c0_2 = arith.constant 0 : index
    %1 = vector.load %arg2[%c0_1, %c0_2] : memref<16x384xf32, #tpu.memory_space<vmem>>, vector<16x384xf32>
    %cst = arith.constant dense<0.000000e+00> : vector<16x384xf32>
    %2 = tpu.matmul %0, %1, %cst {dimension_numbers = #tpu.dot_dimension_numbers<[1], [0], [0], [1], [0, 0, 1, 1], [], []>} : vector<16x16xf32>, vector<16x384xf32>, vector<16x384xf32> -> vector<16x384xf32>
    %c0_3 = arith.constant 0 : index
    %c0_4 = arith.constant 0 : index
    %3 = vector.load %arg3[%c0_3, %c0_4] : memref<1x384xf32, #tpu.memory_space<vmem>>, vector<1x384xf32>
    %4 = vector.broadcast %3 : vector<1x384xf32> to vector<16x384xf32>
    %5 = arith.addf %2, %4 : vector<16x384xf32>
    %6 = vector.extract_strided_slice %5 {offsets = [0, 0], sizes = [16, 256], strides = [1, 1]} : vector<16x384xf32> to vector<16x256xf32>
    %cst_5 = arith.constant 0.000000e+00 : f32
    %7 = vector.broadcast %cst_5 : f32 to vector<16x256xf32>
    %8 = arith.maximumf %6, %7 : vector<16x256xf32>
    %9 = vector.extract_strided_slice %5 {offsets = [0, 256], sizes = [16, 128], strides = [1, 1]} : vector<16x384xf32> to vector<16x128xf32>
    %c0_6 = arith.constant 0 : index
    %c0_7 = arith.constant 0 : index
    %10 = vector.load %arg4[%c0_6, %c0_7] : memref<256x128xf32, #tpu.memory_space<vmem>>, vector<256x128xf32>
    %cst_8 = arith.constant dense<0.000000e+00> : vector<16x128xf32>
    %11 = tpu.matmul %8, %10, %cst_8 {dimension_numbers = #tpu.dot_dimension_numbers<[1], [0], [0], [1], [0, 0, 1, 1], [], []>} : vector<16x256xf32>, vector<256x128xf32>, vector<16x128xf32> -> vector<16x128xf32>
    %c0_9 = arith.constant 0 : index
    %c0_10 = arith.constant 0 : index
    %12 = vector.load %arg5[%c0_9, %c0_10] : memref<1x128xf32, #tpu.memory_space<vmem>>, vector<1x128xf32>
    %13 = vector.broadcast %12 : vector<1x128xf32> to vector<16x128xf32>
    %14 = arith.addf %11, %13 : vector<16x128xf32>
    %15 = arith.addf %14, %9 : vector<16x128xf32>
    %cst_11 = arith.constant 0.000000e+00 : f32
    %16 = vector.broadcast %cst_11 : f32 to vector<16x128xf32>
    %17 = arith.maximumf %15, %16 : vector<16x128xf32>
    %cst_12 = arith.constant 0.000000e+00 : f32
    %18 = vector.broadcast %cst_12 : f32 to vector<16x128xf32>
    %19 = arith.cmpf oge, %17, %18 : vector<16x128xf32>
    %cst_13 = arith.constant 0.00999999977 : f32
    %20 = vector.broadcast %cst_13 : f32 to vector<16x128xf32>
    %21 = arith.mulf %20, %17 : vector<16x128xf32>
    %22 = arith.select %19, %17, %21 : vector<16x128xi1>, vector<16x128xf32>
    %c0_14 = arith.constant 0 : index
    %c0_15 = arith.constant 0 : index
    %23 = vector.load %arg6[%c0_14, %c0_15] : memref<16x128xf32, #tpu.memory_space<vmem>>, vector<16x128xf32>
    tpu.vector_store %arg6[%c0_14, %c0_15], %22 {strides = array<i32>} : memref<16x128xf32, #tpu.memory_space<vmem>>, vector<16x128xf32>,
    return
  }
  func.func @transform_0(%arg0: i32) -> (i32, i32) {
    %c0_i32 = arith.constant 0 : i32
    %c0_i32_0 = arith.constant 0 : i32
    return %arg0, %c0_i32 : i32, i32
  }
  func.func @transform_1(%arg0: i32) -> (i32, i32) {
    %c0_i32 = arith.constant 0 : i32
    %c0_i32_0 = arith.constant 0 : i32
    %c0_i32_1 = arith.constant 0 : i32
    return %c0_i32, %c0_i32_0 : i32, i32
  }
  func.func @transform_2(%arg0: i32) -> (i32, i32) {
    %c0_i32 = arith.constant 0 : i32
    %c0_i32_0 = arith.constant 0 : i32
    %c0_i32_1 = arith.constant 0 : i32
    return %c0_i32, %c0_i32_0 : i32, i32
  }
  func.func @transform_3(%arg0: i32) -> (i32, i32) {
    %c0_i32 = arith.constant 0 : i32
    %c0_i32_0 = arith.constant 0 : i32
    %c0_i32_1 = arith.constant 0 : i32
    return %c0_i32, %c0_i32_0 : i32, i32
  }
  func.func @transform_4(%arg0: i32) -> (i32, i32) {
    %c0_i32 = arith.constant 0 : i32
    %c0_i32_0 = arith.constant 0 : i32
    %c0_i32_1 = arith.constant 0 : i32
    return %c0_i32, %c0_i32_0 : i32, i32
  }
  func.func @transform_5(%arg0: i32) -> (i32, i32) {
    %c0_i32 = arith.constant 0 : i32
    %c0_i32_0 = arith.constant 0 : i32
    return %arg0, %c0_i32 : i32, i32
  }
}

module attributes {stable_mosaic.version = 11 : i64} {
  func.func @_residual_nofc3_body(%arg0: i32, %arg1: memref<16x128xf32, #tpu.memory_space<vmem>>, %arg2: memref<128x256xf32, #tpu.memory_space<vmem>>, %arg3: memref<1x256xf32, #tpu.memory_space<vmem>>, %arg4: memref<256x128xf32, #tpu.memory_space<vmem>>, %arg5: memref<1x128xf32, #tpu.memory_space<vmem>>, %arg6: memref<16x128xf32, #tpu.memory_space<vmem>>) attributes {dimension_semantics = [#tpu.dimension_semantics<parallel>], iteration_bounds = array<i64: 2>, scalar_prefetch = 0 : i64, scratch_operands = 0 : i64, tpu.core_type = #tpu.core_type<tc>, window_params = [{transform_indices = @transform_0, window_bounds = array<i64: 16, 128>}, {pipeline_mode = #tpu.pipeline_mode<synchronous>, transform_indices = @transform_1, window_bounds = array<i64: 128, 256>}, {pipeline_mode = #tpu.pipeline_mode<synchronous>, transform_indices = @transform_2, window_bounds = array<i64: 1, 256>}, {pipeline_mode = #tpu.pipeline_mode<synchronous>, transform_indices = @transform_3, window_bounds = array<i64: 256, 128>}, {pipeline_mode = #tpu.pipeline_mode<synchronous>, transform_indices = @transform_4, window_bounds = array<i64: 1, 128>}, {transform_indices = @transform_5, window_bounds = array<i64: 16, 128>}]} {
    %c0 = arith.constant 0 : index
    %c0_0 = arith.constant 0 : index
    %0 = vector.load %arg1[%c0, %c0_0] : memref<16x128xf32, #tpu.memory_space<vmem>>, vector<16x128xf32>
    %c0_1 = arith.constant 0 : index
    %c0_2 = arith.constant 0 : index
    %1 = vector.load %arg2[%c0_1, %c0_2] : memref<128x256xf32, #tpu.memory_space<vmem>>, vector<128x256xf32>
    %cst = arith.constant dense<0.000000e+00> : vector<16x256xf32>
    %2 = tpu.matmul %0, %1, %cst {dimension_numbers = #tpu.dot_dimension_numbers<[1], [0], [0], [1], [0, 0, 1, 1], [], []>} : vector<16x128xf32>, vector<128x256xf32>, vector<16x256xf32> -> vector<16x256xf32>
    %c0_3 = arith.constant 0 : index
    %c0_4 = arith.constant 0 : index
    %3 = vector.load %arg3[%c0_3, %c0_4] : memref<1x256xf32, #tpu.memory_space<vmem>>, vector<1x256xf32>
    %4 = vector.broadcast %3 : vector<1x256xf32> to vector<16x256xf32>
    %5 = arith.addf %2, %4 : vector<16x256xf32>
    %cst_5 = arith.constant 0.000000e+00 : f32
    %6 = vector.broadcast %cst_5 : f32 to vector<16x256xf32>
    %7 = arith.maximumf %5, %6 : vector<16x256xf32>
    %c0_6 = arith.constant 0 : index
    %c0_7 = arith.constant 0 : index
    %8 = vector.load %arg4[%c0_6, %c0_7] : memref<256x128xf32, #tpu.memory_space<vmem>>, vector<256x128xf32>
    %cst_8 = arith.constant dense<0.000000e+00> : vector<16x128xf32>
    %9 = tpu.matmul %7, %8, %cst_8 {dimension_numbers = #tpu.dot_dimension_numbers<[1], [0], [0], [1], [0, 0, 1, 1], [], []>} : vector<16x256xf32>, vector<256x128xf32>, vector<16x128xf32> -> vector<16x128xf32>
    %c0_9 = arith.constant 0 : index
    %c0_10 = arith.constant 0 : index
    %10 = vector.load %arg5[%c0_9, %c0_10] : memref<1x128xf32, #tpu.memory_space<vmem>>, vector<1x128xf32>
    %11 = vector.broadcast %10 : vector<1x128xf32> to vector<16x128xf32>
    %12 = arith.addf %9, %11 : vector<16x128xf32>
    %13 = arith.addf %12, %0 : vector<16x128xf32>
    %cst_11 = arith.constant 0.000000e+00 : f32
    %14 = vector.broadcast %cst_11 : f32 to vector<16x128xf32>
    %15 = arith.maximumf %13, %14 : vector<16x128xf32>
    %cst_12 = arith.constant 0.000000e+00 : f32
    %16 = vector.broadcast %cst_12 : f32 to vector<16x128xf32>
    %17 = arith.maximumf %15, %16 : vector<16x128xf32>
    %c0_13 = arith.constant 0 : index
    %c0_14 = arith.constant 0 : index
    %18 = vector.load %arg6[%c0_13, %c0_14] : memref<16x128xf32, #tpu.memory_space<vmem>>, vector<16x128xf32>
    tpu.vector_store %arg6[%c0_13, %c0_14], %17 {strides = array<i32>} : memref<16x128xf32, #tpu.memory_space<vmem>>, vector<16x128xf32>,
    return
  }
  func.func @transform_0(%arg0: i32) -> (i32, i32) {
    %c0_i32 = arith.constant 0 : i32
    %c0_i32_0 = arith.constant 0 : i32
    return %arg0, %c0_i32 : i32, i32
  }
  func.func @transform_1(%arg0: i32) -> (i32, i32) {
    %c0_i32 = arith.constant 0 : i32
    %c0_i32_0 = arith.constant 0 : i32
    %c0_i32_1 = arith.constant 0 : i32
    return %c0_i32, %c0_i32_0 : i32, i32
  }
  func.func @transform_2(%arg0: i32) -> (i32, i32) {
    %c0_i32 = arith.constant 0 : i32
    %c0_i32_0 = arith.constant 0 : i32
    %c0_i32_1 = arith.constant 0 : i32
    return %c0_i32, %c0_i32_0 : i32, i32
  }
  func.func @transform_3(%arg0: i32) -> (i32, i32) {
    %c0_i32 = arith.constant 0 : i32
    %c0_i32_0 = arith.constant 0 : i32
    %c0_i32_1 = arith.constant 0 : i32
    return %c0_i32, %c0_i32_0 : i32, i32
  }
  func.func @transform_4(%arg0: i32) -> (i32, i32) {
    %c0_i32 = arith.constant 0 : i32
    %c0_i32_0 = arith.constant 0 : i32
    %c0_i32_1 = arith.constant 0 : i32
    return %c0_i32, %c0_i32_0 : i32, i32
  }
  func.func @transform_5(%arg0: i32) -> (i32, i32) {
    %c0_i32 = arith.constant 0 : i32
    %c0_i32_0 = arith.constant 0 : i32
    return %arg0, %c0_i32 : i32, i32
  }
}

module attributes {stable_mosaic.version = 11 : i64} {
  func.func @_residual_nofc3_body(%arg0: i32, %arg1: memref<16x128xf32, #tpu.memory_space<vmem>>, %arg2: memref<128x256xf32, #tpu.memory_space<vmem>>, %arg3: memref<1x256xf32, #tpu.memory_space<vmem>>, %arg4: memref<256x128xf32, #tpu.memory_space<vmem>>, %arg5: memref<1x128xf32, #tpu.memory_space<vmem>>, %arg6: memref<16x128xf32, #tpu.memory_space<vmem>>) attributes {dimension_semantics = [#tpu.dimension_semantics<parallel>], iteration_bounds = array<i64: 2>, scalar_prefetch = 0 : i64, scratch_operands = 0 : i64, tpu.core_type = #tpu.core_type<tc>, window_params = [{transform_indices = @transform_0, window_bounds = array<i64: 16, 128>}, {pipeline_mode = #tpu.pipeline_mode<synchronous>, transform_indices = @transform_1, window_bounds = array<i64: 128, 256>}, {pipeline_mode = #tpu.pipeline_mode<synchronous>, transform_indices = @transform_2, window_bounds = array<i64: 1, 256>}, {pipeline_mode = #tpu.pipeline_mode<synchronous>, transform_indices = @transform_3, window_bounds = array<i64: 256, 128>}, {pipeline_mode = #tpu.pipeline_mode<synchronous>, transform_indices = @transform_4, window_bounds = array<i64: 1, 128>}, {transform_indices = @transform_5, window_bounds = array<i64: 16, 128>}]} {
    %c0 = arith.constant 0 : index
    %c0_0 = arith.constant 0 : index
    %0 = vector.load %arg1[%c0, %c0_0] : memref<16x128xf32, #tpu.memory_space<vmem>>, vector<16x128xf32>
    %c0_1 = arith.constant 0 : index
    %c0_2 = arith.constant 0 : index
    %1 = vector.load %arg2[%c0_1, %c0_2] : memref<128x256xf32, #tpu.memory_space<vmem>>, vector<128x256xf32>
    %cst = arith.constant dense<0.000000e+00> : vector<16x256xf32>
    %2 = tpu.matmul %0, %1, %cst {dimension_numbers = #tpu.dot_dimension_numbers<[1], [0], [0], [1], [0, 0, 1, 1], [], []>} : vector<16x128xf32>, vector<128x256xf32>, vector<16x256xf32> -> vector<16x256xf32>
    %c0_3 = arith.constant 0 : index
    %c0_4 = arith.constant 0 : index
    %3 = vector.load %arg3[%c0_3, %c0_4] : memref<1x256xf32, #tpu.memory_space<vmem>>, vector<1x256xf32>
    %4 = vector.broadcast %3 : vector<1x256xf32> to vector<16x256xf32>
    %5 = arith.addf %2, %4 : vector<16x256xf32>
    %cst_5 = arith.constant 0.000000e+00 : f32
    %6 = vector.broadcast %cst_5 : f32 to vector<16x256xf32>
    %7 = arith.maximumf %5, %6 : vector<16x256xf32>
    %c0_6 = arith.constant 0 : index
    %c0_7 = arith.constant 0 : index
    %8 = vector.load %arg4[%c0_6, %c0_7] : memref<256x128xf32, #tpu.memory_space<vmem>>, vector<256x128xf32>
    %cst_8 = arith.constant dense<0.000000e+00> : vector<16x128xf32>
    %9 = tpu.matmul %7, %8, %cst_8 {dimension_numbers = #tpu.dot_dimension_numbers<[1], [0], [0], [1], [0, 0, 1, 1], [], []>} : vector<16x256xf32>, vector<256x128xf32>, vector<16x128xf32> -> vector<16x128xf32>
    %c0_9 = arith.constant 0 : index
    %c0_10 = arith.constant 0 : index
    %10 = vector.load %arg5[%c0_9, %c0_10] : memref<1x128xf32, #tpu.memory_space<vmem>>, vector<1x128xf32>
    %11 = vector.broadcast %10 : vector<1x128xf32> to vector<16x128xf32>
    %12 = arith.addf %9, %11 : vector<16x128xf32>
    %13 = arith.addf %12, %0 : vector<16x128xf32>
    %cst_11 = arith.constant 0.000000e+00 : f32
    %14 = vector.broadcast %cst_11 : f32 to vector<16x128xf32>
    %15 = arith.maximumf %13, %14 : vector<16x128xf32>
    %cst_12 = arith.constant 0.000000e+00 : f32
    %16 = vector.broadcast %cst_12 : f32 to vector<16x128xf32>
    %17 = arith.maximumf %15, %16 : vector<16x128xf32>
    %c0_13 = arith.constant 0 : index
    %c0_14 = arith.constant 0 : index
    %18 = vector.load %arg6[%c0_13, %c0_14] : memref<16x128xf32, #tpu.memory_space<vmem>>, vector<16x128xf32>
    tpu.vector_store %arg6[%c0_13, %c0_14], %17 {strides = array<i32>} : memref<16x128xf32, #tpu.memory_space<vmem>>, vector<16x128xf32>,
    return
  }
  func.func @transform_0(%arg0: i32) -> (i32, i32) {
    %c0_i32 = arith.constant 0 : i32
    %c0_i32_0 = arith.constant 0 : i32
    return %arg0, %c0_i32 : i32, i32
  }
  func.func @transform_1(%arg0: i32) -> (i32, i32) {
    %c0_i32 = arith.constant 0 : i32
    %c0_i32_0 = arith.constant 0 : i32
    %c0_i32_1 = arith.constant 0 : i32
    return %c0_i32, %c0_i32_0 : i32, i32
  }
  func.func @transform_2(%arg0: i32) -> (i32, i32) {
    %c0_i32 = arith.constant 0 : i32
    %c0_i32_0 = arith.constant 0 : i32
    %c0_i32_1 = arith.constant 0 : i32
    return %c0_i32, %c0_i32_0 : i32, i32
  }
  func.func @transform_3(%arg0: i32) -> (i32, i32) {
    %c0_i32 = arith.constant 0 : i32
    %c0_i32_0 = arith.constant 0 : i32
    %c0_i32_1 = arith.constant 0 : i32
    return %c0_i32, %c0_i32_0 : i32, i32
  }
  func.func @transform_4(%arg0: i32) -> (i32, i32) {
    %c0_i32 = arith.constant 0 : i32
    %c0_i32_0 = arith.constant 0 : i32
    %c0_i32_1 = arith.constant 0 : i32
    return %c0_i32, %c0_i32_0 : i32, i32
  }
  func.func @transform_5(%arg0: i32) -> (i32, i32) {
    %c0_i32 = arith.constant 0 : i32
    %c0_i32_0 = arith.constant 0 : i32
    return %arg0, %c0_i32 : i32, i32
  }
}

module attributes {stable_mosaic.version = 11 : i64} {
  func.func @_residual_fc3_body(%arg0: i32, %arg1: memref<16x128xf32, #tpu.memory_space<vmem>>, %arg2: memref<128x512xf32, #tpu.memory_space<vmem>>, %arg3: memref<1x512xf32, #tpu.memory_space<vmem>>, %arg4: memref<256x256xf32, #tpu.memory_space<vmem>>, %arg5: memref<1x256xf32, #tpu.memory_space<vmem>>, %arg6: memref<16x256xf32, #tpu.memory_space<vmem>>) attributes {dimension_semantics = [#tpu.dimension_semantics<parallel>], iteration_bounds = array<i64: 2>, scalar_prefetch = 0 : i64, scratch_operands = 0 : i64, tpu.core_type = #tpu.core_type<tc>, window_params = [{transform_indices = @transform_0, window_bounds = array<i64: 16, 128>}, {pipeline_mode = #tpu.pipeline_mode<synchronous>, transform_indices = @transform_1, window_bounds = array<i64: 128, 512>}, {pipeline_mode = #tpu.pipeline_mode<synchronous>, transform_indices = @transform_2, window_bounds = array<i64: 1, 512>}, {pipeline_mode = #tpu.pipeline_mode<synchronous>, transform_indices = @transform_3, window_bounds = array<i64: 256, 256>}, {pipeline_mode = #tpu.pipeline_mode<synchronous>, transform_indices = @transform_4, window_bounds = array<i64: 1, 256>}, {transform_indices = @transform_5, window_bounds = array<i64: 16, 256>}]} {
    %c0 = arith.constant 0 : index
    %c0_0 = arith.constant 0 : index
    %0 = vector.load %arg1[%c0, %c0_0] : memref<16x128xf32, #tpu.memory_space<vmem>>, vector<16x128xf32>
    %c0_1 = arith.constant 0 : index
    %c0_2 = arith.constant 0 : index
    %1 = vector.load %arg2[%c0_1, %c0_2] : memref<128x512xf32, #tpu.memory_space<vmem>>, vector<128x512xf32>
    %cst = arith.constant dense<0.000000e+00> : vector<16x512xf32>
    %2 = tpu.matmul %0, %1, %cst {dimension_numbers = #tpu.dot_dimension_numbers<[1], [0], [0], [1], [0, 0, 1, 1], [], []>} : vector<16x128xf32>, vector<128x512xf32>, vector<16x512xf32> -> vector<16x512xf32>
    %c0_3 = arith.constant 0 : index
    %c0_4 = arith.constant 0 : index
    %3 = vector.load %arg3[%c0_3, %c0_4] : memref<1x512xf32, #tpu.memory_space<vmem>>, vector<1x512xf32>
    %4 = vector.broadcast %3 : vector<1x512xf32> to vector<16x512xf32>
    %5 = arith.addf %2, %4 : vector<16x512xf32>
    %6 = vector.extract_strided_slice %5 {offsets = [0, 0], sizes = [16, 256], strides = [1, 1]} : vector<16x512xf32> to vector<16x256xf32>
    %cst_5 = arith.constant 0.000000e+00 : f32
    %7 = vector.broadcast %cst_5 : f32 to vector<16x256xf32>
    %8 = arith.maximumf %6, %7 : vector<16x256xf32>
    %9 = vector.extract_strided_slice %5 {offsets = [0, 256], sizes = [16, 256], strides = [1, 1]} : vector<16x512xf32> to vector<16x256xf32>
    %c0_6 = arith.constant 0 : index
    %c0_7 = arith.constant 0 : index
    %10 = vector.load %arg4[%c0_6, %c0_7] : memref<256x256xf32, #tpu.memory_space<vmem>>, vector<256x256xf32>
    %cst_8 = arith.constant dense<0.000000e+00> : vector<16x256xf32>
    %11 = tpu.matmul %8, %10, %cst_8 {dimension_numbers = #tpu.dot_dimension_numbers<[1], [0], [0], [1], [0, 0, 1, 1], [], []>} : vector<16x256xf32>, vector<256x256xf32>, vector<16x256xf32> -> vector<16x256xf32>
    %c0_9 = arith.constant 0 : index
    %c0_10 = arith.constant 0 : index
    %12 = vector.load %arg5[%c0_9, %c0_10] : memref<1x256xf32, #tpu.memory_space<vmem>>, vector<1x256xf32>
    %13 = vector.broadcast %12 : vector<1x256xf32> to vector<16x256xf32>
    %14 = arith.addf %11, %13 : vector<16x256xf32>
    %15 = arith.addf %14, %9 : vector<16x256xf32>
    %cst_11 = arith.constant 0.000000e+00 : f32
    %16 = vector.broadcast %cst_11 : f32 to vector<16x256xf32>
    %17 = arith.maximumf %15, %16 : vector<16x256xf32>
    %cst_12 = arith.constant 0.000000e+00 : f32
    %18 = vector.broadcast %cst_12 : f32 to vector<16x256xf32>
    %19 = arith.maximumf %17, %18 : vector<16x256xf32>
    %c0_13 = arith.constant 0 : index
    %c0_14 = arith.constant 0 : index
    %20 = vector.load %arg6[%c0_13, %c0_14] : memref<16x256xf32, #tpu.memory_space<vmem>>, vector<16x256xf32>
    tpu.vector_store %arg6[%c0_13, %c0_14], %19 {strides = array<i32>} : memref<16x256xf32, #tpu.memory_space<vmem>>, vector<16x256xf32>,
    return
  }
  func.func @transform_0(%arg0: i32) -> (i32, i32) {
    %c0_i32 = arith.constant 0 : i32
    %c0_i32_0 = arith.constant 0 : i32
    return %arg0, %c0_i32 : i32, i32
  }
  func.func @transform_1(%arg0: i32) -> (i32, i32) {
    %c0_i32 = arith.constant 0 : i32
    %c0_i32_0 = arith.constant 0 : i32
    %c0_i32_1 = arith.constant 0 : i32
    return %c0_i32, %c0_i32_0 : i32, i32
  }
  func.func @transform_2(%arg0: i32) -> (i32, i32) {
    %c0_i32 = arith.constant 0 : i32
    %c0_i32_0 = arith.constant 0 : i32
    %c0_i32_1 = arith.constant 0 : i32
    return %c0_i32, %c0_i32_0 : i32, i32
  }
  func.func @transform_3(%arg0: i32) -> (i32, i32) {
    %c0_i32 = arith.constant 0 : i32
    %c0_i32_0 = arith.constant 0 : i32
    %c0_i32_1 = arith.constant 0 : i32
    return %c0_i32, %c0_i32_0 : i32, i32
  }
  func.func @transform_4(%arg0: i32) -> (i32, i32) {
    %c0_i32 = arith.constant 0 : i32
    %c0_i32_0 = arith.constant 0 : i32
    %c0_i32_1 = arith.constant 0 : i32
    return %c0_i32, %c0_i32_0 : i32, i32
  }
  func.func @transform_5(%arg0: i32) -> (i32, i32) {
    %c0_i32 = arith.constant 0 : i32
    %c0_i32_0 = arith.constant 0 : i32
    return %arg0, %c0_i32 : i32, i32
  }
}

module attributes {stable_mosaic.version = 11 : i64} {
  func.func @_linear_body(%arg0: i32, %arg1: memref<16x512xf32, #tpu.memory_space<vmem>>, %arg2: memref<512x256xf32, #tpu.memory_space<vmem>>, %arg3: memref<1x256xf32, #tpu.memory_space<vmem>>, %arg4: memref<16x256xf32, #tpu.memory_space<vmem>>) attributes {dimension_semantics = [#tpu.dimension_semantics<parallel>], iteration_bounds = array<i64: 2>, scalar_prefetch = 0 : i64, scratch_operands = 0 : i64, tpu.core_type = #tpu.core_type<tc>, window_params = [{transform_indices = @transform_0, window_bounds = array<i64: 16, 512>}, {pipeline_mode = #tpu.pipeline_mode<synchronous>, transform_indices = @transform_1, window_bounds = array<i64: 512, 256>}, {pipeline_mode = #tpu.pipeline_mode<synchronous>, transform_indices = @transform_2, window_bounds = array<i64: 1, 256>}, {transform_indices = @transform_3, window_bounds = array<i64: 16, 256>}]} {
    %c0 = arith.constant 0 : index
    %c0_0 = arith.constant 0 : index
    %0 = vector.load %arg1[%c0, %c0_0] : memref<16x512xf32, #tpu.memory_space<vmem>>, vector<16x512xf32>
    %c0_1 = arith.constant 0 : index
    %c0_2 = arith.constant 0 : index
    %1 = vector.load %arg2[%c0_1, %c0_2] : memref<512x256xf32, #tpu.memory_space<vmem>>, vector<512x256xf32>
    %cst = arith.constant dense<0.000000e+00> : vector<16x256xf32>
    %2 = tpu.matmul %0, %1, %cst {dimension_numbers = #tpu.dot_dimension_numbers<[1], [0], [0], [1], [0, 0, 1, 1], [], []>} : vector<16x512xf32>, vector<512x256xf32>, vector<16x256xf32> -> vector<16x256xf32>
    %c0_3 = arith.constant 0 : index
    %c0_4 = arith.constant 0 : index
    %3 = vector.load %arg3[%c0_3, %c0_4] : memref<1x256xf32, #tpu.memory_space<vmem>>, vector<1x256xf32>
    %4 = vector.broadcast %3 : vector<1x256xf32> to vector<16x256xf32>
    %5 = arith.addf %2, %4 : vector<16x256xf32>
    %cst_5 = arith.constant 0.000000e+00 : f32
    %6 = vector.broadcast %cst_5 : f32 to vector<16x256xf32>
    %7 = arith.maximumf %5, %6 : vector<16x256xf32>
    %c0_6 = arith.constant 0 : index
    %c0_7 = arith.constant 0 : index
    %8 = vector.load %arg4[%c0_6, %c0_7] : memref<16x256xf32, #tpu.memory_space<vmem>>, vector<16x256xf32>
    tpu.vector_store %arg4[%c0_6, %c0_7], %7 {strides = array<i32>} : memref<16x256xf32, #tpu.memory_space<vmem>>, vector<16x256xf32>,
    return
  }
  func.func @transform_0(%arg0: i32) -> (i32, i32) {
    %c0_i32 = arith.constant 0 : i32
    %c0_i32_0 = arith.constant 0 : i32
    return %arg0, %c0_i32 : i32, i32
  }
  func.func @transform_1(%arg0: i32) -> (i32, i32) {
    %c0_i32 = arith.constant 0 : i32
    %c0_i32_0 = arith.constant 0 : i32
    %c0_i32_1 = arith.constant 0 : i32
    return %c0_i32, %c0_i32_0 : i32, i32
  }
  func.func @transform_2(%arg0: i32) -> (i32, i32) {
    %c0_i32 = arith.constant 0 : i32
    %c0_i32_0 = arith.constant 0 : i32
    %c0_i32_1 = arith.constant 0 : i32
    return %c0_i32, %c0_i32_0 : i32, i32
  }
  func.func @transform_3(%arg0: i32) -> (i32, i32) {
    %c0_i32 = arith.constant 0 : i32
    %c0_i32_0 = arith.constant 0 : i32
    return %arg0, %c0_i32 : i32, i32
  }
}

module attributes {stable_mosaic.version = 11 : i64} {
  func.func @_residual_fc3_body(%arg0: i32, %arg1: memref<16x256xf32, #tpu.memory_space<vmem>>, %arg2: memref<256x640xf32, #tpu.memory_space<vmem>>, %arg3: memref<1x640xf32, #tpu.memory_space<vmem>>, %arg4: memref<128x512xf32, #tpu.memory_space<vmem>>, %arg5: memref<1x512xf32, #tpu.memory_space<vmem>>, %arg6: memref<16x512xf32, #tpu.memory_space<vmem>>) attributes {dimension_semantics = [#tpu.dimension_semantics<parallel>], iteration_bounds = array<i64: 2>, scalar_prefetch = 0 : i64, scratch_operands = 0 : i64, tpu.core_type = #tpu.core_type<tc>, window_params = [{transform_indices = @transform_0, window_bounds = array<i64: 16, 256>}, {pipeline_mode = #tpu.pipeline_mode<synchronous>, transform_indices = @transform_1, window_bounds = array<i64: 256, 640>}, {pipeline_mode = #tpu.pipeline_mode<synchronous>, transform_indices = @transform_2, window_bounds = array<i64: 1, 640>}, {pipeline_mode = #tpu.pipeline_mode<synchronous>, transform_indices = @transform_3, window_bounds = array<i64: 128, 512>}, {pipeline_mode = #tpu.pipeline_mode<synchronous>, transform_indices = @transform_4, window_bounds = array<i64: 1, 512>}, {transform_indices = @transform_5, window_bounds = array<i64: 16, 512>}]} {
    %c0 = arith.constant 0 : index
    %c0_0 = arith.constant 0 : index
    %0 = vector.load %arg1[%c0, %c0_0] : memref<16x256xf32, #tpu.memory_space<vmem>>, vector<16x256xf32>
    %c0_1 = arith.constant 0 : index
    %c0_2 = arith.constant 0 : index
    %1 = vector.load %arg2[%c0_1, %c0_2] : memref<256x640xf32, #tpu.memory_space<vmem>>, vector<256x640xf32>
    %cst = arith.constant dense<0.000000e+00> : vector<16x640xf32>
    %2 = tpu.matmul %0, %1, %cst {dimension_numbers = #tpu.dot_dimension_numbers<[1], [0], [0], [1], [0, 0, 1, 1], [], []>} : vector<16x256xf32>, vector<256x640xf32>, vector<16x640xf32> -> vector<16x640xf32>
    %c0_3 = arith.constant 0 : index
    %c0_4 = arith.constant 0 : index
    %3 = vector.load %arg3[%c0_3, %c0_4] : memref<1x640xf32, #tpu.memory_space<vmem>>, vector<1x640xf32>
    %4 = vector.broadcast %3 : vector<1x640xf32> to vector<16x640xf32>
    %5 = arith.addf %2, %4 : vector<16x640xf32>
    %6 = vector.extract_strided_slice %5 {offsets = [0, 0], sizes = [16, 128], strides = [1, 1]} : vector<16x640xf32> to vector<16x128xf32>
    %cst_5 = arith.constant 0.000000e+00 : f32
    %7 = vector.broadcast %cst_5 : f32 to vector<16x128xf32>
    %8 = arith.maximumf %6, %7 : vector<16x128xf32>
    %9 = vector.extract_strided_slice %5 {offsets = [0, 128], sizes = [16, 512], strides = [1, 1]} : vector<16x640xf32> to vector<16x512xf32>
    %c0_6 = arith.constant 0 : index
    %c0_7 = arith.constant 0 : index
    %10 = vector.load %arg4[%c0_6, %c0_7] : memref<128x512xf32, #tpu.memory_space<vmem>>, vector<128x512xf32>
    %cst_8 = arith.constant dense<0.000000e+00> : vector<16x512xf32>
    %11 = tpu.matmul %8, %10, %cst_8 {dimension_numbers = #tpu.dot_dimension_numbers<[1], [0], [0], [1], [0, 0, 1, 1], [], []>} : vector<16x128xf32>, vector<128x512xf32>, vector<16x512xf32> -> vector<16x512xf32>
    %c0_9 = arith.constant 0 : index
    %c0_10 = arith.constant 0 : index
    %12 = vector.load %arg5[%c0_9, %c0_10] : memref<1x512xf32, #tpu.memory_space<vmem>>, vector<1x512xf32>
    %13 = vector.broadcast %12 : vector<1x512xf32> to vector<16x512xf32>
    %14 = arith.addf %11, %13 : vector<16x512xf32>
    %15 = arith.addf %14, %9 : vector<16x512xf32>
    %cst_11 = arith.constant 0.000000e+00 : f32
    %16 = vector.broadcast %cst_11 : f32 to vector<16x512xf32>
    %17 = arith.maximumf %15, %16 : vector<16x512xf32>
    %cst_12 = arith.constant 0.000000e+00 : f32
    %18 = vector.broadcast %cst_12 : f32 to vector<16x512xf32>
    %19 = arith.maximumf %17, %18 : vector<16x512xf32>
    %c0_13 = arith.constant 0 : index
    %c0_14 = arith.constant 0 : index
    %20 = vector.load %arg6[%c0_13, %c0_14] : memref<16x512xf32, #tpu.memory_space<vmem>>, vector<16x512xf32>
    tpu.vector_store %arg6[%c0_13, %c0_14], %19 {strides = array<i32>} : memref<16x512xf32, #tpu.memory_space<vmem>>, vector<16x512xf32>,
    return
  }
  func.func @transform_0(%arg0: i32) -> (i32, i32) {
    %c0_i32 = arith.constant 0 : i32
    %c0_i32_0 = arith.constant 0 : i32
    return %arg0, %c0_i32 : i32, i32
  }
  func.func @transform_1(%arg0: i32) -> (i32, i32) {
    %c0_i32 = arith.constant 0 : i32
    %c0_i32_0 = arith.constant 0 : i32
    %c0_i32_1 = arith.constant 0 : i32
    return %c0_i32, %c0_i32_0 : i32, i32
  }
  func.func @transform_2(%arg0: i32) -> (i32, i32) {
    %c0_i32 = arith.constant 0 : i32
    %c0_i32_0 = arith.constant 0 : i32
    %c0_i32_1 = arith.constant 0 : i32
    return %c0_i32, %c0_i32_0 : i32, i32
  }
  func.func @transform_3(%arg0: i32) -> (i32, i32) {
    %c0_i32 = arith.constant 0 : i32
    %c0_i32_0 = arith.constant 0 : i32
    %c0_i32_1 = arith.constant 0 : i32
    return %c0_i32, %c0_i32_0 : i32, i32
  }
  func.func @transform_4(%arg0: i32) -> (i32, i32) {
    %c0_i32 = arith.constant 0 : i32
    %c0_i32_0 = arith.constant 0 : i32
    %c0_i32_1 = arith.constant 0 : i32
    return %c0_i32, %c0_i32_0 : i32, i32
  }
  func.func @transform_5(%arg0: i32) -> (i32, i32) {
    %c0_i32 = arith.constant 0 : i32
    %c0_i32_0 = arith.constant 0 : i32
    return %arg0, %c0_i32 : i32, i32
  }
}

module attributes {stable_mosaic.version = 11 : i64} {
  func.func @_linear_body(%arg0: i32, %arg1: memref<16x256xf32, #tpu.memory_space<vmem>>, %arg2: memref<256x4xf32, #tpu.memory_space<vmem>>, %arg3: memref<1x4xf32, #tpu.memory_space<vmem>>, %arg4: memref<16x4xf32, #tpu.memory_space<vmem>>) attributes {dimension_semantics = [#tpu.dimension_semantics<parallel>], iteration_bounds = array<i64: 2>, scalar_prefetch = 0 : i64, scratch_operands = 0 : i64, tpu.core_type = #tpu.core_type<tc>, window_params = [{transform_indices = @transform_0, window_bounds = array<i64: 16, 256>}, {pipeline_mode = #tpu.pipeline_mode<synchronous>, transform_indices = @transform_1, window_bounds = array<i64: 256, 4>}, {pipeline_mode = #tpu.pipeline_mode<synchronous>, transform_indices = @transform_2, window_bounds = array<i64: 1, 4>}, {transform_indices = @transform_3, window_bounds = array<i64: 16, 4>}]} {
    %c0 = arith.constant 0 : index
    %c0_0 = arith.constant 0 : index
    %0 = vector.load %arg1[%c0, %c0_0] : memref<16x256xf32, #tpu.memory_space<vmem>>, vector<16x256xf32>
    %c0_1 = arith.constant 0 : index
    %c0_2 = arith.constant 0 : index
    %1 = vector.load %arg2[%c0_1, %c0_2] : memref<256x4xf32, #tpu.memory_space<vmem>>, vector<256x4xf32>
    %cst = arith.constant dense<0.000000e+00> : vector<16x4xf32>
    %2 = tpu.matmul %0, %1, %cst {dimension_numbers = #tpu.dot_dimension_numbers<[1], [0], [0], [1], [0, 0, 1, 1], [], []>} : vector<16x256xf32>, vector<256x4xf32>, vector<16x4xf32> -> vector<16x4xf32>
    %c0_3 = arith.constant 0 : index
    %c0_4 = arith.constant 0 : index
    %3 = vector.load %arg3[%c0_3, %c0_4] : memref<1x4xf32, #tpu.memory_space<vmem>>, vector<1x4xf32>
    %4 = vector.broadcast %3 : vector<1x4xf32> to vector<16x4xf32>
    %5 = arith.addf %2, %4 : vector<16x4xf32>
    %6 = math.tanh %5 : vector<16x4xf32>
    %cst_5 = arith.constant 1.000000e+00 : f32
    %7 = vector.broadcast %cst_5 : f32 to vector<16x4xf32>
    %8 = arith.addf %6, %7 : vector<16x4xf32>
    %cst_6 = arith.constant 5.000000e+00 : f32
    %9 = vector.broadcast %cst_6 : f32 to vector<16x4xf32>
    %10 = arith.mulf %8, %9 : vector<16x4xf32>
    %cst_7 = arith.constant 0.000000e+00 : f32
    %11 = vector.broadcast %cst_7 : f32 to vector<16x4xf32>
    %12 = arith.addf %10, %11 : vector<16x4xf32>
    %c0_8 = arith.constant 0 : index
    %c0_9 = arith.constant 0 : index
    %13 = vector.load %arg4[%c0_8, %c0_9] : memref<16x4xf32, #tpu.memory_space<vmem>>, vector<16x4xf32>
    tpu.vector_store %arg4[%c0_8, %c0_9], %12 {strides = array<i32>} : memref<16x4xf32, #tpu.memory_space<vmem>>, vector<16x4xf32>,
    return
  }
  func.func @transform_0(%arg0: i32) -> (i32, i32) {
    %c0_i32 = arith.constant 0 : i32
    %c0_i32_0 = arith.constant 0 : i32
    return %arg0, %c0_i32 : i32, i32
  }
  func.func @transform_1(%arg0: i32) -> (i32, i32) {
    %c0_i32 = arith.constant 0 : i32
    %c0_i32_0 = arith.constant 0 : i32
    %c0_i32_1 = arith.constant 0 : i32
    return %c0_i32, %c0_i32_0 : i32, i32
  }
  func.func @transform_2(%arg0: i32) -> (i32, i32) {
    %c0_i32 = arith.constant 0 : i32
    %c0_i32_0 = arith.constant 0 : i32
    %c0_i32_1 = arith.constant 0 : i32
    return %c0_i32, %c0_i32_0 : i32, i32
  }
  func.func @transform_3(%arg0: i32) -> (i32, i32) {
    %c0_i32 = arith.constant 0 : i32
    %c0_i32_0 = arith.constant 0 : i32
    return %arg0, %c0_i32 : i32, i32
  }
}

module attributes {stable_mosaic.version = 11 : i64} {
  func.func @_residual_fc3_body(%arg0: i32, %arg1: memref<16x128xf32, #tpu.memory_space<vmem>>, %arg2: memref<128x768xf32, #tpu.memory_space<vmem>>, %arg3: memref<1x768xf32, #tpu.memory_space<vmem>>, %arg4: memref<256x512xf32, #tpu.memory_space<vmem>>, %arg5: memref<1x512xf32, #tpu.memory_space<vmem>>, %arg6: memref<16x512xf32, #tpu.memory_space<vmem>>) attributes {dimension_semantics = [#tpu.dimension_semantics<parallel>], iteration_bounds = array<i64: 2>, scalar_prefetch = 0 : i64, scratch_operands = 0 : i64, tpu.core_type = #tpu.core_type<tc>, window_params = [{transform_indices = @transform_0, window_bounds = array<i64: 16, 128>}, {pipeline_mode = #tpu.pipeline_mode<synchronous>, transform_indices = @transform_1, window_bounds = array<i64: 128, 768>}, {pipeline_mode = #tpu.pipeline_mode<synchronous>, transform_indices = @transform_2, window_bounds = array<i64: 1, 768>}, {pipeline_mode = #tpu.pipeline_mode<synchronous>, transform_indices = @transform_3, window_bounds = array<i64: 256, 512>}, {pipeline_mode = #tpu.pipeline_mode<synchronous>, transform_indices = @transform_4, window_bounds = array<i64: 1, 512>}, {transform_indices = @transform_5, window_bounds = array<i64: 16, 512>}]} {
    %c0 = arith.constant 0 : index
    %c0_0 = arith.constant 0 : index
    %0 = vector.load %arg1[%c0, %c0_0] : memref<16x128xf32, #tpu.memory_space<vmem>>, vector<16x128xf32>
    %c0_1 = arith.constant 0 : index
    %c0_2 = arith.constant 0 : index
    %1 = vector.load %arg2[%c0_1, %c0_2] : memref<128x768xf32, #tpu.memory_space<vmem>>, vector<128x768xf32>
    %cst = arith.constant dense<0.000000e+00> : vector<16x768xf32>
    %2 = tpu.matmul %0, %1, %cst {dimension_numbers = #tpu.dot_dimension_numbers<[1], [0], [0], [1], [0, 0, 1, 1], [], []>} : vector<16x128xf32>, vector<128x768xf32>, vector<16x768xf32> -> vector<16x768xf32>
    %c0_3 = arith.constant 0 : index
    %c0_4 = arith.constant 0 : index
    %3 = vector.load %arg3[%c0_3, %c0_4] : memref<1x768xf32, #tpu.memory_space<vmem>>, vector<1x768xf32>
    %4 = vector.broadcast %3 : vector<1x768xf32> to vector<16x768xf32>
    %5 = arith.addf %2, %4 : vector<16x768xf32>
    %6 = vector.extract_strided_slice %5 {offsets = [0, 0], sizes = [16, 256], strides = [1, 1]} : vector<16x768xf32> to vector<16x256xf32>
    %cst_5 = arith.constant 0.000000e+00 : f32
    %7 = vector.broadcast %cst_5 : f32 to vector<16x256xf32>
    %8 = arith.maximumf %6, %7 : vector<16x256xf32>
    %9 = vector.extract_strided_slice %5 {offsets = [0, 256], sizes = [16, 512], strides = [1, 1]} : vector<16x768xf32> to vector<16x512xf32>
    %c0_6 = arith.constant 0 : index
    %c0_7 = arith.constant 0 : index
    %10 = vector.load %arg4[%c0_6, %c0_7] : memref<256x512xf32, #tpu.memory_space<vmem>>, vector<256x512xf32>
    %cst_8 = arith.constant dense<0.000000e+00> : vector<16x512xf32>
    %11 = tpu.matmul %8, %10, %cst_8 {dimension_numbers = #tpu.dot_dimension_numbers<[1], [0], [0], [1], [0, 0, 1, 1], [], []>} : vector<16x256xf32>, vector<256x512xf32>, vector<16x512xf32> -> vector<16x512xf32>
    %c0_9 = arith.constant 0 : index
    %c0_10 = arith.constant 0 : index
    %12 = vector.load %arg5[%c0_9, %c0_10] : memref<1x512xf32, #tpu.memory_space<vmem>>, vector<1x512xf32>
    %13 = vector.broadcast %12 : vector<1x512xf32> to vector<16x512xf32>
    %14 = arith.addf %11, %13 : vector<16x512xf32>
    %15 = arith.addf %14, %9 : vector<16x512xf32>
    %cst_11 = arith.constant 0.000000e+00 : f32
    %16 = vector.broadcast %cst_11 : f32 to vector<16x512xf32>
    %17 = arith.maximumf %15, %16 : vector<16x512xf32>
    %cst_12 = arith.constant 0.000000e+00 : f32
    %18 = vector.broadcast %cst_12 : f32 to vector<16x512xf32>
    %19 = arith.maximumf %17, %18 : vector<16x512xf32>
    %c0_13 = arith.constant 0 : index
    %c0_14 = arith.constant 0 : index
    %20 = vector.load %arg6[%c0_13, %c0_14] : memref<16x512xf32, #tpu.memory_space<vmem>>, vector<16x512xf32>
    tpu.vector_store %arg6[%c0_13, %c0_14], %19 {strides = array<i32>} : memref<16x512xf32, #tpu.memory_space<vmem>>, vector<16x512xf32>,
    return
  }
  func.func @transform_0(%arg0: i32) -> (i32, i32) {
    %c0_i32 = arith.constant 0 : i32
    %c0_i32_0 = arith.constant 0 : i32
    return %arg0, %c0_i32 : i32, i32
  }
  func.func @transform_1(%arg0: i32) -> (i32, i32) {
    %c0_i32 = arith.constant 0 : i32
    %c0_i32_0 = arith.constant 0 : i32
    %c0_i32_1 = arith.constant 0 : i32
    return %c0_i32, %c0_i32_0 : i32, i32
  }
  func.func @transform_2(%arg0: i32) -> (i32, i32) {
    %c0_i32 = arith.constant 0 : i32
    %c0_i32_0 = arith.constant 0 : i32
    %c0_i32_1 = arith.constant 0 : i32
    return %c0_i32, %c0_i32_0 : i32, i32
  }
  func.func @transform_3(%arg0: i32) -> (i32, i32) {
    %c0_i32 = arith.constant 0 : i32
    %c0_i32_0 = arith.constant 0 : i32
    %c0_i32_1 = arith.constant 0 : i32
    return %c0_i32, %c0_i32_0 : i32, i32
  }
  func.func @transform_4(%arg0: i32) -> (i32, i32) {
    %c0_i32 = arith.constant 0 : i32
    %c0_i32_0 = arith.constant 0 : i32
    %c0_i32_1 = arith.constant 0 : i32
    return %c0_i32, %c0_i32_0 : i32, i32
  }
  func.func @transform_5(%arg0: i32) -> (i32, i32) {
    %c0_i32 = arith.constant 0 : i32
    %c0_i32_0 = arith.constant 0 : i32
    return %arg0, %c0_i32 : i32, i32
  }
}

module attributes {stable_mosaic.version = 11 : i64} {
  func.func @_residual_nofc3_body(%arg0: i32, %arg1: memref<16x512xf32, #tpu.memory_space<vmem>>, %arg2: memref<512x256xf32, #tpu.memory_space<vmem>>, %arg3: memref<1x256xf32, #tpu.memory_space<vmem>>, %arg4: memref<256x512xf32, #tpu.memory_space<vmem>>, %arg5: memref<1x512xf32, #tpu.memory_space<vmem>>, %arg6: memref<16x512xf32, #tpu.memory_space<vmem>>) attributes {dimension_semantics = [#tpu.dimension_semantics<parallel>], iteration_bounds = array<i64: 2>, scalar_prefetch = 0 : i64, scratch_operands = 0 : i64, tpu.core_type = #tpu.core_type<tc>, window_params = [{transform_indices = @transform_0, window_bounds = array<i64: 16, 512>}, {pipeline_mode = #tpu.pipeline_mode<synchronous>, transform_indices = @transform_1, window_bounds = array<i64: 512, 256>}, {pipeline_mode = #tpu.pipeline_mode<synchronous>, transform_indices = @transform_2, window_bounds = array<i64: 1, 256>}, {pipeline_mode = #tpu.pipeline_mode<synchronous>, transform_indices = @transform_3, window_bounds = array<i64: 256, 512>}, {pipeline_mode = #tpu.pipeline_mode<synchronous>, transform_indices = @transform_4, window_bounds = array<i64: 1, 512>}, {transform_indices = @transform_5, window_bounds = array<i64: 16, 512>}]} {
    %c0 = arith.constant 0 : index
    %c0_0 = arith.constant 0 : index
    %0 = vector.load %arg1[%c0, %c0_0] : memref<16x512xf32, #tpu.memory_space<vmem>>, vector<16x512xf32>
    %c0_1 = arith.constant 0 : index
    %c0_2 = arith.constant 0 : index
    %1 = vector.load %arg2[%c0_1, %c0_2] : memref<512x256xf32, #tpu.memory_space<vmem>>, vector<512x256xf32>
    %cst = arith.constant dense<0.000000e+00> : vector<16x256xf32>
    %2 = tpu.matmul %0, %1, %cst {dimension_numbers = #tpu.dot_dimension_numbers<[1], [0], [0], [1], [0, 0, 1, 1], [], []>} : vector<16x512xf32>, vector<512x256xf32>, vector<16x256xf32> -> vector<16x256xf32>
    %c0_3 = arith.constant 0 : index
    %c0_4 = arith.constant 0 : index
    %3 = vector.load %arg3[%c0_3, %c0_4] : memref<1x256xf32, #tpu.memory_space<vmem>>, vector<1x256xf32>
    %4 = vector.broadcast %3 : vector<1x256xf32> to vector<16x256xf32>
    %5 = arith.addf %2, %4 : vector<16x256xf32>
    %cst_5 = arith.constant 0.000000e+00 : f32
    %6 = vector.broadcast %cst_5 : f32 to vector<16x256xf32>
    %7 = arith.maximumf %5, %6 : vector<16x256xf32>
    %c0_6 = arith.constant 0 : index
    %c0_7 = arith.constant 0 : index
    %8 = vector.load %arg4[%c0_6, %c0_7] : memref<256x512xf32, #tpu.memory_space<vmem>>, vector<256x512xf32>
    %cst_8 = arith.constant dense<0.000000e+00> : vector<16x512xf32>
    %9 = tpu.matmul %7, %8, %cst_8 {dimension_numbers = #tpu.dot_dimension_numbers<[1], [0], [0], [1], [0, 0, 1, 1], [], []>} : vector<16x256xf32>, vector<256x512xf32>, vector<16x512xf32> -> vector<16x512xf32>
    %c0_9 = arith.constant 0 : index
    %c0_10 = arith.constant 0 : index
    %10 = vector.load %arg5[%c0_9, %c0_10] : memref<1x512xf32, #tpu.memory_space<vmem>>, vector<1x512xf32>
    %11 = vector.broadcast %10 : vector<1x512xf32> to vector<16x512xf32>
    %12 = arith.addf %9, %11 : vector<16x512xf32>
    %13 = arith.addf %12, %0 : vector<16x512xf32>
    %cst_11 = arith.constant 0.000000e+00 : f32
    %14 = vector.broadcast %cst_11 : f32 to vector<16x512xf32>
    %15 = arith.maximumf %13, %14 : vector<16x512xf32>
    %cst_12 = arith.constant 0.000000e+00 : f32
    %16 = vector.broadcast %cst_12 : f32 to vector<16x512xf32>
    %17 = arith.maximumf %15, %16 : vector<16x512xf32>
    %c0_13 = arith.constant 0 : index
    %c0_14 = arith.constant 0 : index
    %18 = vector.load %arg6[%c0_13, %c0_14] : memref<16x512xf32, #tpu.memory_space<vmem>>, vector<16x512xf32>
    tpu.vector_store %arg6[%c0_13, %c0_14], %17 {strides = array<i32>} : memref<16x512xf32, #tpu.memory_space<vmem>>, vector<16x512xf32>,
    return
  }
  func.func @transform_0(%arg0: i32) -> (i32, i32) {
    %c0_i32 = arith.constant 0 : i32
    %c0_i32_0 = arith.constant 0 : i32
    return %arg0, %c0_i32 : i32, i32
  }
  func.func @transform_1(%arg0: i32) -> (i32, i32) {
    %c0_i32 = arith.constant 0 : i32
    %c0_i32_0 = arith.constant 0 : i32
    %c0_i32_1 = arith.constant 0 : i32
    return %c0_i32, %c0_i32_0 : i32, i32
  }
  func.func @transform_2(%arg0: i32) -> (i32, i32) {
    %c0_i32 = arith.constant 0 : i32
    %c0_i32_0 = arith.constant 0 : i32
    %c0_i32_1 = arith.constant 0 : i32
    return %c0_i32, %c0_i32_0 : i32, i32
  }
  func.func @transform_3(%arg0: i32) -> (i32, i32) {
    %c0_i32 = arith.constant 0 : i32
    %c0_i32_0 = arith.constant 0 : i32
    %c0_i32_1 = arith.constant 0 : i32
    return %c0_i32, %c0_i32_0 : i32, i32
  }
  func.func @transform_4(%arg0: i32) -> (i32, i32) {
    %c0_i32 = arith.constant 0 : i32
    %c0_i32_0 = arith.constant 0 : i32
    %c0_i32_1 = arith.constant 0 : i32
    return %c0_i32, %c0_i32_0 : i32, i32
  }
  func.func @transform_5(%arg0: i32) -> (i32, i32) {
    %c0_i32 = arith.constant 0 : i32
    %c0_i32_0 = arith.constant 0 : i32
    return %arg0, %c0_i32 : i32, i32
  }
}

module attributes {stable_mosaic.version = 11 : i64} {
  func.func @_residual_fc3_body(%arg0: i32, %arg1: memref<16x512xf32, #tpu.memory_space<vmem>>, %arg2: memref<512x384xf32, #tpu.memory_space<vmem>>, %arg3: memref<1x384xf32, #tpu.memory_space<vmem>>, %arg4: memref<128x256xf32, #tpu.memory_space<vmem>>, %arg5: memref<1x256xf32, #tpu.memory_space<vmem>>, %arg6: memref<16x256xf32, #tpu.memory_space<vmem>>) attributes {dimension_semantics = [#tpu.dimension_semantics<parallel>], iteration_bounds = array<i64: 2>, scalar_prefetch = 0 : i64, scratch_operands = 0 : i64, tpu.core_type = #tpu.core_type<tc>, window_params = [{transform_indices = @transform_0, window_bounds = array<i64: 16, 512>}, {pipeline_mode = #tpu.pipeline_mode<synchronous>, transform_indices = @transform_1, window_bounds = array<i64: 512, 384>}, {pipeline_mode = #tpu.pipeline_mode<synchronous>, transform_indices = @transform_2, window_bounds = array<i64: 1, 384>}, {pipeline_mode = #tpu.pipeline_mode<synchronous>, transform_indices = @transform_3, window_bounds = array<i64: 128, 256>}, {pipeline_mode = #tpu.pipeline_mode<synchronous>, transform_indices = @transform_4, window_bounds = array<i64: 1, 256>}, {transform_indices = @transform_5, window_bounds = array<i64: 16, 256>}]} {
    %c0 = arith.constant 0 : index
    %c0_0 = arith.constant 0 : index
    %0 = vector.load %arg1[%c0, %c0_0] : memref<16x512xf32, #tpu.memory_space<vmem>>, vector<16x512xf32>
    %c0_1 = arith.constant 0 : index
    %c0_2 = arith.constant 0 : index
    %1 = vector.load %arg2[%c0_1, %c0_2] : memref<512x384xf32, #tpu.memory_space<vmem>>, vector<512x384xf32>
    %cst = arith.constant dense<0.000000e+00> : vector<16x384xf32>
    %2 = tpu.matmul %0, %1, %cst {dimension_numbers = #tpu.dot_dimension_numbers<[1], [0], [0], [1], [0, 0, 1, 1], [], []>} : vector<16x512xf32>, vector<512x384xf32>, vector<16x384xf32> -> vector<16x384xf32>
    %c0_3 = arith.constant 0 : index
    %c0_4 = arith.constant 0 : index
    %3 = vector.load %arg3[%c0_3, %c0_4] : memref<1x384xf32, #tpu.memory_space<vmem>>, vector<1x384xf32>
    %4 = vector.broadcast %3 : vector<1x384xf32> to vector<16x384xf32>
    %5 = arith.addf %2, %4 : vector<16x384xf32>
    %6 = vector.extract_strided_slice %5 {offsets = [0, 0], sizes = [16, 128], strides = [1, 1]} : vector<16x384xf32> to vector<16x128xf32>
    %cst_5 = arith.constant 0.000000e+00 : f32
    %7 = vector.broadcast %cst_5 : f32 to vector<16x128xf32>
    %8 = arith.maximumf %6, %7 : vector<16x128xf32>
    %9 = vector.extract_strided_slice %5 {offsets = [0, 128], sizes = [16, 256], strides = [1, 1]} : vector<16x384xf32> to vector<16x256xf32>
    %c0_6 = arith.constant 0 : index
    %c0_7 = arith.constant 0 : index
    %10 = vector.load %arg4[%c0_6, %c0_7] : memref<128x256xf32, #tpu.memory_space<vmem>>, vector<128x256xf32>
    %cst_8 = arith.constant dense<0.000000e+00> : vector<16x256xf32>
    %11 = tpu.matmul %8, %10, %cst_8 {dimension_numbers = #tpu.dot_dimension_numbers<[1], [0], [0], [1], [0, 0, 1, 1], [], []>} : vector<16x128xf32>, vector<128x256xf32>, vector<16x256xf32> -> vector<16x256xf32>
    %c0_9 = arith.constant 0 : index
    %c0_10 = arith.constant 0 : index
    %12 = vector.load %arg5[%c0_9, %c0_10] : memref<1x256xf32, #tpu.memory_space<vmem>>, vector<1x256xf32>
    %13 = vector.broadcast %12 : vector<1x256xf32> to vector<16x256xf32>
    %14 = arith.addf %11, %13 : vector<16x256xf32>
    %15 = arith.addf %14, %9 : vector<16x256xf32>
    %cst_11 = arith.constant 0.000000e+00 : f32
    %16 = vector.broadcast %cst_11 : f32 to vector<16x256xf32>
    %17 = arith.maximumf %15, %16 : vector<16x256xf32>
    %cst_12 = arith.constant 0.000000e+00 : f32
    %18 = vector.broadcast %cst_12 : f32 to vector<16x256xf32>
    %19 = arith.maximumf %17, %18 : vector<16x256xf32>
    %c0_13 = arith.constant 0 : index
    %c0_14 = arith.constant 0 : index
    %20 = vector.load %arg6[%c0_13, %c0_14] : memref<16x256xf32, #tpu.memory_space<vmem>>, vector<16x256xf32>
    tpu.vector_store %arg6[%c0_13, %c0_14], %19 {strides = array<i32>} : memref<16x256xf32, #tpu.memory_space<vmem>>, vector<16x256xf32>,
    return
  }
  func.func @transform_0(%arg0: i32) -> (i32, i32) {
    %c0_i32 = arith.constant 0 : i32
    %c0_i32_0 = arith.constant 0 : i32
    return %arg0, %c0_i32 : i32, i32
  }
  func.func @transform_1(%arg0: i32) -> (i32, i32) {
    %c0_i32 = arith.constant 0 : i32
    %c0_i32_0 = arith.constant 0 : i32
    %c0_i32_1 = arith.constant 0 : i32
    return %c0_i32, %c0_i32_0 : i32, i32
  }
  func.func @transform_2(%arg0: i32) -> (i32, i32) {
    %c0_i32 = arith.constant 0 : i32
    %c0_i32_0 = arith.constant 0 : i32
    %c0_i32_1 = arith.constant 0 : i32
    return %c0_i32, %c0_i32_0 : i32, i32
  }
  func.func @transform_3(%arg0: i32) -> (i32, i32) {
    %c0_i32 = arith.constant 0 : i32
    %c0_i32_0 = arith.constant 0 : i32
    %c0_i32_1 = arith.constant 0 : i32
    return %c0_i32, %c0_i32_0 : i32, i32
  }
  func.func @transform_4(%arg0: i32) -> (i32, i32) {
    %c0_i32 = arith.constant 0 : i32
    %c0_i32_0 = arith.constant 0 : i32
    %c0_i32_1 = arith.constant 0 : i32
    return %c0_i32, %c0_i32_0 : i32, i32
  }
  func.func @transform_5(%arg0: i32) -> (i32, i32) {
    %c0_i32 = arith.constant 0 : i32
    %c0_i32_0 = arith.constant 0 : i32
    return %arg0, %c0_i32 : i32, i32
  }
}

module attributes {stable_mosaic.version = 11 : i64} {
  func.func @_linear_body(%arg0: i32, %arg1: memref<16x256xf32, #tpu.memory_space<vmem>>, %arg2: memref<256x512xf32, #tpu.memory_space<vmem>>, %arg3: memref<1x512xf32, #tpu.memory_space<vmem>>, %arg4: memref<16x512xf32, #tpu.memory_space<vmem>>) attributes {dimension_semantics = [#tpu.dimension_semantics<parallel>], iteration_bounds = array<i64: 2>, scalar_prefetch = 0 : i64, scratch_operands = 0 : i64, tpu.core_type = #tpu.core_type<tc>, window_params = [{transform_indices = @transform_0, window_bounds = array<i64: 16, 256>}, {pipeline_mode = #tpu.pipeline_mode<synchronous>, transform_indices = @transform_1, window_bounds = array<i64: 256, 512>}, {pipeline_mode = #tpu.pipeline_mode<synchronous>, transform_indices = @transform_2, window_bounds = array<i64: 1, 512>}, {transform_indices = @transform_3, window_bounds = array<i64: 16, 512>}]} {
    %c0 = arith.constant 0 : index
    %c0_0 = arith.constant 0 : index
    %0 = vector.load %arg1[%c0, %c0_0] : memref<16x256xf32, #tpu.memory_space<vmem>>, vector<16x256xf32>
    %c0_1 = arith.constant 0 : index
    %c0_2 = arith.constant 0 : index
    %1 = vector.load %arg2[%c0_1, %c0_2] : memref<256x512xf32, #tpu.memory_space<vmem>>, vector<256x512xf32>
    %cst = arith.constant dense<0.000000e+00> : vector<16x512xf32>
    %2 = tpu.matmul %0, %1, %cst {dimension_numbers = #tpu.dot_dimension_numbers<[1], [0], [0], [1], [0, 0, 1, 1], [], []>} : vector<16x256xf32>, vector<256x512xf32>, vector<16x512xf32> -> vector<16x512xf32>
    %c0_3 = arith.constant 0 : index
    %c0_4 = arith.constant 0 : index
    %3 = vector.load %arg3[%c0_3, %c0_4] : memref<1x512xf32, #tpu.memory_space<vmem>>, vector<1x512xf32>
    %4 = vector.broadcast %3 : vector<1x512xf32> to vector<16x512xf32>
    %5 = arith.addf %2, %4 : vector<16x512xf32>
    %cst_5 = arith.constant 0.000000e+00 : f32
    %6 = vector.broadcast %cst_5 : f32 to vector<16x512xf32>
    %7 = arith.maximumf %5, %6 : vector<16x512xf32>
    %c0_6 = arith.constant 0 : index
    %c0_7 = arith.constant 0 : index
    %8 = vector.load %arg4[%c0_6, %c0_7] : memref<16x512xf32, #tpu.memory_space<vmem>>, vector<16x512xf32>
    tpu.vector_store %arg4[%c0_6, %c0_7], %7 {strides = array<i32>} : memref<16x512xf32, #tpu.memory_space<vmem>>, vector<16x512xf32>,
    return
  }
  func.func @transform_0(%arg0: i32) -> (i32, i32) {
    %c0_i32 = arith.constant 0 : i32
    %c0_i32_0 = arith.constant 0 : i32
    return %arg0, %c0_i32 : i32, i32
  }
  func.func @transform_1(%arg0: i32) -> (i32, i32) {
    %c0_i32 = arith.constant 0 : i32
    %c0_i32_0 = arith.constant 0 : i32
    %c0_i32_1 = arith.constant 0 : i32
    return %c0_i32, %c0_i32_0 : i32, i32
  }
  func.func @transform_2(%arg0: i32) -> (i32, i32) {
    %c0_i32 = arith.constant 0 : i32
    %c0_i32_0 = arith.constant 0 : i32
    %c0_i32_1 = arith.constant 0 : i32
    return %c0_i32, %c0_i32_0 : i32, i32
  }
  func.func @transform_3(%arg0: i32) -> (i32, i32) {
    %c0_i32 = arith.constant 0 : i32
    %c0_i32_0 = arith.constant 0 : i32
    return %arg0, %c0_i32 : i32, i32
  }
}

module attributes {stable_mosaic.version = 11 : i64} {
  func.func @_linear_body(%arg0: i32, %arg1: memref<16x512xf32, #tpu.memory_space<vmem>>, %arg2: memref<512x128xf32, #tpu.memory_space<vmem>>, %arg3: memref<1x128xf32, #tpu.memory_space<vmem>>, %arg4: memref<16x128xf32, #tpu.memory_space<vmem>>) attributes {dimension_semantics = [#tpu.dimension_semantics<parallel>], iteration_bounds = array<i64: 2>, scalar_prefetch = 0 : i64, scratch_operands = 0 : i64, tpu.core_type = #tpu.core_type<tc>, window_params = [{transform_indices = @transform_0, window_bounds = array<i64: 16, 512>}, {pipeline_mode = #tpu.pipeline_mode<synchronous>, transform_indices = @transform_1, window_bounds = array<i64: 512, 128>}, {pipeline_mode = #tpu.pipeline_mode<synchronous>, transform_indices = @transform_2, window_bounds = array<i64: 1, 128>}, {transform_indices = @transform_3, window_bounds = array<i64: 16, 128>}]} {
    %c0 = arith.constant 0 : index
    %c0_0 = arith.constant 0 : index
    %0 = vector.load %arg1[%c0, %c0_0] : memref<16x512xf32, #tpu.memory_space<vmem>>, vector<16x512xf32>
    %c0_1 = arith.constant 0 : index
    %c0_2 = arith.constant 0 : index
    %1 = vector.load %arg2[%c0_1, %c0_2] : memref<512x128xf32, #tpu.memory_space<vmem>>, vector<512x128xf32>
    %cst = arith.constant dense<0.000000e+00> : vector<16x128xf32>
    %2 = tpu.matmul %0, %1, %cst {dimension_numbers = #tpu.dot_dimension_numbers<[1], [0], [0], [1], [0, 0, 1, 1], [], []>} : vector<16x512xf32>, vector<512x128xf32>, vector<16x128xf32> -> vector<16x128xf32>
    %c0_3 = arith.constant 0 : index
    %c0_4 = arith.constant 0 : index
    %3 = vector.load %arg3[%c0_3, %c0_4] : memref<1x128xf32, #tpu.memory_space<vmem>>, vector<1x128xf32>
    %4 = vector.broadcast %3 : vector<1x128xf32> to vector<16x128xf32>
    %5 = arith.addf %2, %4 : vector<16x128xf32>
    %cst_5 = arith.constant 0.000000e+00 : f32
    %6 = vector.broadcast %cst_5 : f32 to vector<16x128xf32>
    %7 = arith.maximumf %5, %6 : vector<16x128xf32>
    %c0_6 = arith.constant 0 : index
    %c0_7 = arith.constant 0 : index
    %8 = vector.load %arg4[%c0_6, %c0_7] : memref<16x128xf32, #tpu.memory_space<vmem>>, vector<16x128xf32>
    tpu.vector_store %arg4[%c0_6, %c0_7], %7 {strides = array<i32>} : memref<16x128xf32, #tpu.memory_space<vmem>>, vector<16x128xf32>,
    return
  }
  func.func @transform_0(%arg0: i32) -> (i32, i32) {
    %c0_i32 = arith.constant 0 : i32
    %c0_i32_0 = arith.constant 0 : i32
    return %arg0, %c0_i32 : i32, i32
  }
  func.func @transform_1(%arg0: i32) -> (i32, i32) {
    %c0_i32 = arith.constant 0 : i32
    %c0_i32_0 = arith.constant 0 : i32
    %c0_i32_1 = arith.constant 0 : i32
    return %c0_i32, %c0_i32_0 : i32, i32
  }
  func.func @transform_2(%arg0: i32) -> (i32, i32) {
    %c0_i32 = arith.constant 0 : i32
    %c0_i32_0 = arith.constant 0 : i32
    %c0_i32_1 = arith.constant 0 : i32
    return %c0_i32, %c0_i32_0 : i32, i32
  }
  func.func @transform_3(%arg0: i32) -> (i32, i32) {
    %c0_i32 = arith.constant 0 : i32
    %c0_i32_0 = arith.constant 0 : i32
    return %arg0, %c0_i32 : i32, i32
  }
}

module attributes {stable_mosaic.version = 11 : i64} {
  func.func @_linear_nk_body(%arg0: i32, %arg1: memref<16x128xf32, #tpu.memory_space<vmem>>, %arg2: memref<128x4xf32, #tpu.memory_space<vmem>>, %arg3: memref<1x4xf32, #tpu.memory_space<vmem>>, %arg4: memref<16x4xf32, #tpu.memory_space<vmem>>, %arg5: memref<16x4xf32, #tpu.memory_space<vmem>>) attributes {dimension_semantics = [#tpu.dimension_semantics<parallel>], iteration_bounds = array<i64: 2>, scalar_prefetch = 0 : i64, scratch_operands = 0 : i64, tpu.core_type = #tpu.core_type<tc>, window_params = [{transform_indices = @transform_0, window_bounds = array<i64: 16, 128>}, {pipeline_mode = #tpu.pipeline_mode<synchronous>, transform_indices = @transform_1, window_bounds = array<i64: 128, 4>}, {pipeline_mode = #tpu.pipeline_mode<synchronous>, transform_indices = @transform_2, window_bounds = array<i64: 1, 4>}, {transform_indices = @transform_3, window_bounds = array<i64: 16, 4>}, {transform_indices = @transform_4, window_bounds = array<i64: 16, 4>}]} {
    %c0 = arith.constant 0 : index
    %c0_0 = arith.constant 0 : index
    %0 = vector.load %arg1[%c0, %c0_0] : memref<16x128xf32, #tpu.memory_space<vmem>>, vector<16x128xf32>
    %c0_1 = arith.constant 0 : index
    %c0_2 = arith.constant 0 : index
    %1 = vector.load %arg2[%c0_1, %c0_2] : memref<128x4xf32, #tpu.memory_space<vmem>>, vector<128x4xf32>
    %cst = arith.constant dense<0.000000e+00> : vector<16x4xf32>
    %2 = tpu.matmul %0, %1, %cst {dimension_numbers = #tpu.dot_dimension_numbers<[1], [0], [0], [1], [0, 0, 1, 1], [], []>} : vector<16x128xf32>, vector<128x4xf32>, vector<16x4xf32> -> vector<16x4xf32>
    %c0_3 = arith.constant 0 : index
    %c0_4 = arith.constant 0 : index
    %3 = vector.load %arg3[%c0_3, %c0_4] : memref<1x4xf32, #tpu.memory_space<vmem>>, vector<1x4xf32>
    %4 = vector.broadcast %3 : vector<1x4xf32> to vector<16x4xf32>
    %5 = arith.addf %2, %4 : vector<16x4xf32>
    %6 = math.tanh %5 : vector<16x4xf32>
    %cst_5 = arith.constant 1.000000e+00 : f32
    %7 = vector.broadcast %cst_5 : f32 to vector<16x4xf32>
    %8 = arith.addf %6, %7 : vector<16x4xf32>
    %cst_6 = arith.constant 1.500000e+00 : f32
    %9 = vector.broadcast %cst_6 : f32 to vector<16x4xf32>
    %10 = arith.mulf %8, %9 : vector<16x4xf32>
    %cst_7 = arith.constant 1.000000e+00 : f32
    %11 = vector.broadcast %cst_7 : f32 to vector<16x4xf32>
    %12 = arith.addf %10, %11 : vector<16x4xf32>
    %c0_8 = arith.constant 0 : index
    %c0_9 = arith.constant 0 : index
    %13 = vector.load %arg4[%c0_8, %c0_9] : memref<16x4xf32, #tpu.memory_space<vmem>>, vector<16x4xf32>
    tpu.vector_store %arg4[%c0_8, %c0_9], %12 {strides = array<i32>} : memref<16x4xf32, #tpu.memory_space<vmem>>, vector<16x4xf32>,
    %cst_10 = arith.constant 2.500000e-01 : f32
    %14 = vector.broadcast %cst_10 : f32 to vector<16x4xf32>
    %15 = arith.mulf %8, %14 : vector<16x4xf32>
    %c0_11 = arith.constant 0 : index
    %c0_12 = arith.constant 0 : index
    %16 = vector.load %arg5[%c0_11, %c0_12] : memref<16x4xf32, #tpu.memory_space<vmem>>, vector<16x4xf32>
    tpu.vector_store %arg5[%c0_11, %c0_12], %15 {strides = array<i32>} : memref<16x4xf32, #tpu.memory_space<vmem>>, vector<16x4xf32>,
    return
  }
  func.func @transform_0(%arg0: i32) -> (i32, i32) {
    %c0_i32 = arith.constant 0 : i32
    %c0_i32_0 = arith.constant 0 : i32
    return %arg0, %c0_i32 : i32, i32
  }
  func.func @transform_1(%arg0: i32) -> (i32, i32) {
    %c0_i32 = arith.constant 0 : i32
    %c0_i32_0 = arith.constant 0 : i32
    %c0_i32_1 = arith.constant 0 : i32
    return %c0_i32, %c0_i32_0 : i32, i32
  }
  func.func @transform_2(%arg0: i32) -> (i32, i32) {
    %c0_i32 = arith.constant 0 : i32
    %c0_i32_0 = arith.constant 0 : i32
    %c0_i32_1 = arith.constant 0 : i32
    return %c0_i32, %c0_i32_0 : i32, i32
  }
  func.func @transform_3(%arg0: i32) -> (i32, i32) {
    %c0_i32 = arith.constant 0 : i32
    %c0_i32_0 = arith.constant 0 : i32
    return %arg0, %c0_i32 : i32, i32
  }
  func.func @transform_4(%arg0: i32) -> (i32, i32) {
    %c0_i32 = arith.constant 0 : i32
    %c0_i32_0 = arith.constant 0 : i32
    return %arg0, %c0_i32 : i32, i32
  }
}

</mosaic_0001>

<llo_original>
// kernel: generator1_forward.14
$region0: #{generator1_forward.14}
  #allocation0 [shape = 'u32[]', space=smem, size = 0x4, offset = 0x4, fixed_abs, tag = 'smem constant byte address 0x4 - core index']
  #allocation1 [shape = 'u32[144,128]{1,0:T(1,128)}', space=vmem, size = 0x12000, scoped, tag = 'internal scratch']
  %s0 = inlined_call_operand.vmem [shape: f32[32,16], index: 0, kind: input, shape index: {}]
  %s1 = inlined_call_operand.vmem [shape: f32[16,384], index: 1, kind: input, shape index: {}]
  %s2 = inlined_call_operand.vmem [shape: f32[1,384], index: 2, kind: input, shape index: {}]
  %s3 = inlined_call_operand.vmem [shape: f32[256,128], index: 3, kind: input, shape index: {}]
  %s4 = inlined_call_operand.vmem [shape: f32[1,128], index: 4, kind: input, shape index: {}]
  %s5 = inlined_call_operand.vmem [shape: f32[32,128], index: 5, kind: output, shape index: {}]
  %s6 = sld [smem:[#allocation0]]
  $region53: #{generator1_forward.14} parent=0
    _
  %s8 = ssub.s32 1, %s6
  %s9 = scalar_select 0, %s8, %s6
  loop: start=0, step=1, limit=4
  $region2: #{generator1_forward.14} parent=0 // loop_pre_header
    _
  $region3: #{generator1_forward.14} parent=0 // loop_header
    %s11 = sphi 0, %s15
    %p12 = scmp.ge.s32.totalorder %s11, 4
    %s21 = sphi 0, %s23
    %s24 = sphi 0, %s21
    %s25 = sphi 0, %s24
    %s41 = sphi 0, %s25
    %s45 = sphi 0, %s45
    %s47 = sphi 0, %s45
    %s48 = sphi 0, %s47
    %s62 = sphi 0, %s48
    %s66 = sphi 0, %s66
    %s68 = sphi 0, %s66
    %s69 = sphi 0, %s68
    %s83 = sphi 0, %s69
    %s87 = sphi 0, %s87
    %s89 = sphi 0, %s87
    %s90 = sphi 0, %s89
    %s104 = sphi 0, %s90
    %s108 = sphi 0, %s108
    %s110 = sphi 0, %s108
    %s111 = sphi 0, %s110
    %s125 = sphi 0, %s111
    %s131 = sphi 0, %s133
    %s134 = sphi 0, %s131
    %s135 = sphi 0, %s134
    %s151 = sphi 0, %s135
  $region4: #{generator1_forward.14} parent=0 // loop_header_branch
    %14 = sbr.rel (%p12) target = $region8
  $region5: #{generator1_forward.14} parent=0 // loop_body
    %s16 = ssub.s32 %s11, 1
    %s17 = ssub.s32 %s11, 2
    %s18 = sadd.s32 %s11, 1
    %s19 = ssub.s32 %s11, %s18
    %p20 = scmp.eq.s32.totalorder %s19, 0
    %s22 = sadd.s32 %s21, 1
    %s23 = scalar_select %p20, %s21, %s22
    %p26 = pneg %p20
    %p27 = scmp.eq.s32.totalorder %s11, 1
    %p28 = por %p26, %p27
    %p29 = scmp.ne.s32.totalorder %s21, %s24
    %p30 = scmp.eq.s32.totalorder %s11, 0
    %p31 = por %p29, %p30
    %p32 = scmp.ne.s32.totalorder %s21, %s24
    %p33 = scmp.eq.s32.totalorder %s16, 1
    %p34 = por %p32, %p33
    %p35 = scmp.ne.s32.totalorder %s24, %s25
    %p36 = scmp.eq.s32.totalorder %s16, 0
    %p37 = por %p35, %p36
    %p38 = scmp.ne.s32.totalorder %s24, %s25
    %p39 = scmp.eq.s32.totalorder %s17, 1
    %p40 = por %p38, %p39
    %p42 = scmp.ne.s32.totalorder %s25, %s41
    %p43 = scmp.eq.s32.totalorder %s17, 0
    %p44 = por %p42, %p43
    %s46 = sadd.s32 %s45, 1
    %p49 = scmp.eq.s32.totalorder %s11, 1
    %p50 = scmp.ne.s32.totalorder %s45, %s47
    %p51 = scmp.eq.s32.totalorder %s11, 0
    %p52 = por %p50, %p51
    %p53 = scmp.ne.s32.totalorder %s45, %s47
    %p54 = scmp.eq.s32.totalorder %s16, 1
    %p55 = por %p53, %p54
    %p56 = scmp.ne.s32.totalorder %s47, %s48
    %p57 = scmp.eq.s32.totalorder %s16, 0
    %p58 = por %p56, %p57
    %p59 = scmp.ne.s32.totalorder %s47, %s48
    %p60 = scmp.eq.s32.totalorder %s17, 1
    %p61 = por %p59, %p60
    %p63 = scmp.ne.s32.totalorder %s48, %s62
    %p64 = scmp.eq.s32.totalorder %s17, 0
    %p65 = por %p63, %p64
    %s67 = sadd.s32 %s66, 1
    %p70 = scmp.eq.s32.totalorder %s11, 1
    %p71 = scmp.ne.s32.totalorder %s66, %s68
    %p72 = scmp.eq.s32.totalorder %s11, 0
    %p73 = por %p71, %p72
    %p74 = scmp.ne.s32.totalorder %s66, %s68
    %p75 = scmp.eq.s32.totalorder %s16, 1
    %p76 = por %p74, %p75
    %p77 = scmp.ne.s32.totalorder %s68, %s69
    %p78 = scmp.eq.s32.totalorder %s16, 0
    %p79 = por %p77, %p78
    %p80 = scmp.ne.s32.totalorder %s68, %s69
    %p81 = scmp.eq.s32.totalorder %s17, 1
    %p82 = por %p80, %p81
    %p84 = scmp.ne.s32.totalorder %s69, %s83
    %p85 = scmp.eq.s32.totalorder %s17, 0
    %p86 = por %p84, %p85
    %s88 = sadd.s32 %s87, 1
    %p91 = scmp.eq.s32.totalorder %s11, 1
    %p92 = scmp.ne.s32.totalorder %s87, %s89
    %p93 = scmp.eq.s32.totalorder %s11, 0
    %p94 = por %p92, %p93
    %p95 = scmp.ne.s32.totalorder %s87, %s89
    %p96 = scmp.eq.s32.totalorder %s16, 1
    %p97 = por %p95, %p96
    %p98 = scmp.ne.s32.totalorder %s89, %s90
    %p99 = scmp.eq.s32.totalorder %s16, 0
    %p100 = por %p98, %p99
    %p101 = scmp.ne.s32.totalorder %s89, %s90
    %p102 = scmp.eq.s32.totalorder %s17, 1
    %p103 = por %p101, %p102
    %p105 = scmp.ne.s32.totalorder %s90, %s104
    %p106 = scmp.eq.s32.totalorder %s17, 0
    %p107 = por %p105, %p106
    %s109 = sadd.s32 %s108, 1
    %p112 = scmp.eq.s32.totalorder %s11, 1
    %p113 = scmp.ne.s32.totalorder %s108, %s110
    %p114 = scmp.eq.s32.totalorder %s11, 0
    %p115 = por %p113, %p114
    %p116 = scmp.ne.s32.totalorder %s108, %s110
    %p117 = scmp.eq.s32.totalorder %s16, 1
    %p118 = por %p116, %p117
    %p119 = scmp.ne.s32.totalorder %s110, %s111
    %p120 = scmp.eq.s32.totalorder %s16, 0
    %p121 = por %p119, %p120
    %p122 = scmp.ne.s32.totalorder %s110, %s111
    %p123 = scmp.eq.s32.totalorder %s17, 1
    %p124 = por %p122, %p123
    %p126 = scmp.ne.s32.totalorder %s111, %s125
    %p127 = scmp.eq.s32.totalorder %s17, 0
    %p128 = por %p126, %p127
    %s129 = ssub.s32 %s11, %s18
    %p130 = scmp.eq.s32.totalorder %s129, 0
    %s132 = sadd.s32 %s131, 1
    %s133 = scalar_select %p130, %s131, %s132
    %p136 = pneg %p130
    %p137 = scmp.eq.s32.totalorder %s11, 1
    %p138 = por %p136, %p137
    %p139 = scmp.ne.s32.totalorder %s131, %s134
    %p140 = scmp.eq.s32.totalorder %s11, 0
    %p141 = por %p139, %p140
    %p142 = scmp.ne.s32.totalorder %s131, %s134
    %p143 = scmp.eq.s32.totalorder %s16, 1
    %p144 = por %p142, %p143
    %p145 = scmp.ne.s32.totalorder %s134, %s135
    %p146 = scmp.eq.s32.totalorder %s16, 0
    %p147 = por %p145, %p146
    %p148 = scmp.ne.s32.totalorder %s134, %s135
    %p149 = scmp.eq.s32.totalorder %s17, 1
    %p150 = por %p148, %p149
    %p152 = scmp.ne.s32.totalorder %s135, %s151
    %p153 = scmp.eq.s32.totalorder %s17, 0
    %p154 = por %p152, %p153
    %p155 = scmp.le.s32.totalorder 1, %s11
    %p156 = scmp.lt.s32.totalorder %s11, 3
    %p157 = pnand %p155, %p156
    %p158 = pneg %p157
    // Predicated region
    $region9: #{generator1_forward.14} parent=5 // pred_check
      _
    $region10: #{generator1_forward.14} parent=5 // pred_check_branch
      %160 = sbr.rel (%p157) target = $region12
    $region11: #{generator1_forward.14} parent=5 // pred_region
      %s161 = ssub.s32 %s11, 1
      // Predicated region
      $region13: #{generator1_forward.14} parent=11 // pred_check
        %p162 = pneg %p58
      $region14: #{generator1_forward.14} parent=11 // pred_check_branch
        %164 = sbr.rel (%p162) target = $region16
      $region15: #{generator1_forward.14} parent=11 // pred_region
        _
      $region16: #{generator1_forward.14} parent=11 // pred_fallthru
        _
      // Predicated region
      $region17: #{generator1_forward.14} parent=11 // pred_check
        %p165 = pneg %p79
      $region18: #{generator1_forward.14} parent=11 // pred_check_branch
        %167 = sbr.rel (%p165) target = $region20
      $region19: #{generator1_forward.14} parent=11 // pred_region
        _
      $region20: #{generator1_forward.14} parent=11 // pred_fallthru
        _
      // Predicated region
      $region21: #{generator1_forward.14} parent=11 // pred_check
        %p168 = pneg %p100
      $region22: #{generator1_forward.14} parent=11 // pred_check_branch
        %170 = sbr.rel (%p168) target = $region24
      $region23: #{generator1_forward.14} parent=11 // pred_region
        _
      $region24: #{generator1_forward.14} parent=11 // pred_fallthru
        _
      // Predicated region
      $region25: #{generator1_forward.14} parent=11 // pred_check
        %p171 = pneg %p121
      $region26: #{generator1_forward.14} parent=11 // pred_check_branch
        %173 = sbr.rel (%p171) target = $region28
      $region27: #{generator1_forward.14} parent=11 // pred_region
        _
      $region28: #{generator1_forward.14} parent=11 // pred_fallthru
        _
    $region12: #{generator1_forward.14} parent=5 // pred_fallthru
      _
    %p174 = scmp.lt.s32.totalorder %s11, 2
    // Predicated region
    $region29: #{generator1_forward.14} parent=5 // pred_check
      %p175 = pneg %p174
    $region30: #{generator1_forward.14} parent=5 // pred_check_branch
      %177 = sbr.rel (%p175) target = $region32
    $region31: #{generator1_forward.14} parent=5 // pred_region
      // Predicated region
      $region33: #{generator1_forward.14} parent=31 // pred_check
        %p178 = pneg %p31
      $region34: #{generator1_forward.14} parent=31 // pred_check_branch
        %180 = sbr.rel (%p178) target = $region36
      $region35: #{generator1_forward.14} parent=31 // pred_region
        %s181 = smul.u32 2, %s11
        %p182 = scmp.lt.s32.totalorder %s181, 3
        %s183 = scalar_select %p182, %s181, 3
        %s184 = smul.addr %s183, 8
        %s185 = scalar_lea.vmem %s0, %s184
        %s186 = smul.u32 2, %s11
      $region36: #{generator1_forward.14} parent=31 // pred_fallthru
        _
    $region32: #{generator1_forward.14} parent=5 // pred_fallthru
      _
    %p187 = scmp.le.s32.totalorder 1, %s11
    %p188 = scmp.lt.s32.totalorder %s11, 3
    %p189 = pnand %p187, %p188
    %p190 = pneg %p189
    // Predicated region
    $region37: #{generator1_forward.14} parent=5 // pred_check
      _
    $region38: #{generator1_forward.14} parent=5 // pred_check_branch
      %192 = sbr.rel (%p189) target = $region40
    $region39: #{generator1_forward.14} parent=5 // pred_region
      %s193 = ssub.s32 %s11, 1
      %s194 = smul.u32 2, %s16
      %p195 = scmp.lt.s32.totalorder %s194, 3
      %s196 = scalar_select %p195, %s194, 3
      %s197 = smul.addr %s196, 8
      %s198 = scalar_lea.vmem %s0, %s197
      %p199 = pneg %p37
      %p200 = pneg %p34
      %p201 = pneg %p58
      %p202 = pneg %p55
      %p203 = pneg %p79
      %p204 = pneg %p76
      %p205 = pneg %p100
      %p206 = pneg %p97
      %p207 = pneg %p121
      %p208 = pneg %p118
      %p209 = pneg %p147
      %p210 = pneg %p144
      %s211 = smul.u32 2, %s16
      %p212 = scmp.lt.s32.totalorder %s211, 3
      %s213 = scalar_select %p212, %s211, 3
      %s214 = smul.addr %s213, 8
      %s215 = scalar_lea.vmem %s5, %s214
      %s216 = smul.u32 2, %s16
      %p217 = scmp.lt.s32.totalorder %s216, 3
      %s218 = scalar_select %p217, %s216, 3
      %s219 = smul.addr %s218, 8
      %s220 = scalar_lea.vmem %s0, %s219
      %s221 = smul.u32 2, %s16
      %s222 = smul.u32 2, %s16
      %p223 = scmp.lt.s32.totalorder %s222, 3
      %s224 = scalar_select %p223, %s222, 3
      %s225 = smul.addr %s224, 8
      %s226 = scalar_lea.vmem %s5, %s225
      %s227 = smul.u32 2, %s16
      %v228 = vld [vmem:[%s220] sm:$0xff]
      %v229 = vld [vmem:[%s220 + $0x8] sm:$0xff]
      %v230 = vld [vmem:[%s1] sm:$0xff]
      %v231 = vld [vmem:[%s1 + $0x8] sm:$0xff]
      %v232 = vld [vmem:[%s1 + $0x10] sm:$0xff]
      %v233 = vld [vmem:[%s1 + $0x18] sm:$0xff]
      %v234 = vld [vmem:[%s1 + $0x20] sm:$0xff]
      %v235 = vld [vmem:[%s1 + $0x28] sm:$0xff]
      %v236 = vld [vmem:[%s2] sm:$0x7]
      %v238 = vlaneseq
      %v239 = vshrl.u32 %v238, 7
      %v240 = vsub.s32 0, %v239
      %v241 = vrot.slane %v236, %v240
      %v242 = vlaneseq
      %v243 = vshrl.u32 %v242, 7
      %v244 = vsub.s32 1, %v243
      %v245 = vrot.slane %v236, %v244
      %v246 = vlaneseq
      %v247 = vshrl.u32 %v246, 7
      %v248 = vsub.s32 2, %v247
      %v249 = vrot.slane %v236, %v248
      %vm253 = vcmask 130048
      %v255 = vsel %vm253, %v228, 0
      %v258 = vsel %vm253, %v229, 0
      %260 = vmatprep.subr.mxu0 %v231
      %261 = vmatpush1.msra.mxu0 %v230
      %262 = vmatprep.subr.mxu0 %v234
      %263 = vmatpush1.msra.mxu0 %v233
      %264 = vmatprep.subr.mxu0 0.0
      %265 = vmatpush1.msra.mxu0 0.0
      %266 = vmatprep.subr.mxu0 0.0
      %267 = vmatpush1.msra.mxu0 0.0
      %268 = vmatprep.subr.mxu0 0.0
      %269 = vmatpush1.msra.mxu0 0.0
      %270 = vmatprep.subr.mxu0 0.0
      %271 = vmatpush1.msra.mxu0 0.0
      %272 = vmatprep.subr.mxu0 0.0
      %273 = vmatpush1.msra.mxu0 0.0
      %274 = vmatprep.subr.mxu0 0.0
      %275 = vmatpush1.msra.mxu0 0.0
      %276 = vmatprep.subr.mxu0 0.0
      %277 = vmatpush1.msra.mxu0 0.0
      %278 = vmatprep.subr.mxu0 0.0
      %279 = vmatpush1.msra.mxu0 0.0
      %280 = vmatprep.subr.mxu0 0.0
      %281 = vmatpush1.msra.mxu0 0.0
      %282 = vmatprep.subr.mxu0 0.0
      %283 = vmatpush1.msra.mxu0 0.0
      %284 = vmatprep.subr.mxu0 0.0
      %285 = vmatpush1.msra.mxu0 0.0
      %286 = vmatprep.subr.mxu0 0.0
      %287 = vmatpush1.msra.mxu0 0.0
      %288 = vmatprep.subr.mxu0 0.0
      %289 = vmatpush1.msra.mxu0 0.0
      %290 = vmatprep.subr.mxu0 0.0
      %291 = vmatpush1.msra.mxu0 0.0
      %292 = vmatprep.subr.mxu0 0.0
      %293 = vmatpush1.msra.mxu0 0.0
      %294 = vmatprep.subr.mxu0 0.0
      %295 = vmatpush1.msra.mxu0 0.0
      %296 = vmatprep.subr.mxu0 0.0
      %297 = vmatpush1.msra.mxu0 0.0
      %298 = vmatprep.subr.mxu0 0.0
      %299 = vmatpush1.msra.mxu0 0.0
      %300 = vmatprep.subr.mxu0 0.0
      %301 = vmatpush1.msra.mxu0 0.0
      %302 = vmatprep.subr.mxu0 0.0
      %303 = vmatpush1.msra.mxu0 0.0
      %304 = vmatprep.subr.mxu0 0.0
      %305 = vmatpush1.msra.mxu0 0.0
      %306 = vmatprep.subr.mxu0 0.0
      %307 = vmatpush1.msra.mxu0 0.0
      %308 = vmatprep.subr.mxu0 0.0
      %309 = vmatpush1.msra.mxu0 0.0
      %310 = vmatprep.subr.mxu0 0.0
      %311 = vmatpush1.msra.mxu0 0.0
      %312 = vmatprep.subr.mxu0 0.0
      %313 = vmatpush1.msra.mxu0 0.0
      %314 = vmatprep.subr.mxu0 0.0
      %315 = vmatpush1.msra.mxu0 0.0
      %316 = vmatprep.subr.mxu0 0.0
      %317 = vmatpush1.msra.mxu0 0.0
      %318 = vmatprep.subr.mxu0 0.0
      %319 = vmatpush1.msra.mxu0 0.0
      %320 = vmatprep.subr.mxu0 0.0
      %321 = vmatpush1.msra.mxu0 0.0
      %322 = vmatprep.subr.mxu0 0.0
      %323 = vmatpush1.msra.mxu0 0.0
      %324 = vmatprep.mubr.f32.mxu0 0.0
      %325 = vmatmul.mubr.f32.gmra.mrb[0].mxu0 %v255
      %v326 = vpop.f32.mrb[0].mxu0
      %v327 = vadd.f32 %v241, %v326
      %v328 = vpop.f32.mrb[0].mxu0
      %v329 = vadd.f32 %v245, %v328
      %330 = vmatprep.mubr.f32.mxu0 0.0
      %331 = vmatmul.mubr.f32.gmra.mrb[0].mxu0 %v258
      %v332 = vpop.f32.mrb[0].mxu0
      %v333 = vadd.f32 %v241, %v332
      %v334 = vpop.f32.mrb[0].mxu0
      %v335 = vadd.f32 %v245, %v334
      %336 = vdwg.mxu0
      %337 = vmatprep.subr.mxu0 0.0
      %338 = vmatpush1.msra.mxu0 %v232
      %339 = vmatprep.subr.mxu0 0.0
      %340 = vmatpush1.msra.mxu0 %v235
      %341 = vmatprep.subr.mxu0 0.0
      %342 = vmatpush1.msra.mxu0 0.0
      %343 = vmatprep.subr.mxu0 0.0
      %344 = vmatpush1.msra.mxu0 0.0
      %345 = vmatprep.subr.mxu0 0.0
      %346 = vmatpush1.msra.mxu0 0.0
      %347 = vmatprep.subr.mxu0 0.0
      %348 = vmatpush1.msra.mxu0 0.0
      %349 = vmatprep.subr.mxu0 0.0
      %350 = vmatpush1.msra.mxu0 0.0
      %351 = vmatprep.subr.mxu0 0.0
      %352 = vmatpush1.msra.mxu0 0.0
      %353 = vmatprep.subr.mxu0 0.0
      %354 = vmatpush1.msra.mxu0 0.0
      %355 = vmatprep.subr.mxu0 0.0
      %356 = vmatpush1.msra.mxu0 0.0
      %357 = vmatprep.subr.mxu0 0.0
      %358 = vmatpush1.msra.mxu0 0.0
      %359 = vmatprep.subr.mxu0 0.0
      %360 = vmatpush1.msra.mxu0 0.0
      %361 = vmatprep.subr.mxu0 0.0
      %362 = vmatpush1.msra.mxu0 0.0
      %363 = vmatprep.subr.mxu0 0.0
      %364 = vmatpush1.msra.mxu0 0.0
      %365 = vmatprep.subr.mxu0 0.0
      %366 = vmatpush1.msra.mxu0 0.0
      %367 = vmatprep.subr.mxu0 0.0
      %368 = vmatpush1.msra.mxu0 0.0
      %369 = vmatprep.subr.mxu0 0.0
      %370 = vmatpush1.msra.mxu0 0.0
      %371 = vmatprep.subr.mxu0 0.0
      %372 = vmatpush1.msra.mxu0 0.0
      %373 = vmatprep.subr.mxu0 0.0
      %374 = vmatpush1.msra.mxu0 0.0
      %375 = vmatprep.subr.mxu0 0.0
      %376 = vmatpush1.msra.mxu0 0.0
      %377 = vmatprep.subr.mxu0 0.0
      %378 = vmatpush1.msra.mxu0 0.0
      %379 = vmatprep.subr.mxu0 0.0
      %380 = vmatpush1.msra.mxu0 0.0
      %381 = vmatprep.subr.mxu0 0.0
      %382 = vmatpush1.msra.mxu0 0.0
      %383 = vmatprep.subr.mxu0 0.0
      %384 = vmatpush1.msra.mxu0 0.0
      %385 = vmatprep.subr.mxu0 0.0
      %386 = vmatpush1.msra.mxu0 0.0
      %387 = vmatprep.subr.mxu0 0.0
      %388 = vmatpush1.msra.mxu0 0.0
      %389 = vmatprep.subr.mxu0 0.0
      %390 = vmatpush1.msra.mxu0 0.0
      %391 = vmatprep.subr.mxu0 0.0
      %392 = vmatpush1.msra.mxu0 0.0
      %393 = vmatprep.subr.mxu0 0.0
      %394 = vmatpush1.msra.mxu0 0.0
      %395 = vmatprep.subr.mxu0 0.0
      %396 = vmatpush1.msra.mxu0 0.0
      %397 = vmatprep.subr.mxu0 0.0
      %398 = vmatpush1.msra.mxu0 0.0
      %399 = vmatprep.subr.mxu0 0.0
      %400 = vmatpush1.msra.mxu0 0.0
      %401 = vmatprep.mubr.f32.mxu0 0.0
      %402 = vmatmul.mubr.f32.gmra.mrb[0].mxu0 %v255
      %v403 = vpop.f32.mrb[0].mxu0
      %v404 = vadd.f32 %v249, %v403
      %v405 = vpop.f32.mrb[0].mxu0
      %406 = vmatprep.mubr.f32.mxu0 0.0
      %407 = vmatmul.mubr.f32.gmra.mrb[0].mxu0 %v258
      %v408 = vpop.f32.mrb[0].mxu0
      %v409 = vadd.f32 %v249, %v408
      %v410 = vpop.f32.mrb[0].mxu0
      %411 = vdwg.mxu0
      %v412 = vmax.f32 %v327, 0.0
      %v413 = vmax.f32 %v329, 0.0
      %v414 = vmax.f32 %v333, 0.0
      %v415 = vmax.f32 %v335, 0.0
      %v416 = vld [vmem:[%s3] sm:$0xff]
      %v417 = vld [vmem:[%s3 + $0x8] sm:$0xff]
      %v418 = vld [vmem:[%s3 + $0x10] sm:$0xff]
      %v419 = vld [vmem:[%s3 + $0x18] sm:$0xff]
      %v420 = vld [vmem:[%s3 + $0x20] sm:$0xff]
      %v421 = vld [vmem:[%s3 + $0x28] sm:$0xff]
      %v422 = vld [vmem:[%s3 + $0x30] sm:$0xff]
      %v423 = vld [vmem:[%s3 + $0x38] sm:$0xff]
      %v424 = vld [vmem:[%s3 + $0x40] sm:$0xff]
      %v425 = vld [vmem:[%s3 + $0x48] sm:$0xff]
      %v426 = vld [vmem:[%s3 + $0x50] sm:$0xff]
      %v427 = vld [vmem:[%s3 + $0x58] sm:$0xff]
      %v428 = vld [vmem:[%s3 + $0x60] sm:$0xff]
      %v429 = vld [vmem:[%s3 + $0x68] sm:$0xff]
      %v430 = vld [vmem:[%s3 + $0x70] sm:$0xff]
      %v431 = vld [vmem:[%s3 + $0x78] sm:$0xff]
      %v432 = vld [vmem:[%s3 + $0x80] sm:$0xff]
      %v433 = vld [vmem:[%s3 + $0x88] sm:$0xff]
      %v434 = vld [vmem:[%s3 + $0x90] sm:$0xff]
      %v435 = vld [vmem:[%s3 + $0x98] sm:$0xff]
      %v436 = vld [vmem:[%s3 + $0xa0] sm:$0xff]
      %v437 = vld [vmem:[%s3 + $0xa8] sm:$0xff]
      %v438 = vld [vmem:[%s3 + $0xb0] sm:$0xff]
      %v439 = vld [vmem:[%s3 + $0xb8] sm:$0xff]
      %v440 = vld [vmem:[%s3 + $0xc0] sm:$0xff]
      %v441 = vld [vmem:[%s3 + $0xc8] sm:$0xff]
      %v442 = vld [vmem:[%s3 + $0xd0] sm:$0xff]
      %v443 = vld [vmem:[%s3 + $0xd8] sm:$0xff]
      %v444 = vld [vmem:[%s3 + $0xe0] sm:$0xff]
      %v445 = vld [vmem:[%s3 + $0xe8] sm:$0xff]
      %v446 = vld [vmem:[%s3 + $0xf0] sm:$0xff]
      %v447 = vld [vmem:[%s3 + $0xf8] sm:$0xff]
      %v448 = vld [vmem:[%s4] sm:$0x1]
      %v450 = vlaneseq
      %v451 = vshrl.u32 %v450, 7
      %v452 = vsub.s32 0, %v451
      %v453 = vrot.slane %v448, %v452
      %455 = vmatprep.subr.mxu0 0.0
      %456 = vmatpush1.msra.mxu0 %v416
      %457 = vmatprep.subr.mxu0 0.0
      %458 = vmatpush1.msra.mxu0 %v417
      %459 = vmatprep.subr.mxu0 0.0
      %460 = vmatpush1.msra.mxu0 %v418
      %461 = vmatprep.subr.mxu0 0.0
      %462 = vmatpush1.msra.mxu0 %v419
      %463 = vmatprep.subr.mxu0 0.0
      %464 = vmatpush1.msra.mxu0 %v420
      %465 = vmatprep.subr.mxu0 0.0
      %466 = vmatpush1.msra.mxu0 %v421
      %467 = vmatprep.subr.mxu0 0.0
      %468 = vmatpush1.msra.mxu0 %v422
      %469 = vmatprep.subr.mxu0 0.0
      %470 = vmatpush1.msra.mxu0 %v423
      %471 = vmatprep.subr.mxu0 0.0
      %472 = vmatpush1.msra.mxu0 %v424
      %473 = vmatprep.subr.mxu0 0.0
      %474 = vmatpush1.msra.mxu0 %v425
      %475 = vmatprep.subr.mxu0 0.0
      %476 = vmatpush1.msra.mxu0 %v426
      %477 = vmatprep.subr.mxu0 0.0
      %478 = vmatpush1.msra.mxu0 %v427
      %479 = vmatprep.subr.mxu0 0.0
      %480 = vmatpush1.msra.mxu0 %v428
      %481 = vmatprep.subr.mxu0 0.0
      %482 = vmatpush1.msra.mxu0 %v429
      %483 = vmatprep.subr.mxu0 0.0
      %484 = vmatpush1.msra.mxu0 %v430
      %485 = vmatprep.subr.mxu0 0.0
      %486 = vmatpush1.msra.mxu0 %v431
      %487 = vmatprep.subr.mxu0 0.0
      %488 = vmatpush1.msra.mxu0 %v432
      %489 = vmatprep.subr.mxu0 0.0
      %490 = vmatpush1.msra.mxu0 %v433
      %491 = vmatprep.subr.mxu0 0.0
      %492 = vmatpush1.msra.mxu0 %v434
      %493 = vmatprep.subr.mxu0 0.0
      %494 = vmatpush1.msra.mxu0 %v435
      %495 = vmatprep.subr.mxu0 0.0
      %496 = vmatpush1.msra.mxu0 %v436
      %497 = vmatprep.subr.mxu0 0.0
      %498 = vmatpush1.msra.mxu0 %v437
      %499 = vmatprep.subr.mxu0 0.0
      %500 = vmatpush1.msra.mxu0 %v438
      %501 = vmatprep.subr.mxu0 0.0
      %502 = vmatpush1.msra.mxu0 %v439
      %503 = vmatprep.subr.mxu0 0.0
      %504 = vmatpush1.msra.mxu0 %v440
      %505 = vmatprep.subr.mxu0 0.0
      %506 = vmatpush1.msra.mxu0 %v441
      %507 = vmatprep.subr.mxu0 0.0
      %508 = vmatpush1.msra.mxu0 %v442
      %509 = vmatprep.subr.mxu0 0.0
      %510 = vmatpush1.msra.mxu0 %v443
      %511 = vmatprep.subr.mxu0 0.0
      %512 = vmatpush1.msra.mxu0 %v444
      %513 = vmatprep.subr.mxu0 0.0
      %514 = vmatpush1.msra.mxu0 %v445
      %515 = vmatprep.subr.mxu0 0.0
      %516 = vmatpush1.msra.mxu0 %v446
      %517 = vmatprep.subr.mxu0 0.0
      %518 = vmatpush1.msra.mxu0 %v447
      %519 = vmatprep.mubr.f32.mxu0 %v413
      %520 = vmatmul.mubr.f32.gmra.mrb[0].mxu0 %v412
      %v521 = vpop.f32.mrb[0].mxu0
      %v522 = vadd.f32 %v453, %v521
      %v523 = vpop.f32.mrb[0].mxu0
      %524 = vmatprep.mubr.f32.mxu0 %v415
      %525 = vmatmul.mubr.f32.gmra.mrb[0].mxu0 %v414
      %v526 = vpop.f32.mrb[0].mxu0
      %v527 = vadd.f32 %v453, %v526
      %v528 = vpop.f32.mrb[0].mxu0
      %529 = vdwg.mxu0
      %v530 = vadd.f32 %v522, %v404
      %v531 = vadd.f32 %v527, %v409
      %v532 = vmax.f32 %v530, 0.0
      %v533 = vmax.f32 %v531, 0.0
      %vm534 = vcmp.ge.f32.partialorder %v532, 0.0
      %vm535 = vcmp.ge.f32.partialorder %v533, 0.0
      %v536 = vmul.f32 %v532, 0.01
      %v537 = vmul.f32 %v533, 0.01
      %v538 = vsel %vm534, %v532, %v536
      %v539 = vsel %vm535, %v533, %v537
      %540 = vst [vmem:[%s226] sm:$0xff] %v538
      %541 = vst [vmem:[%s226 + $0x8] sm:$0xff] %v539
      %s542 = smul.u32 2, %s16
      %p543 = scmp.lt.s32.totalorder %s542, 3
      %s544 = scalar_select %p543, %s542, 3
      %s545 = smul.addr %s544, 8
      %s546 = scalar_lea.vmem %s5, %s545
      // Predicated region
      $region41: #{generator1_forward.14} parent=39 // pred_check
        %p547 = pneg %p144
      $region42: #{generator1_forward.14} parent=39 // pred_check_branch
        %549 = sbr.rel (%p547) target = $region44
      $region43: #{generator1_forward.14} parent=39 // pred_region
        %s550 = smul.u32 2, %s16
      $region44: #{generator1_forward.14} parent=39 // pred_fallthru
        _
    $region40: #{generator1_forward.14} parent=5 // pred_fallthru
      _
    %p551 = scmp.le.s32.totalorder 2, %s11
    // Predicated region
    $region45: #{generator1_forward.14} parent=5 // pred_check
      %p552 = pneg %p551
    $region46: #{generator1_forward.14} parent=5 // pred_check_branch
      %554 = sbr.rel (%p552) target = $region48
    $region47: #{generator1_forward.14} parent=5 // pred_region
      %s555 = ssub.s32 %s11, 2
      // Predicated region
      $region49: #{generator1_forward.14} parent=47 // pred_check
        %p556 = pneg %p150
      $region50: #{generator1_forward.14} parent=47 // pred_check_branch
        %558 = sbr.rel (%p556) target = $region52
      $region51: #{generator1_forward.14} parent=47 // pred_region
        %s559 = smul.u32 2, %s17
        %p560 = scmp.lt.s32.totalorder %s559, 3
        %s561 = scalar_select %p560, %s559, 3
        %s562 = smul.addr %s561, 8
        %s563 = scalar_lea.vmem %s5, %s562
      $region52: #{generator1_forward.14} parent=47 // pred_fallthru
        _
    $region48: #{generator1_forward.14} parent=5 // pred_fallthru
      _
  $region6: #{generator1_forward.14} parent=0 // loop_footer
    %s15 = sadd.s32 1, %s11
  $region7: #{generator1_forward.14} parent=0 // loop_footer_branch
    %10 = sbr.rel target = $region3
  $region8: #{generator1_forward.14} parent=0 // loop_exit
    _

// kernel: generator1_forward.15
$region0: #{generator1_forward.15}
  #allocation0 [shape = 'u32[]', space=smem, size = 0x4, offset = 0x4, fixed_abs, tag = 'smem constant byte address 0x4 - core index']
  #allocation1 [shape = 'u32[144,128]{1,0:T(1,128)}', space=vmem, size = 0x12000, scoped, tag = 'internal scratch']
  %s0 = inlined_call_operand.vmem [shape: f32[32,128], index: 0, kind: input, shape index: {}]
  %s1 = inlined_call_operand.vmem [shape: f32[128,256], index: 1, kind: input, shape index: {}]
  %s2 = inlined_call_operand.vmem [shape: f32[1,256], index: 2, kind: input, shape index: {}]
  %s3 = inlined_call_operand.hbm [shape: f32[256,128], index: 3, kind: input, shape index: {}]
  %s4 = inlined_call_operand.vmem [shape: f32[1,128], index: 4, kind: input, shape index: {}]
  %s5 = inlined_call_operand.vmem [shape: f32[32,128], index: 5, kind: output, shape index: {}]
  %s6 = sld [smem:[#allocation0]]
  $region57: #{generator1_forward.15} parent=0
    _
  %s8 = ssub.s32 1, %s6
  %s9 = scalar_select 0, %s8, %s6
  $region1: #{generator1_forward.15} parent=0
    #allocation2 [shape = 'u8[131072]{0}', space=vmem, size = 0x20000, scoped, tag = 'input window, operand 3, single buffered']
    #allocation3 [shape = 's32[2]{0}', space=sflag, size = 0x8, scoped, tag = 'scoped memory for generator1_forward.15']
    %10 = vsyncpa [#allocation3], 0
    loop: start=0, step=1, limit=4
    $region2: #{generator1_forward.15} parent=1 // loop_pre_header
      _
    $region3: #{generator1_forward.15} parent=1 // loop_header
      %s12 = sphi 0, %s16
      %p13 = scmp.ge.s32.totalorder %s12, 4
      %s22 = sphi 0, %s24
      %s25 = sphi 0, %s22
      %s26 = sphi 0, %s25
      %s42 = sphi 0, %s26
      %s46 = sphi 0, %s46
      %s48 = sphi 0, %s46
      %s49 = sphi 0, %s48
      %s63 = sphi 0, %s49
      %s67 = sphi 0, %s67
      %s69 = sphi 0, %s67
      %s70 = sphi 0, %s69
      %s84 = sphi 0, %s70
      %s88 = sphi 0, %s88
      %s90 = sphi 0, %s88
      %s91 = sphi 0, %s90
      %s105 = sphi 0, %s91
      %s109 = sphi 0, %s109
      %s111 = sphi 0, %s109
      %s112 = sphi 0, %s111
      %s126 = sphi 0, %s112
      %s132 = sphi 0, %s134
      %s135 = sphi 0, %s132
      %s136 = sphi 0, %s135
      %s152 = sphi 0, %s136
    $region4: #{generator1_forward.15} parent=1 // loop_header_branch
      %15 = sbr.rel (%p13) target = $region8
    $region5: #{generator1_forward.15} parent=1 // loop_body
      %s17 = ssub.s32 %s12, 1
      %s18 = ssub.s32 %s12, 2
      %s19 = sadd.s32 %s12, 1
      %s20 = ssub.s32 %s12, %s19
      %p21 = scmp.eq.s32.totalorder %s20, 0
      %s23 = sadd.s32 %s22, 1
      %s24 = scalar_select %p21, %s22, %s23
      %p27 = pneg %p21
      %p28 = scmp.eq.s32.totalorder %s12, 1
      %p29 = por %p27, %p28
      %p30 = scmp.ne.s32.totalorder %s22, %s25
      %p31 = scmp.eq.s32.totalorder %s12, 0
      %p32 = por %p30, %p31
      %p33 = scmp.ne.s32.totalorder %s22, %s25
      %p34 = scmp.eq.s32.totalorder %s17, 1
      %p35 = por %p33, %p34
      %p36 = scmp.ne.s32.totalorder %s25, %s26
      %p37 = scmp.eq.s32.totalorder %s17, 0
      %p38 = por %p36, %p37
      %p39 = scmp.ne.s32.totalorder %s25, %s26
      %p40 = scmp.eq.s32.totalorder %s18, 1
      %p41 = por %p39, %p40
      %p43 = scmp.ne.s32.totalorder %s26, %s42
      %p44 = scmp.eq.s32.totalorder %s18, 0
      %p45 = por %p43, %p44
      %s47 = sadd.s32 %s46, 1
      %p50 = scmp.eq.s32.totalorder %s12, 1
      %p51 = scmp.ne.s32.totalorder %s46, %s48
      %p52 = scmp.eq.s32.totalorder %s12, 0
      %p53 = por %p51, %p52
      %p54 = scmp.ne.s32.totalorder %s46, %s48
      %p55 = scmp.eq.s32.totalorder %s17, 1
      %p56 = por %p54, %p55
      %p57 = scmp.ne.s32.totalorder %s48, %s49
      %p58 = scmp.eq.s32.totalorder %s17, 0
      %p59 = por %p57, %p58
      %p60 = scmp.ne.s32.totalorder %s48, %s49
      %p61 = scmp.eq.s32.totalorder %s18, 1
      %p62 = por %p60, %p61
      %p64 = scmp.ne.s32.totalorder %s49, %s63
      %p65 = scmp.eq.s32.totalorder %s18, 0
      %p66 = por %p64, %p65
      %s68 = sadd.s32 %s67, 1
      %p71 = scmp.eq.s32.totalorder %s12, 1
      %p72 = scmp.ne.s32.totalorder %s67, %s69
      %p73 = scmp.eq.s32.totalorder %s12, 0
      %p74 = por %p72, %p73
      %p75 = scmp.ne.s32.totalorder %s67, %s69
      %p76 = scmp.eq.s32.totalorder %s17, 1
      %p77 = por %p75, %p76
      %p78 = scmp.ne.s32.totalorder %s69, %s70
      %p79 = scmp.eq.s32.totalorder %s17, 0
      %p80 = por %p78, %p79
      %p81 = scmp.ne.s32.totalorder %s69, %s70
      %p82 = scmp.eq.s32.totalorder %s18, 1
      %p83 = por %p81, %p82
      %p85 = scmp.ne.s32.totalorder %s70, %s84
      %p86 = scmp.eq.s32.totalorder %s18, 0
      %p87 = por %p85, %p86
      %s89 = sadd.s32 %s88, 1
      %p92 = scmp.eq.s32.totalorder %s12, 1
      %p93 = scmp.ne.s32.totalorder %s88, %s90
      %p94 = scmp.eq.s32.totalorder %s12, 0
      %p95 = por %p93, %p94
      %p96 = scmp.ne.s32.totalorder %s88, %s90
      %p97 = scmp.eq.s32.totalorder %s17, 1
      %p98 = por %p96, %p97
      %p99 = scmp.ne.s32.totalorder %s90, %s91
      %p100 = scmp.eq.s32.totalorder %s17, 0
      %p101 = por %p99, %p100
      %p102 = scmp.ne.s32.totalorder %s90, %s91
      %p103 = scmp.eq.s32.totalorder %s18, 1
      %p104 = por %p102, %p103
      %p106 = scmp.ne.s32.totalorder %s91, %s105
      %p107 = scmp.eq.s32.totalorder %s18, 0
      %p108 = por %p106, %p107
      %s110 = sadd.s32 %s109, 1
      %p113 = scmp.eq.s32.totalorder %s12, 1
      %p114 = scmp.ne.s32.totalorder %s109, %s111
      %p115 = scmp.eq.s32.totalorder %s12, 0
      %p116 = por %p114, %p115
      %p117 = scmp.ne.s32.totalorder %s109, %s111
      %p118 = scmp.eq.s32.totalorder %s17, 1
      %p119 = por %p117, %p118
      %p120 = scmp.ne.s32.totalorder %s111, %s112
      %p121 = scmp.eq.s32.totalorder %s17, 0
      %p122 = por %p120, %p121
      %p123 = scmp.ne.s32.totalorder %s111, %s112
      %p124 = scmp.eq.s32.totalorder %s18, 1
      %p125 = por %p123, %p124
      %p127 = scmp.ne.s32.totalorder %s112, %s126
      %p128 = scmp.eq.s32.totalorder %s18, 0
      %p129 = por %p127, %p128
      %s130 = ssub.s32 %s12, %s19
      %p131 = scmp.eq.s32.totalorder %s130, 0
      %s133 = sadd.s32 %s132, 1
      %s134 = scalar_select %p131, %s132, %s133
      %p137 = pneg %p131
      %p138 = scmp.eq.s32.totalorder %s12, 1
      %p139 = por %p137, %p138
      %p140 = scmp.ne.s32.totalorder %s132, %s135
      %p141 = scmp.eq.s32.totalorder %s12, 0
      %p142 = por %p140, %p141
      %p143 = scmp.ne.s32.totalorder %s132, %s135
      %p144 = scmp.eq.s32.totalorder %s17, 1
      %p145 = por %p143, %p144
      %p146 = scmp.ne.s32.totalorder %s135, %s136
      %p147 = scmp.eq.s32.totalorder %s17, 0
      %p148 = por %p146, %p147
      %p149 = scmp.ne.s32.totalorder %s135, %s136
      %p150 = scmp.eq.s32.totalorder %s18, 1
      %p151 = por %p149, %p150
      %p153 = scmp.ne.s32.totalorder %s136, %s152
      %p154 = scmp.eq.s32.totalorder %s18, 0
      %p155 = por %p153, %p154
      %p156 = scmp.le.s32.totalorder 1, %s12
      %p157 = scmp.lt.s32.totalorder %s12, 3
      %p158 = pnand %p156, %p157
      %p159 = pneg %p158
      // Predicated region
      $region9: #{generator1_forward.15} parent=5 // pred_check
        _
      $region10: #{generator1_forward.15} parent=5 // pred_check_branch
        %161 = sbr.rel (%p158) target = $region12
      $region11: #{generator1_forward.15} parent=5 // pred_region
        %s162 = ssub.s32 %s12, 1
        // Predicated region
        $region13: #{generator1_forward.15} parent=11 // pred_check
          %p163 = pneg %p59
        $region14: #{generator1_forward.15} parent=11 // pred_check_branch
          %165 = sbr.rel (%p163) target = $region16
        $region15: #{generator1_forward.15} parent=11 // pred_region
          _
        $region16: #{generator1_forward.15} parent=11 // pred_fallthru
          _
        // Predicated region
        $region17: #{generator1_forward.15} parent=11 // pred_check
          %p166 = pneg %p80
        $region18: #{generator1_forward.15} parent=11 // pred_check_branch
          %168 = sbr.rel (%p166) target = $region20
        $region19: #{generator1_forward.15} parent=11 // pred_region
          _
        $region20: #{generator1_forward.15} parent=11 // pred_fallthru
          _
        // Predicated region
        $region21: #{generator1_forward.15} parent=11 // pred_check
          %p169 = pneg %p101
        $region22: #{generator1_forward.15} parent=11 // pred_check_branch
          %171 = sbr.rel (%p169) target = $region24
        $region23: #{generator1_forward.15} parent=11 // pred_region
          %s173 = ssub.s32 4096, 4096
          %174 = vsyncadd [#allocation3], %s173
          %s175 = sshll.u32 [#allocation2], 4
          %s176 = int_to_ptr.vmem [resolvable:$true] %s175
          %181 = dma.hbm_to_vmem [thread:$0]  %s3, 4096, %s176, [#allocation3], 128, 128, 8
        $region24: #{generator1_forward.15} parent=11 // pred_fallthru
          _
        // Predicated region
        $region25: #{generator1_forward.15} parent=11 // pred_check
          %p182 = pneg %p122
        $region26: #{generator1_forward.15} parent=11 // pred_check_branch
          %184 = sbr.rel (%p182) target = $region28
        $region27: #{generator1_forward.15} parent=11 // pred_region
          _
        $region28: #{generator1_forward.15} parent=11 // pred_fallthru
          _
      $region12: #{generator1_forward.15} parent=5 // pred_fallthru
        _
      %p185 = scmp.lt.s32.totalorder %s12, 2
      // Predicated region
      $region29: #{generator1_forward.15} parent=5 // pred_check
        %p186 = pneg %p185
      $region30: #{generator1_forward.15} parent=5 // pred_check_branch
        %188 = sbr.rel (%p186) target = $region32
      $region31: #{generator1_forward.15} parent=5 // pred_region
        // Predicated region
        $region33: #{generator1_forward.15} parent=31 // pred_check
          %p189 = pneg %p32
        $region34: #{generator1_forward.15} parent=31 // pred_check_branch
          %191 = sbr.rel (%p189) target = $region36
        $region35: #{generator1_forward.15} parent=31 // pred_region
          %s192 = smul.u32 2, %s12
          %p193 = scmp.lt.s32.totalorder %s192, 3
          %s194 = scalar_select %p193, %s192, 3
          %s195 = smul.addr %s194, 8
          %s196 = scalar_lea.vmem %s0, %s195
          %s197 = smul.u32 2, %s12
        $region36: #{generator1_forward.15} parent=31 // pred_fallthru
          _
      $region32: #{generator1_forward.15} parent=5 // pred_fallthru
        _
      %p198 = scmp.le.s32.totalorder 1, %s12
      %p199 = scmp.lt.s32.totalorder %s12, 3
      %p200 = pnand %p198, %p199
      %p201 = pneg %p200
      // Predicated region
      $region37: #{generator1_forward.15} parent=5 // pred_check
        _
      $region38: #{generator1_forward.15} parent=5 // pred_check_branch
        %203 = sbr.rel (%p200) target = $region40
      $region39: #{generator1_forward.15} parent=5 // pred_region
        %s204 = ssub.s32 %s12, 1
        // Predicated region
        $region41: #{generator1_forward.15} parent=39 // pred_check
          %p205 = pneg %p101
        $region42: #{generator1_forward.15} parent=39 // pred_check_branch
          %207 = sbr.rel (%p205) target = $region44
        $region43: #{generator1_forward.15} parent=39 // pred_region
          %208 = dma.done [#allocation3], 4096
        $region44: #{generator1_forward.15} parent=39 // pred_fallthru
          _
        %s209 = smul.u32 2, %s17
        %p210 = scmp.lt.s32.totalorder %s209, 3
        %s211 = scalar_select %p210, %s209, 3
        %s212 = smul.addr %s211, 8
        %s213 = scalar_lea.vmem %s0, %s212
        %p214 = pneg %p38
        %p215 = pneg %p35
        %p216 = pneg %p59
        %p217 = pneg %p56
        %p218 = pneg %p80
        %p219 = pneg %p77
        %p220 = pneg %p101
        %p221 = pneg %p98
        %p222 = pneg %p122
        %p223 = pneg %p119
        %p224 = pneg %p148
        %p225 = pneg %p145
        %s226 = smul.u32 2, %s17
        %p227 = scmp.lt.s32.totalorder %s226, 3
        %s228 = scalar_select %p227, %s226, 3
        %s229 = smul.addr %s228, 8
        %s230 = scalar_lea.vmem %s5, %s229
        %s231 = smul.u32 2, %s17
        %p232 = scmp.lt.s32.totalorder %s231, 3
        %s233 = scalar_select %p232, %s231, 3
        %s234 = smul.addr %s233, 8
        %s235 = scalar_lea.vmem %s0, %s234
        %s236 = smul.u32 2, %s17
        %s237 = smul.u32 2, %s17
        %p238 = scmp.lt.s32.totalorder %s237, 3
        %s239 = scalar_select %p238, %s237, 3
        %s240 = smul.addr %s239, 8
        %s241 = scalar_lea.vmem %s5, %s240
        %s242 = smul.u32 2, %s17
        %v243 = vld [vmem:[%s235] sm:$0xff]
        %v244 = vld [vmem:[%s235 + $0x8] sm:$0xff]
        %v245 = vld [vmem:[%s1] sm:$0xff]
        %v246 = vld [vmem:[%s1 + $0x8] sm:$0xff]
        %v247 = vld [vmem:[%s1 + $0x10] sm:$0xff]
        %v248 = vld [vmem:[%s1 + $0x18] sm:$0xff]
        %v249 = vld [vmem:[%s1 + $0x20] sm:$0xff]
        %v250 = vld [vmem:[%s1 + $0x28] sm:$0xff]
        %v251 = vld [vmem:[%s1 + $0x30] sm:$0xff]
        %v252 = vld [vmem:[%s1 + $0x38] sm:$0xff]
        %v253 = vld [vmem:[%s1 + $0x40] sm:$0xff]
        %v254 = vld [vmem:[%s1 + $0x48] sm:$0xff]
        %v255 = vld [vmem:[%s1 + $0x50] sm:$0xff]
        %v256 = vld [vmem:[%s1 + $0x58] sm:$0xff]
        %v257 = vld [vmem:[%s1 + $0x60] sm:$0xff]
        %v258 = vld [vmem:[%s1 + $0x68] sm:$0xff]
        %v259 = vld [vmem:[%s1 + $0x70] sm:$0xff]
        %v260 = vld [vmem:[%s1 + $0x78] sm:$0xff]
        %v261 = vld [vmem:[%s1 + $0x80] sm:$0xff]
        %v262 = vld [vmem:[%s1 + $0x88] sm:$0xff]
        %v263 = vld [vmem:[%s1 + $0x90] sm:$0xff]
        %v264 = vld [vmem:[%s1 + $0x98] sm:$0xff]
        %v265 = vld [vmem:[%s1 + $0xa0] sm:$0xff]
        %v266 = vld [vmem:[%s1 + $0xa8] sm:$0xff]
        %v267 = vld [vmem:[%s1 + $0xb0] sm:$0xff]
        %v268 = vld [vmem:[%s1 + $0xb8] sm:$0xff]
        %v269 = vld [vmem:[%s1 + $0xc0] sm:$0xff]
        %v270 = vld [vmem:[%s1 + $0xc8] sm:$0xff]
        %v271 = vld [vmem:[%s1 + $0xd0] sm:$0xff]
        %v272 = vld [vmem:[%s1 + $0xd8] sm:$0xff]
        %v273 = vld [vmem:[%s1 + $0xe0] sm:$0xff]
        %v274 = vld [vmem:[%s1 + $0xe8] sm:$0xff]
        %v275 = vld [vmem:[%s1 + $0xf0] sm:$0xff]
        %v276 = vld [vmem:[%s1 + $0xf8] sm:$0xff]
        %v277 = vld [vmem:[%s2] sm:$0x3]
        %v279 = vlaneseq
        %v280 = vshrl.u32 %v279, 7
        %v281 = vsub.s32 0, %v280
        %v282 = vrot.slane %v277, %v281
        %v283 = vlaneseq
        %v284 = vshrl.u32 %v283, 7
        %v285 = vsub.s32 1, %v284
        %v286 = vrot.slane %v277, %v285
        %289 = vmatprep.subr.mxu0 %v246
        %290 = vmatpush1.msra.mxu0 %v245
        %291 = vmatprep.subr.mxu0 %v248
        %292 = vmatpush1.msra.mxu0 %v247
        %293 = vmatprep.subr.mxu0 %v250
        %294 = vmatpush1.msra.mxu0 %v249
        %295 = vmatprep.subr.mxu0 %v252
        %296 = vmatpush1.msra.mxu0 %v251
        %297 = vmatprep.subr.mxu0 %v254
        %298 = vmatpush1.msra.mxu0 %v253
        %299 = vmatprep.subr.mxu0 %v256
        %300 = vmatpush1.msra.mxu0 %v255
        %301 = vmatprep.subr.mxu0 %v258
        %302 = vmatpush1.msra.mxu0 %v257
        %303 = vmatprep.subr.mxu0 %v260
        %304 = vmatpush1.msra.mxu0 %v259
        %305 = vmatprep.subr.mxu0 %v262
        %306 = vmatpush1.msra.mxu0 %v261
        %307 = vmatprep.subr.mxu0 %v264
        %308 = vmatpush1.msra.mxu0 %v263
        %309 = vmatprep.subr.mxu0 %v266
        %310 = vmatpush1.msra.mxu0 %v265
        %311 = vmatprep.subr.mxu0 %v268
        %312 = vmatpush1.msra.mxu0 %v267
        %313 = vmatprep.subr.mxu0 %v270
        %314 = vmatpush1.msra.mxu0 %v269
        %315 = vmatprep.subr.mxu0 %v272
        %316 = vmatpush1.msra.mxu0 %v271
        %317 = vmatprep.subr.mxu0 %v274
        %318 = vmatpush1.msra.mxu0 %v273
        %319 = vmatprep.subr.mxu0 %v276
        %320 = vmatpush1.msra.mxu0 %v275
        %321 = vmatprep.subr.mxu0 0.0
        %322 = vmatpush1.msra.mxu0 0.0
        %323 = vmatprep.subr.mxu0 0.0
        %324 = vmatpush1.msra.mxu0 0.0
        %325 = vmatprep.subr.mxu0 0.0
        %326 = vmatpush1.msra.mxu0 0.0
        %327 = vmatprep.subr.mxu0 0.0
        %328 = vmatpush1.msra.mxu0 0.0
        %329 = vmatprep.subr.mxu0 0.0
        %330 = vmatpush1.msra.mxu0 0.0
        %331 = vmatprep.subr.mxu0 0.0
        %332 = vmatpush1.msra.mxu0 0.0
        %333 = vmatprep.subr.mxu0 0.0
        %334 = vmatpush1.msra.mxu0 0.0
        %335 = vmatprep.subr.mxu0 0.0
        %336 = vmatpush1.msra.mxu0 0.0
        %337 = vmatprep.subr.mxu0 0.0
        %338 = vmatpush1.msra.mxu0 0.0
        %339 = vmatprep.subr.mxu0 0.0
        %340 = vmatpush1.msra.mxu0 0.0
        %341 = vmatprep.subr.mxu0 0.0
        %342 = vmatpush1.msra.mxu0 0.0
        %343 = vmatprep.subr.mxu0 0.0
        %344 = vmatpush1.msra.mxu0 0.0
        %345 = vmatprep.subr.mxu0 0.0
        %346 = vmatpush1.msra.mxu0 0.0
        %347 = vmatprep.subr.mxu0 0.0
        %348 = vmatpush1.msra.mxu0 0.0
        %349 = vmatprep.subr.mxu0 0.0
        %350 = vmatpush1.msra.mxu0 0.0
        %351 = vmatprep.subr.mxu0 0.0
        %352 = vmatpush1.msra.mxu0 0.0
        %353 = vmatprep.mubr.f32.mxu0 0.0
        %354 = vmatmul.mubr.f32.gmra.mrb[0].mxu0 %v243
        %v355 = vpop.f32.mrb[0].mxu0
        %v356 = vadd.f32 %v282, %v355
        %v357 = vpop.f32.mrb[0].mxu0
        %v358 = vadd.f32 %v286, %v357
        %359 = vmatprep.mubr.f32.mxu0 0.0
        %360 = vmatmul.mubr.f32.gmra.mrb[0].mxu0 %v244
        %v361 = vpop.f32.mrb[0].mxu0
        %v362 = vadd.f32 %v282, %v361
        %v363 = vpop.f32.mrb[0].mxu0
        %v364 = vadd.f32 %v286, %v363
        %365 = vdwg.mxu0
        %v366 = vmax.f32 %v356, 0.0
        %v367 = vmax.f32 %v358, 0.0
        %v368 = vmax.f32 %v362, 0.0
        %v369 = vmax.f32 %v364, 0.0
        %v370 = vld [vmem:[#allocation2] sm:$0xff]
        %v371 = vld [vmem:[#allocation2 + $0x8] sm:$0xff]
        %v372 = vld [vmem:[#allocation2 + $0x10] sm:$0xff]
        %v373 = vld [vmem:[#allocation2 + $0x18] sm:$0xff]
        %v374 = vld [vmem:[#allocation2 + $0x20] sm:$0xff]
        %v375 = vld [vmem:[#allocation2 + $0x28] sm:$0xff]
        %v376 = vld [vmem:[#allocation2 + $0x30] sm:$0xff]
        %v377 = vld [vmem:[#allocation2 + $0x38] sm:$0xff]
        %v378 = vld [vmem:[#allocation2 + $0x40] sm:$0xff]
        %v379 = vld [vmem:[#allocation2 + $0x48] sm:$0xff]
        %v380 = vld [vmem:[#allocation2 + $0x50] sm:$0xff]
        %v381 = vld [vmem:[#allocation2 + $0x58] sm:$0xff]
        %v382 = vld [vmem:[#allocation2 + $0x60] sm:$0xff]
        %v383 = vld [vmem:[#allocation2 + $0x68] sm:$0xff]
        %v384 = vld [vmem:[#allocation2 + $0x70] sm:$0xff]
        %v385 = vld [vmem:[#allocation2 + $0x78] sm:$0xff]
        %v386 = vld [vmem:[#allocation2 + $0x80] sm:$0xff]
        %v387 = vld [vmem:[#allocation2 + $0x88] sm:$0xff]
        %v388 = vld [vmem:[#allocation2 + $0x90] sm:$0xff]
        %v389 = vld [vmem:[#allocation2 + $0x98] sm:$0xff]
        %v390 = vld [vmem:[#allocation2 + $0xa0] sm:$0xff]
        %v391 = vld [vmem:[#allocation2 + $0xa8] sm:$0xff]
        %v392 = vld [vmem:[#allocation2 + $0xb0] sm:$0xff]
        %v393 = vld [vmem:[#allocation2 + $0xb8] sm:$0xff]
        %v394 = vld [vmem:[#allocation2 + $0xc0] sm:$0xff]
        %v395 = vld [vmem:[#allocation2 + $0xc8] sm:$0xff]
        %v396 = vld [vmem:[#allocation2 + $0xd0] sm:$0xff]
        %v397 = vld [vmem:[#allocation2 + $0xd8] sm:$0xff]
        %v398 = vld [vmem:[#allocation2 + $0xe0] sm:$0xff]
        %v399 = vld [vmem:[#allocation2 + $0xe8] sm:$0xff]
        %v400 = vld [vmem:[#allocation2 + $0xf0] sm:$0xff]
        %v401 = vld [vmem:[#allocation2 + $0xf8] sm:$0xff]
        %v402 = vld [vmem:[%s4] sm:$0x1]
        %v404 = vlaneseq
        %v405 = vshrl.u32 %v404, 7
        %v406 = vsub.s32 0, %v405
        %v407 = vrot.slane %v402, %v406
        %409 = vmatprep.subr.mxu0 0.0
        %410 = vmatpush1.msra.mxu0 %v370
        %411 = vmatprep.subr.mxu0 0.0
        %412 = vmatpush1.msra.mxu0 %v371
        %413 = vmatprep.subr.mxu0 0.0
        %414 = vmatpush1.msra.mxu0 %v372
        %415 = vmatprep.subr.mxu0 0.0
        %416 = vmatpush1.msra.mxu0 %v373
        %417 = vmatprep.subr.mxu0 0.0
        %418 = vmatpush1.msra.mxu0 %v374
        %419 = vmatprep.subr.mxu0 0.0
        %420 = vmatpush1.msra.mxu0 %v375
        %421 = vmatprep.subr.mxu0 0.0
        %422 = vmatpush1.msra.mxu0 %v376
        %423 = vmatprep.subr.mxu0 0.0
        %424 = vmatpush1.msra.mxu0 %v377
        %425 = vmatprep.subr.mxu0 0.0
        %426 = vmatpush1.msra.mxu0 %v378
        %427 = vmatprep.subr.mxu0 0.0
        %428 = vmatpush1.msra.mxu0 %v379
        %429 = vmatprep.subr.mxu0 0.0
        %430 = vmatpush1.msra.mxu0 %v380
        %431 = vmatprep.subr.mxu0 0.0
        %432 = vmatpush1.msra.mxu0 %v381
        %433 = vmatprep.subr.mxu0 0.0
        %434 = vmatpush1.msra.mxu0 %v382
        %435 = vmatprep.subr.mxu0 0.0
        %436 = vmatpush1.msra.mxu0 %v383
        %437 = vmatprep.subr.mxu0 0.0
        %438 = vmatpush1.msra.mxu0 %v384
        %439 = vmatprep.subr.mxu0 0.0
        %440 = vmatpush1.msra.mxu0 %v385
        %441 = vmatprep.subr.mxu0 0.0
        %442 = vmatpush1.msra.mxu0 %v386
        %443 = vmatprep.subr.mxu0 0.0
        %444 = vmatpush1.msra.mxu0 %v387
        %445 = vmatprep.subr.mxu0 0.0
        %446 = vmatpush1.msra.mxu0 %v388
        %447 = vmatprep.subr.mxu0 0.0
        %448 = vmatpush1.msra.mxu0 %v389
        %449 = vmatprep.subr.mxu0 0.0
        %450 = vmatpush1.msra.mxu0 %v390
        %451 = vmatprep.subr.mxu0 0.0
        %452 = vmatpush1.msra.mxu0 %v391
        %453 = vmatprep.subr.mxu0 0.0
        %454 = vmatpush1.msra.mxu0 %v392
        %455 = vmatprep.subr.mxu0 0.0
        %456 = vmatpush1.msra.mxu0 %v393
        %457 = vmatprep.subr.mxu0 0.0
        %458 = vmatpush1.msra.mxu0 %v394
        %459 = vmatprep.subr.mxu0 0.0
        %460 = vmatpush1.msra.mxu0 %v395
        %461 = vmatprep.subr.mxu0 0.0
        %462 = vmatpush1.msra.mxu0 %v396
        %463 = vmatprep.subr.mxu0 0.0
        %464 = vmatpush1.msra.mxu0 %v397
        %465 = vmatprep.subr.mxu0 0.0
        %466 = vmatpush1.msra.mxu0 %v398
        %467 = vmatprep.subr.mxu0 0.0
        %468 = vmatpush1.msra.mxu0 %v399
        %469 = vmatprep.subr.mxu0 0.0
        %470 = vmatpush1.msra.mxu0 %v400
        %471 = vmatprep.subr.mxu0 0.0
        %472 = vmatpush1.msra.mxu0 %v401
        %473 = vmatprep.mubr.f32.mxu0 %v367
        %474 = vmatmul.mubr.f32.gmra.mrb[0].mxu0 %v366
        %v475 = vpop.f32.mrb[0].mxu0
        %v476 = vadd.f32 %v407, %v475
        %v477 = vpop.f32.mrb[0].mxu0
        %478 = vmatprep.mubr.f32.mxu0 %v369
        %479 = vmatmul.mubr.f32.gmra.mrb[0].mxu0 %v368
        %v480 = vpop.f32.mrb[0].mxu0
        %v481 = vadd.f32 %v407, %v480
        %v482 = vpop.f32.mrb[0].mxu0
        %483 = vdwg.mxu0
        %v484 = vadd.f32 %v476, %v243
        %v485 = vadd.f32 %v481, %v244
        %v486 = vmax.f32 %v484, 0.0
        %v487 = vmax.f32 %v485, 0.0
        %v488 = vmax.f32 %v486, 0.0
        %v489 = vmax.f32 %v487, 0.0
        %490 = vst [vmem:[%s241] sm:$0xff] %v488
        %491 = vst [vmem:[%s241 + $0x8] sm:$0xff] %v489
        %s492 = smul.u32 2, %s17
        %p493 = scmp.lt.s32.totalorder %s492, 3
        %s494 = scalar_select %p493, %s492, 3
        %s495 = smul.addr %s494, 8
        %s496 = scalar_lea.vmem %s5, %s495
        // Predicated region
        $region45: #{generator1_forward.15} parent=39 // pred_check
          %p497 = pneg %p145
        $region46: #{generator1_forward.15} parent=39 // pred_check_branch
          %499 = sbr.rel (%p497) target = $region48
        $region47: #{generator1_forward.15} parent=39 // pred_region
          %s500 = smul.u32 2, %s17
        $region48: #{generator1_forward.15} parent=39 // pred_fallthru
          _
      $region40: #{generator1_forward.15} parent=5 // pred_fallthru
        _
      %p501 = scmp.le.s32.totalorder 2, %s12
      // Predicated region
      $region49: #{generator1_forward.15} parent=5 // pred_check
        %p502 = pneg %p501
      $region50: #{generator1_forward.15} parent=5 // pred_check_branch
        %504 = sbr.rel (%p502) target = $region52
      $region51: #{generator1_forward.15} parent=5 // pred_region
        %s505 = ssub.s32 %s12, 2
        // Predicated region
        $region53: #{generator1_forward.15} parent=51 // pred_check
          %p506 = pneg %p151
        $region54: #{generator1_forward.15} parent=51 // pred_check_branch
          %508 = sbr.rel (%p506) target = $region56
        $region55: #{generator1_forward.15} parent=51 // pred_region
          %s509 = smul.u32 2, %s18
          %p510 = scmp.lt.s32.totalorder %s509, 3
          %s511 = scalar_select %p510, %s509, 3
          %s512 = smul.addr %s511, 8
          %s513 = scalar_lea.vmem %s5, %s512
        $region56: #{generator1_forward.15} parent=51 // pred_fallthru
          _
      $region52: #{generator1_forward.15} parent=5 // pred_fallthru
        _
    $region6: #{generator1_forward.15} parent=1 // loop_footer
      %s16 = sadd.s32 1, %s12
    $region7: #{generator1_forward.15} parent=1 // loop_footer_branch
      %11 = sbr.rel target = $region3
    $region8: #{generator1_forward.15} parent=1 // loop_exit
      _
    %514 = vsyncpa [#allocation3], 1
    %s515 = scalar_lea.sflag [#allocation3], 1
    %516 = vsyncpa %s515, 1

// kernel: generator1_forward.16
$region0: #{generator1_forward.16}
  #allocation0 [shape = 'u32[]', space=smem, size = 0x4, offset = 0x4, fixed_abs, tag = 'smem constant byte address 0x4 - core index']
  #allocation1 [shape = 'u32[144,128]{1,0:T(1,128)}', space=vmem, size = 0x12000, scoped, tag = 'internal scratch']
  %s0 = inlined_call_operand.vmem [shape: f32[32,128], index: 0, kind: input, shape index: {}]
  %s1 = inlined_call_operand.vmem [shape: f32[128,256], index: 1, kind: input, shape index: {}]
  %s2 = inlined_call_operand.vmem [shape: f32[1,256], index: 2, kind: input, shape index: {}]
  %s3 = inlined_call_operand.vmem [shape: f32[256,128], index: 3, kind: input, shape index: {}]
  %s4 = inlined_call_operand.vmem [shape: f32[1,128], index: 4, kind: input, shape index: {}]
  %s5 = inlined_call_operand.vmem [shape: f32[32,128], index: 5, kind: output, shape index: {}]
  %s6 = sld [smem:[#allocation0]]
  $region53: #{generator1_forward.16} parent=0
    _
  %s8 = ssub.s32 1, %s6
  %s9 = scalar_select 0, %s8, %s6
  loop: start=0, step=1, limit=4
  $region2: #{generator1_forward.16} parent=0 // loop_pre_header
    _
  $region3: #{generator1_forward.16} parent=0 // loop_header
    %s11 = sphi 0, %s15
    %p12 = scmp.ge.s32.totalorder %s11, 4
    %s21 = sphi 0, %s23
    %s24 = sphi 0, %s21
    %s25 = sphi 0, %s24
    %s41 = sphi 0, %s25
    %s45 = sphi 0, %s45
    %s47 = sphi 0, %s45
    %s48 = sphi 0, %s47
    %s62 = sphi 0, %s48
    %s66 = sphi 0, %s66
    %s68 = sphi 0, %s66
    %s69 = sphi 0, %s68
    %s83 = sphi 0, %s69
    %s87 = sphi 0, %s87
    %s89 = sphi 0, %s87
    %s90 = sphi 0, %s89
    %s104 = sphi 0, %s90
    %s108 = sphi 0, %s108
    %s110 = sphi 0, %s108
    %s111 = sphi 0, %s110
    %s125 = sphi 0, %s111
    %s131 = sphi 0, %s133
    %s134 = sphi 0, %s131
    %s135 = sphi 0, %s134
    %s151 = sphi 0, %s135
  $region4: #{generator1_forward.16} parent=0 // loop_header_branch
    %14 = sbr.rel (%p12) target = $region8
  $region5: #{generator1_forward.16} parent=0 // loop_body
    %s16 = ssub.s32 %s11, 1
    %s17 = ssub.s32 %s11, 2
    %s18 = sadd.s32 %s11, 1
    %s19 = ssub.s32 %s11, %s18
    %p20 = scmp.eq.s32.totalorder %s19, 0
    %s22 = sadd.s32 %s21, 1
    %s23 = scalar_select %p20, %s21, %s22
    %p26 = pneg %p20
    %p27 = scmp.eq.s32.totalorder %s11, 1
    %p28 = por %p26, %p27
    %p29 = scmp.ne.s32.totalorder %s21, %s24
    %p30 = scmp.eq.s32.totalorder %s11, 0
    %p31 = por %p29, %p30
    %p32 = scmp.ne.s32.totalorder %s21, %s24
    %p33 = scmp.eq.s32.totalorder %s16, 1
    %p34 = por %p32, %p33
    %p35 = scmp.ne.s32.totalorder %s24, %s25
    %p36 = scmp.eq.s32.totalorder %s16, 0
    %p37 = por %p35, %p36
    %p38 = scmp.ne.s32.totalorder %s24, %s25
    %p39 = scmp.eq.s32.totalorder %s17, 1
    %p40 = por %p38, %p39
    %p42 = scmp.ne.s32.totalorder %s25, %s41
    %p43 = scmp.eq.s32.totalorder %s17, 0
    %p44 = por %p42, %p43
    %s46 = sadd.s32 %s45, 1
    %p49 = scmp.eq.s32.totalorder %s11, 1
    %p50 = scmp.ne.s32.totalorder %s45, %s47
    %p51 = scmp.eq.s32.totalorder %s11, 0
    %p52 = por %p50, %p51
    %p53 = scmp.ne.s32.totalorder %s45, %s47
    %p54 = scmp.eq.s32.totalorder %s16, 1
    %p55 = por %p53, %p54
    %p56 = scmp.ne.s32.totalorder %s47, %s48
    %p57 = scmp.eq.s32.totalorder %s16, 0
    %p58 = por %p56, %p57
    %p59 = scmp.ne.s32.totalorder %s47, %s48
    %p60 = scmp.eq.s32.totalorder %s17, 1
    %p61 = por %p59, %p60
    %p63 = scmp.ne.s32.totalorder %s48, %s62
    %p64 = scmp.eq.s32.totalorder %s17, 0
    %p65 = por %p63, %p64
    %s67 = sadd.s32 %s66, 1
    %p70 = scmp.eq.s32.totalorder %s11, 1
    %p71 = scmp.ne.s32.totalorder %s66, %s68
    %p72 = scmp.eq.s32.totalorder %s11, 0
    %p73 = por %p71, %p72
    %p74 = scmp.ne.s32.totalorder %s66, %s68
    %p75 = scmp.eq.s32.totalorder %s16, 1
    %p76 = por %p74, %p75
    %p77 = scmp.ne.s32.totalorder %s68, %s69
    %p78 = scmp.eq.s32.totalorder %s16, 0
    %p79 = por %p77, %p78
    %p80 = scmp.ne.s32.totalorder %s68, %s69
    %p81 = scmp.eq.s32.totalorder %s17, 1
    %p82 = por %p80, %p81
    %p84 = scmp.ne.s32.totalorder %s69, %s83
    %p85 = scmp.eq.s32.totalorder %s17, 0
    %p86 = por %p84, %p85
    %s88 = sadd.s32 %s87, 1
    %p91 = scmp.eq.s32.totalorder %s11, 1
    %p92 = scmp.ne.s32.totalorder %s87, %s89
    %p93 = scmp.eq.s32.totalorder %s11, 0
    %p94 = por %p92, %p93
    %p95 = scmp.ne.s32.totalorder %s87, %s89
    %p96 = scmp.eq.s32.totalorder %s16, 1
    %p97 = por %p95, %p96
    %p98 = scmp.ne.s32.totalorder %s89, %s90
    %p99 = scmp.eq.s32.totalorder %s16, 0
    %p100 = por %p98, %p99
    %p101 = scmp.ne.s32.totalorder %s89, %s90
    %p102 = scmp.eq.s32.totalorder %s17, 1
    %p103 = por %p101, %p102
    %p105 = scmp.ne.s32.totalorder %s90, %s104
    %p106 = scmp.eq.s32.totalorder %s17, 0
    %p107 = por %p105, %p106
    %s109 = sadd.s32 %s108, 1
    %p112 = scmp.eq.s32.totalorder %s11, 1
    %p113 = scmp.ne.s32.totalorder %s108, %s110
    %p114 = scmp.eq.s32.totalorder %s11, 0
    %p115 = por %p113, %p114
    %p116 = scmp.ne.s32.totalorder %s108, %s110
    %p117 = scmp.eq.s32.totalorder %s16, 1
    %p118 = por %p116, %p117
    %p119 = scmp.ne.s32.totalorder %s110, %s111
    %p120 = scmp.eq.s32.totalorder %s16, 0
    %p121 = por %p119, %p120
    %p122 = scmp.ne.s32.totalorder %s110, %s111
    %p123 = scmp.eq.s32.totalorder %s17, 1
    %p124 = por %p122, %p123
    %p126 = scmp.ne.s32.totalorder %s111, %s125
    %p127 = scmp.eq.s32.totalorder %s17, 0
    %p128 = por %p126, %p127
    %s129 = ssub.s32 %s11, %s18
    %p130 = scmp.eq.s32.totalorder %s129, 0
    %s132 = sadd.s32 %s131, 1
    %s133 = scalar_select %p130, %s131, %s132
    %p136 = pneg %p130
    %p137 = scmp.eq.s32.totalorder %s11, 1
    %p138 = por %p136, %p137
    %p139 = scmp.ne.s32.totalorder %s131, %s134
    %p140 = scmp.eq.s32.totalorder %s11, 0
    %p141 = por %p139, %p140
    %p142 = scmp.ne.s32.totalorder %s131, %s134
    %p143 = scmp.eq.s32.totalorder %s16, 1
    %p144 = por %p142, %p143
    %p145 = scmp.ne.s32.totalorder %s134, %s135
    %p146 = scmp.eq.s32.totalorder %s16, 0
    %p147 = por %p145, %p146
    %p148 = scmp.ne.s32.totalorder %s134, %s135
    %p149 = scmp.eq.s32.totalorder %s17, 1
    %p150 = por %p148, %p149
    %p152 = scmp.ne.s32.totalorder %s135, %s151
    %p153 = scmp.eq.s32.totalorder %s17, 0
    %p154 = por %p152, %p153
    %p155 = scmp.le.s32.totalorder 1, %s11
    %p156 = scmp.lt.s32.totalorder %s11, 3
    %p157 = pnand %p155, %p156
    %p158 = pneg %p157
    // Predicated region
    $region9: #{generator1_forward.16} parent=5 // pred_check
      _
    $region10: #{generator1_forward.16} parent=5 // pred_check_branch
      %160 = sbr.rel (%p157) target = $region12
    $region11: #{generator1_forward.16} parent=5 // pred_region
      %s161 = ssub.s32 %s11, 1
      // Predicated region
      $region13: #{generator1_forward.16} parent=11 // pred_check
        %p162 = pneg %p58
      $region14: #{generator1_forward.16} parent=11 // pred_check_branch
        %164 = sbr.rel (%p162) target = $region16
      $region15: #{generator1_forward.16} parent=11 // pred_region
        _
      $region16: #{generator1_forward.16} parent=11 // pred_fallthru
        _
      // Predicated region
      $region17: #{generator1_forward.16} parent=11 // pred_check
        %p165 = pneg %p79
      $region18: #{generator1_forward.16} parent=11 // pred_check_branch
        %167 = sbr.rel (%p165) target = $region20
      $region19: #{generator1_forward.16} parent=11 // pred_region
        _
      $region20: #{generator1_forward.16} parent=11 // pred_fallthru
        _
      // Predicated region
      $region21: #{generator1_forward.16} parent=11 // pred_check
        %p168 = pneg %p100
      $region22: #{generator1_forward.16} parent=11 // pred_check_branch
        %170 = sbr.rel (%p168) target = $region24
      $region23: #{generator1_forward.16} parent=11 // pred_region
        _
      $region24: #{generator1_forward.16} parent=11 // pred_fallthru
        _
      // Predicated region
      $region25: #{generator1_forward.16} parent=11 // pred_check
        %p171 = pneg %p121
      $region26: #{generator1_forward.16} parent=11 // pred_check_branch
        %173 = sbr.rel (%p171) target = $region28
      $region27: #{generator1_forward.16} parent=11 // pred_region
        _
      $region28: #{generator1_forward.16} parent=11 // pred_fallthru
        _
    $region12: #{generator1_forward.16} parent=5 // pred_fallthru
      _
    %p174 = scmp.lt.s32.totalorder %s11, 2
    // Predicated region
    $region29: #{generator1_forward.16} parent=5 // pred_check
      %p175 = pneg %p174
    $region30: #{generator1_forward.16} parent=5 // pred_check_branch
      %177 = sbr.rel (%p175) target = $region32
    $region31: #{generator1_forward.16} parent=5 // pred_region
      // Predicated region
      $region33: #{generator1_forward.16} parent=31 // pred_check
        %p178 = pneg %p31
      $region34: #{generator1_forward.16} parent=31 // pred_check_branch
        %180 = sbr.rel (%p178) target = $region36
      $region35: #{generator1_forward.16} parent=31 // pred_region
        %s181 = smul.u32 2, %s11
        %p182 = scmp.lt.s32.totalorder %s181, 3
        %s183 = scalar_select %p182, %s181, 3
        %s184 = smul.addr %s183, 8
        %s185 = scalar_lea.vmem %s0, %s184
        %s186 = smul.u32 2, %s11
      $region36: #{generator1_forward.16} parent=31 // pred_fallthru
        _
    $region32: #{generator1_forward.16} parent=5 // pred_fallthru
      _
    %p187 = scmp.le.s32.totalorder 1, %s11
    %p188 = scmp.lt.s32.totalorder %s11, 3
    %p189 = pnand %p187, %p188
    %p190 = pneg %p189
    // Predicated region
    $region37: #{generator1_forward.16} parent=5 // pred_check
      _
    $region38: #{generator1_forward.16} parent=5 // pred_check_branch
      %192 = sbr.rel (%p189) target = $region40
    $region39: #{generator1_forward.16} parent=5 // pred_region
      %s193 = ssub.s32 %s11, 1
      %s194 = smul.u32 2, %s16
      %p195 = scmp.lt.s32.totalorder %s194, 3
      %s196 = scalar_select %p195, %s194, 3
      %s197 = smul.addr %s196, 8
      %s198 = scalar_lea.vmem %s0, %s197
      %p199 = pneg %p37
      %p200 = pneg %p34
      %p201 = pneg %p58
      %p202 = pneg %p55
      %p203 = pneg %p79
      %p204 = pneg %p76
      %p205 = pneg %p100
      %p206 = pneg %p97
      %p207 = pneg %p121
      %p208 = pneg %p118
      %p209 = pneg %p147
      %p210 = pneg %p144
      %s211 = smul.u32 2, %s16
      %p212 = scmp.lt.s32.totalorder %s211, 3
      %s213 = scalar_select %p212, %s211, 3
      %s214 = smul.addr %s213, 8
      %s215 = scalar_lea.vmem %s5, %s214
      %s216 = smul.u32 2, %s16
      %p217 = scmp.lt.s32.totalorder %s216, 3
      %s218 = scalar_select %p217, %s216, 3
      %s219 = smul.addr %s218, 8
      %s220 = scalar_lea.vmem %s0, %s219
      %s221 = smul.u32 2, %s16
      %s222 = smul.u32 2, %s16
      %p223 = scmp.lt.s32.totalorder %s222, 3
      %s224 = scalar_select %p223, %s222, 3
      %s225 = smul.addr %s224, 8
      %s226 = scalar_lea.vmem %s5, %s225
      %s227 = smul.u32 2, %s16
      %v228 = vld [vmem:[%s220] sm:$0xff]
      %v229 = vld [vmem:[%s220 + $0x8] sm:$0xff]
      %v230 = vld [vmem:[%s1] sm:$0xff]
      %v231 = vld [vmem:[%s1 + $0x8] sm:$0xff]
      %v232 = vld [vmem:[%s1 + $0x10] sm:$0xff]
      %v233 = vld [vmem:[%s1 + $0x18] sm:$0xff]
      %v234 = vld [vmem:[%s1 + $0x20] sm:$0xff]
      %v235 = vld [vmem:[%s1 + $0x28] sm:$0xff]
      %v236 = vld [vmem:[%s1 + $0x30] sm:$0xff]
      %v237 = vld [vmem:[%s1 + $0x38] sm:$0xff]
      %v238 = vld [vmem:[%s1 + $0x40] sm:$0xff]
      %v239 = vld [vmem:[%s1 + $0x48] sm:$0xff]
      %v240 = vld [vmem:[%s1 + $0x50] sm:$0xff]
      %v241 = vld [vmem:[%s1 + $0x58] sm:$0xff]
      %v242 = vld [vmem:[%s1 + $0x60] sm:$0xff]
      %v243 = vld [vmem:[%s1 + $0x68] sm:$0xff]
      %v244 = vld [vmem:[%s1 + $0x70] sm:$0xff]
      %v245 = vld [vmem:[%s1 + $0x78] sm:$0xff]
      %v246 = vld [vmem:[%s1 + $0x80] sm:$0xff]
      %v247 = vld [vmem:[%s1 + $0x88] sm:$0xff]
      %v248 = vld [vmem:[%s1 + $0x90] sm:$0xff]
      %v249 = vld [vmem:[%s1 + $0x98] sm:$0xff]
      %v250 = vld [vmem:[%s1 + $0xa0] sm:$0xff]
      %v251 = vld [vmem:[%s1 + $0xa8] sm:$0xff]
      %v252 = vld [vmem:[%s1 + $0xb0] sm:$0xff]
      %v253 = vld [vmem:[%s1 + $0xb8] sm:$0xff]
      %v254 = vld [vmem:[%s1 + $0xc0] sm:$0xff]
      %v255 = vld [vmem:[%s1 + $0xc8] sm:$0xff]
      %v256 = vld [vmem:[%s1 + $0xd0] sm:$0xff]
      %v257 = vld [vmem:[%s1 + $0xd8] sm:$0xff]
      %v258 = vld [vmem:[%s1 + $0xe0] sm:$0xff]
      %v259 = vld [vmem:[%s1 + $0xe8] sm:$0xff]
      %v260 = vld [vmem:[%s1 + $0xf0] sm:$0xff]
      %v261 = vld [vmem:[%s1 + $0xf8] sm:$0xff]
      %v262 = vld [vmem:[%s2] sm:$0x3]
      %v264 = vlaneseq
      %v265 = vshrl.u32 %v264, 7
      %v266 = vsub.s32 0, %v265
      %v267 = vrot.slane %v262, %v266
      %v268 = vlaneseq
      %v269 = vshrl.u32 %v268, 7
      %v270 = vsub.s32 1, %v269
      %v271 = vrot.slane %v262, %v270
      %274 = vmatprep.subr.mxu0 %v231
      %275 = vmatpush1.msra.mxu0 %v230
      %276 = vmatprep.subr.mxu0 %v233
      %277 = vmatpush1.msra.mxu0 %v232
      %278 = vmatprep.subr.mxu0 %v235
      %279 = vmatpush1.msra.mxu0 %v234
      %280 = vmatprep.subr.mxu0 %v237
      %281 = vmatpush1.msra.mxu0 %v236
      %282 = vmatprep.subr.mxu0 %v239
      %283 = vmatpush1.msra.mxu0 %v238
      %284 = vmatprep.subr.mxu0 %v241
      %285 = vmatpush1.msra.mxu0 %v240
      %286 = vmatprep.subr.mxu0 %v243
      %287 = vmatpush1.msra.mxu0 %v242
      %288 = vmatprep.subr.mxu0 %v245
      %289 = vmatpush1.msra.mxu0 %v244
      %290 = vmatprep.subr.mxu0 %v247
      %291 = vmatpush1.msra.mxu0 %v246
      %292 = vmatprep.subr.mxu0 %v249
      %293 = vmatpush1.msra.mxu0 %v248
      %294 = vmatprep.subr.mxu0 %v251
      %295 = vmatpush1.msra.mxu0 %v250
      %296 = vmatprep.subr.mxu0 %v253
      %297 = vmatpush1.msra.mxu0 %v252
      %298 = vmatprep.subr.mxu0 %v255
      %299 = vmatpush1.msra.mxu0 %v254
      %300 = vmatprep.subr.mxu0 %v257
      %301 = vmatpush1.msra.mxu0 %v256
      %302 = vmatprep.subr.mxu0 %v259
      %303 = vmatpush1.msra.mxu0 %v258
      %304 = vmatprep.subr.mxu0 %v261
      %305 = vmatpush1.msra.mxu0 %v260
      %306 = vmatprep.subr.mxu0 0.0
      %307 = vmatpush1.msra.mxu0 0.0
      %308 = vmatprep.subr.mxu0 0.0
      %309 = vmatpush1.msra.mxu0 0.0
      %310 = vmatprep.subr.mxu0 0.0
      %311 = vmatpush1.msra.mxu0 0.0
      %312 = vmatprep.subr.mxu0 0.0
      %313 = vmatpush1.msra.mxu0 0.0
      %314 = vmatprep.subr.mxu0 0.0
      %315 = vmatpush1.msra.mxu0 0.0
      %316 = vmatprep.subr.mxu0 0.0
      %317 = vmatpush1.msra.mxu0 0.0
      %318 = vmatprep.subr.mxu0 0.0
      %319 = vmatpush1.msra.mxu0 0.0
      %320 = vmatprep.subr.mxu0 0.0
      %321 = vmatpush1.msra.mxu0 0.0
      %322 = vmatprep.subr.mxu0 0.0
      %323 = vmatpush1.msra.mxu0 0.0
      %324 = vmatprep.subr.mxu0 0.0
      %325 = vmatpush1.msra.mxu0 0.0
      %326 = vmatprep.subr.mxu0 0.0
      %327 = vmatpush1.msra.mxu0 0.0
      %328 = vmatprep.subr.mxu0 0.0
      %329 = vmatpush1.msra.mxu0 0.0
      %330 = vmatprep.subr.mxu0 0.0
      %331 = vmatpush1.msra.mxu0 0.0
      %332 = vmatprep.subr.mxu0 0.0
      %333 = vmatpush1.msra.mxu0 0.0
      %334 = vmatprep.subr.mxu0 0.0
      %335 = vmatpush1.msra.mxu0 0.0
      %336 = vmatprep.subr.mxu0 0.0
      %337 = vmatpush1.msra.mxu0 0.0
      %338 = vmatprep.mubr.f32.mxu0 0.0
      %339 = vmatmul.mubr.f32.gmra.mrb[0].mxu0 %v228
      %v340 = vpop.f32.mrb[0].mxu0
      %v341 = vadd.f32 %v267, %v340
      %v342 = vpop.f32.mrb[0].mxu0
      %v343 = vadd.f32 %v271, %v342
      %344 = vmatprep.mubr.f32.mxu0 0.0
      %345 = vmatmul.mubr.f32.gmra.mrb[0].mxu0 %v229
      %v346 = vpop.f32.mrb[0].mxu0
      %v347 = vadd.f32 %v267, %v346
      %v348 = vpop.f32.mrb[0].mxu0
      %v349 = vadd.f32 %v271, %v348
      %350 = vdwg.mxu0
      %v351 = vmax.f32 %v341, 0.0
      %v352 = vmax.f32 %v343, 0.0
      %v353 = vmax.f32 %v347, 0.0
      %v354 = vmax.f32 %v349, 0.0
      %v355 = vld [vmem:[%s3] sm:$0xff]
      %v356 = vld [vmem:[%s3 + $0x8] sm:$0xff]
      %v357 = vld [vmem:[%s3 + $0x10] sm:$0xff]
      %v358 = vld [vmem:[%s3 + $0x18] sm:$0xff]
      %v359 = vld [vmem:[%s3 + $0x20] sm:$0xff]
      %v360 = vld [vmem:[%s3 + $0x28] sm:$0xff]
      %v361 = vld [vmem:[%s3 + $0x30] sm:$0xff]
      %v362 = vld [vmem:[%s3 + $0x38] sm:$0xff]
      %v363 = vld [vmem:[%s3 + $0x40] sm:$0xff]
      %v364 = vld [vmem:[%s3 + $0x48] sm:$0xff]
      %v365 = vld [vmem:[%s3 + $0x50] sm:$0xff]
      %v366 = vld [vmem:[%s3 + $0x58] sm:$0xff]
      %v367 = vld [vmem:[%s3 + $0x60] sm:$0xff]
      %v368 = vld [vmem:[%s3 + $0x68] sm:$0xff]
      %v369 = vld [vmem:[%s3 + $0x70] sm:$0xff]
      %v370 = vld [vmem:[%s3 + $0x78] sm:$0xff]
      %v371 = vld [vmem:[%s3 + $0x80] sm:$0xff]
      %v372 = vld [vmem:[%s3 + $0x88] sm:$0xff]
      %v373 = vld [vmem:[%s3 + $0x90] sm:$0xff]
      %v374 = vld [vmem:[%s3 + $0x98] sm:$0xff]
      %v375 = vld [vmem:[%s3 + $0xa0] sm:$0xff]
      %v376 = vld [vmem:[%s3 + $0xa8] sm:$0xff]
      %v377 = vld [vmem:[%s3 + $0xb0] sm:$0xff]
      %v378 = vld [vmem:[%s3 + $0xb8] sm:$0xff]
      %v379 = vld [vmem:[%s3 + $0xc0] sm:$0xff]
      %v380 = vld [vmem:[%s3 + $0xc8] sm:$0xff]
      %v381 = vld [vmem:[%s3 + $0xd0] sm:$0xff]
      %v382 = vld [vmem:[%s3 + $0xd8] sm:$0xff]
      %v383 = vld [vmem:[%s3 + $0xe0] sm:$0xff]
      %v384 = vld [vmem:[%s3 + $0xe8] sm:$0xff]
      %v385 = vld [vmem:[%s3 + $0xf0] sm:$0xff]
      %v386 = vld [vmem:[%s3 + $0xf8] sm:$0xff]
      %v387 = vld [vmem:[%s4] sm:$0x1]
      %v389 = vlaneseq
      %v390 = vshrl.u32 %v389, 7
      %v391 = vsub.s32 0, %v390
      %v392 = vrot.slane %v387, %v391
      %394 = vmatprep.subr.mxu0 0.0
      %395 = vmatpush1.msra.mxu0 %v355
      %396 = vmatprep.subr.mxu0 0.0
      %397 = vmatpush1.msra.mxu0 %v356
      %398 = vmatprep.subr.mxu0 0.0
      %399 = vmatpush1.msra.mxu0 %v357
      %400 = vmatprep.subr.mxu0 0.0
      %401 = vmatpush1.msra.mxu0 %v358
      %402 = vmatprep.subr.mxu0 0.0
      %403 = vmatpush1.msra.mxu0 %v359
      %404 = vmatprep.subr.mxu0 0.0
      %405 = vmatpush1.msra.mxu0 %v360
      %406 = vmatprep.subr.mxu0 0.0
      %407 = vmatpush1.msra.mxu0 %v361
      %408 = vmatprep.subr.mxu0 0.0
      %409 = vmatpush1.msra.mxu0 %v362
      %410 = vmatprep.subr.mxu0 0.0
      %411 = vmatpush1.msra.mxu0 %v363
      %412 = vmatprep.subr.mxu0 0.0
      %413 = vmatpush1.msra.mxu0 %v364
      %414 = vmatprep.subr.mxu0 0.0
      %415 = vmatpush1.msra.mxu0 %v365
      %416 = vmatprep.subr.mxu0 0.0
      %417 = vmatpush1.msra.mxu0 %v366
      %418 = vmatprep.subr.mxu0 0.0
      %419 = vmatpush1.msra.mxu0 %v367
      %420 = vmatprep.subr.mxu0 0.0
      %421 = vmatpush1.msra.mxu0 %v368
      %422 = vmatprep.subr.mxu0 0.0
      %423 = vmatpush1.msra.mxu0 %v369
      %424 = vmatprep.subr.mxu0 0.0
      %425 = vmatpush1.msra.mxu0 %v370
      %426 = vmatprep.subr.mxu0 0.0
      %427 = vmatpush1.msra.mxu0 %v371
      %428 = vmatprep.subr.mxu0 0.0
      %429 = vmatpush1.msra.mxu0 %v372
      %430 = vmatprep.subr.mxu0 0.0
      %431 = vmatpush1.msra.mxu0 %v373
      %432 = vmatprep.subr.mxu0 0.0
      %433 = vmatpush1.msra.mxu0 %v374
      %434 = vmatprep.subr.mxu0 0.0
      %435 = vmatpush1.msra.mxu0 %v375
      %436 = vmatprep.subr.mxu0 0.0
      %437 = vmatpush1.msra.mxu0 %v376
      %438 = vmatprep.subr.mxu0 0.0
      %439 = vmatpush1.msra.mxu0 %v377
      %440 = vmatprep.subr.mxu0 0.0
      %441 = vmatpush1.msra.mxu0 %v378
      %442 = vmatprep.subr.mxu0 0.0
      %443 = vmatpush1.msra.mxu0 %v379
      %444 = vmatprep.subr.mxu0 0.0
      %445 = vmatpush1.msra.mxu0 %v380
      %446 = vmatprep.subr.mxu0 0.0
      %447 = vmatpush1.msra.mxu0 %v381
      %448 = vmatprep.subr.mxu0 0.0
      %449 = vmatpush1.msra.mxu0 %v382
      %450 = vmatprep.subr.mxu0 0.0
      %451 = vmatpush1.msra.mxu0 %v383
      %452 = vmatprep.subr.mxu0 0.0
      %453 = vmatpush1.msra.mxu0 %v384
      %454 = vmatprep.subr.mxu0 0.0
      %455 = vmatpush1.msra.mxu0 %v385
      %456 = vmatprep.subr.mxu0 0.0
      %457 = vmatpush1.msra.mxu0 %v386
      %458 = vmatprep.mubr.f32.mxu0 %v352
      %459 = vmatmul.mubr.f32.gmra.mrb[0].mxu0 %v351
      %v460 = vpop.f32.mrb[0].mxu0
      %v461 = vadd.f32 %v392, %v460
      %v462 = vpop.f32.mrb[0].mxu0
      %463 = vmatprep.mubr.f32.mxu0 %v354
      %464 = vmatmul.mubr.f32.gmra.mrb[0].mxu0 %v353
      %v465 = vpop.f32.mrb[0].mxu0
      %v466 = vadd.f32 %v392, %v465
      %v467 = vpop.f32.mrb[0].mxu0
      %468 = vdwg.mxu0
      %v469 = vadd.f32 %v461, %v228
      %v470 = vadd.f32 %v466, %v229
      %v471 = vmax.f32 %v469, 0.0
      %v472 = vmax.f32 %v470, 0.0
      %v473 = vmax.f32 %v471, 0.0
      %v474 = vmax.f32 %v472, 0.0
      %475 = vst [vmem:[%s226] sm:$0xff] %v473
      %476 = vst [vmem:[%s226 + $0x8] sm:$0xff] %v474
      %s477 = smul.u32 2, %s16
      %p478 = scmp.lt.s32.totalorder %s477, 3
      %s479 = scalar_select %p478, %s477, 3
      %s480 = smul.addr %s479, 8
      %s481 = scalar_lea.vmem %s5, %s480
      // Predicated region
      $region41: #{generator1_forward.16} parent=39 // pred_check
        %p482 = pneg %p144
      $region42: #{generator1_forward.16} parent=39 // pred_check_branch
        %484 = sbr.rel (%p482) target = $region44
      $region43: #{generator1_forward.16} parent=39 // pred_region
        %s485 = smul.u32 2, %s16
      $region44: #{generator1_forward.16} parent=39 // pred_fallthru
        _
    $region40: #{generator1_forward.16} parent=5 // pred_fallthru
      _
    %p486 = scmp.le.s32.totalorder 2, %s11
    // Predicated region
    $region45: #{generator1_forward.16} parent=5 // pred_check
      %p487 = pneg %p486
    $region46: #{generator1_forward.16} parent=5 // pred_check_branch
      %489 = sbr.rel (%p487) target = $region48
    $region47: #{generator1_forward.16} parent=5 // pred_region
      %s490 = ssub.s32 %s11, 2
      // Predicated region
      $region49: #{generator1_forward.16} parent=47 // pred_check
        %p491 = pneg %p150
      $region50: #{generator1_forward.16} parent=47 // pred_check_branch
        %493 = sbr.rel (%p491) target = $region52
      $region51: #{generator1_forward.16} parent=47 // pred_region
        %s494 = smul.u32 2, %s17
        %p495 = scmp.lt.s32.totalorder %s494, 3
        %s496 = scalar_select %p495, %s494, 3
        %s497 = smul.addr %s496, 8
        %s498 = scalar_lea.vmem %s5, %s497
      $region52: #{generator1_forward.16} parent=47 // pred_fallthru
        _
    $region48: #{generator1_forward.16} parent=5 // pred_fallthru
      _
  $region6: #{generator1_forward.16} parent=0 // loop_footer
    %s15 = sadd.s32 1, %s11
  $region7: #{generator1_forward.16} parent=0 // loop_footer_branch
    %10 = sbr.rel target = $region3
  $region8: #{generator1_forward.16} parent=0 // loop_exit
    _

// kernel: generator1_forward.18
$region0: #{generator1_forward.18}
  #allocation0 [shape = 'u32[]', space=smem, size = 0x4, offset = 0x4, fixed_abs, tag = 'smem constant byte address 0x4 - core index']
  #allocation1 [shape = 'u32[144,128]{1,0:T(1,128)}', space=vmem, size = 0x12000, scoped, tag = 'internal scratch']
  %s0 = inlined_call_operand.vmem [shape: f32[32,128], index: 0, kind: input, shape index: {}]
  %s1 = inlined_call_operand.vmem [shape: f32[128,512], index: 1, kind: input, shape index: {}]
  %s2 = inlined_call_operand.vmem [shape: f32[1,512], index: 2, kind: input, shape index: {}]
  %s3 = inlined_call_operand.vmem [shape: f32[256,256], index: 3, kind: input, shape index: {}]
  %s4 = inlined_call_operand.vmem [shape: f32[1,256], index: 4, kind: input, shape index: {}]
  %s5 = inlined_call_operand.vmem [shape: f32[32,256], index: 5, kind: output, shape index: {}]
  %s6 = sld [smem:[#allocation0]]
  $region53: #{generator1_forward.18} parent=0
    _
  %s8 = ssub.s32 1, %s6
  %s9 = scalar_select 0, %s8, %s6
  loop: start=0, step=1, limit=4
  $region2: #{generator1_forward.18} parent=0 // loop_pre_header
    _
  $region3: #{generator1_forward.18} parent=0 // loop_header
    %s11 = sphi 0, %s15
    %p12 = scmp.ge.s32.totalorder %s11, 4
    %s21 = sphi 0, %s23
    %s24 = sphi 0, %s21
    %s25 = sphi 0, %s24
    %s41 = sphi 0, %s25
    %s45 = sphi 0, %s45
    %s47 = sphi 0, %s45
    %s48 = sphi 0, %s47
    %s62 = sphi 0, %s48
    %s66 = sphi 0, %s66
    %s68 = sphi 0, %s66
    %s69 = sphi 0, %s68
    %s83 = sphi 0, %s69
    %s87 = sphi 0, %s87
    %s89 = sphi 0, %s87
    %s90 = sphi 0, %s89
    %s104 = sphi 0, %s90
    %s108 = sphi 0, %s108
    %s110 = sphi 0, %s108
    %s111 = sphi 0, %s110
    %s125 = sphi 0, %s111
    %s131 = sphi 0, %s133
    %s134 = sphi 0, %s131
    %s135 = sphi 0, %s134
    %s151 = sphi 0, %s135
  $region4: #{generator1_forward.18} parent=0 // loop_header_branch
    %14 = sbr.rel (%p12) target = $region8
  $region5: #{generator1_forward.18} parent=0 // loop_body
    %s16 = ssub.s32 %s11, 1
    %s17 = ssub.s32 %s11, 2
    %s18 = sadd.s32 %s11, 1
    %s19 = ssub.s32 %s11, %s18
    %p20 = scmp.eq.s32.totalorder %s19, 0
    %s22 = sadd.s32 %s21, 1
    %s23 = scalar_select %p20, %s21, %s22
    %p26 = pneg %p20
    %p27 = scmp.eq.s32.totalorder %s11, 1
    %p28 = por %p26, %p27
    %p29 = scmp.ne.s32.totalorder %s21, %s24
    %p30 = scmp.eq.s32.totalorder %s11, 0
    %p31 = por %p29, %p30
    %p32 = scmp.ne.s32.totalorder %s21, %s24
    %p33 = scmp.eq.s32.totalorder %s16, 1
    %p34 = por %p32, %p33
    %p35 = scmp.ne.s32.totalorder %s24, %s25
    %p36 = scmp.eq.s32.totalorder %s16, 0
    %p37 = por %p35, %p36
    %p38 = scmp.ne.s32.totalorder %s24, %s25
    %p39 = scmp.eq.s32.totalorder %s17, 1
    %p40 = por %p38, %p39
    %p42 = scmp.ne.s32.totalorder %s25, %s41
    %p43 = scmp.eq.s32.totalorder %s17, 0
    %p44 = por %p42, %p43
    %s46 = sadd.s32 %s45, 1
    %p49 = scmp.eq.s32.totalorder %s11, 1
    %p50 = scmp.ne.s32.totalorder %s45, %s47
    %p51 = scmp.eq.s32.totalorder %s11, 0
    %p52 = por %p50, %p51
    %p53 = scmp.ne.s32.totalorder %s45, %s47
    %p54 = scmp.eq.s32.totalorder %s16, 1
    %p55 = por %p53, %p54
    %p56 = scmp.ne.s32.totalorder %s47, %s48
    %p57 = scmp.eq.s32.totalorder %s16, 0
    %p58 = por %p56, %p57
    %p59 = scmp.ne.s32.totalorder %s47, %s48
    %p60 = scmp.eq.s32.totalorder %s17, 1
    %p61 = por %p59, %p60
    %p63 = scmp.ne.s32.totalorder %s48, %s62
    %p64 = scmp.eq.s32.totalorder %s17, 0
    %p65 = por %p63, %p64
    %s67 = sadd.s32 %s66, 1
    %p70 = scmp.eq.s32.totalorder %s11, 1
    %p71 = scmp.ne.s32.totalorder %s66, %s68
    %p72 = scmp.eq.s32.totalorder %s11, 0
    %p73 = por %p71, %p72
    %p74 = scmp.ne.s32.totalorder %s66, %s68
    %p75 = scmp.eq.s32.totalorder %s16, 1
    %p76 = por %p74, %p75
    %p77 = scmp.ne.s32.totalorder %s68, %s69
    %p78 = scmp.eq.s32.totalorder %s16, 0
    %p79 = por %p77, %p78
    %p80 = scmp.ne.s32.totalorder %s68, %s69
    %p81 = scmp.eq.s32.totalorder %s17, 1
    %p82 = por %p80, %p81
    %p84 = scmp.ne.s32.totalorder %s69, %s83
    %p85 = scmp.eq.s32.totalorder %s17, 0
    %p86 = por %p84, %p85
    %s88 = sadd.s32 %s87, 1
    %p91 = scmp.eq.s32.totalorder %s11, 1
    %p92 = scmp.ne.s32.totalorder %s87, %s89
    %p93 = scmp.eq.s32.totalorder %s11, 0
    %p94 = por %p92, %p93
    %p95 = scmp.ne.s32.totalorder %s87, %s89
    %p96 = scmp.eq.s32.totalorder %s16, 1
    %p97 = por %p95, %p96
    %p98 = scmp.ne.s32.totalorder %s89, %s90
    %p99 = scmp.eq.s32.totalorder %s16, 0
    %p100 = por %p98, %p99
    %p101 = scmp.ne.s32.totalorder %s89, %s90
    %p102 = scmp.eq.s32.totalorder %s17, 1
    %p103 = por %p101, %p102
    %p105 = scmp.ne.s32.totalorder %s90, %s104
    %p106 = scmp.eq.s32.totalorder %s17, 0
    %p107 = por %p105, %p106
    %s109 = sadd.s32 %s108, 1
    %p112 = scmp.eq.s32.totalorder %s11, 1
    %p113 = scmp.ne.s32.totalorder %s108, %s110
    %p114 = scmp.eq.s32.totalorder %s11, 0
    %p115 = por %p113, %p114
    %p116 = scmp.ne.s32.totalorder %s108, %s110
    %p117 = scmp.eq.s32.totalorder %s16, 1
    %p118 = por %p116, %p117
    %p119 = scmp.ne.s32.totalorder %s110, %s111
    %p120 = scmp.eq.s32.totalorder %s16, 0
    %p121 = por %p119, %p120
    %p122 = scmp.ne.s32.totalorder %s110, %s111
    %p123 = scmp.eq.s32.totalorder %s17, 1
    %p124 = por %p122, %p123
    %p126 = scmp.ne.s32.totalorder %s111, %s125
    %p127 = scmp.eq.s32.totalorder %s17, 0
    %p128 = por %p126, %p127
    %s129 = ssub.s32 %s11, %s18
    %p130 = scmp.eq.s32.totalorder %s129, 0
    %s132 = sadd.s32 %s131, 1
    %s133 = scalar_select %p130, %s131, %s132
    %p136 = pneg %p130
    %p137 = scmp.eq.s32.totalorder %s11, 1
    %p138 = por %p136, %p137
    %p139 = scmp.ne.s32.totalorder %s131, %s134
    %p140 = scmp.eq.s32.totalorder %s11, 0
    %p141 = por %p139, %p140
    %p142 = scmp.ne.s32.totalorder %s131, %s134
    %p143 = scmp.eq.s32.totalorder %s16, 1
    %p144 = por %p142, %p143
    %p145 = scmp.ne.s32.totalorder %s134, %s135
    %p146 = scmp.eq.s32.totalorder %s16, 0
    %p147 = por %p145, %p146
    %p148 = scmp.ne.s32.totalorder %s134, %s135
    %p149 = scmp.eq.s32.totalorder %s17, 1
    %p150 = por %p148, %p149
    %p152 = scmp.ne.s32.totalorder %s135, %s151
    %p153 = scmp.eq.s32.totalorder %s17, 0
    %p154 = por %p152, %p153
    %p155 = scmp.le.s32.totalorder 1, %s11
    %p156 = scmp.lt.s32.totalorder %s11, 3
    %p157 = pnand %p155, %p156
    %p158 = pneg %p157
    // Predicated region
    $region9: #{generator1_forward.18} parent=5 // pred_check
      _
    $region10: #{generator1_forward.18} parent=5 // pred_check_branch
      %160 = sbr.rel (%p157) target = $region12
    $region11: #{generator1_forward.18} parent=5 // pred_region
      %s161 = ssub.s32 %s11, 1
      // Predicated region
      $region13: #{generator1_forward.18} parent=11 // pred_check
        %p162 = pneg %p58
      $region14: #{generator1_forward.18} parent=11 // pred_check_branch
        %164 = sbr.rel (%p162) target = $region16
      $region15: #{generator1_forward.18} parent=11 // pred_region
        _
      $region16: #{generator1_forward.18} parent=11 // pred_fallthru
        _
      // Predicated region
      $region17: #{generator1_forward.18} parent=11 // pred_check
        %p165 = pneg %p79
      $region18: #{generator1_forward.18} parent=11 // pred_check_branch
        %167 = sbr.rel (%p165) target = $region20
      $region19: #{generator1_forward.18} parent=11 // pred_region
        _
      $region20: #{generator1_forward.18} parent=11 // pred_fallthru
        _
      // Predicated region
      $region21: #{generator1_forward.18} parent=11 // pred_check
        %p168 = pneg %p100
      $region22: #{generator1_forward.18} parent=11 // pred_check_branch
        %170 = sbr.rel (%p168) target = $region24
      $region23: #{generator1_forward.18} parent=11 // pred_region
        _
      $region24: #{generator1_forward.18} parent=11 // pred_fallthru
        _
      // Predicated region
      $region25: #{generator1_forward.18} parent=11 // pred_check
        %p171 = pneg %p121
      $region26: #{generator1_forward.18} parent=11 // pred_check_branch
        %173 = sbr.rel (%p171) target = $region28
      $region27: #{generator1_forward.18} parent=11 // pred_region
        _
      $region28: #{generator1_forward.18} parent=11 // pred_fallthru
        _
    $region12: #{generator1_forward.18} parent=5 // pred_fallthru
      _
    %p174 = scmp.lt.s32.totalorder %s11, 2
    // Predicated region
    $region29: #{generator1_forward.18} parent=5 // pred_check
      %p175 = pneg %p174
    $region30: #{generator1_forward.18} parent=5 // pred_check_branch
      %177 = sbr.rel (%p175) target = $region32
    $region31: #{generator1_forward.18} parent=5 // pred_region
      // Predicated region
      $region33: #{generator1_forward.18} parent=31 // pred_check
        %p178 = pneg %p31
      $region34: #{generator1_forward.18} parent=31 // pred_check_branch
        %180 = sbr.rel (%p178) target = $region36
      $region35: #{generator1_forward.18} parent=31 // pred_region
        %s181 = smul.u32 2, %s11
        %p182 = scmp.lt.s32.totalorder %s181, 3
        %s183 = scalar_select %p182, %s181, 3
        %s184 = smul.addr %s183, 8
        %s185 = scalar_lea.vmem %s0, %s184
        %s186 = smul.u32 2, %s11
      $region36: #{generator1_forward.18} parent=31 // pred_fallthru
        _
    $region32: #{generator1_forward.18} parent=5 // pred_fallthru
      _
    %p187 = scmp.le.s32.totalorder 1, %s11
    %p188 = scmp.lt.s32.totalorder %s11, 3
    %p189 = pnand %p187, %p188
    %p190 = pneg %p189
    // Predicated region
    $region37: #{generator1_forward.18} parent=5 // pred_check
      _
    $region38: #{generator1_forward.18} parent=5 // pred_check_branch
      %192 = sbr.rel (%p189) target = $region40
    $region39: #{generator1_forward.18} parent=5 // pred_region
      %s193 = ssub.s32 %s11, 1
      %s194 = smul.u32 2, %s16
      %p195 = scmp.lt.s32.totalorder %s194, 3
      %s196 = scalar_select %p195, %s194, 3
      %s197 = smul.addr %s196, 8
      %s198 = scalar_lea.vmem %s0, %s197
      %p199 = pneg %p37
      %p200 = pneg %p34
      %p201 = pneg %p58
      %p202 = pneg %p55
      %p203 = pneg %p79
      %p204 = pneg %p76
      %p205 = pneg %p100
      %p206 = pneg %p97
      %p207 = pneg %p121
      %p208 = pneg %p118
      %p209 = pneg %p147
      %p210 = pneg %p144
      %s211 = smul.u32 2, %s16
      %p212 = scmp.lt.s32.totalorder %s211, 3
      %s213 = scalar_select %p212, %s211, 3
      %s214 = smul.addr %s213, 2
      %s215 = smul.addr %s214, 8
      %s216 = scalar_lea.vmem %s5, %s215
      %s217 = smul.u32 2, %s16
      %p218 = scmp.lt.s32.totalorder %s217, 3
      %s219 = scalar_select %p218, %s217, 3
      %s220 = smul.addr %s219, 8
      %s221 = scalar_lea.vmem %s0, %s220
      %s222 = smul.u32 2, %s16
      %s223 = smul.u32 2, %s16
      %p224 = scmp.lt.s32.totalorder %s223, 3
      %s225 = scalar_select %p224, %s223, 3
      %s226 = smul.addr %s225, 2
      %s227 = smul.addr %s226, 8
      %s228 = scalar_lea.vmem %s5, %s227
      %s229 = smul.u32 2, %s16
      %v230 = vld [vmem:[%s221] sm:$0xff]
      %v231 = vld [vmem:[%s221 + $0x8] sm:$0xff]
      %v232 = vld [vmem:[%s1] sm:$0xff]
      %v233 = vld [vmem:[%s1 + $0x8] sm:$0xff]
      %v234 = vld [vmem:[%s1 + $0x10] sm:$0xff]
      %v235 = vld [vmem:[%s1 + $0x18] sm:$0xff]
      %v236 = vld [vmem:[%s1 + $0x20] sm:$0xff]
      %v237 = vld [vmem:[%s1 + $0x28] sm:$0xff]
      %v238 = vld [vmem:[%s1 + $0x30] sm:$0xff]
      %v239 = vld [vmem:[%s1 + $0x38] sm:$0xff]
      %v240 = vld [vmem:[%s1 + $0x40] sm:$0xff]
      %v241 = vld [vmem:[%s1 + $0x48] sm:$0xff]
      %v242 = vld [vmem:[%s1 + $0x50] sm:$0xff]
      %v243 = vld [vmem:[%s1 + $0x58] sm:$0xff]
      %v244 = vld [vmem:[%s1 + $0x60] sm:$0xff]
      %v245 = vld [vmem:[%s1 + $0x68] sm:$0xff]
      %v246 = vld [vmem:[%s1 + $0x70] sm:$0xff]
      %v247 = vld [vmem:[%s1 + $0x78] sm:$0xff]
      %v248 = vld [vmem:[%s1 + $0x80] sm:$0xff]
      %v249 = vld [vmem:[%s1 + $0x88] sm:$0xff]
      %v250 = vld [vmem:[%s1 + $0x90] sm:$0xff]
      %v251 = vld [vmem:[%s1 + $0x98] sm:$0xff]
      %v252 = vld [vmem:[%s1 + $0xa0] sm:$0xff]
      %v253 = vld [vmem:[%s1 + $0xa8] sm:$0xff]
      %v254 = vld [vmem:[%s1 + $0xb0] sm:$0xff]
      %v255 = vld [vmem:[%s1 + $0xb8] sm:$0xff]
      %v256 = vld [vmem:[%s1 + $0xc0] sm:$0xff]
      %v257 = vld [vmem:[%s1 + $0xc8] sm:$0xff]
      %v258 = vld [vmem:[%s1 + $0xd0] sm:$0xff]
      %v259 = vld [vmem:[%s1 + $0xd8] sm:$0xff]
      %v260 = vld [vmem:[%s1 + $0xe0] sm:$0xff]
      %v261 = vld [vmem:[%s1 + $0xe8] sm:$0xff]
      %v262 = vld [vmem:[%s1 + $0xf0] sm:$0xff]
      %v263 = vld [vmem:[%s1 + $0xf8] sm:$0xff]
      %v264 = vld [vmem:[%s1 + $0x100] sm:$0xff]
      %v265 = vld [vmem:[%s1 + $0x108] sm:$0xff]
      %v266 = vld [vmem:[%s1 + $0x110] sm:$0xff]
      %v267 = vld [vmem:[%s1 + $0x118] sm:$0xff]
      %v268 = vld [vmem:[%s1 + $0x120] sm:$0xff]
      %v269 = vld [vmem:[%s1 + $0x128] sm:$0xff]
      %v270 = vld [vmem:[%s1 + $0x130] sm:$0xff]
      %v271 = vld [vmem:[%s1 + $0x138] sm:$0xff]
      %v272 = vld [vmem:[%s1 + $0x140] sm:$0xff]
      %v273 = vld [vmem:[%s1 + $0x148] sm:$0xff]
      %v274 = vld [vmem:[%s1 + $0x150] sm:$0xff]
      %v275 = vld [vmem:[%s1 + $0x158] sm:$0xff]
      %v276 = vld [vmem:[%s1 + $0x160] sm:$0xff]
      %v277 = vld [vmem:[%s1 + $0x168] sm:$0xff]
      %v278 = vld [vmem:[%s1 + $0x170] sm:$0xff]
      %v279 = vld [vmem:[%s1 + $0x178] sm:$0xff]
      %v280 = vld [vmem:[%s1 + $0x180] sm:$0xff]
      %v281 = vld [vmem:[%s1 + $0x188] sm:$0xff]
      %v282 = vld [vmem:[%s1 + $0x190] sm:$0xff]
      %v283 = vld [vmem:[%s1 + $0x198] sm:$0xff]
      %v284 = vld [vmem:[%s1 + $0x1a0] sm:$0xff]
      %v285 = vld [vmem:[%s1 + $0x1a8] sm:$0xff]
      %v286 = vld [vmem:[%s1 + $0x1b0] sm:$0xff]
      %v287 = vld [vmem:[%s1 + $0x1b8] sm:$0xff]
      %v288 = vld [vmem:[%s1 + $0x1c0] sm:$0xff]
      %v289 = vld [vmem:[%s1 + $0x1c8] sm:$0xff]
      %v290 = vld [vmem:[%s1 + $0x1d0] sm:$0xff]
      %v291 = vld [vmem:[%s1 + $0x1d8] sm:$0xff]
      %v292 = vld [vmem:[%s1 + $0x1e0] sm:$0xff]
      %v293 = vld [vmem:[%s1 + $0x1e8] sm:$0xff]
      %v294 = vld [vmem:[%s1 + $0x1f0] sm:$0xff]
      %v295 = vld [vmem:[%s1 + $0x1f8] sm:$0xff]
      %v296 = vld [vmem:[%s2] sm:$0xf]
      %v298 = vlaneseq
      %v299 = vshrl.u32 %v298, 7
      %v300 = vsub.s32 0, %v299
      %v301 = vrot.slane %v296, %v300
      %v302 = vlaneseq
      %v303 = vshrl.u32 %v302, 7
      %v304 = vsub.s32 1, %v303
      %v305 = vrot.slane %v296, %v304
      %v306 = vlaneseq
      %v307 = vshrl.u32 %v306, 7
      %v308 = vsub.s32 2, %v307
      %v309 = vrot.slane %v296, %v308
      %v310 = vlaneseq
      %v311 = vshrl.u32 %v310, 7
      %v312 = vsub.s32 3, %v311
      %v313 = vrot.slane %v296, %v312
      %318 = vmatprep.subr.mxu0 %v233
      %319 = vmatpush1.msra.mxu0 %v232
      %320 = vmatprep.subr.mxu0 %v237
      %321 = vmatpush1.msra.mxu0 %v236
      %322 = vmatprep.subr.mxu0 %v241
      %323 = vmatpush1.msra.mxu0 %v240
      %324 = vmatprep.subr.mxu0 %v245
      %325 = vmatpush1.msra.mxu0 %v244
      %326 = vmatprep.subr.mxu0 %v249
      %327 = vmatpush1.msra.mxu0 %v248
      %328 = vmatprep.subr.mxu0 %v253
      %329 = vmatpush1.msra.mxu0 %v252
      %330 = vmatprep.subr.mxu0 %v257
      %331 = vmatpush1.msra.mxu0 %v256
      %332 = vmatprep.subr.mxu0 %v261
      %333 = vmatpush1.msra.mxu0 %v260
      %334 = vmatprep.subr.mxu0 %v265
      %335 = vmatpush1.msra.mxu0 %v264
      %336 = vmatprep.subr.mxu0 %v269
      %337 = vmatpush1.msra.mxu0 %v268
      %338 = vmatprep.subr.mxu0 %v273
      %339 = vmatpush1.msra.mxu0 %v272
      %340 = vmatprep.subr.mxu0 %v277
      %341 = vmatpush1.msra.mxu0 %v276
      %342 = vmatprep.subr.mxu0 %v281
      %343 = vmatpush1.msra.mxu0 %v280
      %344 = vmatprep.subr.mxu0 %v285
      %345 = vmatpush1.msra.mxu0 %v284
      %346 = vmatprep.subr.mxu0 %v289
      %347 = vmatpush1.msra.mxu0 %v288
      %348 = vmatprep.subr.mxu0 %v293
      %349 = vmatpush1.msra.mxu0 %v292
      %350 = vmatprep.subr.mxu0 0.0
      %351 = vmatpush1.msra.mxu0 0.0
      %352 = vmatprep.subr.mxu0 0.0
      %353 = vmatpush1.msra.mxu0 0.0
      %354 = vmatprep.subr.mxu0 0.0
      %355 = vmatpush1.msra.mxu0 0.0
      %356 = vmatprep.subr.mxu0 0.0
      %357 = vmatpush1.msra.mxu0 0.0
      %358 = vmatprep.subr.mxu0 0.0
      %359 = vmatpush1.msra.mxu0 0.0
      %360 = vmatprep.subr.mxu0 0.0
      %361 = vmatpush1.msra.mxu0 0.0
      %362 = vmatprep.subr.mxu0 0.0
      %363 = vmatpush1.msra.mxu0 0.0
      %364 = vmatprep.subr.mxu0 0.0
      %365 = vmatpush1.msra.mxu0 0.0
      %366 = vmatprep.subr.mxu0 0.0
      %367 = vmatpush1.msra.mxu0 0.0
      %368 = vmatprep.subr.mxu0 0.0
      %369 = vmatpush1.msra.mxu0 0.0
      %370 = vmatprep.subr.mxu0 0.0
      %371 = vmatpush1.msra.mxu0 0.0
      %372 = vmatprep.subr.mxu0 0.0
      %373 = vmatpush1.msra.mxu0 0.0
      %374 = vmatprep.subr.mxu0 0.0
      %375 = vmatpush1.msra.mxu0 0.0
      %376 = vmatprep.subr.mxu0 0.0
      %377 = vmatpush1.msra.mxu0 0.0
      %378 = vmatprep.subr.mxu0 0.0
      %379 = vmatpush1.msra.mxu0 0.0
      %380 = vmatprep.subr.mxu0 0.0
      %381 = vmatpush1.msra.mxu0 0.0
      %382 = vmatprep.mubr.f32.mxu0 0.0
      %383 = vmatmul.mubr.f32.gmra.mrb[0].mxu0 %v230
      %v384 = vpop.f32.mrb[0].mxu0
      %v385 = vadd.f32 %v301, %v384
      %v386 = vpop.f32.mrb[0].mxu0
      %v387 = vadd.f32 %v305, %v386
      %388 = vmatprep.mubr.f32.mxu0 0.0
      %389 = vmatmul.mubr.f32.gmra.mrb[0].mxu0 %v231
      %v390 = vpop.f32.mrb[0].mxu0
      %v391 = vadd.f32 %v301, %v390
      %v392 = vpop.f32.mrb[0].mxu0
      %v393 = vadd.f32 %v305, %v392
      %394 = vdwg.mxu0
      %395 = vmatprep.subr.mxu0 %v235
      %396 = vmatpush1.msra.mxu0 %v234
      %397 = vmatprep.subr.mxu0 %v239
      %398 = vmatpush1.msra.mxu0 %v238
      %399 = vmatprep.subr.mxu0 %v243
      %400 = vmatpush1.msra.mxu0 %v242
      %401 = vmatprep.subr.mxu0 %v247
      %402 = vmatpush1.msra.mxu0 %v246
      %403 = vmatprep.subr.mxu0 %v251
      %404 = vmatpush1.msra.mxu0 %v250
      %405 = vmatprep.subr.mxu0 %v255
      %406 = vmatpush1.msra.mxu0 %v254
      %407 = vmatprep.subr.mxu0 %v259
      %408 = vmatpush1.msra.mxu0 %v258
      %409 = vmatprep.subr.mxu0 %v263
      %410 = vmatpush1.msra.mxu0 %v262
      %411 = vmatprep.subr.mxu0 %v267
      %412 = vmatpush1.msra.mxu0 %v266
      %413 = vmatprep.subr.mxu0 %v271
      %414 = vmatpush1.msra.mxu0 %v270
      %415 = vmatprep.subr.mxu0 %v275
      %416 = vmatpush1.msra.mxu0 %v274
      %417 = vmatprep.subr.mxu0 %v279
      %418 = vmatpush1.msra.mxu0 %v278
      %419 = vmatprep.subr.mxu0 %v283
      %420 = vmatpush1.msra.mxu0 %v282
      %421 = vmatprep.subr.mxu0 %v287
      %422 = vmatpush1.msra.mxu0 %v286
      %423 = vmatprep.subr.mxu0 %v291
      %424 = vmatpush1.msra.mxu0 %v290
      %425 = vmatprep.subr.mxu0 %v295
      %426 = vmatpush1.msra.mxu0 %v294
      %427 = vmatprep.subr.mxu0 0.0
      %428 = vmatpush1.msra.mxu0 0.0
      %429 = vmatprep.subr.mxu0 0.0
      %430 = vmatpush1.msra.mxu0 0.0
      %431 = vmatprep.subr.mxu0 0.0
      %432 = vmatpush1.msra.mxu0 0.0
      %433 = vmatprep.subr.mxu0 0.0
      %434 = vmatpush1.msra.mxu0 0.0
      %435 = vmatprep.subr.mxu0 0.0
      %436 = vmatpush1.msra.mxu0 0.0
      %437 = vmatprep.subr.mxu0 0.0
      %438 = vmatpush1.msra.mxu0 0.0
      %439 = vmatprep.subr.mxu0 0.0
      %440 = vmatpush1.msra.mxu0 0.0
      %441 = vmatprep.subr.mxu0 0.0
      %442 = vmatpush1.msra.mxu0 0.0
      %443 = vmatprep.subr.mxu0 0.0
      %444 = vmatpush1.msra.mxu0 0.0
      %445 = vmatprep.subr.mxu0 0.0
      %446 = vmatpush1.msra.mxu0 0.0
      %447 = vmatprep.subr.mxu0 0.0
      %448 = vmatpush1.msra.mxu0 0.0
      %449 = vmatprep.subr.mxu0 0.0
      %450 = vmatpush1.msra.mxu0 0.0
      %451 = vmatprep.subr.mxu0 0.0
      %452 = vmatpush1.msra.mxu0 0.0
      %453 = vmatprep.subr.mxu0 0.0
      %454 = vmatpush1.msra.mxu0 0.0
      %455 = vmatprep.subr.mxu0 0.0
      %456 = vmatpush1.msra.mxu0 0.0
      %457 = vmatprep.subr.mxu0 0.0
      %458 = vmatpush1.msra.mxu0 0.0
      %459 = vmatprep.mubr.f32.mxu0 0.0
      %460 = vmatmul.mubr.f32.gmra.mrb[0].mxu0 %v230
      %v461 = vpop.f32.mrb[0].mxu0
      %v462 = vadd.f32 %v309, %v461
      %v463 = vpop.f32.mrb[0].mxu0
      %v464 = vadd.f32 %v313, %v463
      %465 = vmatprep.mubr.f32.mxu0 0.0
      %466 = vmatmul.mubr.f32.gmra.mrb[0].mxu0 %v231
      %v467 = vpop.f32.mrb[0].mxu0
      %v468 = vadd.f32 %v309, %v467
      %v469 = vpop.f32.mrb[0].mxu0
      %v470 = vadd.f32 %v313, %v469
      %471 = vdwg.mxu0
      %v472 = vmax.f32 %v385, 0.0
      %v473 = vmax.f32 %v387, 0.0
      %v474 = vmax.f32 %v391, 0.0
      %v475 = vmax.f32 %v393, 0.0
      %v476 = vld [vmem:[%s3] sm:$0xff]
      %v477 = vld [vmem:[%s3 + $0x8] sm:$0xff]
      %v478 = vld [vmem:[%s3 + $0x10] sm:$0xff]
      %v479 = vld [vmem:[%s3 + $0x18] sm:$0xff]
      %v480 = vld [vmem:[%s3 + $0x20] sm:$0xff]
      %v481 = vld [vmem:[%s3 + $0x28] sm:$0xff]
      %v482 = vld [vmem:[%s3 + $0x30] sm:$0xff]
      %v483 = vld [vmem:[%s3 + $0x38] sm:$0xff]
      %v484 = vld [vmem:[%s3 + $0x40] sm:$0xff]
      %v485 = vld [vmem:[%s3 + $0x48] sm:$0xff]
      %v486 = vld [vmem:[%s3 + $0x50] sm:$0xff]
      %v487 = vld [vmem:[%s3 + $0x58] sm:$0xff]
      %v488 = vld [vmem:[%s3 + $0x60] sm:$0xff]
      %v489 = vld [vmem:[%s3 + $0x68] sm:$0xff]
      %v490 = vld [vmem:[%s3 + $0x70] sm:$0xff]
      %v491 = vld [vmem:[%s3 + $0x78] sm:$0xff]
      %v492 = vld [vmem:[%s3 + $0x80] sm:$0xff]
      %v493 = vld [vmem:[%s3 + $0x88] sm:$0xff]
      %v494 = vld [vmem:[%s3 + $0x90] sm:$0xff]
      %v495 = vld [vmem:[%s3 + $0x98] sm:$0xff]
      %v496 = vld [vmem:[%s3 + $0xa0] sm:$0xff]
      %v497 = vld [vmem:[%s3 + $0xa8] sm:$0xff]
      %v498 = vld [vmem:[%s3 + $0xb0] sm:$0xff]
      %v499 = vld [vmem:[%s3 + $0xb8] sm:$0xff]
      %v500 = vld [vmem:[%s3 + $0xc0] sm:$0xff]
      %v501 = vld [vmem:[%s3 + $0xc8] sm:$0xff]
      %v502 = vld [vmem:[%s3 + $0xd0] sm:$0xff]
      %v503 = vld [vmem:[%s3 + $0xd8] sm:$0xff]
      %v504 = vld [vmem:[%s3 + $0xe0] sm:$0xff]
      %v505 = vld [vmem:[%s3 + $0xe8] sm:$0xff]
      %v506 = vld [vmem:[%s3 + $0xf0] sm:$0xff]
      %v507 = vld [vmem:[%s3 + $0xf8] sm:$0xff]
      %v508 = vld [vmem:[%s3 + $0x100] sm:$0xff]
      %v509 = vld [vmem:[%s3 + $0x108] sm:$0xff]
      %v510 = vld [vmem:[%s3 + $0x110] sm:$0xff]
      %v511 = vld [vmem:[%s3 + $0x118] sm:$0xff]
      %v512 = vld [vmem:[%s3 + $0x120] sm:$0xff]
      %v513 = vld [vmem:[%s3 + $0x128] sm:$0xff]
      %v514 = vld [vmem:[%s3 + $0x130] sm:$0xff]
      %v515 = vld [vmem:[%s3 + $0x138] sm:$0xff]
      %v516 = vld [vmem:[%s3 + $0x140] sm:$0xff]
      %v517 = vld [vmem:[%s3 + $0x148] sm:$0xff]
      %v518 = vld [vmem:[%s3 + $0x150] sm:$0xff]
      %v519 = vld [vmem:[%s3 + $0x158] sm:$0xff]
      %v520 = vld [vmem:[%s3 + $0x160] sm:$0xff]
      %v521 = vld [vmem:[%s3 + $0x168] sm:$0xff]
      %v522 = vld [vmem:[%s3 + $0x170] sm:$0xff]
      %v523 = vld [vmem:[%s3 + $0x178] sm:$0xff]
      %v524 = vld [vmem:[%s3 + $0x180] sm:$0xff]
      %v525 = vld [vmem:[%s3 + $0x188] sm:$0xff]
      %v526 = vld [vmem:[%s3 + $0x190] sm:$0xff]
      %v527 = vld [vmem:[%s3 + $0x198] sm:$0xff]
      %v528 = vld [vmem:[%s3 + $0x1a0] sm:$0xff]
      %v529 = vld [vmem:[%s3 + $0x1a8] sm:$0xff]
      %v530 = vld [vmem:[%s3 + $0x1b0] sm:$0xff]
      %v531 = vld [vmem:[%s3 + $0x1b8] sm:$0xff]
      %v532 = vld [vmem:[%s3 + $0x1c0] sm:$0xff]
      %v533 = vld [vmem:[%s3 + $0x1c8] sm:$0xff]
      %v534 = vld [vmem:[%s3 + $0x1d0] sm:$0xff]
      %v535 = vld [vmem:[%s3 + $0x1d8] sm:$0xff]
      %v536 = vld [vmem:[%s3 + $0x1e0] sm:$0xff]
      %v537 = vld [vmem:[%s3 + $0x1e8] sm:$0xff]
      %v538 = vld [vmem:[%s3 + $0x1f0] sm:$0xff]
      %v539 = vld [vmem:[%s3 + $0x1f8] sm:$0xff]
      %v540 = vld [vmem:[%s4] sm:$0x3]
      %v542 = vlaneseq
      %v543 = vshrl.u32 %v542, 7
      %v544 = vsub.s32 0, %v543
      %v545 = vrot.slane %v540, %v544
      %v546 = vlaneseq
      %v547 = vshrl.u32 %v546, 7
      %v548 = vsub.s32 1, %v547
      %v549 = vrot.slane %v540, %v548
      %552 = vmatprep.subr.mxu0 %v477
      %553 = vmatpush1.msra.mxu0 %v476
      %554 = vmatprep.subr.mxu0 %v479
      %555 = vmatpush1.msra.mxu0 %v478
      %556 = vmatprep.subr.mxu0 %v481
      %557 = vmatpush1.msra.mxu0 %v480
      %558 = vmatprep.subr.mxu0 %v483
      %559 = vmatpush1.msra.mxu0 %v482
      %560 = vmatprep.subr.mxu0 %v485
      %561 = vmatpush1.msra.mxu0 %v484
      %562 = vmatprep.subr.mxu0 %v487
      %563 = vmatpush1.msra.mxu0 %v486
      %564 = vmatprep.subr.mxu0 %v489
      %565 = vmatpush1.msra.mxu0 %v488
      %566 = vmatprep.subr.mxu0 %v491
      %567 = vmatpush1.msra.mxu0 %v490
      %568 = vmatprep.subr.mxu0 %v493
      %569 = vmatpush1.msra.mxu0 %v492
      %570 = vmatprep.subr.mxu0 %v495
      %571 = vmatpush1.msra.mxu0 %v494
      %572 = vmatprep.subr.mxu0 %v497
      %573 = vmatpush1.msra.mxu0 %v496
      %574 = vmatprep.subr.mxu0 %v499
      %575 = vmatpush1.msra.mxu0 %v498
      %576 = vmatprep.subr.mxu0 %v501
      %577 = vmatpush1.msra.mxu0 %v500
      %578 = vmatprep.subr.mxu0 %v503
      %579 = vmatpush1.msra.mxu0 %v502
      %580 = vmatprep.subr.mxu0 %v505
      %581 = vmatpush1.msra.mxu0 %v504
      %582 = vmatprep.subr.mxu0 %v507
      %583 = vmatpush1.msra.mxu0 %v506
      %584 = vmatprep.subr.mxu0 %v509
      %585 = vmatpush1.msra.mxu0 %v508
      %586 = vmatprep.subr.mxu0 %v511
      %587 = vmatpush1.msra.mxu0 %v510
      %588 = vmatprep.subr.mxu0 %v513
      %589 = vmatpush1.msra.mxu0 %v512
      %590 = vmatprep.subr.mxu0 %v515
      %591 = vmatpush1.msra.mxu0 %v514
      %592 = vmatprep.subr.mxu0 %v517
      %593 = vmatpush1.msra.mxu0 %v516
      %594 = vmatprep.subr.mxu0 %v519
      %595 = vmatpush1.msra.mxu0 %v518
      %596 = vmatprep.subr.mxu0 %v521
      %597 = vmatpush1.msra.mxu0 %v520
      %598 = vmatprep.subr.mxu0 %v523
      %599 = vmatpush1.msra.mxu0 %v522
      %600 = vmatprep.subr.mxu0 %v525
      %601 = vmatpush1.msra.mxu0 %v524
      %602 = vmatprep.subr.mxu0 %v527
      %603 = vmatpush1.msra.mxu0 %v526
      %604 = vmatprep.subr.mxu0 %v529
      %605 = vmatpush1.msra.mxu0 %v528
      %606 = vmatprep.subr.mxu0 %v531
      %607 = vmatpush1.msra.mxu0 %v530
      %608 = vmatprep.subr.mxu0 %v533
      %609 = vmatpush1.msra.mxu0 %v532
      %610 = vmatprep.subr.mxu0 %v535
      %611 = vmatpush1.msra.mxu0 %v534
      %612 = vmatprep.subr.mxu0 %v537
      %613 = vmatpush1.msra.mxu0 %v536
      %614 = vmatprep.subr.mxu0 %v539
      %615 = vmatpush1.msra.mxu0 %v538
      %616 = vmatprep.mubr.f32.mxu0 %v473
      %617 = vmatmul.mubr.f32.gmra.mrb[0].mxu0 %v472
      %v618 = vpop.f32.mrb[0].mxu0
      %v619 = vadd.f32 %v545, %v618
      %v620 = vpop.f32.mrb[0].mxu0
      %v621 = vadd.f32 %v549, %v620
      %622 = vmatprep.mubr.f32.mxu0 %v475
      %623 = vmatmul.mubr.f32.gmra.mrb[0].mxu0 %v474
      %v624 = vpop.f32.mrb[0].mxu0
      %v625 = vadd.f32 %v545, %v624
      %v626 = vpop.f32.mrb[0].mxu0
      %v627 = vadd.f32 %v549, %v626
      %628 = vdwg.mxu0
      %v629 = vadd.f32 %v619, %v462
      %v630 = vadd.f32 %v621, %v464
      %v631 = vadd.f32 %v625, %v468
      %v632 = vadd.f32 %v627, %v470
      %v633 = vmax.f32 %v629, 0.0
      %v634 = vmax.f32 %v630, 0.0
      %v635 = vmax.f32 %v631, 0.0
      %v636 = vmax.f32 %v632, 0.0
      %v637 = vmax.f32 %v633, 0.0
      %v638 = vmax.f32 %v634, 0.0
      %v639 = vmax.f32 %v635, 0.0
      %v640 = vmax.f32 %v636, 0.0
      %641 = vst [vmem:[%s228] sm:$0xff] %v637
      %642 = vst [vmem:[%s228 + $0x8] sm:$0xff] %v638
      %643 = vst [vmem:[%s228 + $0x10] sm:$0xff] %v639
      %644 = vst [vmem:[%s228 + $0x18] sm:$0xff] %v640
      %s645 = smul.u32 2, %s16
      %p646 = scmp.lt.s32.totalorder %s645, 3
      %s647 = scalar_select %p646, %s645, 3
      %s648 = smul.addr %s647, 2
      %s649 = smul.addr %s648, 8
      %s650 = scalar_lea.vmem %s5, %s649
      // Predicated region
      $region41: #{generator1_forward.18} parent=39 // pred_check
        %p651 = pneg %p144
      $region42: #{generator1_forward.18} parent=39 // pred_check_branch
        %653 = sbr.rel (%p651) target = $region44
      $region43: #{generator1_forward.18} parent=39 // pred_region
        %s654 = smul.u32 2, %s16
      $region44: #{generator1_forward.18} parent=39 // pred_fallthru
        _
    $region40: #{generator1_forward.18} parent=5 // pred_fallthru
      _
    %p655 = scmp.le.s32.totalorder 2, %s11
    // Predicated region
    $region45: #{generator1_forward.18} parent=5 // pred_check
      %p656 = pneg %p655
    $region46: #{generator1_forward.18} parent=5 // pred_check_branch
      %658 = sbr.rel (%p656) target = $region48
    $region47: #{generator1_forward.18} parent=5 // pred_region
      %s659 = ssub.s32 %s11, 2
      // Predicated region
      $region49: #{generator1_forward.18} parent=47 // pred_check
        %p660 = pneg %p150
      $region50: #{generator1_forward.18} parent=47 // pred_check_branch
        %662 = sbr.rel (%p660) target = $region52
      $region51: #{generator1_forward.18} parent=47 // pred_region
        %s663 = smul.u32 2, %s17
        %p664 = scmp.lt.s32.totalorder %s663, 3
        %s665 = scalar_select %p664, %s663, 3
        %s666 = smul.addr %s665, 2
        %s667 = smul.addr %s666, 8
        %s668 = scalar_lea.vmem %s5, %s667
      $region52: #{generator1_forward.18} parent=47 // pred_fallthru
        _
    $region48: #{generator1_forward.18} parent=5 // pred_fallthru
      _
  $region6: #{generator1_forward.18} parent=0 // loop_footer
    %s15 = sadd.s32 1, %s11
  $region7: #{generator1_forward.18} parent=0 // loop_footer_branch
    %10 = sbr.rel target = $region3
  $region8: #{generator1_forward.18} parent=0 // loop_exit
    _

// kernel: generator1_forward.21
$region0: #{generator1_forward.21}
  #allocation0 [shape = 'u32[]', space=smem, size = 0x4, offset = 0x4, fixed_abs, tag = 'smem constant byte address 0x4 - core index']
  #allocation1 [shape = 'u32[144,128]{1,0:T(1,128)}', space=vmem, size = 0x12000, scoped, tag = 'internal scratch']
  %s0 = inlined_call_operand.vmem [shape: f32[32,256], index: 0, kind: input, shape index: {}]
  %s1 = inlined_call_operand.vmem [shape: f32[256,4], index: 1, kind: input, shape index: {}]
  %s2 = inlined_call_operand.vmem [shape: f32[1,4], index: 2, kind: input, shape index: {}]
  %s3 = inlined_call_operand.vmem [shape: f32[32,4], index: 3, kind: output, shape index: {}]
  %s4 = sld [smem:[#allocation0]]
  $region45: #{generator1_forward.21} parent=0
    _
  %s6 = ssub.s32 1, %s4
  %s7 = scalar_select 0, %s6, %s4
  loop: start=0, step=1, limit=4
  $region2: #{generator1_forward.21} parent=0 // loop_pre_header
    _
  $region3: #{generator1_forward.21} parent=0 // loop_header
    %s9 = sphi 0, %s13
    %p10 = scmp.ge.s32.totalorder %s9, 4
    %s19 = sphi 0, %s21
    %s22 = sphi 0, %s19
    %s23 = sphi 0, %s22
    %s39 = sphi 0, %s23
    %s43 = sphi 0, %s43
    %s45 = sphi 0, %s43
    %s46 = sphi 0, %s45
    %s60 = sphi 0, %s46
    %s64 = sphi 0, %s64
    %s66 = sphi 0, %s64
    %s67 = sphi 0, %s66
    %s81 = sphi 0, %s67
    %s87 = sphi 0, %s89
    %s90 = sphi 0, %s87
    %s91 = sphi 0, %s90
    %s107 = sphi 0, %s91
  $region4: #{generator1_forward.21} parent=0 // loop_header_branch
    %12 = sbr.rel (%p10) target = $region8
  $region5: #{generator1_forward.21} parent=0 // loop_body
    %s14 = ssub.s32 %s9, 1
    %s15 = ssub.s32 %s9, 2
    %s16 = sadd.s32 %s9, 1
    %s17 = ssub.s32 %s9, %s16
    %p18 = scmp.eq.s32.totalorder %s17, 0
    %s20 = sadd.s32 %s19, 1
    %s21 = scalar_select %p18, %s19, %s20
    %p24 = pneg %p18
    %p25 = scmp.eq.s32.totalorder %s9, 1
    %p26 = por %p24, %p25
    %p27 = scmp.ne.s32.totalorder %s19, %s22
    %p28 = scmp.eq.s32.totalorder %s9, 0
    %p29 = por %p27, %p28
    %p30 = scmp.ne.s32.totalorder %s19, %s22
    %p31 = scmp.eq.s32.totalorder %s14, 1
    %p32 = por %p30, %p31
    %p33 = scmp.ne.s32.totalorder %s22, %s23
    %p34 = scmp.eq.s32.totalorder %s14, 0
    %p35 = por %p33, %p34
    %p36 = scmp.ne.s32.totalorder %s22, %s23
    %p37 = scmp.eq.s32.totalorder %s15, 1
    %p38 = por %p36, %p37
    %p40 = scmp.ne.s32.totalorder %s23, %s39
    %p41 = scmp.eq.s32.totalorder %s15, 0
    %p42 = por %p40, %p41
    %s44 = sadd.s32 %s43, 1
    %p47 = scmp.eq.s32.totalorder %s9, 1
    %p48 = scmp.ne.s32.totalorder %s43, %s45
    %p49 = scmp.eq.s32.totalorder %s9, 0
    %p50 = por %p48, %p49
    %p51 = scmp.ne.s32.totalorder %s43, %s45
    %p52 = scmp.eq.s32.totalorder %s14, 1
    %p53 = por %p51, %p52
    %p54 = scmp.ne.s32.totalorder %s45, %s46
    %p55 = scmp.eq.s32.totalorder %s14, 0
    %p56 = por %p54, %p55
    %p57 = scmp.ne.s32.totalorder %s45, %s46
    %p58 = scmp.eq.s32.totalorder %s15, 1
    %p59 = por %p57, %p58
    %p61 = scmp.ne.s32.totalorder %s46, %s60
    %p62 = scmp.eq.s32.totalorder %s15, 0
    %p63 = por %p61, %p62
    %s65 = sadd.s32 %s64, 1
    %p68 = scmp.eq.s32.totalorder %s9, 1
    %p69 = scmp.ne.s32.totalorder %s64, %s66
    %p70 = scmp.eq.s32.totalorder %s9, 0
    %p71 = por %p69, %p70
    %p72 = scmp.ne.s32.totalorder %s64, %s66
    %p73 = scmp.eq.s32.totalorder %s14, 1
    %p74 = por %p72, %p73
    %p75 = scmp.ne.s32.totalorder %s66, %s67
    %p76 = scmp.eq.s32.totalorder %s14, 0
    %p77 = por %p75, %p76
    %p78 = scmp.ne.s32.totalorder %s66, %s67
    %p79 = scmp.eq.s32.totalorder %s15, 1
    %p80 = por %p78, %p79
    %p82 = scmp.ne.s32.totalorder %s67, %s81
    %p83 = scmp.eq.s32.totalorder %s15, 0
    %p84 = por %p82, %p83
    %s85 = ssub.s32 %s9, %s16
    %p86 = scmp.eq.s32.totalorder %s85, 0
    %s88 = sadd.s32 %s87, 1
    %s89 = scalar_select %p86, %s87, %s88
    %p92 = pneg %p86
    %p93 = scmp.eq.s32.totalorder %s9, 1
    %p94 = por %p92, %p93
    %p95 = scmp.ne.s32.totalorder %s87, %s90
    %p96 = scmp.eq.s32.totalorder %s9, 0
    %p97 = por %p95, %p96
    %p98 = scmp.ne.s32.totalorder %s87, %s90
    %p99 = scmp.eq.s32.totalorder %s14, 1
    %p100 = por %p98, %p99
    %p101 = scmp.ne.s32.totalorder %s90, %s91
    %p102 = scmp.eq.s32.totalorder %s14, 0
    %p103 = por %p101, %p102
    %p104 = scmp.ne.s32.totalorder %s90, %s91
    %p105 = scmp.eq.s32.totalorder %s15, 1
    %p106 = por %p104, %p105
    %p108 = scmp.ne.s32.totalorder %s91, %s107
    %p109 = scmp.eq.s32.totalorder %s15, 0
    %p110 = por %p108, %p109
    %p111 = scmp.le.s32.totalorder 1, %s9
    %p112 = scmp.lt.s32.totalorder %s9, 3
    %p113 = pnand %p111, %p112
    %p114 = pneg %p113
    // Predicated region
    $region9: #{generator1_forward.21} parent=5 // pred_check
      _
    $region10: #{generator1_forward.21} parent=5 // pred_check_branch
      %116 = sbr.rel (%p113) target = $region12
    $region11: #{generator1_forward.21} parent=5 // pred_region
      %s117 = ssub.s32 %s9, 1
      // Predicated region
      $region13: #{generator1_forward.21} parent=11 // pred_check
        %p118 = pneg %p56
      $region14: #{generator1_forward.21} parent=11 // pred_check_branch
        %120 = sbr.rel (%p118) target = $region16
      $region15: #{generator1_forward.21} parent=11 // pred_region
        _
      $region16: #{generator1_forward.21} parent=11 // pred_fallthru
        _
      // Predicated region
      $region17: #{generator1_forward.21} parent=11 // pred_check
        %p121 = pneg %p77
      $region18: #{generator1_forward.21} parent=11 // pred_check_branch
        %123 = sbr.rel (%p121) target = $region20
      $region19: #{generator1_forward.21} parent=11 // pred_region
        _
      $region20: #{generator1_forward.21} parent=11 // pred_fallthru
        _
    $region12: #{generator1_forward.21} parent=5 // pred_fallthru
      _
    %p124 = scmp.lt.s32.totalorder %s9, 2
    // Predicated region
    $region21: #{generator1_forward.21} parent=5 // pred_check
      %p125 = pneg %p124
    $region22: #{generator1_forward.21} parent=5 // pred_check_branch
      %127 = sbr.rel (%p125) target = $region24
    $region23: #{generator1_forward.21} parent=5 // pred_region
      // Predicated region
      $region25: #{generator1_forward.21} parent=23 // pred_check
        %p128 = pneg %p29
      $region26: #{generator1_forward.21} parent=23 // pred_check_branch
        %130 = sbr.rel (%p128) target = $region28
      $region27: #{generator1_forward.21} parent=23 // pred_region
        %s131 = smul.u32 2, %s9
        %p132 = scmp.lt.s32.totalorder %s131, 3
        %s133 = scalar_select %p132, %s131, 3
        %s134 = smul.addr %s133, 2
        %s135 = smul.addr %s134, 8
        %s136 = scalar_lea.vmem %s0, %s135
        %s137 = smul.u32 2, %s9
      $region28: #{generator1_forward.21} parent=23 // pred_fallthru
        _
    $region24: #{generator1_forward.21} parent=5 // pred_fallthru
      _
    %p138 = scmp.le.s32.totalorder 1, %s9
    %p139 = scmp.lt.s32.totalorder %s9, 3
    %p140 = pnand %p138, %p139
    %p141 = pneg %p140
    // Predicated region
    $region29: #{generator1_forward.21} parent=5 // pred_check
      _
    $region30: #{generator1_forward.21} parent=5 // pred_check_branch
      %143 = sbr.rel (%p140) target = $region32
    $region31: #{generator1_forward.21} parent=5 // pred_region
      %s144 = ssub.s32 %s9, 1
      %s145 = smul.u32 2, %s14
      %p146 = scmp.lt.s32.totalorder %s145, 3
      %s147 = scalar_select %p146, %s145, 3
      %s148 = smul.addr %s147, 2
      %s149 = smul.addr %s148, 8
      %s150 = scalar_lea.vmem %s0, %s149
      %p151 = pneg %p35
      %p152 = pneg %p32
      %p153 = pneg %p56
      %p154 = pneg %p53
      %p155 = pneg %p77
      %p156 = pneg %p74
      %p157 = pneg %p103
      %p158 = pneg %p100
      %s159 = smul.u32 2, %s14
      %p160 = scmp.lt.s32.totalorder %s159, 3
      %s161 = scalar_select %p160, %s159, 3
      %s162 = smul.addr %s161, 8
      %s163 = scalar_lea.vmem %s3, %s162
      %s164 = smul.u32 2, %s14
      %p165 = scmp.lt.s32.totalorder %s164, 3
      %s166 = scalar_select %p165, %s164, 3
      %s167 = smul.addr %s166, 2
      %s168 = smul.addr %s167, 8
      %s169 = scalar_lea.vmem %s0, %s168
      %s170 = smul.u32 2, %s14
      %s171 = smul.u32 2, %s14
      %p172 = scmp.lt.s32.totalorder %s171, 3
      %s173 = scalar_select %p172, %s171, 3
      %s174 = smul.addr %s173, 8
      %s175 = scalar_lea.vmem %s3, %s174
      %s176 = smul.u32 2, %s14
      %v177 = vld [vmem:[%s169] sm:$0xff]
      %v178 = vld [vmem:[%s169 + $0x8] sm:$0xff]
      %v179 = vld [vmem:[%s169 + $0x10] sm:$0xff]
      %v180 = vld [vmem:[%s169 + $0x18] sm:$0xff]
      %v181 = vld [vmem:[%s1] sm:$0xff]
      %v182 = vld [vmem:[%s1 + $0x8] sm:$0xff]
      %v183 = vld [vmem:[%s1 + $0x10] sm:$0xff]
      %v184 = vld [vmem:[%s1 + $0x18] sm:$0xff]
      %v185 = vld [vmem:[%s1 + $0x20] sm:$0xff]
      %v186 = vld [vmem:[%s1 + $0x28] sm:$0xff]
      %v187 = vld [vmem:[%s1 + $0x30] sm:$0xff]
      %v188 = vld [vmem:[%s1 + $0x38] sm:$0xff]
      %v189 = vld [vmem:[%s1 + $0x40] sm:$0xff]
      %v190 = vld [vmem:[%s1 + $0x48] sm:$0xff]
      %v191 = vld [vmem:[%s1 + $0x50] sm:$0xff]
      %v192 = vld [vmem:[%s1 + $0x58] sm:$0xff]
      %v193 = vld [vmem:[%s1 + $0x60] sm:$0xff]
      %v194 = vld [vmem:[%s1 + $0x68] sm:$0xff]
      %v195 = vld [vmem:[%s1 + $0x70] sm:$0xff]
      %v196 = vld [vmem:[%s1 + $0x78] sm:$0xff]
      %v197 = vld [vmem:[%s1 + $0x80] sm:$0xff]
      %v198 = vld [vmem:[%s1 + $0x88] sm:$0xff]
      %v199 = vld [vmem:[%s1 + $0x90] sm:$0xff]
      %v200 = vld [vmem:[%s1 + $0x98] sm:$0xff]
      %v201 = vld [vmem:[%s1 + $0xa0] sm:$0xff]
      %v202 = vld [vmem:[%s1 + $0xa8] sm:$0xff]
      %v203 = vld [vmem:[%s1 + $0xb0] sm:$0xff]
      %v204 = vld [vmem:[%s1 + $0xb8] sm:$0xff]
      %v205 = vld [vmem:[%s1 + $0xc0] sm:$0xff]
      %v206 = vld [vmem:[%s1 + $0xc8] sm:$0xff]
      %v207 = vld [vmem:[%s1 + $0xd0] sm:$0xff]
      %v208 = vld [vmem:[%s1 + $0xd8] sm:$0xff]
      %v209 = vld [vmem:[%s1 + $0xe0] sm:$0xff]
      %v210 = vld [vmem:[%s1 + $0xe8] sm:$0xff]
      %v211 = vld [vmem:[%s1 + $0xf0] sm:$0xff]
      %v212 = vld [vmem:[%s1 + $0xf8] sm:$0xff]
      %v213 = vld [vmem:[%s2] sm:$0x1]
      %v215 = vlaneseq
      %v216 = vshrl.u32 %v215, 7
      %v217 = vsub.s32 0, %v216
      %v218 = vrot.slane %v213, %v217
      %220 = vmatprep.subr.mxu0 0.0
      %221 = vmatpush1.msra.mxu0 %v181
      %222 = vmatprep.subr.mxu0 0.0
      %223 = vmatpush1.msra.mxu0 %v182
      %224 = vmatprep.subr.mxu0 0.0
      %225 = vmatpush1.msra.mxu0 %v183
      %226 = vmatprep.subr.mxu0 0.0
      %227 = vmatpush1.msra.mxu0 %v184
      %228 = vmatprep.subr.mxu0 0.0
      %229 = vmatpush1.msra.mxu0 %v185
      %230 = vmatprep.subr.mxu0 0.0
      %231 = vmatpush1.msra.mxu0 %v186
      %232 = vmatprep.subr.mxu0 0.0
      %233 = vmatpush1.msra.mxu0 %v187
      %234 = vmatprep.subr.mxu0 0.0
      %235 = vmatpush1.msra.mxu0 %v188
      %236 = vmatprep.subr.mxu0 0.0
      %237 = vmatpush1.msra.mxu0 %v189
      %238 = vmatprep.subr.mxu0 0.0
      %239 = vmatpush1.msra.mxu0 %v190
      %240 = vmatprep.subr.mxu0 0.0
      %241 = vmatpush1.msra.mxu0 %v191
      %242 = vmatprep.subr.mxu0 0.0
      %243 = vmatpush1.msra.mxu0 %v192
      %244 = vmatprep.subr.mxu0 0.0
      %245 = vmatpush1.msra.mxu0 %v193
      %246 = vmatprep.subr.mxu0 0.0
      %247 = vmatpush1.msra.mxu0 %v194
      %248 = vmatprep.subr.mxu0 0.0
      %249 = vmatpush1.msra.mxu0 %v195
      %250 = vmatprep.subr.mxu0 0.0
      %251 = vmatpush1.msra.mxu0 %v196
      %252 = vmatprep.subr.mxu0 0.0
      %253 = vmatpush1.msra.mxu0 %v197
      %254 = vmatprep.subr.mxu0 0.0
      %255 = vmatpush1.msra.mxu0 %v198
      %256 = vmatprep.subr.mxu0 0.0
      %257 = vmatpush1.msra.mxu0 %v199
      %258 = vmatprep.subr.mxu0 0.0
      %259 = vmatpush1.msra.mxu0 %v200
      %260 = vmatprep.subr.mxu0 0.0
      %261 = vmatpush1.msra.mxu0 %v201
      %262 = vmatprep.subr.mxu0 0.0
      %263 = vmatpush1.msra.mxu0 %v202
      %264 = vmatprep.subr.mxu0 0.0
      %265 = vmatpush1.msra.mxu0 %v203
      %266 = vmatprep.subr.mxu0 0.0
      %267 = vmatpush1.msra.mxu0 %v204
      %268 = vmatprep.subr.mxu0 0.0
      %269 = vmatpush1.msra.mxu0 %v205
      %270 = vmatprep.subr.mxu0 0.0
      %271 = vmatpush1.msra.mxu0 %v206
      %272 = vmatprep.subr.mxu0 0.0
      %273 = vmatpush1.msra.mxu0 %v207
      %274 = vmatprep.subr.mxu0 0.0
      %275 = vmatpush1.msra.mxu0 %v208
      %276 = vmatprep.subr.mxu0 0.0
      %277 = vmatpush1.msra.mxu0 %v209
      %278 = vmatprep.subr.mxu0 0.0
      %279 = vmatpush1.msra.mxu0 %v210
      %280 = vmatprep.subr.mxu0 0.0
      %281 = vmatpush1.msra.mxu0 %v211
      %282 = vmatprep.subr.mxu0 0.0
      %283 = vmatpush1.msra.mxu0 %v212
      %284 = vmatprep.mubr.f32.mxu0 %v178
      %285 = vmatmul.mubr.f32.gmra.mrb[0].mxu0 %v177
      %v286 = vpop.f32.mrb[0].mxu0
      %v287 = vadd.f32 %v218, %v286
      %v288 = vpop.f32.mrb[0].mxu0
      %289 = vmatprep.mubr.f32.mxu0 %v180
      %290 = vmatmul.mubr.f32.gmra.mrb[0].mxu0 %v179
      %v291 = vpop.f32.mrb[0].mxu0
      %v292 = vadd.f32 %v218, %v291
      %v293 = vpop.f32.mrb[0].mxu0
      %294 = vdwg.mxu0
      %v295 = vtanh.pop %v287
      %v296 = vtanh.pop %v292
      %v297 = vadd.f32 %v295, 1.0
      %v298 = vadd.f32 %v296, 1.0
      %v299 = vmul.f32 %v297, 5.0
      %v300 = vmul.f32 %v298, 5.0
      %v301 = vadd.f32 %v299, 0.0
      %v302 = vadd.f32 %v300, 0.0
      %vm303 = vcmask 31744
      %304 = vst.msk [vmem:[%s175] sm:$0xff] %vm303, %v301
      %305 = vst.msk [vmem:[%s175 + $0x8] sm:$0xff] %vm303, %v302
      %s306 = smul.u32 2, %s14
      %p307 = scmp.lt.s32.totalorder %s306, 3
      %s308 = scalar_select %p307, %s306, 3
      %s309 = smul.addr %s308, 8
      %s310 = scalar_lea.vmem %s3, %s309
      // Predicated region
      $region33: #{generator1_forward.21} parent=31 // pred_check
        %p311 = pneg %p100
      $region34: #{generator1_forward.21} parent=31 // pred_check_branch
        %313 = sbr.rel (%p311) target = $region36
      $region35: #{generator1_forward.21} parent=31 // pred_region
        %s314 = smul.u32 2, %s14
      $region36: #{generator1_forward.21} parent=31 // pred_fallthru
        _
    $region32: #{generator1_forward.21} parent=5 // pred_fallthru
      _
    %p315 = scmp.le.s32.totalorder 2, %s9
    // Predicated region
    $region37: #{generator1_forward.21} parent=5 // pred_check
      %p316 = pneg %p315
    $region38: #{generator1_forward.21} parent=5 // pred_check_branch
      %318 = sbr.rel (%p316) target = $region40
    $region39: #{generator1_forward.21} parent=5 // pred_region
      %s319 = ssub.s32 %s9, 2
      // Predicated region
      $region41: #{generator1_forward.21} parent=39 // pred_check
        %p320 = pneg %p106
      $region42: #{generator1_forward.21} parent=39 // pred_check_branch
        %322 = sbr.rel (%p320) target = $region44
      $region43: #{generator1_forward.21} parent=39 // pred_region
        %s323 = smul.u32 2, %s15
        %p324 = scmp.lt.s32.totalorder %s323, 3
        %s325 = scalar_select %p324, %s323, 3
        %s326 = smul.addr %s325, 8
        %s327 = scalar_lea.vmem %s3, %s326
      $region44: #{generator1_forward.21} parent=39 // pred_fallthru
        _
    $region40: #{generator1_forward.21} parent=5 // pred_fallthru
      _
  $region6: #{generator1_forward.21} parent=0 // loop_footer
    %s13 = sadd.s32 1, %s9
  $region7: #{generator1_forward.21} parent=0 // loop_footer_branch
    %8 = sbr.rel target = $region3
  $region8: #{generator1_forward.21} parent=0 // loop_exit
    _

// kernel: generator1_forward.20
$region0: #{generator1_forward.20}
  #allocation0 [shape = 'u32[]', space=smem, size = 0x4, offset = 0x4, fixed_abs, tag = 'smem constant byte address 0x4 - core index']
  #allocation1 [shape = 'u32[144,128]{1,0:T(1,128)}', space=vmem, size = 0x12000, scoped, tag = 'internal scratch']
  %s0 = inlined_call_operand.vmem [shape: f32[32,512], index: 0, kind: input, shape index: {}]
  %s1 = inlined_call_operand.vmem [shape: f32[512,256], index: 1, kind: input, shape index: {}]
  %s2 = inlined_call_operand.vmem [shape: f32[1,256], index: 2, kind: input, shape index: {}]
  %s3 = inlined_call_operand.vmem [shape: f32[32,256], index: 3, kind: output, shape index: {}]
  %s4 = sld [smem:[#allocation0]]
  $region45: #{generator1_forward.20} parent=0
    _
  %s6 = ssub.s32 1, %s4
  %s7 = scalar_select 0, %s6, %s4
  loop: start=0, step=1, limit=4
  $region2: #{generator1_forward.20} parent=0 // loop_pre_header
    _
  $region3: #{generator1_forward.20} parent=0 // loop_header
    %s9 = sphi 0, %s13
    %p10 = scmp.ge.s32.totalorder %s9, 4
    %s19 = sphi 0, %s21
    %s22 = sphi 0, %s19
    %s23 = sphi 0, %s22
    %s39 = sphi 0, %s23
    %s43 = sphi 0, %s43
    %s45 = sphi 0, %s43
    %s46 = sphi 0, %s45
    %s60 = sphi 0, %s46
    %s64 = sphi 0, %s64
    %s66 = sphi 0, %s64
    %s67 = sphi 0, %s66
    %s81 = sphi 0, %s67
    %s87 = sphi 0, %s89
    %s90 = sphi 0, %s87
    %s91 = sphi 0, %s90
    %s107 = sphi 0, %s91
  $region4: #{generator1_forward.20} parent=0 // loop_header_branch
    %12 = sbr.rel (%p10) target = $region8
  $region5: #{generator1_forward.20} parent=0 // loop_body
    %s14 = ssub.s32 %s9, 1
    %s15 = ssub.s32 %s9, 2
    %s16 = sadd.s32 %s9, 1
    %s17 = ssub.s32 %s9, %s16
    %p18 = scmp.eq.s32.totalorder %s17, 0
    %s20 = sadd.s32 %s19, 1
    %s21 = scalar_select %p18, %s19, %s20
    %p24 = pneg %p18
    %p25 = scmp.eq.s32.totalorder %s9, 1
    %p26 = por %p24, %p25
    %p27 = scmp.ne.s32.totalorder %s19, %s22
    %p28 = scmp.eq.s32.totalorder %s9, 0
    %p29 = por %p27, %p28
    %p30 = scmp.ne.s32.totalorder %s19, %s22
    %p31 = scmp.eq.s32.totalorder %s14, 1
    %p32 = por %p30, %p31
    %p33 = scmp.ne.s32.totalorder %s22, %s23
    %p34 = scmp.eq.s32.totalorder %s14, 0
    %p35 = por %p33, %p34
    %p36 = scmp.ne.s32.totalorder %s22, %s23
    %p37 = scmp.eq.s32.totalorder %s15, 1
    %p38 = por %p36, %p37
    %p40 = scmp.ne.s32.totalorder %s23, %s39
    %p41 = scmp.eq.s32.totalorder %s15, 0
    %p42 = por %p40, %p41
    %s44 = sadd.s32 %s43, 1
    %p47 = scmp.eq.s32.totalorder %s9, 1
    %p48 = scmp.ne.s32.totalorder %s43, %s45
    %p49 = scmp.eq.s32.totalorder %s9, 0
    %p50 = por %p48, %p49
    %p51 = scmp.ne.s32.totalorder %s43, %s45
    %p52 = scmp.eq.s32.totalorder %s14, 1
    %p53 = por %p51, %p52
    %p54 = scmp.ne.s32.totalorder %s45, %s46
    %p55 = scmp.eq.s32.totalorder %s14, 0
    %p56 = por %p54, %p55
    %p57 = scmp.ne.s32.totalorder %s45, %s46
    %p58 = scmp.eq.s32.totalorder %s15, 1
    %p59 = por %p57, %p58
    %p61 = scmp.ne.s32.totalorder %s46, %s60
    %p62 = scmp.eq.s32.totalorder %s15, 0
    %p63 = por %p61, %p62
    %s65 = sadd.s32 %s64, 1
    %p68 = scmp.eq.s32.totalorder %s9, 1
    %p69 = scmp.ne.s32.totalorder %s64, %s66
    %p70 = scmp.eq.s32.totalorder %s9, 0
    %p71 = por %p69, %p70
    %p72 = scmp.ne.s32.totalorder %s64, %s66
    %p73 = scmp.eq.s32.totalorder %s14, 1
    %p74 = por %p72, %p73
    %p75 = scmp.ne.s32.totalorder %s66, %s67
    %p76 = scmp.eq.s32.totalorder %s14, 0
    %p77 = por %p75, %p76
    %p78 = scmp.ne.s32.totalorder %s66, %s67
    %p79 = scmp.eq.s32.totalorder %s15, 1
    %p80 = por %p78, %p79
    %p82 = scmp.ne.s32.totalorder %s67, %s81
    %p83 = scmp.eq.s32.totalorder %s15, 0
    %p84 = por %p82, %p83
    %s85 = ssub.s32 %s9, %s16
    %p86 = scmp.eq.s32.totalorder %s85, 0
    %s88 = sadd.s32 %s87, 1
    %s89 = scalar_select %p86, %s87, %s88
    %p92 = pneg %p86
    %p93 = scmp.eq.s32.totalorder %s9, 1
    %p94 = por %p92, %p93
    %p95 = scmp.ne.s32.totalorder %s87, %s90
    %p96 = scmp.eq.s32.totalorder %s9, 0
    %p97 = por %p95, %p96
    %p98 = scmp.ne.s32.totalorder %s87, %s90
    %p99 = scmp.eq.s32.totalorder %s14, 1
    %p100 = por %p98, %p99
    %p101 = scmp.ne.s32.totalorder %s90, %s91
    %p102 = scmp.eq.s32.totalorder %s14, 0
    %p103 = por %p101, %p102
    %p104 = scmp.ne.s32.totalorder %s90, %s91
    %p105 = scmp.eq.s32.totalorder %s15, 1
    %p106 = por %p104, %p105
    %p108 = scmp.ne.s32.totalorder %s91, %s107
    %p109 = scmp.eq.s32.totalorder %s15, 0
    %p110 = por %p108, %p109
    %p111 = scmp.le.s32.totalorder 1, %s9
    %p112 = scmp.lt.s32.totalorder %s9, 3
    %p113 = pnand %p111, %p112
    %p114 = pneg %p113
    // Predicated region
    $region9: #{generator1_forward.20} parent=5 // pred_check
      _
    $region10: #{generator1_forward.20} parent=5 // pred_check_branch
      %116 = sbr.rel (%p113) target = $region12
    $region11: #{generator1_forward.20} parent=5 // pred_region
      %s117 = ssub.s32 %s9, 1
      // Predicated region
      $region13: #{generator1_forward.20} parent=11 // pred_check
        %p118 = pneg %p56
      $region14: #{generator1_forward.20} parent=11 // pred_check_branch
        %120 = sbr.rel (%p118) target = $region16
      $region15: #{generator1_forward.20} parent=11 // pred_region
        _
      $region16: #{generator1_forward.20} parent=11 // pred_fallthru
        _
      // Predicated region
      $region17: #{generator1_forward.20} parent=11 // pred_check
        %p121 = pneg %p77
      $region18: #{generator1_forward.20} parent=11 // pred_check_branch
        %123 = sbr.rel (%p121) target = $region20
      $region19: #{generator1_forward.20} parent=11 // pred_region
        _
      $region20: #{generator1_forward.20} parent=11 // pred_fallthru
        _
    $region12: #{generator1_forward.20} parent=5 // pred_fallthru
      _
    %p124 = scmp.lt.s32.totalorder %s9, 2
    // Predicated region
    $region21: #{generator1_forward.20} parent=5 // pred_check
      %p125 = pneg %p124
    $region22: #{generator1_forward.20} parent=5 // pred_check_branch
      %127 = sbr.rel (%p125) target = $region24
    $region23: #{generator1_forward.20} parent=5 // pred_region
      // Predicated region
      $region25: #{generator1_forward.20} parent=23 // pred_check
        %p128 = pneg %p29
      $region26: #{generator1_forward.20} parent=23 // pred_check_branch
        %130 = sbr.rel (%p128) target = $region28
      $region27: #{generator1_forward.20} parent=23 // pred_region
        %s131 = smul.u32 2, %s9
        %p132 = scmp.lt.s32.totalorder %s131, 3
        %s133 = scalar_select %p132, %s131, 3
        %s134 = smul.addr %s133, 4
        %s135 = smul.addr %s134, 8
        %s136 = scalar_lea.vmem %s0, %s135
        %s137 = smul.u32 2, %s9
      $region28: #{generator1_forward.20} parent=23 // pred_fallthru
        _
    $region24: #{generator1_forward.20} parent=5 // pred_fallthru
      _
    %p138 = scmp.le.s32.totalorder 1, %s9
    %p139 = scmp.lt.s32.totalorder %s9, 3
    %p140 = pnand %p138, %p139
    %p141 = pneg %p140
    // Predicated region
    $region29: #{generator1_forward.20} parent=5 // pred_check
      _
    $region30: #{generator1_forward.20} parent=5 // pred_check_branch
      %143 = sbr.rel (%p140) target = $region32
    $region31: #{generator1_forward.20} parent=5 // pred_region
      %s144 = ssub.s32 %s9, 1
      %s145 = smul.u32 2, %s14
      %p146 = scmp.lt.s32.totalorder %s145, 3
      %s147 = scalar_select %p146, %s145, 3
      %s148 = smul.addr %s147, 4
      %s149 = smul.addr %s148, 8
      %s150 = scalar_lea.vmem %s0, %s149
      %p151 = pneg %p35
      %p152 = pneg %p32
      %p153 = pneg %p56
      %p154 = pneg %p53
      %p155 = pneg %p77
      %p156 = pneg %p74
      %p157 = pneg %p103
      %p158 = pneg %p100
      %s159 = smul.u32 2, %s14
      %p160 = scmp.lt.s32.totalorder %s159, 3
      %s161 = scalar_select %p160, %s159, 3
      %s162 = smul.addr %s161, 2
      %s163 = smul.addr %s162, 8
      %s164 = scalar_lea.vmem %s3, %s163
      %s165 = smul.u32 2, %s14
      %p166 = scmp.lt.s32.totalorder %s165, 3
      %s167 = scalar_select %p166, %s165, 3
      %s168 = smul.addr %s167, 4
      %s169 = smul.addr %s168, 8
      %s170 = scalar_lea.vmem %s0, %s169
      %s171 = smul.u32 2, %s14
      %s172 = smul.u32 2, %s14
      %p173 = scmp.lt.s32.totalorder %s172, 3
      %s174 = scalar_select %p173, %s172, 3
      %s175 = smul.addr %s174, 2
      %s176 = smul.addr %s175, 8
      %s177 = scalar_lea.vmem %s3, %s176
      %s178 = smul.u32 2, %s14
      %v179 = vld [vmem:[%s170] sm:$0xff]
      %v180 = vld [vmem:[%s170 + $0x8] sm:$0xff]
      %v181 = vld [vmem:[%s170 + $0x10] sm:$0xff]
      %v182 = vld [vmem:[%s170 + $0x18] sm:$0xff]
      %v183 = vld [vmem:[%s170 + $0x20] sm:$0xff]
      %v184 = vld [vmem:[%s170 + $0x28] sm:$0xff]
      %v185 = vld [vmem:[%s170 + $0x30] sm:$0xff]
      %v186 = vld [vmem:[%s170 + $0x38] sm:$0xff]
      %v187 = vld [vmem:[%s1] sm:$0xff]
      %v188 = vld [vmem:[%s1 + $0x8] sm:$0xff]
      %v189 = vld [vmem:[%s1 + $0x10] sm:$0xff]
      %v190 = vld [vmem:[%s1 + $0x18] sm:$0xff]
      %v191 = vld [vmem:[%s1 + $0x20] sm:$0xff]
      %v192 = vld [vmem:[%s1 + $0x28] sm:$0xff]
      %v193 = vld [vmem:[%s1 + $0x30] sm:$0xff]
      %v194 = vld [vmem:[%s1 + $0x38] sm:$0xff]
      %v195 = vld [vmem:[%s1 + $0x40] sm:$0xff]
      %v196 = vld [vmem:[%s1 + $0x48] sm:$0xff]
      %v197 = vld [vmem:[%s1 + $0x50] sm:$0xff]
      %v198 = vld [vmem:[%s1 + $0x58] sm:$0xff]
      %v199 = vld [vmem:[%s1 + $0x60] sm:$0xff]
      %v200 = vld [vmem:[%s1 + $0x68] sm:$0xff]
      %v201 = vld [vmem:[%s1 + $0x70] sm:$0xff]
      %v202 = vld [vmem:[%s1 + $0x78] sm:$0xff]
      %v203 = vld [vmem:[%s1 + $0x80] sm:$0xff]
      %v204 = vld [vmem:[%s1 + $0x88] sm:$0xff]
      %v205 = vld [vmem:[%s1 + $0x90] sm:$0xff]
      %v206 = vld [vmem:[%s1 + $0x98] sm:$0xff]
      %v207 = vld [vmem:[%s1 + $0xa0] sm:$0xff]
      %v208 = vld [vmem:[%s1 + $0xa8] sm:$0xff]
      %v209 = vld [vmem:[%s1 + $0xb0] sm:$0xff]
      %v210 = vld [vmem:[%s1 + $0xb8] sm:$0xff]
      %v211 = vld [vmem:[%s1 + $0xc0] sm:$0xff]
      %v212 = vld [vmem:[%s1 + $0xc8] sm:$0xff]
      %v213 = vld [vmem:[%s1 + $0xd0] sm:$0xff]
      %v214 = vld [vmem:[%s1 + $0xd8] sm:$0xff]
      %v215 = vld [vmem:[%s1 + $0xe0] sm:$0xff]
      %v216 = vld [vmem:[%s1 + $0xe8] sm:$0xff]
      %v217 = vld [vmem:[%s1 + $0xf0] sm:$0xff]
      %v218 = vld [vmem:[%s1 + $0xf8] sm:$0xff]
      %v219 = vld [vmem:[%s1 + $0x100] sm:$0xff]
      %v220 = vld [vmem:[%s1 + $0x108] sm:$0xff]
      %v221 = vld [vmem:[%s1 + $0x110] sm:$0xff]
      %v222 = vld [vmem:[%s1 + $0x118] sm:$0xff]
      %v223 = vld [vmem:[%s1 + $0x120] sm:$0xff]
      %v224 = vld [vmem:[%s1 + $0x128] sm:$0xff]
      %v225 = vld [vmem:[%s1 + $0x130] sm:$0xff]
      %v226 = vld [vmem:[%s1 + $0x138] sm:$0xff]
      %v227 = vld [vmem:[%s1 + $0x140] sm:$0xff]
      %v228 = vld [vmem:[%s1 + $0x148] sm:$0xff]
      %v229 = vld [vmem:[%s1 + $0x150] sm:$0xff]
      %v230 = vld [vmem:[%s1 + $0x158] sm:$0xff]
      %v231 = vld [vmem:[%s1 + $0x160] sm:$0xff]
      %v232 = vld [vmem:[%s1 + $0x168] sm:$0xff]
      %v233 = vld [vmem:[%s1 + $0x170] sm:$0xff]
      %v234 = vld [vmem:[%s1 + $0x178] sm:$0xff]
      %v235 = vld [vmem:[%s1 + $0x180] sm:$0xff]
      %v236 = vld [vmem:[%s1 + $0x188] sm:$0xff]
      %v237 = vld [vmem:[%s1 + $0x190] sm:$0xff]
      %v238 = vld [vmem:[%s1 + $0x198] sm:$0xff]
      %v239 = vld [vmem:[%s1 + $0x1a0] sm:$0xff]
      %v240 = vld [vmem:[%s1 + $0x1a8] sm:$0xff]
      %v241 = vld [vmem:[%s1 + $0x1b0] sm:$0xff]
      %v242 = vld [vmem:[%s1 + $0x1b8] sm:$0xff]
      %v243 = vld [vmem:[%s1 + $0x1c0] sm:$0xff]
      %v244 = vld [vmem:[%s1 + $0x1c8] sm:$0xff]
      %v245 = vld [vmem:[%s1 + $0x1d0] sm:$0xff]
      %v246 = vld [vmem:[%s1 + $0x1d8] sm:$0xff]
      %v247 = vld [vmem:[%s1 + $0x1e0] sm:$0xff]
      %v248 = vld [vmem:[%s1 + $0x1e8] sm:$0xff]
      %v249 = vld [vmem:[%s1 + $0x1f0] sm:$0xff]
      %v250 = vld [vmem:[%s1 + $0x1f8] sm:$0xff]
      %v251 = vld [vmem:[%s1 + $0x200] sm:$0xff]
      %v252 = vld [vmem:[%s1 + $0x208] sm:$0xff]
      %v253 = vld [vmem:[%s1 + $0x210] sm:$0xff]
      %v254 = vld [vmem:[%s1 + $0x218] sm:$0xff]
      %v255 = vld [vmem:[%s1 + $0x220] sm:$0xff]
      %v256 = vld [vmem:[%s1 + $0x228] sm:$0xff]
      %v257 = vld [vmem:[%s1 + $0x230] sm:$0xff]
      %v258 = vld [vmem:[%s1 + $0x238] sm:$0xff]
      %v259 = vld [vmem:[%s1 + $0x240] sm:$0xff]
      %v260 = vld [vmem:[%s1 + $0x248] sm:$0xff]
      %v261 = vld [vmem:[%s1 + $0x250] sm:$0xff]
      %v262 = vld [vmem:[%s1 + $0x258] sm:$0xff]
      %v263 = vld [vmem:[%s1 + $0x260] sm:$0xff]
      %v264 = vld [vmem:[%s1 + $0x268] sm:$0xff]
      %v265 = vld [vmem:[%s1 + $0x270] sm:$0xff]
      %v266 = vld [vmem:[%s1 + $0x278] sm:$0xff]
      %v267 = vld [vmem:[%s1 + $0x280] sm:$0xff]
      %v268 = vld [vmem:[%s1 + $0x288] sm:$0xff]
      %v269 = vld [vmem:[%s1 + $0x290] sm:$0xff]
      %v270 = vld [vmem:[%s1 + $0x298] sm:$0xff]
      %v271 = vld [vmem:[%s1 + $0x2a0] sm:$0xff]
      %v272 = vld [vmem:[%s1 + $0x2a8] sm:$0xff]
      %v273 = vld [vmem:[%s1 + $0x2b0] sm:$0xff]
      %v274 = vld [vmem:[%s1 + $0x2b8] sm:$0xff]
      %v275 = vld [vmem:[%s1 + $0x2c0] sm:$0xff]
      %v276 = vld [vmem:[%s1 + $0x2c8] sm:$0xff]
      %v277 = vld [vmem:[%s1 + $0x2d0] sm:$0xff]
      %v278 = vld [vmem:[%s1 + $0x2d8] sm:$0xff]
      %v279 = vld [vmem:[%s1 + $0x2e0] sm:$0xff]
      %v280 = vld [vmem:[%s1 + $0x2e8] sm:$0xff]
      %v281 = vld [vmem:[%s1 + $0x2f0] sm:$0xff]
      %v282 = vld [vmem:[%s1 + $0x2f8] sm:$0xff]
      %v283 = vld [vmem:[%s1 + $0x300] sm:$0xff]
      %v284 = vld [vmem:[%s1 + $0x308] sm:$0xff]
      %v285 = vld [vmem:[%s1 + $0x310] sm:$0xff]
      %v286 = vld [vmem:[%s1 + $0x318] sm:$0xff]
      %v287 = vld [vmem:[%s1 + $0x320] sm:$0xff]
      %v288 = vld [vmem:[%s1 + $0x328] sm:$0xff]
      %v289 = vld [vmem:[%s1 + $0x330] sm:$0xff]
      %v290 = vld [vmem:[%s1 + $0x338] sm:$0xff]
      %v291 = vld [vmem:[%s1 + $0x340] sm:$0xff]
      %v292 = vld [vmem:[%s1 + $0x348] sm:$0xff]
      %v293 = vld [vmem:[%s1 + $0x350] sm:$0xff]
      %v294 = vld [vmem:[%s1 + $0x358] sm:$0xff]
      %v295 = vld [vmem:[%s1 + $0x360] sm:$0xff]
      %v296 = vld [vmem:[%s1 + $0x368] sm:$0xff]
      %v297 = vld [vmem:[%s1 + $0x370] sm:$0xff]
      %v298 = vld [vmem:[%s1 + $0x378] sm:$0xff]
      %v299 = vld [vmem:[%s1 + $0x380] sm:$0xff]
      %v300 = vld [vmem:[%s1 + $0x388] sm:$0xff]
      %v301 = vld [vmem:[%s1 + $0x390] sm:$0xff]
      %v302 = vld [vmem:[%s1 + $0x398] sm:$0xff]
      %v303 = vld [vmem:[%s1 + $0x3a0] sm:$0xff]
      %v304 = vld [vmem:[%s1 + $0x3a8] sm:$0xff]
      %v305 = vld [vmem:[%s1 + $0x3b0] sm:$0xff]
      %v306 = vld [vmem:[%s1 + $0x3b8] sm:$0xff]
      %v307 = vld [vmem:[%s1 + $0x3c0] sm:$0xff]
      %v308 = vld [vmem:[%s1 + $0x3c8] sm:$0xff]
      %v309 = vld [vmem:[%s1 + $0x3d0] sm:$0xff]
      %v310 = vld [vmem:[%s1 + $0x3d8] sm:$0xff]
      %v311 = vld [vmem:[%s1 + $0x3e0] sm:$0xff]
      %v312 = vld [vmem:[%s1 + $0x3e8] sm:$0xff]
      %v313 = vld [vmem:[%s1 + $0x3f0] sm:$0xff]
      %v314 = vld [vmem:[%s1 + $0x3f8] sm:$0xff]
      %v315 = vld [vmem:[%s2] sm:$0x3]
      %v317 = vlaneseq
      %v318 = vshrl.u32 %v317, 7
      %v319 = vsub.s32 0, %v318
      %v320 = vrot.slane %v315, %v319
      %v321 = vlaneseq
      %v322 = vshrl.u32 %v321, 7
      %v323 = vsub.s32 1, %v322
      %v324 = vrot.slane %v315, %v323
      %327 = vmatprep.subr.mxu0 %v188
      %328 = vmatpush1.msra.mxu0 %v187
      %329 = vmatprep.subr.mxu0 %v190
      %330 = vmatpush1.msra.mxu0 %v189
      %331 = vmatprep.subr.mxu0 %v192
      %332 = vmatpush1.msra.mxu0 %v191
      %333 = vmatprep.subr.mxu0 %v194
      %334 = vmatpush1.msra.mxu0 %v193
      %335 = vmatprep.subr.mxu0 %v196
      %336 = vmatpush1.msra.mxu0 %v195
      %337 = vmatprep.subr.mxu0 %v198
      %338 = vmatpush1.msra.mxu0 %v197
      %339 = vmatprep.subr.mxu0 %v200
      %340 = vmatpush1.msra.mxu0 %v199
      %341 = vmatprep.subr.mxu0 %v202
      %342 = vmatpush1.msra.mxu0 %v201
      %343 = vmatprep.subr.mxu0 %v204
      %344 = vmatpush1.msra.mxu0 %v203
      %345 = vmatprep.subr.mxu0 %v206
      %346 = vmatpush1.msra.mxu0 %v205
      %347 = vmatprep.subr.mxu0 %v208
      %348 = vmatpush1.msra.mxu0 %v207
      %349 = vmatprep.subr.mxu0 %v210
      %350 = vmatpush1.msra.mxu0 %v209
      %351 = vmatprep.subr.mxu0 %v212
      %352 = vmatpush1.msra.mxu0 %v211
      %353 = vmatprep.subr.mxu0 %v214
      %354 = vmatpush1.msra.mxu0 %v213
      %355 = vmatprep.subr.mxu0 %v216
      %356 = vmatpush1.msra.mxu0 %v215
      %357 = vmatprep.subr.mxu0 %v218
      %358 = vmatpush1.msra.mxu0 %v217
      %359 = vmatprep.subr.mxu0 %v220
      %360 = vmatpush1.msra.mxu0 %v219
      %361 = vmatprep.subr.mxu0 %v222
      %362 = vmatpush1.msra.mxu0 %v221
      %363 = vmatprep.subr.mxu0 %v224
      %364 = vmatpush1.msra.mxu0 %v223
      %365 = vmatprep.subr.mxu0 %v226
      %366 = vmatpush1.msra.mxu0 %v225
      %367 = vmatprep.subr.mxu0 %v228
      %368 = vmatpush1.msra.mxu0 %v227
      %369 = vmatprep.subr.mxu0 %v230
      %370 = vmatpush1.msra.mxu0 %v229
      %371 = vmatprep.subr.mxu0 %v232
      %372 = vmatpush1.msra.mxu0 %v231
      %373 = vmatprep.subr.mxu0 %v234
      %374 = vmatpush1.msra.mxu0 %v233
      %375 = vmatprep.subr.mxu0 %v236
      %376 = vmatpush1.msra.mxu0 %v235
      %377 = vmatprep.subr.mxu0 %v238
      %378 = vmatpush1.msra.mxu0 %v237
      %379 = vmatprep.subr.mxu0 %v240
      %380 = vmatpush1.msra.mxu0 %v239
      %381 = vmatprep.subr.mxu0 %v242
      %382 = vmatpush1.msra.mxu0 %v241
      %383 = vmatprep.subr.mxu0 %v244
      %384 = vmatpush1.msra.mxu0 %v243
      %385 = vmatprep.subr.mxu0 %v246
      %386 = vmatpush1.msra.mxu0 %v245
      %387 = vmatprep.subr.mxu0 %v248
      %388 = vmatpush1.msra.mxu0 %v247
      %389 = vmatprep.subr.mxu0 %v250
      %390 = vmatpush1.msra.mxu0 %v249
      %391 = vmatprep.mubr.f32.mxu0 %v180
      %392 = vmatmul.mubr.f32.gmra.mrb[0].mxu0 %v179
      %v393 = vpop.f32.mrb[0].mxu0
      %v394 = vadd.f32 %v320, %v393
      %v395 = vpop.f32.mrb[0].mxu0
      %v396 = vadd.f32 %v324, %v395
      %397 = vmatprep.mubr.f32.mxu0 %v184
      %398 = vmatmul.mubr.f32.gmra.mrb[0].mxu0 %v183
      %v399 = vpop.f32.mrb[0].mxu0
      %v400 = vadd.f32 %v320, %v399
      %v401 = vpop.f32.mrb[0].mxu0
      %v402 = vadd.f32 %v324, %v401
      %403 = vdwg.mxu0
      %404 = vmatprep.subr.mxu0 %v252
      %405 = vmatpush1.msra.mxu0 %v251
      %406 = vmatprep.subr.mxu0 %v254
      %407 = vmatpush1.msra.mxu0 %v253
      %408 = vmatprep.subr.mxu0 %v256
      %409 = vmatpush1.msra.mxu0 %v255
      %410 = vmatprep.subr.mxu0 %v258
      %411 = vmatpush1.msra.mxu0 %v257
      %412 = vmatprep.subr.mxu0 %v260
      %413 = vmatpush1.msra.mxu0 %v259
      %414 = vmatprep.subr.mxu0 %v262
      %415 = vmatpush1.msra.mxu0 %v261
      %416 = vmatprep.subr.mxu0 %v264
      %417 = vmatpush1.msra.mxu0 %v263
      %418 = vmatprep.subr.mxu0 %v266
      %419 = vmatpush1.msra.mxu0 %v265
      %420 = vmatprep.subr.mxu0 %v268
      %421 = vmatpush1.msra.mxu0 %v267
      %422 = vmatprep.subr.mxu0 %v270
      %423 = vmatpush1.msra.mxu0 %v269
      %424 = vmatprep.subr.mxu0 %v272
      %425 = vmatpush1.msra.mxu0 %v271
      %426 = vmatprep.subr.mxu0 %v274
      %427 = vmatpush1.msra.mxu0 %v273
      %428 = vmatprep.subr.mxu0 %v276
      %429 = vmatpush1.msra.mxu0 %v275
      %430 = vmatprep.subr.mxu0 %v278
      %431 = vmatpush1.msra.mxu0 %v277
      %432 = vmatprep.subr.mxu0 %v280
      %433 = vmatpush1.msra.mxu0 %v279
      %434 = vmatprep.subr.mxu0 %v282
      %435 = vmatpush1.msra.mxu0 %v281
      %436 = vmatprep.subr.mxu0 %v284
      %437 = vmatpush1.msra.mxu0 %v283
      %438 = vmatprep.subr.mxu0 %v286
      %439 = vmatpush1.msra.mxu0 %v285
      %440 = vmatprep.subr.mxu0 %v288
      %441 = vmatpush1.msra.mxu0 %v287
      %442 = vmatprep.subr.mxu0 %v290
      %443 = vmatpush1.msra.mxu0 %v289
      %444 = vmatprep.subr.mxu0 %v292
      %445 = vmatpush1.msra.mxu0 %v291
      %446 = vmatprep.subr.mxu0 %v294
      %447 = vmatpush1.msra.mxu0 %v293
      %448 = vmatprep.subr.mxu0 %v296
      %449 = vmatpush1.msra.mxu0 %v295
      %450 = vmatprep.subr.mxu0 %v298
      %451 = vmatpush1.msra.mxu0 %v297
      %452 = vmatprep.subr.mxu0 %v300
      %453 = vmatpush1.msra.mxu0 %v299
      %454 = vmatprep.subr.mxu0 %v302
      %455 = vmatpush1.msra.mxu0 %v301
      %456 = vmatprep.subr.mxu0 %v304
      %457 = vmatpush1.msra.mxu0 %v303
      %458 = vmatprep.subr.mxu0 %v306
      %459 = vmatpush1.msra.mxu0 %v305
      %460 = vmatprep.subr.mxu0 %v308
      %461 = vmatpush1.msra.mxu0 %v307
      %462 = vmatprep.subr.mxu0 %v310
      %463 = vmatpush1.msra.mxu0 %v309
      %464 = vmatprep.subr.mxu0 %v312
      %465 = vmatpush1.msra.mxu0 %v311
      %466 = vmatprep.subr.mxu0 %v314
      %467 = vmatpush1.msra.mxu0 %v313
      %468 = vmatprep.mubr.f32.mxu0 %v182
      %469 = vmatmul.mubr.f32.gmra.mrb[0].mxu0 %v181
      %v470 = vpop.f32.mrb[0].mxu0
      %v471 = vadd.f32 %v394, %v470
      %v472 = vpop.f32.mrb[0].mxu0
      %v473 = vadd.f32 %v396, %v472
      %474 = vmatprep.mubr.f32.mxu0 %v186
      %475 = vmatmul.mubr.f32.gmra.mrb[0].mxu0 %v185
      %v476 = vpop.f32.mrb[0].mxu0
      %v477 = vadd.f32 %v400, %v476
      %v478 = vpop.f32.mrb[0].mxu0
      %v479 = vadd.f32 %v402, %v478
      %480 = vdwg.mxu0
      %v481 = vmax.f32 %v471, 0.0
      %v482 = vmax.f32 %v473, 0.0
      %v483 = vmax.f32 %v477, 0.0
      %v484 = vmax.f32 %v479, 0.0
      %485 = vst [vmem:[%s177] sm:$0xff] %v481
      %486 = vst [vmem:[%s177 + $0x8] sm:$0xff] %v482
      %487 = vst [vmem:[%s177 + $0x10] sm:$0xff] %v483
      %488 = vst [vmem:[%s177 + $0x18] sm:$0xff] %v484
      %s489 = smul.u32 2, %s14
      %p490 = scmp.lt.s32.totalorder %s489, 3
      %s491 = scalar_select %p490, %s489, 3
      %s492 = smul.addr %s491, 2
      %s493 = smul.addr %s492, 8
      %s494 = scalar_lea.vmem %s3, %s493
      // Predicated region
      $region33: #{generator1_forward.20} parent=31 // pred_check
        %p495 = pneg %p100
      $region34: #{generator1_forward.20} parent=31 // pred_check_branch
        %497 = sbr.rel (%p495) target = $region36
      $region35: #{generator1_forward.20} parent=31 // pred_region
        %s498 = smul.u32 2, %s14
      $region36: #{generator1_forward.20} parent=31 // pred_fallthru
        _
    $region32: #{generator1_forward.20} parent=5 // pred_fallthru
      _
    %p499 = scmp.le.s32.totalorder 2, %s9
    // Predicated region
    $region37: #{generator1_forward.20} parent=5 // pred_check
      %p500 = pneg %p499
    $region38: #{generator1_forward.20} parent=5 // pred_check_branch
      %502 = sbr.rel (%p500) target = $region40
    $region39: #{generator1_forward.20} parent=5 // pred_region
      %s503 = ssub.s32 %s9, 2
      // Predicated region
      $region41: #{generator1_forward.20} parent=39 // pred_check
        %p504 = pneg %p106
      $region42: #{generator1_forward.20} parent=39 // pred_check_branch
        %506 = sbr.rel (%p504) target = $region44
      $region43: #{generator1_forward.20} parent=39 // pred_region
        %s507 = smul.u32 2, %s15
        %p508 = scmp.lt.s32.totalorder %s507, 3
        %s509 = scalar_select %p508, %s507, 3
        %s510 = smul.addr %s509, 2
        %s511 = smul.addr %s510, 8
        %s512 = scalar_lea.vmem %s3, %s511
      $region44: #{generator1_forward.20} parent=39 // pred_fallthru
        _
    $region40: #{generator1_forward.20} parent=5 // pred_fallthru
      _
  $region6: #{generator1_forward.20} parent=0 // loop_footer
    %s13 = sadd.s32 1, %s9
  $region7: #{generator1_forward.20} parent=0 // loop_footer_branch
    %8 = sbr.rel target = $region3
  $region8: #{generator1_forward.20} parent=0 // loop_exit
    _

// kernel: generator1_forward.19
$region0: #{generator1_forward.19}
  #allocation0 [shape = 'u32[]', space=smem, size = 0x4, offset = 0x4, fixed_abs, tag = 'smem constant byte address 0x4 - core index']
  #allocation1 [shape = 'u32[144,128]{1,0:T(1,128)}', space=vmem, size = 0x12000, scoped, tag = 'internal scratch']
  %s0 = inlined_call_operand.vmem [shape: f32[32,256], index: 0, kind: input, shape index: {}]
  %s1 = inlined_call_operand.vmem [shape: f32[256,640], index: 1, kind: input, shape index: {}]
  %s2 = inlined_call_operand.vmem [shape: f32[1,640], index: 2, kind: input, shape index: {}]
  %s3 = inlined_call_operand.vmem [shape: f32[128,512], index: 3, kind: input, shape index: {}]
  %s4 = inlined_call_operand.vmem [shape: f32[1,512], index: 4, kind: input, shape index: {}]
  %s5 = inlined_call_operand.vmem [shape: f32[32,512], index: 5, kind: output, shape index: {}]
  %s6 = sld [smem:[#allocation0]]
  $region53: #{generator1_forward.19} parent=0
    _
  %s8 = ssub.s32 1, %s6
  %s9 = scalar_select 0, %s8, %s6
  loop: start=0, step=1, limit=4
  $region2: #{generator1_forward.19} parent=0 // loop_pre_header
    _
  $region3: #{generator1_forward.19} parent=0 // loop_header
    %s11 = sphi 0, %s15
    %p12 = scmp.ge.s32.totalorder %s11, 4
    %s21 = sphi 0, %s23
    %s24 = sphi 0, %s21
    %s25 = sphi 0, %s24
    %s41 = sphi 0, %s25
    %s45 = sphi 0, %s45
    %s47 = sphi 0, %s45
    %s48 = sphi 0, %s47
    %s62 = sphi 0, %s48
    %s66 = sphi 0, %s66
    %s68 = sphi 0, %s66
    %s69 = sphi 0, %s68
    %s83 = sphi 0, %s69
    %s87 = sphi 0, %s87
    %s89 = sphi 0, %s87
    %s90 = sphi 0, %s89
    %s104 = sphi 0, %s90
    %s108 = sphi 0, %s108
    %s110 = sphi 0, %s108
    %s111 = sphi 0, %s110
    %s125 = sphi 0, %s111
    %s131 = sphi 0, %s133
    %s134 = sphi 0, %s131
    %s135 = sphi 0, %s134
    %s151 = sphi 0, %s135
  $region4: #{generator1_forward.19} parent=0 // loop_header_branch
    %14 = sbr.rel (%p12) target = $region8
  $region5: #{generator1_forward.19} parent=0 // loop_body
    %s16 = ssub.s32 %s11, 1
    %s17 = ssub.s32 %s11, 2
    %s18 = sadd.s32 %s11, 1
    %s19 = ssub.s32 %s11, %s18
    %p20 = scmp.eq.s32.totalorder %s19, 0
    %s22 = sadd.s32 %s21, 1
    %s23 = scalar_select %p20, %s21, %s22
    %p26 = pneg %p20
    %p27 = scmp.eq.s32.totalorder %s11, 1
    %p28 = por %p26, %p27
    %p29 = scmp.ne.s32.totalorder %s21, %s24
    %p30 = scmp.eq.s32.totalorder %s11, 0
    %p31 = por %p29, %p30
    %p32 = scmp.ne.s32.totalorder %s21, %s24
    %p33 = scmp.eq.s32.totalorder %s16, 1
    %p34 = por %p32, %p33
    %p35 = scmp.ne.s32.totalorder %s24, %s25
    %p36 = scmp.eq.s32.totalorder %s16, 0
    %p37 = por %p35, %p36
    %p38 = scmp.ne.s32.totalorder %s24, %s25
    %p39 = scmp.eq.s32.totalorder %s17, 1
    %p40 = por %p38, %p39
    %p42 = scmp.ne.s32.totalorder %s25, %s41
    %p43 = scmp.eq.s32.totalorder %s17, 0
    %p44 = por %p42, %p43
    %s46 = sadd.s32 %s45, 1
    %p49 = scmp.eq.s32.totalorder %s11, 1
    %p50 = scmp.ne.s32.totalorder %s45, %s47
    %p51 = scmp.eq.s32.totalorder %s11, 0
    %p52 = por %p50, %p51
    %p53 = scmp.ne.s32.totalorder %s45, %s47
    %p54 = scmp.eq.s32.totalorder %s16, 1
    %p55 = por %p53, %p54
    %p56 = scmp.ne.s32.totalorder %s47, %s48
    %p57 = scmp.eq.s32.totalorder %s16, 0
    %p58 = por %p56, %p57
    %p59 = scmp.ne.s32.totalorder %s47, %s48
    %p60 = scmp.eq.s32.totalorder %s17, 1
    %p61 = por %p59, %p60
    %p63 = scmp.ne.s32.totalorder %s48, %s62
    %p64 = scmp.eq.s32.totalorder %s17, 0
    %p65 = por %p63, %p64
    %s67 = sadd.s32 %s66, 1
    %p70 = scmp.eq.s32.totalorder %s11, 1
    %p71 = scmp.ne.s32.totalorder %s66, %s68
    %p72 = scmp.eq.s32.totalorder %s11, 0
    %p73 = por %p71, %p72
    %p74 = scmp.ne.s32.totalorder %s66, %s68
    %p75 = scmp.eq.s32.totalorder %s16, 1
    %p76 = por %p74, %p75
    %p77 = scmp.ne.s32.totalorder %s68, %s69
    %p78 = scmp.eq.s32.totalorder %s16, 0
    %p79 = por %p77, %p78
    %p80 = scmp.ne.s32.totalorder %s68, %s69
    %p81 = scmp.eq.s32.totalorder %s17, 1
    %p82 = por %p80, %p81
    %p84 = scmp.ne.s32.totalorder %s69, %s83
    %p85 = scmp.eq.s32.totalorder %s17, 0
    %p86 = por %p84, %p85
    %s88 = sadd.s32 %s87, 1
    %p91 = scmp.eq.s32.totalorder %s11, 1
    %p92 = scmp.ne.s32.totalorder %s87, %s89
    %p93 = scmp.eq.s32.totalorder %s11, 0
    %p94 = por %p92, %p93
    %p95 = scmp.ne.s32.totalorder %s87, %s89
    %p96 = scmp.eq.s32.totalorder %s16, 1
    %p97 = por %p95, %p96
    %p98 = scmp.ne.s32.totalorder %s89, %s90
    %p99 = scmp.eq.s32.totalorder %s16, 0
    %p100 = por %p98, %p99
    %p101 = scmp.ne.s32.totalorder %s89, %s90
    %p102 = scmp.eq.s32.totalorder %s17, 1
    %p103 = por %p101, %p102
    %p105 = scmp.ne.s32.totalorder %s90, %s104
    %p106 = scmp.eq.s32.totalorder %s17, 0
    %p107 = por %p105, %p106
    %s109 = sadd.s32 %s108, 1
    %p112 = scmp.eq.s32.totalorder %s11, 1
    %p113 = scmp.ne.s32.totalorder %s108, %s110
    %p114 = scmp.eq.s32.totalorder %s11, 0
    %p115 = por %p113, %p114
    %p116 = scmp.ne.s32.totalorder %s108, %s110
    %p117 = scmp.eq.s32.totalorder %s16, 1
    %p118 = por %p116, %p117
    %p119 = scmp.ne.s32.totalorder %s110, %s111
    %p120 = scmp.eq.s32.totalorder %s16, 0
    %p121 = por %p119, %p120
    %p122 = scmp.ne.s32.totalorder %s110, %s111
    %p123 = scmp.eq.s32.totalorder %s17, 1
    %p124 = por %p122, %p123
    %p126 = scmp.ne.s32.totalorder %s111, %s125
    %p127 = scmp.eq.s32.totalorder %s17, 0
    %p128 = por %p126, %p127
    %s129 = ssub.s32 %s11, %s18
    %p130 = scmp.eq.s32.totalorder %s129, 0
    %s132 = sadd.s32 %s131, 1
    %s133 = scalar_select %p130, %s131, %s132
    %p136 = pneg %p130
    %p137 = scmp.eq.s32.totalorder %s11, 1
    %p138 = por %p136, %p137
    %p139 = scmp.ne.s32.totalorder %s131, %s134
    %p140 = scmp.eq.s32.totalorder %s11, 0
    %p141 = por %p139, %p140
    %p142 = scmp.ne.s32.totalorder %s131, %s134
    %p143 = scmp.eq.s32.totalorder %s16, 1
    %p144 = por %p142, %p143
    %p145 = scmp.ne.s32.totalorder %s134, %s135
    %p146 = scmp.eq.s32.totalorder %s16, 0
    %p147 = por %p145, %p146
    %p148 = scmp.ne.s32.totalorder %s134, %s135
    %p149 = scmp.eq.s32.totalorder %s17, 1
    %p150 = por %p148, %p149
    %p152 = scmp.ne.s32.totalorder %s135, %s151
    %p153 = scmp.eq.s32.totalorder %s17, 0
    %p154 = por %p152, %p153
    %p155 = scmp.le.s32.totalorder 1, %s11
    %p156 = scmp.lt.s32.totalorder %s11, 3
    %p157 = pnand %p155, %p156
    %p158 = pneg %p157
    // Predicated region
    $region9: #{generator1_forward.19} parent=5 // pred_check
      _
    $region10: #{generator1_forward.19} parent=5 // pred_check_branch
      %160 = sbr.rel (%p157) target = $region12
    $region11: #{generator1_forward.19} parent=5 // pred_region
      %s161 = ssub.s32 %s11, 1
      // Predicated region
      $region13: #{generator1_forward.19} parent=11 // pred_check
        %p162 = pneg %p58
      $region14: #{generator1_forward.19} parent=11 // pred_check_branch
        %164 = sbr.rel (%p162) target = $region16
      $region15: #{generator1_forward.19} parent=11 // pred_region
        _
      $region16: #{generator1_forward.19} parent=11 // pred_fallthru
        _
      // Predicated region
      $region17: #{generator1_forward.19} parent=11 // pred_check
        %p165 = pneg %p79
      $region18: #{generator1_forward.19} parent=11 // pred_check_branch
        %167 = sbr.rel (%p165) target = $region20
      $region19: #{generator1_forward.19} parent=11 // pred_region
        _
      $region20: #{generator1_forward.19} parent=11 // pred_fallthru
        _
      // Predicated region
      $region21: #{generator1_forward.19} parent=11 // pred_check
        %p168 = pneg %p100
      $region22: #{generator1_forward.19} parent=11 // pred_check_branch
        %170 = sbr.rel (%p168) target = $region24
      $region23: #{generator1_forward.19} parent=11 // pred_region
        _
      $region24: #{generator1_forward.19} parent=11 // pred_fallthru
        _
      // Predicated region
      $region25: #{generator1_forward.19} parent=11 // pred_check
        %p171 = pneg %p121
      $region26: #{generator1_forward.19} parent=11 // pred_check_branch
        %173 = sbr.rel (%p171) target = $region28
      $region27: #{generator1_forward.19} parent=11 // pred_region
        _
      $region28: #{generator1_forward.19} parent=11 // pred_fallthru
        _
    $region12: #{generator1_forward.19} parent=5 // pred_fallthru
      _
    %p174 = scmp.lt.s32.totalorder %s11, 2
    // Predicated region
    $region29: #{generator1_forward.19} parent=5 // pred_check
      %p175 = pneg %p174
    $region30: #{generator1_forward.19} parent=5 // pred_check_branch
      %177 = sbr.rel (%p175) target = $region32
    $region31: #{generator1_forward.19} parent=5 // pred_region
      // Predicated region
      $region33: #{generator1_forward.19} parent=31 // pred_check
        %p178 = pneg %p31
      $region34: #{generator1_forward.19} parent=31 // pred_check_branch
        %180 = sbr.rel (%p178) target = $region36
      $region35: #{generator1_forward.19} parent=31 // pred_region
        %s181 = smul.u32 2, %s11
        %p182 = scmp.lt.s32.totalorder %s181, 3
        %s183 = scalar_select %p182, %s181, 3
        %s184 = smul.addr %s183, 2
        %s185 = smul.addr %s184, 8
        %s186 = scalar_lea.vmem %s0, %s185
        %s187 = smul.u32 2, %s11
      $region36: #{generator1_forward.19} parent=31 // pred_fallthru
        _
    $region32: #{generator1_forward.19} parent=5 // pred_fallthru
      _
    %p188 = scmp.le.s32.totalorder 1, %s11
    %p189 = scmp.lt.s32.totalorder %s11, 3
    %p190 = pnand %p188, %p189
    %p191 = pneg %p190
    // Predicated region
    $region37: #{generator1_forward.19} parent=5 // pred_check
      _
    $region38: #{generator1_forward.19} parent=5 // pred_check_branch
      %193 = sbr.rel (%p190) target = $region40
    $region39: #{generator1_forward.19} parent=5 // pred_region
      %s194 = ssub.s32 %s11, 1
      %s195 = smul.u32 2, %s16
      %p196 = scmp.lt.s32.totalorder %s195, 3
      %s197 = scalar_select %p196, %s195, 3
      %s198 = smul.addr %s197, 2
      %s199 = smul.addr %s198, 8
      %s200 = scalar_lea.vmem %s0, %s199
      %p201 = pneg %p37
      %p202 = pneg %p34
      %p203 = pneg %p58
      %p204 = pneg %p55
      %p205 = pneg %p79
      %p206 = pneg %p76
      %p207 = pneg %p100
      %p208 = pneg %p97
      %p209 = pneg %p121
      %p210 = pneg %p118
      %p211 = pneg %p147
      %p212 = pneg %p144
      %s213 = smul.u32 2, %s16
      %p214 = scmp.lt.s32.totalorder %s213, 3
      %s215 = scalar_select %p214, %s213, 3
      %s216 = smul.addr %s215, 4
      %s217 = smul.addr %s216, 8
      %s218 = scalar_lea.vmem %s5, %s217
      %s219 = smul.u32 2, %s16
      %p220 = scmp.lt.s32.totalorder %s219, 3
      %s221 = scalar_select %p220, %s219, 3
      %s222 = smul.addr %s221, 2
      %s223 = smul.addr %s222, 8
      %s224 = scalar_lea.vmem %s0, %s223
      %s225 = smul.u32 2, %s16
      %s226 = smul.u32 2, %s16
      %p227 = scmp.lt.s32.totalorder %s226, 3
      %s228 = scalar_select %p227, %s226, 3
      %s229 = smul.addr %s228, 4
      %s230 = smul.addr %s229, 8
      %s231 = scalar_lea.vmem %s5, %s230
      %s232 = smul.u32 2, %s16
      %v233 = vld [vmem:[%s224] sm:$0xff]
      %v234 = vld [vmem:[%s224 + $0x8] sm:$0xff]
      %v235 = vld [vmem:[%s224 + $0x10] sm:$0xff]
      %v236 = vld [vmem:[%s224 + $0x18] sm:$0xff]
      %v237 = vld [vmem:[%s1] sm:$0xff]
      %v238 = vld [vmem:[%s1 + $0x8] sm:$0xff]
      %v239 = vld [vmem:[%s1 + $0x10] sm:$0xff]
      %v240 = vld [vmem:[%s1 + $0x18] sm:$0xff]
      %v241 = vld [vmem:[%s1 + $0x20] sm:$0xff]
      %v242 = vld [vmem:[%s1 + $0x28] sm:$0xff]
      %v243 = vld [vmem:[%s1 + $0x30] sm:$0xff]
      %v244 = vld [vmem:[%s1 + $0x38] sm:$0xff]
      %v245 = vld [vmem:[%s1 + $0x40] sm:$0xff]
      %v246 = vld [vmem:[%s1 + $0x48] sm:$0xff]
      %v247 = vld [vmem:[%s1 + $0x50] sm:$0xff]
      %v248 = vld [vmem:[%s1 + $0x58] sm:$0xff]
      %v249 = vld [vmem:[%s1 + $0x60] sm:$0xff]
      %v250 = vld [vmem:[%s1 + $0x68] sm:$0xff]
      %v251 = vld [vmem:[%s1 + $0x70] sm:$0xff]
      %v252 = vld [vmem:[%s1 + $0x78] sm:$0xff]
      %v253 = vld [vmem:[%s1 + $0x80] sm:$0xff]
      %v254 = vld [vmem:[%s1 + $0x88] sm:$0xff]
      %v255 = vld [vmem:[%s1 + $0x90] sm:$0xff]
      %v256 = vld [vmem:[%s1 + $0x98] sm:$0xff]
      %v257 = vld [vmem:[%s1 + $0xa0] sm:$0xff]
      %v258 = vld [vmem:[%s1 + $0xa8] sm:$0xff]
      %v259 = vld [vmem:[%s1 + $0xb0] sm:$0xff]
      %v260 = vld [vmem:[%s1 + $0xb8] sm:$0xff]
      %v261 = vld [vmem:[%s1 + $0xc0] sm:$0xff]
      %v262 = vld [vmem:[%s1 + $0xc8] sm:$0xff]
      %v263 = vld [vmem:[%s1 + $0xd0] sm:$0xff]
      %v264 = vld [vmem:[%s1 + $0xd8] sm:$0xff]
      %v265 = vld [vmem:[%s1 + $0xe0] sm:$0xff]
      %v266 = vld [vmem:[%s1 + $0xe8] sm:$0xff]
      %v267 = vld [vmem:[%s1 + $0xf0] sm:$0xff]
      %v268 = vld [vmem:[%s1 + $0xf8] sm:$0xff]
      %v269 = vld [vmem:[%s1 + $0x100] sm:$0xff]
      %v270 = vld [vmem:[%s1 + $0x108] sm:$0xff]
      %v271 = vld [vmem:[%s1 + $0x110] sm:$0xff]
      %v272 = vld [vmem:[%s1 + $0x118] sm:$0xff]
      %v273 = vld [vmem:[%s1 + $0x120] sm:$0xff]
      %v274 = vld [vmem:[%s1 + $0x128] sm:$0xff]
      %v275 = vld [vmem:[%s1 + $0x130] sm:$0xff]
      %v276 = vld [vmem:[%s1 + $0x138] sm:$0xff]
      %v277 = vld [vmem:[%s1 + $0x140] sm:$0xff]
      %v278 = vld [vmem:[%s1 + $0x148] sm:$0xff]
      %v279 = vld [vmem:[%s1 + $0x150] sm:$0xff]
      %v280 = vld [vmem:[%s1 + $0x158] sm:$0xff]
      %v281 = vld [vmem:[%s1 + $0x160] sm:$0xff]
      %v282 = vld [vmem:[%s1 + $0x168] sm:$0xff]
      %v283 = vld [vmem:[%s1 + $0x170] sm:$0xff]
      %v284 = vld [vmem:[%s1 + $0x178] sm:$0xff]
      %v285 = vld [vmem:[%s1 + $0x180] sm:$0xff]
      %v286 = vld [vmem:[%s1 + $0x188] sm:$0xff]
      %v287 = vld [vmem:[%s1 + $0x190] sm:$0xff]
      %v288 = vld [vmem:[%s1 + $0x198] sm:$0xff]
      %v289 = vld [vmem:[%s1 + $0x1a0] sm:$0xff]
      %v290 = vld [vmem:[%s1 + $0x1a8] sm:$0xff]
      %v291 = vld [vmem:[%s1 + $0x1b0] sm:$0xff]
      %v292 = vld [vmem:[%s1 + $0x1b8] sm:$0xff]
      %v293 = vld [vmem:[%s1 + $0x1c0] sm:$0xff]
      %v294 = vld [vmem:[%s1 + $0x1c8] sm:$0xff]
      %v295 = vld [vmem:[%s1 + $0x1d0] sm:$0xff]
      %v296 = vld [vmem:[%s1 + $0x1d8] sm:$0xff]
      %v297 = vld [vmem:[%s1 + $0x1e0] sm:$0xff]
      %v298 = vld [vmem:[%s1 + $0x1e8] sm:$0xff]
      %v299 = vld [vmem:[%s1 + $0x1f0] sm:$0xff]
      %v300 = vld [vmem:[%s1 + $0x1f8] sm:$0xff]
      %v301 = vld [vmem:[%s1 + $0x200] sm:$0xff]
      %v302 = vld [vmem:[%s1 + $0x208] sm:$0xff]
      %v303 = vld [vmem:[%s1 + $0x210] sm:$0xff]
      %v304 = vld [vmem:[%s1 + $0x218] sm:$0xff]
      %v305 = vld [vmem:[%s1 + $0x220] sm:$0xff]
      %v306 = vld [vmem:[%s1 + $0x228] sm:$0xff]
      %v307 = vld [vmem:[%s1 + $0x230] sm:$0xff]
      %v308 = vld [vmem:[%s1 + $0x238] sm:$0xff]
      %v309 = vld [vmem:[%s1 + $0x240] sm:$0xff]
      %v310 = vld [vmem:[%s1 + $0x248] sm:$0xff]
      %v311 = vld [vmem:[%s1 + $0x250] sm:$0xff]
      %v312 = vld [vmem:[%s1 + $0x258] sm:$0xff]
      %v313 = vld [vmem:[%s1 + $0x260] sm:$0xff]
      %v314 = vld [vmem:[%s1 + $0x268] sm:$0xff]
      %v315 = vld [vmem:[%s1 + $0x270] sm:$0xff]
      %v316 = vld [vmem:[%s1 + $0x278] sm:$0xff]
      %v317 = vld [vmem:[%s1 + $0x280] sm:$0xff]
      %v318 = vld [vmem:[%s1 + $0x288] sm:$0xff]
      %v319 = vld [vmem:[%s1 + $0x290] sm:$0xff]
      %v320 = vld [vmem:[%s1 + $0x298] sm:$0xff]
      %v321 = vld [vmem:[%s1 + $0x2a0] sm:$0xff]
      %v322 = vld [vmem:[%s1 + $0x2a8] sm:$0xff]
      %v323 = vld [vmem:[%s1 + $0x2b0] sm:$0xff]
      %v324 = vld [vmem:[%s1 + $0x2b8] sm:$0xff]
      %v325 = vld [vmem:[%s1 + $0x2c0] sm:$0xff]
      %v326 = vld [vmem:[%s1 + $0x2c8] sm:$0xff]
      %v327 = vld [vmem:[%s1 + $0x2d0] sm:$0xff]
      %v328 = vld [vmem:[%s1 + $0x2d8] sm:$0xff]
      %v329 = vld [vmem:[%s1 + $0x2e0] sm:$0xff]
      %v330 = vld [vmem:[%s1 + $0x2e8] sm:$0xff]
      %v331 = vld [vmem:[%s1 + $0x2f0] sm:$0xff]
      %v332 = vld [vmem:[%s1 + $0x2f8] sm:$0xff]
      %v333 = vld [vmem:[%s1 + $0x300] sm:$0xff]
      %v334 = vld [vmem:[%s1 + $0x308] sm:$0xff]
      %v335 = vld [vmem:[%s1 + $0x310] sm:$0xff]
      %v336 = vld [vmem:[%s1 + $0x318] sm:$0xff]
      %v337 = vld [vmem:[%s1 + $0x320] sm:$0xff]
      %v338 = vld [vmem:[%s1 + $0x328] sm:$0xff]
      %v339 = vld [vmem:[%s1 + $0x330] sm:$0xff]
      %v340 = vld [vmem:[%s1 + $0x338] sm:$0xff]
      %v341 = vld [vmem:[%s1 + $0x340] sm:$0xff]
      %v342 = vld [vmem:[%s1 + $0x348] sm:$0xff]
      %v343 = vld [vmem:[%s1 + $0x350] sm:$0xff]
      %v344 = vld [vmem:[%s1 + $0x358] sm:$0xff]
      %v345 = vld [vmem:[%s1 + $0x360] sm:$0xff]
      %v346 = vld [vmem:[%s1 + $0x368] sm:$0xff]
      %v347 = vld [vmem:[%s1 + $0x370] sm:$0xff]
      %v348 = vld [vmem:[%s1 + $0x378] sm:$0xff]
      %v349 = vld [vmem:[%s1 + $0x380] sm:$0xff]
      %v350 = vld [vmem:[%s1 + $0x388] sm:$0xff]
      %v351 = vld [vmem:[%s1 + $0x390] sm:$0xff]
      %v352 = vld [vmem:[%s1 + $0x398] sm:$0xff]
      %v353 = vld [vmem:[%s1 + $0x3a0] sm:$0xff]
      %v354 = vld [vmem:[%s1 + $0x3a8] sm:$0xff]
      %v355 = vld [vmem:[%s1 + $0x3b0] sm:$0xff]
      %v356 = vld [vmem:[%s1 + $0x3b8] sm:$0xff]
      %v357 = vld [vmem:[%s1 + $0x3c0] sm:$0xff]
      %v358 = vld [vmem:[%s1 + $0x3c8] sm:$0xff]
      %v359 = vld [vmem:[%s1 + $0x3d0] sm:$0xff]
      %v360 = vld [vmem:[%s1 + $0x3d8] sm:$0xff]
      %v361 = vld [vmem:[%s1 + $0x3e0] sm:$0xff]
      %v362 = vld [vmem:[%s1 + $0x3e8] sm:$0xff]
      %v363 = vld [vmem:[%s1 + $0x3f0] sm:$0xff]
      %v364 = vld [vmem:[%s1 + $0x3f8] sm:$0xff]
      %v365 = vld [vmem:[%s1 + $0x400] sm:$0xff]
      %v366 = vld [vmem:[%s1 + $0x408] sm:$0xff]
      %v367 = vld [vmem:[%s1 + $0x410] sm:$0xff]
      %v368 = vld [vmem:[%s1 + $0x418] sm:$0xff]
      %v369 = vld [vmem:[%s1 + $0x420] sm:$0xff]
      %v370 = vld [vmem:[%s1 + $0x428] sm:$0xff]
      %v371 = vld [vmem:[%s1 + $0x430] sm:$0xff]
      %v372 = vld [vmem:[%s1 + $0x438] sm:$0xff]
      %v373 = vld [vmem:[%s1 + $0x440] sm:$0xff]
      %v374 = vld [vmem:[%s1 + $0x448] sm:$0xff]
      %v375 = vld [vmem:[%s1 + $0x450] sm:$0xff]
      %v376 = vld [vmem:[%s1 + $0x458] sm:$0xff]
      %v377 = vld [vmem:[%s1 + $0x460] sm:$0xff]
      %v378 = vld [vmem:[%s1 + $0x468] sm:$0xff]
      %v379 = vld [vmem:[%s1 + $0x470] sm:$0xff]
      %v380 = vld [vmem:[%s1 + $0x478] sm:$0xff]
      %v381 = vld [vmem:[%s1 + $0x480] sm:$0xff]
      %v382 = vld [vmem:[%s1 + $0x488] sm:$0xff]
      %v383 = vld [vmem:[%s1 + $0x490] sm:$0xff]
      %v384 = vld [vmem:[%s1 + $0x498] sm:$0xff]
      %v385 = vld [vmem:[%s1 + $0x4a0] sm:$0xff]
      %v386 = vld [vmem:[%s1 + $0x4a8] sm:$0xff]
      %v387 = vld [vmem:[%s1 + $0x4b0] sm:$0xff]
      %v388 = vld [vmem:[%s1 + $0x4b8] sm:$0xff]
      %v389 = vld [vmem:[%s1 + $0x4c0] sm:$0xff]
      %v390 = vld [vmem:[%s1 + $0x4c8] sm:$0xff]
      %v391 = vld [vmem:[%s1 + $0x4d0] sm:$0xff]
      %v392 = vld [vmem:[%s1 + $0x4d8] sm:$0xff]
      %v393 = vld [vmem:[%s1 + $0x4e0] sm:$0xff]
      %v394 = vld [vmem:[%s1 + $0x4e8] sm:$0xff]
      %v395 = vld [vmem:[%s1 + $0x4f0] sm:$0xff]
      %v396 = vld [vmem:[%s1 + $0x4f8] sm:$0xff]
      %v397 = vld [vmem:[%s2] sm:$0x1f]
      %v399 = vlaneseq
      %v400 = vshrl.u32 %v399, 7
      %v401 = vsub.s32 0, %v400
      %v402 = vrot.slane %v397, %v401
      %v403 = vlaneseq
      %v404 = vshrl.u32 %v403, 7
      %v405 = vsub.s32 1, %v404
      %v406 = vrot.slane %v397, %v405
      %v407 = vlaneseq
      %v408 = vshrl.u32 %v407, 7
      %v409 = vsub.s32 2, %v408
      %v410 = vrot.slane %v397, %v409
      %v411 = vlaneseq
      %v412 = vshrl.u32 %v411, 7
      %v413 = vsub.s32 3, %v412
      %v414 = vrot.slane %v397, %v413
      %v415 = vlaneseq
      %v416 = vshrl.u32 %v415, 7
      %v417 = vsub.s32 4, %v416
      %v418 = vrot.slane %v397, %v417
      %424 = vmatprep.subr.mxu0 %v238
      %425 = vmatpush1.msra.mxu0 %v237
      %426 = vmatprep.subr.mxu0 %v243
      %427 = vmatpush1.msra.mxu0 %v242
      %428 = vmatprep.subr.mxu0 %v248
      %429 = vmatpush1.msra.mxu0 %v247
      %430 = vmatprep.subr.mxu0 %v253
      %431 = vmatpush1.msra.mxu0 %v252
      %432 = vmatprep.subr.mxu0 %v258
      %433 = vmatpush1.msra.mxu0 %v257
      %434 = vmatprep.subr.mxu0 %v263
      %435 = vmatpush1.msra.mxu0 %v262
      %436 = vmatprep.subr.mxu0 %v268
      %437 = vmatpush1.msra.mxu0 %v267
      %438 = vmatprep.subr.mxu0 %v273
      %439 = vmatpush1.msra.mxu0 %v272
      %440 = vmatprep.subr.mxu0 %v278
      %441 = vmatpush1.msra.mxu0 %v277
      %442 = vmatprep.subr.mxu0 %v283
      %443 = vmatpush1.msra.mxu0 %v282
      %444 = vmatprep.subr.mxu0 %v288
      %445 = vmatpush1.msra.mxu0 %v287
      %446 = vmatprep.subr.mxu0 %v293
      %447 = vmatpush1.msra.mxu0 %v292
      %448 = vmatprep.subr.mxu0 %v298
      %449 = vmatpush1.msra.mxu0 %v297
      %450 = vmatprep.subr.mxu0 %v303
      %451 = vmatpush1.msra.mxu0 %v302
      %452 = vmatprep.subr.mxu0 %v308
      %453 = vmatpush1.msra.mxu0 %v307
      %454 = vmatprep.subr.mxu0 %v313
      %455 = vmatpush1.msra.mxu0 %v312
      %456 = vmatprep.subr.mxu0 %v318
      %457 = vmatpush1.msra.mxu0 %v317
      %458 = vmatprep.subr.mxu0 %v323
      %459 = vmatpush1.msra.mxu0 %v322
      %460 = vmatprep.subr.mxu0 %v328
      %461 = vmatpush1.msra.mxu0 %v327
      %462 = vmatprep.subr.mxu0 %v333
      %463 = vmatpush1.msra.mxu0 %v332
      %464 = vmatprep.subr.mxu0 %v338
      %465 = vmatpush1.msra.mxu0 %v337
      %466 = vmatprep.subr.mxu0 %v343
      %467 = vmatpush1.msra.mxu0 %v342
      %468 = vmatprep.subr.mxu0 %v348
      %469 = vmatpush1.msra.mxu0 %v347
      %470 = vmatprep.subr.mxu0 %v353
      %471 = vmatpush1.msra.mxu0 %v352
      %472 = vmatprep.subr.mxu0 %v358
      %473 = vmatpush1.msra.mxu0 %v357
      %474 = vmatprep.subr.mxu0 %v363
      %475 = vmatpush1.msra.mxu0 %v362
      %476 = vmatprep.subr.mxu0 %v368
      %477 = vmatpush1.msra.mxu0 %v367
      %478 = vmatprep.subr.mxu0 %v373
      %479 = vmatpush1.msra.mxu0 %v372
      %480 = vmatprep.subr.mxu0 %v378
      %481 = vmatpush1.msra.mxu0 %v377
      %482 = vmatprep.subr.mxu0 %v383
      %483 = vmatpush1.msra.mxu0 %v382
      %484 = vmatprep.subr.mxu0 %v388
      %485 = vmatpush1.msra.mxu0 %v387
      %486 = vmatprep.subr.mxu0 %v393
      %487 = vmatpush1.msra.mxu0 %v392
      %488 = vmatprep.mubr.f32.mxu0 %v234
      %489 = vmatmul.mubr.f32.gmra.mrb[0].mxu0 %v233
      %v490 = vpop.f32.mrb[0].mxu0
      %v491 = vadd.f32 %v402, %v490
      %v492 = vpop.f32.mrb[0].mxu0
      %v493 = vadd.f32 %v406, %v492
      %494 = vmatprep.mubr.f32.mxu0 %v236
      %495 = vmatmul.mubr.f32.gmra.mrb[0].mxu0 %v235
      %v496 = vpop.f32.mrb[0].mxu0
      %v497 = vadd.f32 %v402, %v496
      %v498 = vpop.f32.mrb[0].mxu0
      %v499 = vadd.f32 %v406, %v498
      %500 = vdwg.mxu0
      %501 = vmatprep.subr.mxu0 %v240
      %502 = vmatpush1.msra.mxu0 %v239
      %503 = vmatprep.subr.mxu0 %v245
      %504 = vmatpush1.msra.mxu0 %v244
      %505 = vmatprep.subr.mxu0 %v250
      %506 = vmatpush1.msra.mxu0 %v249
      %507 = vmatprep.subr.mxu0 %v255
      %508 = vmatpush1.msra.mxu0 %v254
      %509 = vmatprep.subr.mxu0 %v260
      %510 = vmatpush1.msra.mxu0 %v259
      %511 = vmatprep.subr.mxu0 %v265
      %512 = vmatpush1.msra.mxu0 %v264
      %513 = vmatprep.subr.mxu0 %v270
      %514 = vmatpush1.msra.mxu0 %v269
      %515 = vmatprep.subr.mxu0 %v275
      %516 = vmatpush1.msra.mxu0 %v274
      %517 = vmatprep.subr.mxu0 %v280
      %518 = vmatpush1.msra.mxu0 %v279
      %519 = vmatprep.subr.mxu0 %v285
      %520 = vmatpush1.msra.mxu0 %v284
      %521 = vmatprep.subr.mxu0 %v290
      %522 = vmatpush1.msra.mxu0 %v289
      %523 = vmatprep.subr.mxu0 %v295
      %524 = vmatpush1.msra.mxu0 %v294
      %525 = vmatprep.subr.mxu0 %v300
      %526 = vmatpush1.msra.mxu0 %v299
      %527 = vmatprep.subr.mxu0 %v305
      %528 = vmatpush1.msra.mxu0 %v304
      %529 = vmatprep.subr.mxu0 %v310
      %530 = vmatpush1.msra.mxu0 %v309
      %531 = vmatprep.subr.mxu0 %v315
      %532 = vmatpush1.msra.mxu0 %v314
      %533 = vmatprep.subr.mxu0 %v320
      %534 = vmatpush1.msra.mxu0 %v319
      %535 = vmatprep.subr.mxu0 %v325
      %536 = vmatpush1.msra.mxu0 %v324
      %537 = vmatprep.subr.mxu0 %v330
      %538 = vmatpush1.msra.mxu0 %v329
      %539 = vmatprep.subr.mxu0 %v335
      %540 = vmatpush1.msra.mxu0 %v334
      %541 = vmatprep.subr.mxu0 %v340
      %542 = vmatpush1.msra.mxu0 %v339
      %543 = vmatprep.subr.mxu0 %v345
      %544 = vmatpush1.msra.mxu0 %v344
      %545 = vmatprep.subr.mxu0 %v350
      %546 = vmatpush1.msra.mxu0 %v349
      %547 = vmatprep.subr.mxu0 %v355
      %548 = vmatpush1.msra.mxu0 %v354
      %549 = vmatprep.subr.mxu0 %v360
      %550 = vmatpush1.msra.mxu0 %v359
      %551 = vmatprep.subr.mxu0 %v365
      %552 = vmatpush1.msra.mxu0 %v364
      %553 = vmatprep.subr.mxu0 %v370
      %554 = vmatpush1.msra.mxu0 %v369
      %555 = vmatprep.subr.mxu0 %v375
      %556 = vmatpush1.msra.mxu0 %v374
      %557 = vmatprep.subr.mxu0 %v380
      %558 = vmatpush1.msra.mxu0 %v379
      %559 = vmatprep.subr.mxu0 %v385
      %560 = vmatpush1.msra.mxu0 %v384
      %561 = vmatprep.subr.mxu0 %v390
      %562 = vmatpush1.msra.mxu0 %v389
      %563 = vmatprep.subr.mxu0 %v395
      %564 = vmatpush1.msra.mxu0 %v394
      %565 = vmatprep.mubr.f32.mxu0 %v234
      %566 = vmatmul.mubr.f32.gmra.mrb[0].mxu0 %v233
      %v567 = vpop.f32.mrb[0].mxu0
      %v568 = vadd.f32 %v410, %v567
      %v569 = vpop.f32.mrb[0].mxu0
      %v570 = vadd.f32 %v414, %v569
      %571 = vmatprep.mubr.f32.mxu0 %v236
      %572 = vmatmul.mubr.f32.gmra.mrb[0].mxu0 %v235
      %v573 = vpop.f32.mrb[0].mxu0
      %v574 = vadd.f32 %v410, %v573
      %v575 = vpop.f32.mrb[0].mxu0
      %v576 = vadd.f32 %v414, %v575
      %577 = vdwg.mxu0
      %578 = vmatprep.subr.mxu0 0.0
      %579 = vmatpush1.msra.mxu0 %v241
      %580 = vmatprep.subr.mxu0 0.0
      %581 = vmatpush1.msra.mxu0 %v246
      %582 = vmatprep.subr.mxu0 0.0
      %583 = vmatpush1.msra.mxu0 %v251
      %584 = vmatprep.subr.mxu0 0.0
      %585 = vmatpush1.msra.mxu0 %v256
      %586 = vmatprep.subr.mxu0 0.0
      %587 = vmatpush1.msra.mxu0 %v261
      %588 = vmatprep.subr.mxu0 0.0
      %589 = vmatpush1.msra.mxu0 %v266
      %590 = vmatprep.subr.mxu0 0.0
      %591 = vmatpush1.msra.mxu0 %v271
      %592 = vmatprep.subr.mxu0 0.0
      %593 = vmatpush1.msra.mxu0 %v276
      %594 = vmatprep.subr.mxu0 0.0
      %595 = vmatpush1.msra.mxu0 %v281
      %596 = vmatprep.subr.mxu0 0.0
      %597 = vmatpush1.msra.mxu0 %v286
      %598 = vmatprep.subr.mxu0 0.0
      %599 = vmatpush1.msra.mxu0 %v291
      %600 = vmatprep.subr.mxu0 0.0
      %601 = vmatpush1.msra.mxu0 %v296
      %602 = vmatprep.subr.mxu0 0.0
      %603 = vmatpush1.msra.mxu0 %v301
      %604 = vmatprep.subr.mxu0 0.0
      %605 = vmatpush1.msra.mxu0 %v306
      %606 = vmatprep.subr.mxu0 0.0
      %607 = vmatpush1.msra.mxu0 %v311
      %608 = vmatprep.subr.mxu0 0.0
      %609 = vmatpush1.msra.mxu0 %v316
      %610 = vmatprep.subr.mxu0 0.0
      %611 = vmatpush1.msra.mxu0 %v321
      %612 = vmatprep.subr.mxu0 0.0
      %613 = vmatpush1.msra.mxu0 %v326
      %614 = vmatprep.subr.mxu0 0.0
      %615 = vmatpush1.msra.mxu0 %v331
      %616 = vmatprep.subr.mxu0 0.0
      %617 = vmatpush1.msra.mxu0 %v336
      %618 = vmatprep.subr.mxu0 0.0
      %619 = vmatpush1.msra.mxu0 %v341
      %620 = vmatprep.subr.mxu0 0.0
      %621 = vmatpush1.msra.mxu0 %v346
      %622 = vmatprep.subr.mxu0 0.0
      %623 = vmatpush1.msra.mxu0 %v351
      %624 = vmatprep.subr.mxu0 0.0
      %625 = vmatpush1.msra.mxu0 %v356
      %626 = vmatprep.subr.mxu0 0.0
      %627 = vmatpush1.msra.mxu0 %v361
      %628 = vmatprep.subr.mxu0 0.0
      %629 = vmatpush1.msra.mxu0 %v366
      %630 = vmatprep.subr.mxu0 0.0
      %631 = vmatpush1.msra.mxu0 %v371
      %632 = vmatprep.subr.mxu0 0.0
      %633 = vmatpush1.msra.mxu0 %v376
      %634 = vmatprep.subr.mxu0 0.0
      %635 = vmatpush1.msra.mxu0 %v381
      %636 = vmatprep.subr.mxu0 0.0
      %637 = vmatpush1.msra.mxu0 %v386
      %638 = vmatprep.subr.mxu0 0.0
      %639 = vmatpush1.msra.mxu0 %v391
      %640 = vmatprep.subr.mxu0 0.0
      %641 = vmatpush1.msra.mxu0 %v396
      %642 = vmatprep.mubr.f32.mxu0 %v234
      %643 = vmatmul.mubr.f32.gmra.mrb[0].mxu0 %v233
      %v644 = vpop.f32.mrb[0].mxu0
      %v645 = vadd.f32 %v418, %v644
      %v646 = vpop.f32.mrb[0].mxu0
      %647 = vmatprep.mubr.f32.mxu0 %v236
      %648 = vmatmul.mubr.f32.gmra.mrb[0].mxu0 %v235
      %v649 = vpop.f32.mrb[0].mxu0
      %v650 = vadd.f32 %v418, %v649
      %v651 = vpop.f32.mrb[0].mxu0
      %652 = vdwg.mxu0
      %v653 = vmax.f32 %v491, 0.0
      %v654 = vmax.f32 %v497, 0.0
      %v655 = vld [vmem:[%s3] sm:$0xff]
      %v656 = vld [vmem:[%s3 + $0x8] sm:$0xff]
      %v657 = vld [vmem:[%s3 + $0x10] sm:$0xff]
      %v658 = vld [vmem:[%s3 + $0x18] sm:$0xff]
      %v659 = vld [vmem:[%s3 + $0x20] sm:$0xff]
      %v660 = vld [vmem:[%s3 + $0x28] sm:$0xff]
      %v661 = vld [vmem:[%s3 + $0x30] sm:$0xff]
      %v662 = vld [vmem:[%s3 + $0x38] sm:$0xff]
      %v663 = vld [vmem:[%s3 + $0x40] sm:$0xff]
      %v664 = vld [vmem:[%s3 + $0x48] sm:$0xff]
      %v665 = vld [vmem:[%s3 + $0x50] sm:$0xff]
      %v666 = vld [vmem:[%s3 + $0x58] sm:$0xff]
      %v667 = vld [vmem:[%s3 + $0x60] sm:$0xff]
      %v668 = vld [vmem:[%s3 + $0x68] sm:$0xff]
      %v669 = vld [vmem:[%s3 + $0x70] sm:$0xff]
      %v670 = vld [vmem:[%s3 + $0x78] sm:$0xff]
      %v671 = vld [vmem:[%s3 + $0x80] sm:$0xff]
      %v672 = vld [vmem:[%s3 + $0x88] sm:$0xff]
      %v673 = vld [vmem:[%s3 + $0x90] sm:$0xff]
      %v674 = vld [vmem:[%s3 + $0x98] sm:$0xff]
      %v675 = vld [vmem:[%s3 + $0xa0] sm:$0xff]
      %v676 = vld [vmem:[%s3 + $0xa8] sm:$0xff]
      %v677 = vld [vmem:[%s3 + $0xb0] sm:$0xff]
      %v678 = vld [vmem:[%s3 + $0xb8] sm:$0xff]
      %v679 = vld [vmem:[%s3 + $0xc0] sm:$0xff]
      %v680 = vld [vmem:[%s3 + $0xc8] sm:$0xff]
      %v681 = vld [vmem:[%s3 + $0xd0] sm:$0xff]
      %v682 = vld [vmem:[%s3 + $0xd8] sm:$0xff]
      %v683 = vld [vmem:[%s3 + $0xe0] sm:$0xff]
      %v684 = vld [vmem:[%s3 + $0xe8] sm:$0xff]
      %v685 = vld [vmem:[%s3 + $0xf0] sm:$0xff]
      %v686 = vld [vmem:[%s3 + $0xf8] sm:$0xff]
      %v687 = vld [vmem:[%s3 + $0x100] sm:$0xff]
      %v688 = vld [vmem:[%s3 + $0x108] sm:$0xff]
      %v689 = vld [vmem:[%s3 + $0x110] sm:$0xff]
      %v690 = vld [vmem:[%s3 + $0x118] sm:$0xff]
      %v691 = vld [vmem:[%s3 + $0x120] sm:$0xff]
      %v692 = vld [vmem:[%s3 + $0x128] sm:$0xff]
      %v693 = vld [vmem:[%s3 + $0x130] sm:$0xff]
      %v694 = vld [vmem:[%s3 + $0x138] sm:$0xff]
      %v695 = vld [vmem:[%s3 + $0x140] sm:$0xff]
      %v696 = vld [vmem:[%s3 + $0x148] sm:$0xff]
      %v697 = vld [vmem:[%s3 + $0x150] sm:$0xff]
      %v698 = vld [vmem:[%s3 + $0x158] sm:$0xff]
      %v699 = vld [vmem:[%s3 + $0x160] sm:$0xff]
      %v700 = vld [vmem:[%s3 + $0x168] sm:$0xff]
      %v701 = vld [vmem:[%s3 + $0x170] sm:$0xff]
      %v702 = vld [vmem:[%s3 + $0x178] sm:$0xff]
      %v703 = vld [vmem:[%s3 + $0x180] sm:$0xff]
      %v704 = vld [vmem:[%s3 + $0x188] sm:$0xff]
      %v705 = vld [vmem:[%s3 + $0x190] sm:$0xff]
      %v706 = vld [vmem:[%s3 + $0x198] sm:$0xff]
      %v707 = vld [vmem:[%s3 + $0x1a0] sm:$0xff]
      %v708 = vld [vmem:[%s3 + $0x1a8] sm:$0xff]
      %v709 = vld [vmem:[%s3 + $0x1b0] sm:$0xff]
      %v710 = vld [vmem:[%s3 + $0x1b8] sm:$0xff]
      %v711 = vld [vmem:[%s3 + $0x1c0] sm:$0xff]
      %v712 = vld [vmem:[%s3 + $0x1c8] sm:$0xff]
      %v713 = vld [vmem:[%s3 + $0x1d0] sm:$0xff]
      %v714 = vld [vmem:[%s3 + $0x1d8] sm:$0xff]
      %v715 = vld [vmem:[%s3 + $0x1e0] sm:$0xff]
      %v716 = vld [vmem:[%s3 + $0x1e8] sm:$0xff]
      %v717 = vld [vmem:[%s3 + $0x1f0] sm:$0xff]
      %v718 = vld [vmem:[%s3 + $0x1f8] sm:$0xff]
      %v719 = vld [vmem:[%s4] sm:$0xf]
      %v721 = vlaneseq
      %v722 = vshrl.u32 %v721, 7
      %v723 = vsub.s32 0, %v722
      %v724 = vrot.slane %v719, %v723
      %v725 = vlaneseq
      %v726 = vshrl.u32 %v725, 7
      %v727 = vsub.s32 1, %v726
      %v728 = vrot.slane %v719, %v727
      %v729 = vlaneseq
      %v730 = vshrl.u32 %v729, 7
      %v731 = vsub.s32 2, %v730
      %v732 = vrot.slane %v719, %v731
      %v733 = vlaneseq
      %v734 = vshrl.u32 %v733, 7
      %v735 = vsub.s32 3, %v734
      %v736 = vrot.slane %v719, %v735
      %741 = vmatprep.subr.mxu0 %v656
      %742 = vmatpush1.msra.mxu0 %v655
      %743 = vmatprep.subr.mxu0 %v660
      %744 = vmatpush1.msra.mxu0 %v659
      %745 = vmatprep.subr.mxu0 %v664
      %746 = vmatpush1.msra.mxu0 %v663
      %747 = vmatprep.subr.mxu0 %v668
      %748 = vmatpush1.msra.mxu0 %v667
      %749 = vmatprep.subr.mxu0 %v672
      %750 = vmatpush1.msra.mxu0 %v671
      %751 = vmatprep.subr.mxu0 %v676
      %752 = vmatpush1.msra.mxu0 %v675
      %753 = vmatprep.subr.mxu0 %v680
      %754 = vmatpush1.msra.mxu0 %v679
      %755 = vmatprep.subr.mxu0 %v684
      %756 = vmatpush1.msra.mxu0 %v683
      %757 = vmatprep.subr.mxu0 %v688
      %758 = vmatpush1.msra.mxu0 %v687
      %759 = vmatprep.subr.mxu0 %v692
      %760 = vmatpush1.msra.mxu0 %v691
      %761 = vmatprep.subr.mxu0 %v696
      %762 = vmatpush1.msra.mxu0 %v695
      %763 = vmatprep.subr.mxu0 %v700
      %764 = vmatpush1.msra.mxu0 %v699
      %765 = vmatprep.subr.mxu0 %v704
      %766 = vmatpush1.msra.mxu0 %v703
      %767 = vmatprep.subr.mxu0 %v708
      %768 = vmatpush1.msra.mxu0 %v707
      %769 = vmatprep.subr.mxu0 %v712
      %770 = vmatpush1.msra.mxu0 %v711
      %771 = vmatprep.subr.mxu0 %v716
      %772 = vmatpush1.msra.mxu0 %v715
      %773 = vmatprep.subr.mxu0 0.0
      %774 = vmatpush1.msra.mxu0 0.0
      %775 = vmatprep.subr.mxu0 0.0
      %776 = vmatpush1.msra.mxu0 0.0
      %777 = vmatprep.subr.mxu0 0.0
      %778 = vmatpush1.msra.mxu0 0.0
      %779 = vmatprep.subr.mxu0 0.0
      %780 = vmatpush1.msra.mxu0 0.0
      %781 = vmatprep.subr.mxu0 0.0
      %782 = vmatpush1.msra.mxu0 0.0
      %783 = vmatprep.subr.mxu0 0.0
      %784 = vmatpush1.msra.mxu0 0.0
      %785 = vmatprep.subr.mxu0 0.0
      %786 = vmatpush1.msra.mxu0 0.0
      %787 = vmatprep.subr.mxu0 0.0
      %788 = vmatpush1.msra.mxu0 0.0
      %789 = vmatprep.subr.mxu0 0.0
      %790 = vmatpush1.msra.mxu0 0.0
      %791 = vmatprep.subr.mxu0 0.0
      %792 = vmatpush1.msra.mxu0 0.0
      %793 = vmatprep.subr.mxu0 0.0
      %794 = vmatpush1.msra.mxu0 0.0
      %795 = vmatprep.subr.mxu0 0.0
      %796 = vmatpush1.msra.mxu0 0.0
      %797 = vmatprep.subr.mxu0 0.0
      %798 = vmatpush1.msra.mxu0 0.0
      %799 = vmatprep.subr.mxu0 0.0
      %800 = vmatpush1.msra.mxu0 0.0
      %801 = vmatprep.subr.mxu0 0.0
      %802 = vmatpush1.msra.mxu0 0.0
      %803 = vmatprep.subr.mxu0 0.0
      %804 = vmatpush1.msra.mxu0 0.0
      %805 = vmatprep.mubr.f32.mxu0 0.0
      %806 = vmatmul.mubr.f32.gmra.mrb[0].mxu0 %v653
      %v807 = vpop.f32.mrb[0].mxu0
      %v808 = vadd.f32 %v724, %v807
      %v809 = vpop.f32.mrb[0].mxu0
      %v810 = vadd.f32 %v728, %v809
      %811 = vmatprep.mubr.f32.mxu0 0.0
      %812 = vmatmul.mubr.f32.gmra.mrb[0].mxu0 %v654
      %v813 = vpop.f32.mrb[0].mxu0
      %v814 = vadd.f32 %v724, %v813
      %v815 = vpop.f32.mrb[0].mxu0
      %v816 = vadd.f32 %v728, %v815
      %817 = vdwg.mxu0
      %818 = vmatprep.subr.mxu0 %v658
      %819 = vmatpush1.msra.mxu0 %v657
      %820 = vmatprep.subr.mxu0 %v662
      %821 = vmatpush1.msra.mxu0 %v661
      %822 = vmatprep.subr.mxu0 %v666
      %823 = vmatpush1.msra.mxu0 %v665
      %824 = vmatprep.subr.mxu0 %v670
      %825 = vmatpush1.msra.mxu0 %v669
      %826 = vmatprep.subr.mxu0 %v674
      %827 = vmatpush1.msra.mxu0 %v673
      %828 = vmatprep.subr.mxu0 %v678
      %829 = vmatpush1.msra.mxu0 %v677
      %830 = vmatprep.subr.mxu0 %v682
      %831 = vmatpush1.msra.mxu0 %v681
      %832 = vmatprep.subr.mxu0 %v686
      %833 = vmatpush1.msra.mxu0 %v685
      %834 = vmatprep.subr.mxu0 %v690
      %835 = vmatpush1.msra.mxu0 %v689
      %836 = vmatprep.subr.mxu0 %v694
      %837 = vmatpush1.msra.mxu0 %v693
      %838 = vmatprep.subr.mxu0 %v698
      %839 = vmatpush1.msra.mxu0 %v697
      %840 = vmatprep.subr.mxu0 %v702
      %841 = vmatpush1.msra.mxu0 %v701
      %842 = vmatprep.subr.mxu0 %v706
      %843 = vmatpush1.msra.mxu0 %v705
      %844 = vmatprep.subr.mxu0 %v710
      %845 = vmatpush1.msra.mxu0 %v709
      %846 = vmatprep.subr.mxu0 %v714
      %847 = vmatpush1.msra.mxu0 %v713
      %848 = vmatprep.subr.mxu0 %v718
      %849 = vmatpush1.msra.mxu0 %v717
      %850 = vmatprep.subr.mxu0 0.0
      %851 = vmatpush1.msra.mxu0 0.0
      %852 = vmatprep.subr.mxu0 0.0
      %853 = vmatpush1.msra.mxu0 0.0
      %854 = vmatprep.subr.mxu0 0.0
      %855 = vmatpush1.msra.mxu0 0.0
      %856 = vmatprep.subr.mxu0 0.0
      %857 = vmatpush1.msra.mxu0 0.0
      %858 = vmatprep.subr.mxu0 0.0
      %859 = vmatpush1.msra.mxu0 0.0
      %860 = vmatprep.subr.mxu0 0.0
      %861 = vmatpush1.msra.mxu0 0.0
      %862 = vmatprep.subr.mxu0 0.0
      %863 = vmatpush1.msra.mxu0 0.0
      %864 = vmatprep.subr.mxu0 0.0
      %865 = vmatpush1.msra.mxu0 0.0
      %866 = vmatprep.subr.mxu0 0.0
      %867 = vmatpush1.msra.mxu0 0.0
      %868 = vmatprep.subr.mxu0 0.0
      %869 = vmatpush1.msra.mxu0 0.0
      %870 = vmatprep.subr.mxu0 0.0
      %871 = vmatpush1.msra.mxu0 0.0
      %872 = vmatprep.subr.mxu0 0.0
      %873 = vmatpush1.msra.mxu0 0.0
      %874 = vmatprep.subr.mxu0 0.0
      %875 = vmatpush1.msra.mxu0 0.0
      %876 = vmatprep.subr.mxu0 0.0
      %877 = vmatpush1.msra.mxu0 0.0
      %878 = vmatprep.subr.mxu0 0.0
      %879 = vmatpush1.msra.mxu0 0.0
      %880 = vmatprep.subr.mxu0 0.0
      %881 = vmatpush1.msra.mxu0 0.0
      %882 = vmatprep.mubr.f32.mxu0 0.0
      %883 = vmatmul.mubr.f32.gmra.mrb[0].mxu0 %v653
      %v884 = vpop.f32.mrb[0].mxu0
      %v885 = vadd.f32 %v732, %v884
      %v886 = vpop.f32.mrb[0].mxu0
      %v887 = vadd.f32 %v736, %v886
      %888 = vmatprep.mubr.f32.mxu0 0.0
      %889 = vmatmul.mubr.f32.gmra.mrb[0].mxu0 %v654
      %v890 = vpop.f32.mrb[0].mxu0
      %v891 = vadd.f32 %v732, %v890
      %v892 = vpop.f32.mrb[0].mxu0
      %v893 = vadd.f32 %v736, %v892
      %894 = vdwg.mxu0
      %v895 = vadd.f32 %v808, %v493
      %v896 = vadd.f32 %v810, %v568
      %v897 = vadd.f32 %v885, %v570
      %v898 = vadd.f32 %v887, %v645
      %v899 = vadd.f32 %v814, %v499
      %v900 = vadd.f32 %v816, %v574
      %v901 = vadd.f32 %v891, %v576
      %v902 = vadd.f32 %v893, %v650
      %v903 = vmax.f32 %v895, 0.0
      %v904 = vmax.f32 %v896, 0.0
      %v905 = vmax.f32 %v897, 0.0
      %v906 = vmax.f32 %v898, 0.0
      %v907 = vmax.f32 %v899, 0.0
      %v908 = vmax.f32 %v900, 0.0
      %v909 = vmax.f32 %v901, 0.0
      %v910 = vmax.f32 %v902, 0.0
      %v911 = vmax.f32 %v903, 0.0
      %v912 = vmax.f32 %v904, 0.0
      %v913 = vmax.f32 %v905, 0.0
      %v914 = vmax.f32 %v906, 0.0
      %v915 = vmax.f32 %v907, 0.0
      %v916 = vmax.f32 %v908, 0.0
      %v917 = vmax.f32 %v909, 0.0
      %v918 = vmax.f32 %v910, 0.0
      %919 = vst [vmem:[%s231] sm:$0xff] %v911
      %920 = vst [vmem:[%s231 + $0x8] sm:$0xff] %v912
      %921 = vst [vmem:[%s231 + $0x10] sm:$0xff] %v913
      %922 = vst [vmem:[%s231 + $0x18] sm:$0xff] %v914
      %923 = vst [vmem:[%s231 + $0x20] sm:$0xff] %v915
      %924 = vst [vmem:[%s231 + $0x28] sm:$0xff] %v916
      %925 = vst [vmem:[%s231 + $0x30] sm:$0xff] %v917
      %926 = vst [vmem:[%s231 + $0x38] sm:$0xff] %v918
      %s927 = smul.u32 2, %s16
      %p928 = scmp.lt.s32.totalorder %s927, 3
      %s929 = scalar_select %p928, %s927, 3
      %s930 = smul.addr %s929, 4
      %s931 = smul.addr %s930, 8
      %s932 = scalar_lea.vmem %s5, %s931
      // Predicated region
      $region41: #{generator1_forward.19} parent=39 // pred_check
        %p933 = pneg %p144
      $region42: #{generator1_forward.19} parent=39 // pred_check_branch
        %935 = sbr.rel (%p933) target = $region44
      $region43: #{generator1_forward.19} parent=39 // pred_region
        %s936 = smul.u32 2, %s16
      $region44: #{generator1_forward.19} parent=39 // pred_fallthru
        _
    $region40: #{generator1_forward.19} parent=5 // pred_fallthru
      _
    %p937 = scmp.le.s32.totalorder 2, %s11
    // Predicated region
    $region45: #{generator1_forward.19} parent=5 // pred_check
      %p938 = pneg %p937
    $region46: #{generator1_forward.19} parent=5 // pred_check_branch
      %940 = sbr.rel (%p938) target = $region48
    $region47: #{generator1_forward.19} parent=5 // pred_region
      %s941 = ssub.s32 %s11, 2
      // Predicated region
      $region49: #{generator1_forward.19} parent=47 // pred_check
        %p942 = pneg %p150
      $region50: #{generator1_forward.19} parent=47 // pred_check_branch
        %944 = sbr.rel (%p942) target = $region52
      $region51: #{generator1_forward.19} parent=47 // pred_region
        %s945 = smul.u32 2, %s17
        %p946 = scmp.lt.s32.totalorder %s945, 3
        %s947 = scalar_select %p946, %s945, 3
        %s948 = smul.addr %s947, 4
        %s949 = smul.addr %s948, 8
        %s950 = scalar_lea.vmem %s5, %s949
      $region52: #{generator1_forward.19} parent=47 // pred_fallthru
        _
    $region48: #{generator1_forward.19} parent=5 // pred_fallthru
      _
  $region6: #{generator1_forward.19} parent=0 // loop_footer
    %s15 = sadd.s32 1, %s11
  $region7: #{generator1_forward.19} parent=0 // loop_footer_branch
    %10 = sbr.rel target = $region3
  $region8: #{generator1_forward.19} parent=0 // loop_exit
    _

// kernel: generator1_forward.22
$region0: #{generator1_forward.22}
  #allocation0 [shape = 'u32[]', space=smem, size = 0x4, offset = 0x4, fixed_abs, tag = 'smem constant byte address 0x4 - core index']
  #allocation1 [shape = 'u32[144,128]{1,0:T(1,128)}', space=vmem, size = 0x12000, scoped, tag = 'internal scratch']
  %s0 = inlined_call_operand.vmem [shape: f32[32,128], index: 0, kind: input, shape index: {}]
  %s1 = inlined_call_operand.vmem [shape: f32[128,768], index: 1, kind: input, shape index: {}]
  %s2 = inlined_call_operand.vmem [shape: f32[1,768], index: 2, kind: input, shape index: {}]
  %s3 = inlined_call_operand.vmem [shape: f32[256,512], index: 3, kind: input, shape index: {}]
  %s4 = inlined_call_operand.vmem [shape: f32[1,512], index: 4, kind: input, shape index: {}]
  %s5 = inlined_call_operand.vmem [shape: f32[32,512], index: 5, kind: output, shape index: {}]
  %s6 = sld [smem:[#allocation0]]
  $region53: #{generator1_forward.22} parent=0
    _
  %s8 = ssub.s32 1, %s6
  %s9 = scalar_select 0, %s8, %s6
  loop: start=0, step=1, limit=4
  $region2: #{generator1_forward.22} parent=0 // loop_pre_header
    _
  $region3: #{generator1_forward.22} parent=0 // loop_header
    %s11 = sphi 0, %s15
    %p12 = scmp.ge.s32.totalorder %s11, 4
    %s21 = sphi 0, %s23
    %s24 = sphi 0, %s21
    %s25 = sphi 0, %s24
    %s41 = sphi 0, %s25
    %s45 = sphi 0, %s45
    %s47 = sphi 0, %s45
    %s48 = sphi 0, %s47
    %s62 = sphi 0, %s48
    %s66 = sphi 0, %s66
    %s68 = sphi 0, %s66
    %s69 = sphi 0, %s68
    %s83 = sphi 0, %s69
    %s87 = sphi 0, %s87
    %s89 = sphi 0, %s87
    %s90 = sphi 0, %s89
    %s104 = sphi 0, %s90
    %s108 = sphi 0, %s108
    %s110 = sphi 0, %s108
    %s111 = sphi 0, %s110
    %s125 = sphi 0, %s111
    %s131 = sphi 0, %s133
    %s134 = sphi 0, %s131
    %s135 = sphi 0, %s134
    %s151 = sphi 0, %s135
  $region4: #{generator1_forward.22} parent=0 // loop_header_branch
    %14 = sbr.rel (%p12) target = $region8
  $region5: #{generator1_forward.22} parent=0 // loop_body
    %s16 = ssub.s32 %s11, 1
    %s17 = ssub.s32 %s11, 2
    %s18 = sadd.s32 %s11, 1
    %s19 = ssub.s32 %s11, %s18
    %p20 = scmp.eq.s32.totalorder %s19, 0
    %s22 = sadd.s32 %s21, 1
    %s23 = scalar_select %p20, %s21, %s22
    %p26 = pneg %p20
    %p27 = scmp.eq.s32.totalorder %s11, 1
    %p28 = por %p26, %p27
    %p29 = scmp.ne.s32.totalorder %s21, %s24
    %p30 = scmp.eq.s32.totalorder %s11, 0
    %p31 = por %p29, %p30
    %p32 = scmp.ne.s32.totalorder %s21, %s24
    %p33 = scmp.eq.s32.totalorder %s16, 1
    %p34 = por %p32, %p33
    %p35 = scmp.ne.s32.totalorder %s24, %s25
    %p36 = scmp.eq.s32.totalorder %s16, 0
    %p37 = por %p35, %p36
    %p38 = scmp.ne.s32.totalorder %s24, %s25
    %p39 = scmp.eq.s32.totalorder %s17, 1
    %p40 = por %p38, %p39
    %p42 = scmp.ne.s32.totalorder %s25, %s41
    %p43 = scmp.eq.s32.totalorder %s17, 0
    %p44 = por %p42, %p43
    %s46 = sadd.s32 %s45, 1
    %p49 = scmp.eq.s32.totalorder %s11, 1
    %p50 = scmp.ne.s32.totalorder %s45, %s47
    %p51 = scmp.eq.s32.totalorder %s11, 0
    %p52 = por %p50, %p51
    %p53 = scmp.ne.s32.totalorder %s45, %s47
    %p54 = scmp.eq.s32.totalorder %s16, 1
    %p55 = por %p53, %p54
    %p56 = scmp.ne.s32.totalorder %s47, %s48
    %p57 = scmp.eq.s32.totalorder %s16, 0
    %p58 = por %p56, %p57
    %p59 = scmp.ne.s32.totalorder %s47, %s48
    %p60 = scmp.eq.s32.totalorder %s17, 1
    %p61 = por %p59, %p60
    %p63 = scmp.ne.s32.totalorder %s48, %s62
    %p64 = scmp.eq.s32.totalorder %s17, 0
    %p65 = por %p63, %p64
    %s67 = sadd.s32 %s66, 1
    %p70 = scmp.eq.s32.totalorder %s11, 1
    %p71 = scmp.ne.s32.totalorder %s66, %s68
    %p72 = scmp.eq.s32.totalorder %s11, 0
    %p73 = por %p71, %p72
    %p74 = scmp.ne.s32.totalorder %s66, %s68
    %p75 = scmp.eq.s32.totalorder %s16, 1
    %p76 = por %p74, %p75
    %p77 = scmp.ne.s32.totalorder %s68, %s69
    %p78 = scmp.eq.s32.totalorder %s16, 0
    %p79 = por %p77, %p78
    %p80 = scmp.ne.s32.totalorder %s68, %s69
    %p81 = scmp.eq.s32.totalorder %s17, 1
    %p82 = por %p80, %p81
    %p84 = scmp.ne.s32.totalorder %s69, %s83
    %p85 = scmp.eq.s32.totalorder %s17, 0
    %p86 = por %p84, %p85
    %s88 = sadd.s32 %s87, 1
    %p91 = scmp.eq.s32.totalorder %s11, 1
    %p92 = scmp.ne.s32.totalorder %s87, %s89
    %p93 = scmp.eq.s32.totalorder %s11, 0
    %p94 = por %p92, %p93
    %p95 = scmp.ne.s32.totalorder %s87, %s89
    %p96 = scmp.eq.s32.totalorder %s16, 1
    %p97 = por %p95, %p96
    %p98 = scmp.ne.s32.totalorder %s89, %s90
    %p99 = scmp.eq.s32.totalorder %s16, 0
    %p100 = por %p98, %p99
    %p101 = scmp.ne.s32.totalorder %s89, %s90
    %p102 = scmp.eq.s32.totalorder %s17, 1
    %p103 = por %p101, %p102
    %p105 = scmp.ne.s32.totalorder %s90, %s104
    %p106 = scmp.eq.s32.totalorder %s17, 0
    %p107 = por %p105, %p106
    %s109 = sadd.s32 %s108, 1
    %p112 = scmp.eq.s32.totalorder %s11, 1
    %p113 = scmp.ne.s32.totalorder %s108, %s110
    %p114 = scmp.eq.s32.totalorder %s11, 0
    %p115 = por %p113, %p114
    %p116 = scmp.ne.s32.totalorder %s108, %s110
    %p117 = scmp.eq.s32.totalorder %s16, 1
    %p118 = por %p116, %p117
    %p119 = scmp.ne.s32.totalorder %s110, %s111
    %p120 = scmp.eq.s32.totalorder %s16, 0
    %p121 = por %p119, %p120
    %p122 = scmp.ne.s32.totalorder %s110, %s111
    %p123 = scmp.eq.s32.totalorder %s17, 1
    %p124 = por %p122, %p123
    %p126 = scmp.ne.s32.totalorder %s111, %s125
    %p127 = scmp.eq.s32.totalorder %s17, 0
    %p128 = por %p126, %p127
    %s129 = ssub.s32 %s11, %s18
    %p130 = scmp.eq.s32.totalorder %s129, 0
    %s132 = sadd.s32 %s131, 1
    %s133 = scalar_select %p130, %s131, %s132
    %p136 = pneg %p130
    %p137 = scmp.eq.s32.totalorder %s11, 1
    %p138 = por %p136, %p137
    %p139 = scmp.ne.s32.totalorder %s131, %s134
    %p140 = scmp.eq.s32.totalorder %s11, 0
    %p141 = por %p139, %p140
    %p142 = scmp.ne.s32.totalorder %s131, %s134
    %p143 = scmp.eq.s32.totalorder %s16, 1
    %p144 = por %p142, %p143
    %p145 = scmp.ne.s32.totalorder %s134, %s135
    %p146 = scmp.eq.s32.totalorder %s16, 0
    %p147 = por %p145, %p146
    %p148 = scmp.ne.s32.totalorder %s134, %s135
    %p149 = scmp.eq.s32.totalorder %s17, 1
    %p150 = por %p148, %p149
    %p152 = scmp.ne.s32.totalorder %s135, %s151
    %p153 = scmp.eq.s32.totalorder %s17, 0
    %p154 = por %p152, %p153
    %p155 = scmp.le.s32.totalorder 1, %s11
    %p156 = scmp.lt.s32.totalorder %s11, 3
    %p157 = pnand %p155, %p156
    %p158 = pneg %p157
    // Predicated region
    $region9: #{generator1_forward.22} parent=5 // pred_check
      _
    $region10: #{generator1_forward.22} parent=5 // pred_check_branch
      %160 = sbr.rel (%p157) target = $region12
    $region11: #{generator1_forward.22} parent=5 // pred_region
      %s161 = ssub.s32 %s11, 1
      // Predicated region
      $region13: #{generator1_forward.22} parent=11 // pred_check
        %p162 = pneg %p58
      $region14: #{generator1_forward.22} parent=11 // pred_check_branch
        %164 = sbr.rel (%p162) target = $region16
      $region15: #{generator1_forward.22} parent=11 // pred_region
        _
      $region16: #{generator1_forward.22} parent=11 // pred_fallthru
        _
      // Predicated region
      $region17: #{generator1_forward.22} parent=11 // pred_check
        %p165 = pneg %p79
      $region18: #{generator1_forward.22} parent=11 // pred_check_branch
        %167 = sbr.rel (%p165) target = $region20
      $region19: #{generator1_forward.22} parent=11 // pred_region
        _
      $region20: #{generator1_forward.22} parent=11 // pred_fallthru
        _
      // Predicated region
      $region21: #{generator1_forward.22} parent=11 // pred_check
        %p168 = pneg %p100
      $region22: #{generator1_forward.22} parent=11 // pred_check_branch
        %170 = sbr.rel (%p168) target = $region24
      $region23: #{generator1_forward.22} parent=11 // pred_region
        _
      $region24: #{generator1_forward.22} parent=11 // pred_fallthru
        _
      // Predicated region
      $region25: #{generator1_forward.22} parent=11 // pred_check
        %p171 = pneg %p121
      $region26: #{generator1_forward.22} parent=11 // pred_check_branch
        %173 = sbr.rel (%p171) target = $region28
      $region27: #{generator1_forward.22} parent=11 // pred_region
        _
      $region28: #{generator1_forward.22} parent=11 // pred_fallthru
        _
    $region12: #{generator1_forward.22} parent=5 // pred_fallthru
      _
    %p174 = scmp.lt.s32.totalorder %s11, 2
    // Predicated region
    $region29: #{generator1_forward.22} parent=5 // pred_check
      %p175 = pneg %p174
    $region30: #{generator1_forward.22} parent=5 // pred_check_branch
      %177 = sbr.rel (%p175) target = $region32
    $region31: #{generator1_forward.22} parent=5 // pred_region
      // Predicated region
      $region33: #{generator1_forward.22} parent=31 // pred_check
        %p178 = pneg %p31
      $region34: #{generator1_forward.22} parent=31 // pred_check_branch
        %180 = sbr.rel (%p178) target = $region36
      $region35: #{generator1_forward.22} parent=31 // pred_region
        %s181 = smul.u32 2, %s11
        %p182 = scmp.lt.s32.totalorder %s181, 3
        %s183 = scalar_select %p182, %s181, 3
        %s184 = smul.addr %s183, 8
        %s185 = scalar_lea.vmem %s0, %s184
        %s186 = smul.u32 2, %s11
      $region36: #{generator1_forward.22} parent=31 // pred_fallthru
        _
    $region32: #{generator1_forward.22} parent=5 // pred_fallthru
      _
    %p187 = scmp.le.s32.totalorder 1, %s11
    %p188 = scmp.lt.s32.totalorder %s11, 3
    %p189 = pnand %p187, %p188
    %p190 = pneg %p189
    // Predicated region
    $region37: #{generator1_forward.22} parent=5 // pred_check
      _
    $region38: #{generator1_forward.22} parent=5 // pred_check_branch
      %192 = sbr.rel (%p189) target = $region40
    $region39: #{generator1_forward.22} parent=5 // pred_region
      %s193 = ssub.s32 %s11, 1
      %s194 = smul.u32 2, %s16
      %p195 = scmp.lt.s32.totalorder %s194, 3
      %s196 = scalar_select %p195, %s194, 3
      %s197 = smul.addr %s196, 8
      %s198 = scalar_lea.vmem %s0, %s197
      %p199 = pneg %p37
      %p200 = pneg %p34
      %p201 = pneg %p58
      %p202 = pneg %p55
      %p203 = pneg %p79
      %p204 = pneg %p76
      %p205 = pneg %p100
      %p206 = pneg %p97
      %p207 = pneg %p121
      %p208 = pneg %p118
      %p209 = pneg %p147
      %p210 = pneg %p144
      %s211 = smul.u32 2, %s16
      %p212 = scmp.lt.s32.totalorder %s211, 3
      %s213 = scalar_select %p212, %s211, 3
      %s214 = smul.addr %s213, 4
      %s215 = smul.addr %s214, 8
      %s216 = scalar_lea.vmem %s5, %s215
      %s217 = smul.u32 2, %s16
      %p218 = scmp.lt.s32.totalorder %s217, 3
      %s219 = scalar_select %p218, %s217, 3
      %s220 = smul.addr %s219, 8
      %s221 = scalar_lea.vmem %s0, %s220
      %s222 = smul.u32 2, %s16
      %s223 = smul.u32 2, %s16
      %p224 = scmp.lt.s32.totalorder %s223, 3
      %s225 = scalar_select %p224, %s223, 3
      %s226 = smul.addr %s225, 4
      %s227 = smul.addr %s226, 8
      %s228 = scalar_lea.vmem %s5, %s227
      %s229 = smul.u32 2, %s16
      %v230 = vld [vmem:[%s221] sm:$0xff]
      %v231 = vld [vmem:[%s221 + $0x8] sm:$0xff]
      %v232 = vld [vmem:[%s1] sm:$0xff]
      %v233 = vld [vmem:[%s1 + $0x8] sm:$0xff]
      %v234 = vld [vmem:[%s1 + $0x10] sm:$0xff]
      %v235 = vld [vmem:[%s1 + $0x18] sm:$0xff]
      %v236 = vld [vmem:[%s1 + $0x20] sm:$0xff]
      %v237 = vld [vmem:[%s1 + $0x28] sm:$0xff]
      %v238 = vld [vmem:[%s1 + $0x30] sm:$0xff]
      %v239 = vld [vmem:[%s1 + $0x38] sm:$0xff]
      %v240 = vld [vmem:[%s1 + $0x40] sm:$0xff]
      %v241 = vld [vmem:[%s1 + $0x48] sm:$0xff]
      %v242 = vld [vmem:[%s1 + $0x50] sm:$0xff]
      %v243 = vld [vmem:[%s1 + $0x58] sm:$0xff]
      %v244 = vld [vmem:[%s1 + $0x60] sm:$0xff]
      %v245 = vld [vmem:[%s1 + $0x68] sm:$0xff]
      %v246 = vld [vmem:[%s1 + $0x70] sm:$0xff]
      %v247 = vld [vmem:[%s1 + $0x78] sm:$0xff]
      %v248 = vld [vmem:[%s1 + $0x80] sm:$0xff]
      %v249 = vld [vmem:[%s1 + $0x88] sm:$0xff]
      %v250 = vld [vmem:[%s1 + $0x90] sm:$0xff]
      %v251 = vld [vmem:[%s1 + $0x98] sm:$0xff]
      %v252 = vld [vmem:[%s1 + $0xa0] sm:$0xff]
      %v253 = vld [vmem:[%s1 + $0xa8] sm:$0xff]
      %v254 = vld [vmem:[%s1 + $0xb0] sm:$0xff]
      %v255 = vld [vmem:[%s1 + $0xb8] sm:$0xff]
      %v256 = vld [vmem:[%s1 + $0xc0] sm:$0xff]
      %v257 = vld [vmem:[%s1 + $0xc8] sm:$0xff]
      %v258 = vld [vmem:[%s1 + $0xd0] sm:$0xff]
      %v259 = vld [vmem:[%s1 + $0xd8] sm:$0xff]
      %v260 = vld [vmem:[%s1 + $0xe0] sm:$0xff]
      %v261 = vld [vmem:[%s1 + $0xe8] sm:$0xff]
      %v262 = vld [vmem:[%s1 + $0xf0] sm:$0xff]
      %v263 = vld [vmem:[%s1 + $0xf8] sm:$0xff]
      %v264 = vld [vmem:[%s1 + $0x100] sm:$0xff]
      %v265 = vld [vmem:[%s1 + $0x108] sm:$0xff]
      %v266 = vld [vmem:[%s1 + $0x110] sm:$0xff]
      %v267 = vld [vmem:[%s1 + $0x118] sm:$0xff]
      %v268 = vld [vmem:[%s1 + $0x120] sm:$0xff]
      %v269 = vld [vmem:[%s1 + $0x128] sm:$0xff]
      %v270 = vld [vmem:[%s1 + $0x130] sm:$0xff]
      %v271 = vld [vmem:[%s1 + $0x138] sm:$0xff]
      %v272 = vld [vmem:[%s1 + $0x140] sm:$0xff]
      %v273 = vld [vmem:[%s1 + $0x148] sm:$0xff]
      %v274 = vld [vmem:[%s1 + $0x150] sm:$0xff]
      %v275 = vld [vmem:[%s1 + $0x158] sm:$0xff]
      %v276 = vld [vmem:[%s1 + $0x160] sm:$0xff]
      %v277 = vld [vmem:[%s1 + $0x168] sm:$0xff]
      %v278 = vld [vmem:[%s1 + $0x170] sm:$0xff]
      %v279 = vld [vmem:[%s1 + $0x178] sm:$0xff]
      %v280 = vld [vmem:[%s1 + $0x180] sm:$0xff]
      %v281 = vld [vmem:[%s1 + $0x188] sm:$0xff]
      %v282 = vld [vmem:[%s1 + $0x190] sm:$0xff]
      %v283 = vld [vmem:[%s1 + $0x198] sm:$0xff]
      %v284 = vld [vmem:[%s1 + $0x1a0] sm:$0xff]
      %v285 = vld [vmem:[%s1 + $0x1a8] sm:$0xff]
      %v286 = vld [vmem:[%s1 + $0x1b0] sm:$0xff]
      %v287 = vld [vmem:[%s1 + $0x1b8] sm:$0xff]
      %v288 = vld [vmem:[%s1 + $0x1c0] sm:$0xff]
      %v289 = vld [vmem:[%s1 + $0x1c8] sm:$0xff]
      %v290 = vld [vmem:[%s1 + $0x1d0] sm:$0xff]
      %v291 = vld [vmem:[%s1 + $0x1d8] sm:$0xff]
      %v292 = vld [vmem:[%s1 + $0x1e0] sm:$0xff]
      %v293 = vld [vmem:[%s1 + $0x1e8] sm:$0xff]
      %v294 = vld [vmem:[%s1 + $0x1f0] sm:$0xff]
      %v295 = vld [vmem:[%s1 + $0x1f8] sm:$0xff]
      %v296 = vld [vmem:[%s1 + $0x200] sm:$0xff]
      %v297 = vld [vmem:[%s1 + $0x208] sm:$0xff]
      %v298 = vld [vmem:[%s1 + $0x210] sm:$0xff]
      %v299 = vld [vmem:[%s1 + $0x218] sm:$0xff]
      %v300 = vld [vmem:[%s1 + $0x220] sm:$0xff]
      %v301 = vld [vmem:[%s1 + $0x228] sm:$0xff]
      %v302 = vld [vmem:[%s1 + $0x230] sm:$0xff]
      %v303 = vld [vmem:[%s1 + $0x238] sm:$0xff]
      %v304 = vld [vmem:[%s1 + $0x240] sm:$0xff]
      %v305 = vld [vmem:[%s1 + $0x248] sm:$0xff]
      %v306 = vld [vmem:[%s1 + $0x250] sm:$0xff]
      %v307 = vld [vmem:[%s1 + $0x258] sm:$0xff]
      %v308 = vld [vmem:[%s1 + $0x260] sm:$0xff]
      %v309 = vld [vmem:[%s1 + $0x268] sm:$0xff]
      %v310 = vld [vmem:[%s1 + $0x270] sm:$0xff]
      %v311 = vld [vmem:[%s1 + $0x278] sm:$0xff]
      %v312 = vld [vmem:[%s1 + $0x280] sm:$0xff]
      %v313 = vld [vmem:[%s1 + $0x288] sm:$0xff]
      %v314 = vld [vmem:[%s1 + $0x290] sm:$0xff]
      %v315 = vld [vmem:[%s1 + $0x298] sm:$0xff]
      %v316 = vld [vmem:[%s1 + $0x2a0] sm:$0xff]
      %v317 = vld [vmem:[%s1 + $0x2a8] sm:$0xff]
      %v318 = vld [vmem:[%s1 + $0x2b0] sm:$0xff]
      %v319 = vld [vmem:[%s1 + $0x2b8] sm:$0xff]
      %v320 = vld [vmem:[%s1 + $0x2c0] sm:$0xff]
      %v321 = vld [vmem:[%s1 + $0x2c8] sm:$0xff]
      %v322 = vld [vmem:[%s1 + $0x2d0] sm:$0xff]
      %v323 = vld [vmem:[%s1 + $0x2d8] sm:$0xff]
      %v324 = vld [vmem:[%s1 + $0x2e0] sm:$0xff]
      %v325 = vld [vmem:[%s1 + $0x2e8] sm:$0xff]
      %v326 = vld [vmem:[%s1 + $0x2f0] sm:$0xff]
      %v327 = vld [vmem:[%s1 + $0x2f8] sm:$0xff]
      %v328 = vld [vmem:[%s2] sm:$0x3f]
      %v330 = vlaneseq
      %v331 = vshrl.u32 %v330, 7
      %v332 = vsub.s32 0, %v331
      %v333 = vrot.slane %v328, %v332
      %v334 = vlaneseq
      %v335 = vshrl.u32 %v334, 7
      %v336 = vsub.s32 1, %v335
      %v337 = vrot.slane %v328, %v336
      %v338 = vlaneseq
      %v339 = vshrl.u32 %v338, 7
      %v340 = vsub.s32 2, %v339
      %v341 = vrot.slane %v328, %v340
      %v342 = vlaneseq
      %v343 = vshrl.u32 %v342, 7
      %v344 = vsub.s32 3, %v343
      %v345 = vrot.slane %v328, %v344
      %v346 = vlaneseq
      %v347 = vshrl.u32 %v346, 7
      %v348 = vsub.s32 4, %v347
      %v349 = vrot.slane %v328, %v348
      %v350 = vlaneseq
      %v351 = vshrl.u32 %v350, 7
      %v352 = vsub.s32 5, %v351
      %v353 = vrot.slane %v328, %v352
      %360 = vmatprep.subr.mxu0 %v233
      %361 = vmatpush1.msra.mxu0 %v232
      %362 = vmatprep.subr.mxu0 %v239
      %363 = vmatpush1.msra.mxu0 %v238
      %364 = vmatprep.subr.mxu0 %v245
      %365 = vmatpush1.msra.mxu0 %v244
      %366 = vmatprep.subr.mxu0 %v251
      %367 = vmatpush1.msra.mxu0 %v250
      %368 = vmatprep.subr.mxu0 %v257
      %369 = vmatpush1.msra.mxu0 %v256
      %370 = vmatprep.subr.mxu0 %v263
      %371 = vmatpush1.msra.mxu0 %v262
      %372 = vmatprep.subr.mxu0 %v269
      %373 = vmatpush1.msra.mxu0 %v268
      %374 = vmatprep.subr.mxu0 %v275
      %375 = vmatpush1.msra.mxu0 %v274
      %376 = vmatprep.subr.mxu0 %v281
      %377 = vmatpush1.msra.mxu0 %v280
      %378 = vmatprep.subr.mxu0 %v287
      %379 = vmatpush1.msra.mxu0 %v286
      %380 = vmatprep.subr.mxu0 %v293
      %381 = vmatpush1.msra.mxu0 %v292
      %382 = vmatprep.subr.mxu0 %v299
      %383 = vmatpush1.msra.mxu0 %v298
      %384 = vmatprep.subr.mxu0 %v305
      %385 = vmatpush1.msra.mxu0 %v304
      %386 = vmatprep.subr.mxu0 %v311
      %387 = vmatpush1.msra.mxu0 %v310
      %388 = vmatprep.subr.mxu0 %v317
      %389 = vmatpush1.msra.mxu0 %v316
      %390 = vmatprep.subr.mxu0 %v323
      %391 = vmatpush1.msra.mxu0 %v322
      %392 = vmatprep.subr.mxu0 0.0
      %393 = vmatpush1.msra.mxu0 0.0
      %394 = vmatprep.subr.mxu0 0.0
      %395 = vmatpush1.msra.mxu0 0.0
      %396 = vmatprep.subr.mxu0 0.0
      %397 = vmatpush1.msra.mxu0 0.0
      %398 = vmatprep.subr.mxu0 0.0
      %399 = vmatpush1.msra.mxu0 0.0
      %400 = vmatprep.subr.mxu0 0.0
      %401 = vmatpush1.msra.mxu0 0.0
      %402 = vmatprep.subr.mxu0 0.0
      %403 = vmatpush1.msra.mxu0 0.0
      %404 = vmatprep.subr.mxu0 0.0
      %405 = vmatpush1.msra.mxu0 0.0
      %406 = vmatprep.subr.mxu0 0.0
      %407 = vmatpush1.msra.mxu0 0.0
      %408 = vmatprep.subr.mxu0 0.0
      %409 = vmatpush1.msra.mxu0 0.0
      %410 = vmatprep.subr.mxu0 0.0
      %411 = vmatpush1.msra.mxu0 0.0
      %412 = vmatprep.subr.mxu0 0.0
      %413 = vmatpush1.msra.mxu0 0.0
      %414 = vmatprep.subr.mxu0 0.0
      %415 = vmatpush1.msra.mxu0 0.0
      %416 = vmatprep.subr.mxu0 0.0
      %417 = vmatpush1.msra.mxu0 0.0
      %418 = vmatprep.subr.mxu0 0.0
      %419 = vmatpush1.msra.mxu0 0.0
      %420 = vmatprep.subr.mxu0 0.0
      %421 = vmatpush1.msra.mxu0 0.0
      %422 = vmatprep.subr.mxu0 0.0
      %423 = vmatpush1.msra.mxu0 0.0
      %424 = vmatprep.mubr.f32.mxu0 0.0
      %425 = vmatmul.mubr.f32.gmra.mrb[0].mxu0 %v230
      %v426 = vpop.f32.mrb[0].mxu0
      %v427 = vadd.f32 %v333, %v426
      %v428 = vpop.f32.mrb[0].mxu0
      %v429 = vadd.f32 %v337, %v428
      %430 = vmatprep.mubr.f32.mxu0 0.0
      %431 = vmatmul.mubr.f32.gmra.mrb[0].mxu0 %v231
      %v432 = vpop.f32.mrb[0].mxu0
      %v433 = vadd.f32 %v333, %v432
      %v434 = vpop.f32.mrb[0].mxu0
      %v435 = vadd.f32 %v337, %v434
      %436 = vdwg.mxu0
      %437 = vmatprep.subr.mxu0 %v235
      %438 = vmatpush1.msra.mxu0 %v234
      %439 = vmatprep.subr.mxu0 %v241
      %440 = vmatpush1.msra.mxu0 %v240
      %441 = vmatprep.subr.mxu0 %v247
      %442 = vmatpush1.msra.mxu0 %v246
      %443 = vmatprep.subr.mxu0 %v253
      %444 = vmatpush1.msra.mxu0 %v252
      %445 = vmatprep.subr.mxu0 %v259
      %446 = vmatpush1.msra.mxu0 %v258
      %447 = vmatprep.subr.mxu0 %v265
      %448 = vmatpush1.msra.mxu0 %v264
      %449 = vmatprep.subr.mxu0 %v271
      %450 = vmatpush1.msra.mxu0 %v270
      %451 = vmatprep.subr.mxu0 %v277
      %452 = vmatpush1.msra.mxu0 %v276
      %453 = vmatprep.subr.mxu0 %v283
      %454 = vmatpush1.msra.mxu0 %v282
      %455 = vmatprep.subr.mxu0 %v289
      %456 = vmatpush1.msra.mxu0 %v288
      %457 = vmatprep.subr.mxu0 %v295
      %458 = vmatpush1.msra.mxu0 %v294
      %459 = vmatprep.subr.mxu0 %v301
      %460 = vmatpush1.msra.mxu0 %v300
      %461 = vmatprep.subr.mxu0 %v307
      %462 = vmatpush1.msra.mxu0 %v306
      %463 = vmatprep.subr.mxu0 %v313
      %464 = vmatpush1.msra.mxu0 %v312
      %465 = vmatprep.subr.mxu0 %v319
      %466 = vmatpush1.msra.mxu0 %v318
      %467 = vmatprep.subr.mxu0 %v325
      %468 = vmatpush1.msra.mxu0 %v324
      %469 = vmatprep.subr.mxu0 0.0
      %470 = vmatpush1.msra.mxu0 0.0
      %471 = vmatprep.subr.mxu0 0.0
      %472 = vmatpush1.msra.mxu0 0.0
      %473 = vmatprep.subr.mxu0 0.0
      %474 = vmatpush1.msra.mxu0 0.0
      %475 = vmatprep.subr.mxu0 0.0
      %476 = vmatpush1.msra.mxu0 0.0
      %477 = vmatprep.subr.mxu0 0.0
      %478 = vmatpush1.msra.mxu0 0.0
      %479 = vmatprep.subr.mxu0 0.0
      %480 = vmatpush1.msra.mxu0 0.0
      %481 = vmatprep.subr.mxu0 0.0
      %482 = vmatpush1.msra.mxu0 0.0
      %483 = vmatprep.subr.mxu0 0.0
      %484 = vmatpush1.msra.mxu0 0.0
      %485 = vmatprep.subr.mxu0 0.0
      %486 = vmatpush1.msra.mxu0 0.0
      %487 = vmatprep.subr.mxu0 0.0
      %488 = vmatpush1.msra.mxu0 0.0
      %489 = vmatprep.subr.mxu0 0.0
      %490 = vmatpush1.msra.mxu0 0.0
      %491 = vmatprep.subr.mxu0 0.0
      %492 = vmatpush1.msra.mxu0 0.0
      %493 = vmatprep.subr.mxu0 0.0
      %494 = vmatpush1.msra.mxu0 0.0
      %495 = vmatprep.subr.mxu0 0.0
      %496 = vmatpush1.msra.mxu0 0.0
      %497 = vmatprep.subr.mxu0 0.0
      %498 = vmatpush1.msra.mxu0 0.0
      %499 = vmatprep.subr.mxu0 0.0
      %500 = vmatpush1.msra.mxu0 0.0
      %501 = vmatprep.mubr.f32.mxu0 0.0
      %502 = vmatmul.mubr.f32.gmra.mrb[0].mxu0 %v230
      %v503 = vpop.f32.mrb[0].mxu0
      %v504 = vadd.f32 %v341, %v503
      %v505 = vpop.f32.mrb[0].mxu0
      %v506 = vadd.f32 %v345, %v505
      %507 = vmatprep.mubr.f32.mxu0 0.0
      %508 = vmatmul.mubr.f32.gmra.mrb[0].mxu0 %v231
      %v509 = vpop.f32.mrb[0].mxu0
      %v510 = vadd.f32 %v341, %v509
      %v511 = vpop.f32.mrb[0].mxu0
      %v512 = vadd.f32 %v345, %v511
      %513 = vdwg.mxu0
      %514 = vmatprep.subr.mxu0 %v237
      %515 = vmatpush1.msra.mxu0 %v236
      %516 = vmatprep.subr.mxu0 %v243
      %517 = vmatpush1.msra.mxu0 %v242
      %518 = vmatprep.subr.mxu0 %v249
      %519 = vmatpush1.msra.mxu0 %v248
      %520 = vmatprep.subr.mxu0 %v255
      %521 = vmatpush1.msra.mxu0 %v254
      %522 = vmatprep.subr.mxu0 %v261
      %523 = vmatpush1.msra.mxu0 %v260
      %524 = vmatprep.subr.mxu0 %v267
      %525 = vmatpush1.msra.mxu0 %v266
      %526 = vmatprep.subr.mxu0 %v273
      %527 = vmatpush1.msra.mxu0 %v272
      %528 = vmatprep.subr.mxu0 %v279
      %529 = vmatpush1.msra.mxu0 %v278
      %530 = vmatprep.subr.mxu0 %v285
      %531 = vmatpush1.msra.mxu0 %v284
      %532 = vmatprep.subr.mxu0 %v291
      %533 = vmatpush1.msra.mxu0 %v290
      %534 = vmatprep.subr.mxu0 %v297
      %535 = vmatpush1.msra.mxu0 %v296
      %536 = vmatprep.subr.mxu0 %v303
      %537 = vmatpush1.msra.mxu0 %v302
      %538 = vmatprep.subr.mxu0 %v309
      %539 = vmatpush1.msra.mxu0 %v308
      %540 = vmatprep.subr.mxu0 %v315
      %541 = vmatpush1.msra.mxu0 %v314
      %542 = vmatprep.subr.mxu0 %v321
      %543 = vmatpush1.msra.mxu0 %v320
      %544 = vmatprep.subr.mxu0 %v327
      %545 = vmatpush1.msra.mxu0 %v326
      %546 = vmatprep.subr.mxu0 0.0
      %547 = vmatpush1.msra.mxu0 0.0
      %548 = vmatprep.subr.mxu0 0.0
      %549 = vmatpush1.msra.mxu0 0.0
      %550 = vmatprep.subr.mxu0 0.0
      %551 = vmatpush1.msra.mxu0 0.0
      %552 = vmatprep.subr.mxu0 0.0
      %553 = vmatpush1.msra.mxu0 0.0
      %554 = vmatprep.subr.mxu0 0.0
      %555 = vmatpush1.msra.mxu0 0.0
      %556 = vmatprep.subr.mxu0 0.0
      %557 = vmatpush1.msra.mxu0 0.0
      %558 = vmatprep.subr.mxu0 0.0
      %559 = vmatpush1.msra.mxu0 0.0
      %560 = vmatprep.subr.mxu0 0.0
      %561 = vmatpush1.msra.mxu0 0.0
      %562 = vmatprep.subr.mxu0 0.0
      %563 = vmatpush1.msra.mxu0 0.0
      %564 = vmatprep.subr.mxu0 0.0
      %565 = vmatpush1.msra.mxu0 0.0
      %566 = vmatprep.subr.mxu0 0.0
      %567 = vmatpush1.msra.mxu0 0.0
      %568 = vmatprep.subr.mxu0 0.0
      %569 = vmatpush1.msra.mxu0 0.0
      %570 = vmatprep.subr.mxu0 0.0
      %571 = vmatpush1.msra.mxu0 0.0
      %572 = vmatprep.subr.mxu0 0.0
      %573 = vmatpush1.msra.mxu0 0.0
      %574 = vmatprep.subr.mxu0 0.0
      %575 = vmatpush1.msra.mxu0 0.0
      %576 = vmatprep.subr.mxu0 0.0
      %577 = vmatpush1.msra.mxu0 0.0
      %578 = vmatprep.mubr.f32.mxu0 0.0
      %579 = vmatmul.mubr.f32.gmra.mrb[0].mxu0 %v230
      %v580 = vpop.f32.mrb[0].mxu0
      %v581 = vadd.f32 %v349, %v580
      %v582 = vpop.f32.mrb[0].mxu0
      %v583 = vadd.f32 %v353, %v582
      %584 = vmatprep.mubr.f32.mxu0 0.0
      %585 = vmatmul.mubr.f32.gmra.mrb[0].mxu0 %v231
      %v586 = vpop.f32.mrb[0].mxu0
      %v587 = vadd.f32 %v349, %v586
      %v588 = vpop.f32.mrb[0].mxu0
      %v589 = vadd.f32 %v353, %v588
      %590 = vdwg.mxu0
      %v591 = vmax.f32 %v427, 0.0
      %v592 = vmax.f32 %v429, 0.0
      %v593 = vmax.f32 %v433, 0.0
      %v594 = vmax.f32 %v435, 0.0
      %v595 = vld [vmem:[%s3] sm:$0xff]
      %v596 = vld [vmem:[%s3 + $0x8] sm:$0xff]
      %v597 = vld [vmem:[%s3 + $0x10] sm:$0xff]
      %v598 = vld [vmem:[%s3 + $0x18] sm:$0xff]
      %v599 = vld [vmem:[%s3 + $0x20] sm:$0xff]
      %v600 = vld [vmem:[%s3 + $0x28] sm:$0xff]
      %v601 = vld [vmem:[%s3 + $0x30] sm:$0xff]
      %v602 = vld [vmem:[%s3 + $0x38] sm:$0xff]
      %v603 = vld [vmem:[%s3 + $0x40] sm:$0xff]
      %v604 = vld [vmem:[%s3 + $0x48] sm:$0xff]
      %v605 = vld [vmem:[%s3 + $0x50] sm:$0xff]
      %v606 = vld [vmem:[%s3 + $0x58] sm:$0xff]
      %v607 = vld [vmem:[%s3 + $0x60] sm:$0xff]
      %v608 = vld [vmem:[%s3 + $0x68] sm:$0xff]
      %v609 = vld [vmem:[%s3 + $0x70] sm:$0xff]
      %v610 = vld [vmem:[%s3 + $0x78] sm:$0xff]
      %v611 = vld [vmem:[%s3 + $0x80] sm:$0xff]
      %v612 = vld [vmem:[%s3 + $0x88] sm:$0xff]
      %v613 = vld [vmem:[%s3 + $0x90] sm:$0xff]
      %v614 = vld [vmem:[%s3 + $0x98] sm:$0xff]
      %v615 = vld [vmem:[%s3 + $0xa0] sm:$0xff]
      %v616 = vld [vmem:[%s3 + $0xa8] sm:$0xff]
      %v617 = vld [vmem:[%s3 + $0xb0] sm:$0xff]
      %v618 = vld [vmem:[%s3 + $0xb8] sm:$0xff]
      %v619 = vld [vmem:[%s3 + $0xc0] sm:$0xff]
      %v620 = vld [vmem:[%s3 + $0xc8] sm:$0xff]
      %v621 = vld [vmem:[%s3 + $0xd0] sm:$0xff]
      %v622 = vld [vmem:[%s3 + $0xd8] sm:$0xff]
      %v623 = vld [vmem:[%s3 + $0xe0] sm:$0xff]
      %v624 = vld [vmem:[%s3 + $0xe8] sm:$0xff]
      %v625 = vld [vmem:[%s3 + $0xf0] sm:$0xff]
      %v626 = vld [vmem:[%s3 + $0xf8] sm:$0xff]
      %v627 = vld [vmem:[%s3 + $0x100] sm:$0xff]
      %v628 = vld [vmem:[%s3 + $0x108] sm:$0xff]
      %v629 = vld [vmem:[%s3 + $0x110] sm:$0xff]
      %v630 = vld [vmem:[%s3 + $0x118] sm:$0xff]
      %v631 = vld [vmem:[%s3 + $0x120] sm:$0xff]
      %v632 = vld [vmem:[%s3 + $0x128] sm:$0xff]
      %v633 = vld [vmem:[%s3 + $0x130] sm:$0xff]
      %v634 = vld [vmem:[%s3 + $0x138] sm:$0xff]
      %v635 = vld [vmem:[%s3 + $0x140] sm:$0xff]
      %v636 = vld [vmem:[%s3 + $0x148] sm:$0xff]
      %v637 = vld [vmem:[%s3 + $0x150] sm:$0xff]
      %v638 = vld [vmem:[%s3 + $0x158] sm:$0xff]
      %v639 = vld [vmem:[%s3 + $0x160] sm:$0xff]
      %v640 = vld [vmem:[%s3 + $0x168] sm:$0xff]
      %v641 = vld [vmem:[%s3 + $0x170] sm:$0xff]
      %v642 = vld [vmem:[%s3 + $0x178] sm:$0xff]
      %v643 = vld [vmem:[%s3 + $0x180] sm:$0xff]
      %v644 = vld [vmem:[%s3 + $0x188] sm:$0xff]
      %v645 = vld [vmem:[%s3 + $0x190] sm:$0xff]
      %v646 = vld [vmem:[%s3 + $0x198] sm:$0xff]
      %v647 = vld [vmem:[%s3 + $0x1a0] sm:$0xff]
      %v648 = vld [vmem:[%s3 + $0x1a8] sm:$0xff]
      %v649 = vld [vmem:[%s3 + $0x1b0] sm:$0xff]
      %v650 = vld [vmem:[%s3 + $0x1b8] sm:$0xff]
      %v651 = vld [vmem:[%s3 + $0x1c0] sm:$0xff]
      %v652 = vld [vmem:[%s3 + $0x1c8] sm:$0xff]
      %v653 = vld [vmem:[%s3 + $0x1d0] sm:$0xff]
      %v654 = vld [vmem:[%s3 + $0x1d8] sm:$0xff]
      %v655 = vld [vmem:[%s3 + $0x1e0] sm:$0xff]
      %v656 = vld [vmem:[%s3 + $0x1e8] sm:$0xff]
      %v657 = vld [vmem:[%s3 + $0x1f0] sm:$0xff]
      %v658 = vld [vmem:[%s3 + $0x1f8] sm:$0xff]
      %v659 = vld [vmem:[%s3 + $0x200] sm:$0xff]
      %v660 = vld [vmem:[%s3 + $0x208] sm:$0xff]
      %v661 = vld [vmem:[%s3 + $0x210] sm:$0xff]
      %v662 = vld [vmem:[%s3 + $0x218] sm:$0xff]
      %v663 = vld [vmem:[%s3 + $0x220] sm:$0xff]
      %v664 = vld [vmem:[%s3 + $0x228] sm:$0xff]
      %v665 = vld [vmem:[%s3 + $0x230] sm:$0xff]
      %v666 = vld [vmem:[%s3 + $0x238] sm:$0xff]
      %v667 = vld [vmem:[%s3 + $0x240] sm:$0xff]
      %v668 = vld [vmem:[%s3 + $0x248] sm:$0xff]
      %v669 = vld [vmem:[%s3 + $0x250] sm:$0xff]
      %v670 = vld [vmem:[%s3 + $0x258] sm:$0xff]
      %v671 = vld [vmem:[%s3 + $0x260] sm:$0xff]
      %v672 = vld [vmem:[%s3 + $0x268] sm:$0xff]
      %v673 = vld [vmem:[%s3 + $0x270] sm:$0xff]
      %v674 = vld [vmem:[%s3 + $0x278] sm:$0xff]
      %v675 = vld [vmem:[%s3 + $0x280] sm:$0xff]
      %v676 = vld [vmem:[%s3 + $0x288] sm:$0xff]
      %v677 = vld [vmem:[%s3 + $0x290] sm:$0xff]
      %v678 = vld [vmem:[%s3 + $0x298] sm:$0xff]
      %v679 = vld [vmem:[%s3 + $0x2a0] sm:$0xff]
      %v680 = vld [vmem:[%s3 + $0x2a8] sm:$0xff]
      %v681 = vld [vmem:[%s3 + $0x2b0] sm:$0xff]
      %v682 = vld [vmem:[%s3 + $0x2b8] sm:$0xff]
      %v683 = vld [vmem:[%s3 + $0x2c0] sm:$0xff]
      %v684 = vld [vmem:[%s3 + $0x2c8] sm:$0xff]
      %v685 = vld [vmem:[%s3 + $0x2d0] sm:$0xff]
      %v686 = vld [vmem:[%s3 + $0x2d8] sm:$0xff]
      %v687 = vld [vmem:[%s3 + $0x2e0] sm:$0xff]
      %v688 = vld [vmem:[%s3 + $0x2e8] sm:$0xff]
      %v689 = vld [vmem:[%s3 + $0x2f0] sm:$0xff]
      %v690 = vld [vmem:[%s3 + $0x2f8] sm:$0xff]
      %v691 = vld [vmem:[%s3 + $0x300] sm:$0xff]
      %v692 = vld [vmem:[%s3 + $0x308] sm:$0xff]
      %v693 = vld [vmem:[%s3 + $0x310] sm:$0xff]
      %v694 = vld [vmem:[%s3 + $0x318] sm:$0xff]
      %v695 = vld [vmem:[%s3 + $0x320] sm:$0xff]
      %v696 = vld [vmem:[%s3 + $0x328] sm:$0xff]
      %v697 = vld [vmem:[%s3 + $0x330] sm:$0xff]
      %v698 = vld [vmem:[%s3 + $0x338] sm:$0xff]
      %v699 = vld [vmem:[%s3 + $0x340] sm:$0xff]
      %v700 = vld [vmem:[%s3 + $0x348] sm:$0xff]
      %v701 = vld [vmem:[%s3 + $0x350] sm:$0xff]
      %v702 = vld [vmem:[%s3 + $0x358] sm:$0xff]
      %v703 = vld [vmem:[%s3 + $0x360] sm:$0xff]
      %v704 = vld [vmem:[%s3 + $0x368] sm:$0xff]
      %v705 = vld [vmem:[%s3 + $0x370] sm:$0xff]
      %v706 = vld [vmem:[%s3 + $0x378] sm:$0xff]
      %v707 = vld [vmem:[%s3 + $0x380] sm:$0xff]
      %v708 = vld [vmem:[%s3 + $0x388] sm:$0xff]
      %v709 = vld [vmem:[%s3 + $0x390] sm:$0xff]
      %v710 = vld [vmem:[%s3 + $0x398] sm:$0xff]
      %v711 = vld [vmem:[%s3 + $0x3a0] sm:$0xff]
      %v712 = vld [vmem:[%s3 + $0x3a8] sm:$0xff]
      %v713 = vld [vmem:[%s3 + $0x3b0] sm:$0xff]
      %v714 = vld [vmem:[%s3 + $0x3b8] sm:$0xff]
      %v715 = vld [vmem:[%s3 + $0x3c0] sm:$0xff]
      %v716 = vld [vmem:[%s3 + $0x3c8] sm:$0xff]
      %v717 = vld [vmem:[%s3 + $0x3d0] sm:$0xff]
      %v718 = vld [vmem:[%s3 + $0x3d8] sm:$0xff]
      %v719 = vld [vmem:[%s3 + $0x3e0] sm:$0xff]
      %v720 = vld [vmem:[%s3 + $0x3e8] sm:$0xff]
      %v721 = vld [vmem:[%s3 + $0x3f0] sm:$0xff]
      %v722 = vld [vmem:[%s3 + $0x3f8] sm:$0xff]
      %v723 = vld [vmem:[%s4] sm:$0xf]
      %v725 = vlaneseq
      %v726 = vshrl.u32 %v725, 7
      %v727 = vsub.s32 0, %v726
      %v728 = vrot.slane %v723, %v727
      %v729 = vlaneseq
      %v730 = vshrl.u32 %v729, 7
      %v731 = vsub.s32 1, %v730
      %v732 = vrot.slane %v723, %v731
      %v733 = vlaneseq
      %v734 = vshrl.u32 %v733, 7
      %v735 = vsub.s32 2, %v734
      %v736 = vrot.slane %v723, %v735
      %v737 = vlaneseq
      %v738 = vshrl.u32 %v737, 7
      %v739 = vsub.s32 3, %v738
      %v740 = vrot.slane %v723, %v739
      %745 = vmatprep.subr.mxu0 %v596
      %746 = vmatpush1.msra.mxu0 %v595
      %747 = vmatprep.subr.mxu0 %v600
      %748 = vmatpush1.msra.mxu0 %v599
      %749 = vmatprep.subr.mxu0 %v604
      %750 = vmatpush1.msra.mxu0 %v603
      %751 = vmatprep.subr.mxu0 %v608
      %752 = vmatpush1.msra.mxu0 %v607
      %753 = vmatprep.subr.mxu0 %v612
      %754 = vmatpush1.msra.mxu0 %v611
      %755 = vmatprep.subr.mxu0 %v616
      %756 = vmatpush1.msra.mxu0 %v615
      %757 = vmatprep.subr.mxu0 %v620
      %758 = vmatpush1.msra.mxu0 %v619
      %759 = vmatprep.subr.mxu0 %v624
      %760 = vmatpush1.msra.mxu0 %v623
      %761 = vmatprep.subr.mxu0 %v628
      %762 = vmatpush1.msra.mxu0 %v627
      %763 = vmatprep.subr.mxu0 %v632
      %764 = vmatpush1.msra.mxu0 %v631
      %765 = vmatprep.subr.mxu0 %v636
      %766 = vmatpush1.msra.mxu0 %v635
      %767 = vmatprep.subr.mxu0 %v640
      %768 = vmatpush1.msra.mxu0 %v639
      %769 = vmatprep.subr.mxu0 %v644
      %770 = vmatpush1.msra.mxu0 %v643
      %771 = vmatprep.subr.mxu0 %v648
      %772 = vmatpush1.msra.mxu0 %v647
      %773 = vmatprep.subr.mxu0 %v652
      %774 = vmatpush1.msra.mxu0 %v651
      %775 = vmatprep.subr.mxu0 %v656
      %776 = vmatpush1.msra.mxu0 %v655
      %777 = vmatprep.subr.mxu0 %v660
      %778 = vmatpush1.msra.mxu0 %v659
      %779 = vmatprep.subr.mxu0 %v664
      %780 = vmatpush1.msra.mxu0 %v663
      %781 = vmatprep.subr.mxu0 %v668
      %782 = vmatpush1.msra.mxu0 %v667
      %783 = vmatprep.subr.mxu0 %v672
      %784 = vmatpush1.msra.mxu0 %v671
      %785 = vmatprep.subr.mxu0 %v676
      %786 = vmatpush1.msra.mxu0 %v675
      %787 = vmatprep.subr.mxu0 %v680
      %788 = vmatpush1.msra.mxu0 %v679
      %789 = vmatprep.subr.mxu0 %v684
      %790 = vmatpush1.msra.mxu0 %v683
      %791 = vmatprep.subr.mxu0 %v688
      %792 = vmatpush1.msra.mxu0 %v687
      %793 = vmatprep.subr.mxu0 %v692
      %794 = vmatpush1.msra.mxu0 %v691
      %795 = vmatprep.subr.mxu0 %v696
      %796 = vmatpush1.msra.mxu0 %v695
      %797 = vmatprep.subr.mxu0 %v700
      %798 = vmatpush1.msra.mxu0 %v699
      %799 = vmatprep.subr.mxu0 %v704
      %800 = vmatpush1.msra.mxu0 %v703
      %801 = vmatprep.subr.mxu0 %v708
      %802 = vmatpush1.msra.mxu0 %v707
      %803 = vmatprep.subr.mxu0 %v712
      %804 = vmatpush1.msra.mxu0 %v711
      %805 = vmatprep.subr.mxu0 %v716
      %806 = vmatpush1.msra.mxu0 %v715
      %807 = vmatprep.subr.mxu0 %v720
      %808 = vmatpush1.msra.mxu0 %v719
      %809 = vmatprep.mubr.f32.mxu0 %v592
      %810 = vmatmul.mubr.f32.gmra.mrb[0].mxu0 %v591
      %v811 = vpop.f32.mrb[0].mxu0
      %v812 = vadd.f32 %v728, %v811
      %v813 = vpop.f32.mrb[0].mxu0
      %v814 = vadd.f32 %v732, %v813
      %815 = vmatprep.mubr.f32.mxu0 %v594
      %816 = vmatmul.mubr.f32.gmra.mrb[0].mxu0 %v593
      %v817 = vpop.f32.mrb[0].mxu0
      %v818 = vadd.f32 %v728, %v817
      %v819 = vpop.f32.mrb[0].mxu0
      %v820 = vadd.f32 %v732, %v819
      %821 = vdwg.mxu0
      %822 = vmatprep.subr.mxu0 %v598
      %823 = vmatpush1.msra.mxu0 %v597
      %824 = vmatprep.subr.mxu0 %v602
      %825 = vmatpush1.msra.mxu0 %v601
      %826 = vmatprep.subr.mxu0 %v606
      %827 = vmatpush1.msra.mxu0 %v605
      %828 = vmatprep.subr.mxu0 %v610
      %829 = vmatpush1.msra.mxu0 %v609
      %830 = vmatprep.subr.mxu0 %v614
      %831 = vmatpush1.msra.mxu0 %v613
      %832 = vmatprep.subr.mxu0 %v618
      %833 = vmatpush1.msra.mxu0 %v617
      %834 = vmatprep.subr.mxu0 %v622
      %835 = vmatpush1.msra.mxu0 %v621
      %836 = vmatprep.subr.mxu0 %v626
      %837 = vmatpush1.msra.mxu0 %v625
      %838 = vmatprep.subr.mxu0 %v630
      %839 = vmatpush1.msra.mxu0 %v629
      %840 = vmatprep.subr.mxu0 %v634
      %841 = vmatpush1.msra.mxu0 %v633
      %842 = vmatprep.subr.mxu0 %v638
      %843 = vmatpush1.msra.mxu0 %v637
      %844 = vmatprep.subr.mxu0 %v642
      %845 = vmatpush1.msra.mxu0 %v641
      %846 = vmatprep.subr.mxu0 %v646
      %847 = vmatpush1.msra.mxu0 %v645
      %848 = vmatprep.subr.mxu0 %v650
      %849 = vmatpush1.msra.mxu0 %v649
      %850 = vmatprep.subr.mxu0 %v654
      %851 = vmatpush1.msra.mxu0 %v653
      %852 = vmatprep.subr.mxu0 %v658
      %853 = vmatpush1.msra.mxu0 %v657
      %854 = vmatprep.subr.mxu0 %v662
      %855 = vmatpush1.msra.mxu0 %v661
      %856 = vmatprep.subr.mxu0 %v666
      %857 = vmatpush1.msra.mxu0 %v665
      %858 = vmatprep.subr.mxu0 %v670
      %859 = vmatpush1.msra.mxu0 %v669
      %860 = vmatprep.subr.mxu0 %v674
      %861 = vmatpush1.msra.mxu0 %v673
      %862 = vmatprep.subr.mxu0 %v678
      %863 = vmatpush1.msra.mxu0 %v677
      %864 = vmatprep.subr.mxu0 %v682
      %865 = vmatpush1.msra.mxu0 %v681
      %866 = vmatprep.subr.mxu0 %v686
      %867 = vmatpush1.msra.mxu0 %v685
      %868 = vmatprep.subr.mxu0 %v690
      %869 = vmatpush1.msra.mxu0 %v689
      %870 = vmatprep.subr.mxu0 %v694
      %871 = vmatpush1.msra.mxu0 %v693
      %872 = vmatprep.subr.mxu0 %v698
      %873 = vmatpush1.msra.mxu0 %v697
      %874 = vmatprep.subr.mxu0 %v702
      %875 = vmatpush1.msra.mxu0 %v701
      %876 = vmatprep.subr.mxu0 %v706
      %877 = vmatpush1.msra.mxu0 %v705
      %878 = vmatprep.subr.mxu0 %v710
      %879 = vmatpush1.msra.mxu0 %v709
      %880 = vmatprep.subr.mxu0 %v714
      %881 = vmatpush1.msra.mxu0 %v713
      %882 = vmatprep.subr.mxu0 %v718
      %883 = vmatpush1.msra.mxu0 %v717
      %884 = vmatprep.subr.mxu0 %v722
      %885 = vmatpush1.msra.mxu0 %v721
      %886 = vmatprep.mubr.f32.mxu0 %v592
      %887 = vmatmul.mubr.f32.gmra.mrb[0].mxu0 %v591
      %v888 = vpop.f32.mrb[0].mxu0
      %v889 = vadd.f32 %v736, %v888
      %v890 = vpop.f32.mrb[0].mxu0
      %v891 = vadd.f32 %v740, %v890
      %892 = vmatprep.mubr.f32.mxu0 %v594
      %893 = vmatmul.mubr.f32.gmra.mrb[0].mxu0 %v593
      %v894 = vpop.f32.mrb[0].mxu0
      %v895 = vadd.f32 %v736, %v894
      %v896 = vpop.f32.mrb[0].mxu0
      %v897 = vadd.f32 %v740, %v896
      %898 = vdwg.mxu0
      %v899 = vadd.f32 %v812, %v504
      %v900 = vadd.f32 %v814, %v506
      %v901 = vadd.f32 %v889, %v581
      %v902 = vadd.f32 %v891, %v583
      %v903 = vadd.f32 %v818, %v510
      %v904 = vadd.f32 %v820, %v512
      %v905 = vadd.f32 %v895, %v587
      %v906 = vadd.f32 %v897, %v589
      %v907 = vmax.f32 %v899, 0.0
      %v908 = vmax.f32 %v900, 0.0
      %v909 = vmax.f32 %v901, 0.0
      %v910 = vmax.f32 %v902, 0.0
      %v911 = vmax.f32 %v903, 0.0
      %v912 = vmax.f32 %v904, 0.0
      %v913 = vmax.f32 %v905, 0.0
      %v914 = vmax.f32 %v906, 0.0
      %v915 = vmax.f32 %v907, 0.0
      %v916 = vmax.f32 %v908, 0.0
      %v917 = vmax.f32 %v909, 0.0
      %v918 = vmax.f32 %v910, 0.0
      %v919 = vmax.f32 %v911, 0.0
      %v920 = vmax.f32 %v912, 0.0
      %v921 = vmax.f32 %v913, 0.0
      %v922 = vmax.f32 %v914, 0.0
      %923 = vst [vmem:[%s228] sm:$0xff] %v915
      %924 = vst [vmem:[%s228 + $0x8] sm:$0xff] %v916
      %925 = vst [vmem:[%s228 + $0x10] sm:$0xff] %v917
      %926 = vst [vmem:[%s228 + $0x18] sm:$0xff] %v918
      %927 = vst [vmem:[%s228 + $0x20] sm:$0xff] %v919
      %928 = vst [vmem:[%s228 + $0x28] sm:$0xff] %v920
      %929 = vst [vmem:[%s228 + $0x30] sm:$0xff] %v921
      %930 = vst [vmem:[%s228 + $0x38] sm:$0xff] %v922
      %s931 = smul.u32 2, %s16
      %p932 = scmp.lt.s32.totalorder %s931, 3
      %s933 = scalar_select %p932, %s931, 3
      %s934 = smul.addr %s933, 4
      %s935 = smul.addr %s934, 8
      %s936 = scalar_lea.vmem %s5, %s935
      // Predicated region
      $region41: #{generator1_forward.22} parent=39 // pred_check
        %p937 = pneg %p144
      $region42: #{generator1_forward.22} parent=39 // pred_check_branch
        %939 = sbr.rel (%p937) target = $region44
      $region43: #{generator1_forward.22} parent=39 // pred_region
        %s940 = smul.u32 2, %s16
      $region44: #{generator1_forward.22} parent=39 // pred_fallthru
        _
    $region40: #{generator1_forward.22} parent=5 // pred_fallthru
      _
    %p941 = scmp.le.s32.totalorder 2, %s11
    // Predicated region
    $region45: #{generator1_forward.22} parent=5 // pred_check
      %p942 = pneg %p941
    $region46: #{generator1_forward.22} parent=5 // pred_check_branch
      %944 = sbr.rel (%p942) target = $region48
    $region47: #{generator1_forward.22} parent=5 // pred_region
      %s945 = ssub.s32 %s11, 2
      // Predicated region
      $region49: #{generator1_forward.22} parent=47 // pred_check
        %p946 = pneg %p150
      $region50: #{generator1_forward.22} parent=47 // pred_check_branch
        %948 = sbr.rel (%p946) target = $region52
      $region51: #{generator1_forward.22} parent=47 // pred_region
        %s949 = smul.u32 2, %s17
        %p950 = scmp.lt.s32.totalorder %s949, 3
        %s951 = scalar_select %p950, %s949, 3
        %s952 = smul.addr %s951, 4
        %s953 = smul.addr %s952, 8
        %s954 = scalar_lea.vmem %s5, %s953
      $region52: #{generator1_forward.22} parent=47 // pred_fallthru
        _
    $region48: #{generator1_forward.22} parent=5 // pred_fallthru
      _
  $region6: #{generator1_forward.22} parent=0 // loop_footer
    %s15 = sadd.s32 1, %s11
  $region7: #{generator1_forward.22} parent=0 // loop_footer_branch
    %10 = sbr.rel target = $region3
  $region8: #{generator1_forward.22} parent=0 // loop_exit
    _

// kernel: generator1_forward.23
$region0: #{generator1_forward.23}
  #allocation0 [shape = 'u32[]', space=smem, size = 0x4, offset = 0x4, fixed_abs, tag = 'smem constant byte address 0x4 - core index']
  #allocation1 [shape = 'u32[144,128]{1,0:T(1,128)}', space=vmem, size = 0x12000, scoped, tag = 'internal scratch']
  %s0 = inlined_call_operand.vmem [shape: f32[32,512], index: 0, kind: input, shape index: {}]
  %s1 = inlined_call_operand.vmem [shape: f32[512,256], index: 1, kind: input, shape index: {}]
  %s2 = inlined_call_operand.vmem [shape: f32[1,256], index: 2, kind: input, shape index: {}]
  %s3 = inlined_call_operand.vmem [shape: f32[256,512], index: 3, kind: input, shape index: {}]
  %s4 = inlined_call_operand.vmem [shape: f32[1,512], index: 4, kind: input, shape index: {}]
  %s5 = inlined_call_operand.vmem [shape: f32[32,512], index: 5, kind: output, shape index: {}]
  %s6 = sld [smem:[#allocation0]]
  $region53: #{generator1_forward.23} parent=0
    _
  %s8 = ssub.s32 1, %s6
  %s9 = scalar_select 0, %s8, %s6
  loop: start=0, step=1, limit=4
  $region2: #{generator1_forward.23} parent=0 // loop_pre_header
    _
  $region3: #{generator1_forward.23} parent=0 // loop_header
    %s11 = sphi 0, %s15
    %p12 = scmp.ge.s32.totalorder %s11, 4
    %s21 = sphi 0, %s23
    %s24 = sphi 0, %s21
    %s25 = sphi 0, %s24
    %s41 = sphi 0, %s25
    %s45 = sphi 0, %s45
    %s47 = sphi 0, %s45
    %s48 = sphi 0, %s47
    %s62 = sphi 0, %s48
    %s66 = sphi 0, %s66
    %s68 = sphi 0, %s66
    %s69 = sphi 0, %s68
    %s83 = sphi 0, %s69
    %s87 = sphi 0, %s87
    %s89 = sphi 0, %s87
    %s90 = sphi 0, %s89
    %s104 = sphi 0, %s90
    %s108 = sphi 0, %s108
    %s110 = sphi 0, %s108
    %s111 = sphi 0, %s110
    %s125 = sphi 0, %s111
    %s131 = sphi 0, %s133
    %s134 = sphi 0, %s131
    %s135 = sphi 0, %s134
    %s151 = sphi 0, %s135
  $region4: #{generator1_forward.23} parent=0 // loop_header_branch
    %14 = sbr.rel (%p12) target = $region8
  $region5: #{generator1_forward.23} parent=0 // loop_body
    %s16 = ssub.s32 %s11, 1
    %s17 = ssub.s32 %s11, 2
    %s18 = sadd.s32 %s11, 1
    %s19 = ssub.s32 %s11, %s18
    %p20 = scmp.eq.s32.totalorder %s19, 0
    %s22 = sadd.s32 %s21, 1
    %s23 = scalar_select %p20, %s21, %s22
    %p26 = pneg %p20
    %p27 = scmp.eq.s32.totalorder %s11, 1
    %p28 = por %p26, %p27
    %p29 = scmp.ne.s32.totalorder %s21, %s24
    %p30 = scmp.eq.s32.totalorder %s11, 0
    %p31 = por %p29, %p30
    %p32 = scmp.ne.s32.totalorder %s21, %s24
    %p33 = scmp.eq.s32.totalorder %s16, 1
    %p34 = por %p32, %p33
    %p35 = scmp.ne.s32.totalorder %s24, %s25
    %p36 = scmp.eq.s32.totalorder %s16, 0
    %p37 = por %p35, %p36
    %p38 = scmp.ne.s32.totalorder %s24, %s25
    %p39 = scmp.eq.s32.totalorder %s17, 1
    %p40 = por %p38, %p39
    %p42 = scmp.ne.s32.totalorder %s25, %s41
    %p43 = scmp.eq.s32.totalorder %s17, 0
    %p44 = por %p42, %p43
    %s46 = sadd.s32 %s45, 1
    %p49 = scmp.eq.s32.totalorder %s11, 1
    %p50 = scmp.ne.s32.totalorder %s45, %s47
    %p51 = scmp.eq.s32.totalorder %s11, 0
    %p52 = por %p50, %p51
    %p53 = scmp.ne.s32.totalorder %s45, %s47
    %p54 = scmp.eq.s32.totalorder %s16, 1
    %p55 = por %p53, %p54
    %p56 = scmp.ne.s32.totalorder %s47, %s48
    %p57 = scmp.eq.s32.totalorder %s16, 0
    %p58 = por %p56, %p57
    %p59 = scmp.ne.s32.totalorder %s47, %s48
    %p60 = scmp.eq.s32.totalorder %s17, 1
    %p61 = por %p59, %p60
    %p63 = scmp.ne.s32.totalorder %s48, %s62
    %p64 = scmp.eq.s32.totalorder %s17, 0
    %p65 = por %p63, %p64
    %s67 = sadd.s32 %s66, 1
    %p70 = scmp.eq.s32.totalorder %s11, 1
    %p71 = scmp.ne.s32.totalorder %s66, %s68
    %p72 = scmp.eq.s32.totalorder %s11, 0
    %p73 = por %p71, %p72
    %p74 = scmp.ne.s32.totalorder %s66, %s68
    %p75 = scmp.eq.s32.totalorder %s16, 1
    %p76 = por %p74, %p75
    %p77 = scmp.ne.s32.totalorder %s68, %s69
    %p78 = scmp.eq.s32.totalorder %s16, 0
    %p79 = por %p77, %p78
    %p80 = scmp.ne.s32.totalorder %s68, %s69
    %p81 = scmp.eq.s32.totalorder %s17, 1
    %p82 = por %p80, %p81
    %p84 = scmp.ne.s32.totalorder %s69, %s83
    %p85 = scmp.eq.s32.totalorder %s17, 0
    %p86 = por %p84, %p85
    %s88 = sadd.s32 %s87, 1
    %p91 = scmp.eq.s32.totalorder %s11, 1
    %p92 = scmp.ne.s32.totalorder %s87, %s89
    %p93 = scmp.eq.s32.totalorder %s11, 0
    %p94 = por %p92, %p93
    %p95 = scmp.ne.s32.totalorder %s87, %s89
    %p96 = scmp.eq.s32.totalorder %s16, 1
    %p97 = por %p95, %p96
    %p98 = scmp.ne.s32.totalorder %s89, %s90
    %p99 = scmp.eq.s32.totalorder %s16, 0
    %p100 = por %p98, %p99
    %p101 = scmp.ne.s32.totalorder %s89, %s90
    %p102 = scmp.eq.s32.totalorder %s17, 1
    %p103 = por %p101, %p102
    %p105 = scmp.ne.s32.totalorder %s90, %s104
    %p106 = scmp.eq.s32.totalorder %s17, 0
    %p107 = por %p105, %p106
    %s109 = sadd.s32 %s108, 1
    %p112 = scmp.eq.s32.totalorder %s11, 1
    %p113 = scmp.ne.s32.totalorder %s108, %s110
    %p114 = scmp.eq.s32.totalorder %s11, 0
    %p115 = por %p113, %p114
    %p116 = scmp.ne.s32.totalorder %s108, %s110
    %p117 = scmp.eq.s32.totalorder %s16, 1
    %p118 = por %p116, %p117
    %p119 = scmp.ne.s32.totalorder %s110, %s111
    %p120 = scmp.eq.s32.totalorder %s16, 0
    %p121 = por %p119, %p120
    %p122 = scmp.ne.s32.totalorder %s110, %s111
    %p123 = scmp.eq.s32.totalorder %s17, 1
    %p124 = por %p122, %p123
    %p126 = scmp.ne.s32.totalorder %s111, %s125
    %p127 = scmp.eq.s32.totalorder %s17, 0
    %p128 = por %p126, %p127
    %s129 = ssub.s32 %s11, %s18
    %p130 = scmp.eq.s32.totalorder %s129, 0
    %s132 = sadd.s32 %s131, 1
    %s133 = scalar_select %p130, %s131, %s132
    %p136 = pneg %p130
    %p137 = scmp.eq.s32.totalorder %s11, 1
    %p138 = por %p136, %p137
    %p139 = scmp.ne.s32.totalorder %s131, %s134
    %p140 = scmp.eq.s32.totalorder %s11, 0
    %p141 = por %p139, %p140
    %p142 = scmp.ne.s32.totalorder %s131, %s134
    %p143 = scmp.eq.s32.totalorder %s16, 1
    %p144 = por %p142, %p143
    %p145 = scmp.ne.s32.totalorder %s134, %s135
    %p146 = scmp.eq.s32.totalorder %s16, 0
    %p147 = por %p145, %p146
    %p148 = scmp.ne.s32.totalorder %s134, %s135
    %p149 = scmp.eq.s32.totalorder %s17, 1
    %p150 = por %p148, %p149
    %p152 = scmp.ne.s32.totalorder %s135, %s151
    %p153 = scmp.eq.s32.totalorder %s17, 0
    %p154 = por %p152, %p153
    %p155 = scmp.le.s32.totalorder 1, %s11
    %p156 = scmp.lt.s32.totalorder %s11, 3
    %p157 = pnand %p155, %p156
    %p158 = pneg %p157
    // Predicated region
    $region9: #{generator1_forward.23} parent=5 // pred_check
      _
    $region10: #{generator1_forward.23} parent=5 // pred_check_branch
      %160 = sbr.rel (%p157) target = $region12
    $region11: #{generator1_forward.23} parent=5 // pred_region
      %s161 = ssub.s32 %s11, 1
      // Predicated region
      $region13: #{generator1_forward.23} parent=11 // pred_check
        %p162 = pneg %p58
      $region14: #{generator1_forward.23} parent=11 // pred_check_branch
        %164 = sbr.rel (%p162) target = $region16
      $region15: #{generator1_forward.23} parent=11 // pred_region
        _
      $region16: #{generator1_forward.23} parent=11 // pred_fallthru
        _
      // Predicated region
      $region17: #{generator1_forward.23} parent=11 // pred_check
        %p165 = pneg %p79
      $region18: #{generator1_forward.23} parent=11 // pred_check_branch
        %167 = sbr.rel (%p165) target = $region20
      $region19: #{generator1_forward.23} parent=11 // pred_region
        _
      $region20: #{generator1_forward.23} parent=11 // pred_fallthru
        _
      // Predicated region
      $region21: #{generator1_forward.23} parent=11 // pred_check
        %p168 = pneg %p100
      $region22: #{generator1_forward.23} parent=11 // pred_check_branch
        %170 = sbr.rel (%p168) target = $region24
      $region23: #{generator1_forward.23} parent=11 // pred_region
        _
      $region24: #{generator1_forward.23} parent=11 // pred_fallthru
        _
      // Predicated region
      $region25: #{generator1_forward.23} parent=11 // pred_check
        %p171 = pneg %p121
      $region26: #{generator1_forward.23} parent=11 // pred_check_branch
        %173 = sbr.rel (%p171) target = $region28
      $region27: #{generator1_forward.23} parent=11 // pred_region
        _
      $region28: #{generator1_forward.23} parent=11 // pred_fallthru
        _
    $region12: #{generator1_forward.23} parent=5 // pred_fallthru
      _
    %p174 = scmp.lt.s32.totalorder %s11, 2
    // Predicated region
    $region29: #{generator1_forward.23} parent=5 // pred_check
      %p175 = pneg %p174
    $region30: #{generator1_forward.23} parent=5 // pred_check_branch
      %177 = sbr.rel (%p175) target = $region32
    $region31: #{generator1_forward.23} parent=5 // pred_region
      // Predicated region
      $region33: #{generator1_forward.23} parent=31 // pred_check
        %p178 = pneg %p31
      $region34: #{generator1_forward.23} parent=31 // pred_check_branch
        %180 = sbr.rel (%p178) target = $region36
      $region35: #{generator1_forward.23} parent=31 // pred_region
        %s181 = smul.u32 2, %s11
        %p182 = scmp.lt.s32.totalorder %s181, 3
        %s183 = scalar_select %p182, %s181, 3
        %s184 = smul.addr %s183, 4
        %s185 = smul.addr %s184, 8
        %s186 = scalar_lea.vmem %s0, %s185
        %s187 = smul.u32 2, %s11
      $region36: #{generator1_forward.23} parent=31 // pred_fallthru
        _
    $region32: #{generator1_forward.23} parent=5 // pred_fallthru
      _
    %p188 = scmp.le.s32.totalorder 1, %s11
    %p189 = scmp.lt.s32.totalorder %s11, 3
    %p190 = pnand %p188, %p189
    %p191 = pneg %p190
    // Predicated region
    $region37: #{generator1_forward.23} parent=5 // pred_check
      _
    $region38: #{generator1_forward.23} parent=5 // pred_check_branch
      %193 = sbr.rel (%p190) target = $region40
    $region39: #{generator1_forward.23} parent=5 // pred_region
      %s194 = ssub.s32 %s11, 1
      %s195 = smul.u32 2, %s16
      %p196 = scmp.lt.s32.totalorder %s195, 3
      %s197 = scalar_select %p196, %s195, 3
      %s198 = smul.addr %s197, 4
      %s199 = smul.addr %s198, 8
      %s200 = scalar_lea.vmem %s0, %s199
      %p201 = pneg %p37
      %p202 = pneg %p34
      %p203 = pneg %p58
      %p204 = pneg %p55
      %p205 = pneg %p79
      %p206 = pneg %p76
      %p207 = pneg %p100
      %p208 = pneg %p97
      %p209 = pneg %p121
      %p210 = pneg %p118
      %p211 = pneg %p147
      %p212 = pneg %p144
      %s213 = smul.u32 2, %s16
      %p214 = scmp.lt.s32.totalorder %s213, 3
      %s215 = scalar_select %p214, %s213, 3
      %s216 = smul.addr %s215, 4
      %s217 = smul.addr %s216, 8
      %s218 = scalar_lea.vmem %s5, %s217
      %s219 = smul.u32 2, %s16
      %p220 = scmp.lt.s32.totalorder %s219, 3
      %s221 = scalar_select %p220, %s219, 3
      %s222 = smul.addr %s221, 4
      %s223 = smul.addr %s222, 8
      %s224 = scalar_lea.vmem %s0, %s223
      %s225 = smul.u32 2, %s16
      %s226 = smul.u32 2, %s16
      %p227 = scmp.lt.s32.totalorder %s226, 3
      %s228 = scalar_select %p227, %s226, 3
      %s229 = smul.addr %s228, 4
      %s230 = smul.addr %s229, 8
      %s231 = scalar_lea.vmem %s5, %s230
      %s232 = smul.u32 2, %s16
      %v233 = vld [vmem:[%s224] sm:$0xff]
      %v234 = vld [vmem:[%s224 + $0x8] sm:$0xff]
      %v235 = vld [vmem:[%s224 + $0x10] sm:$0xff]
      %v236 = vld [vmem:[%s224 + $0x18] sm:$0xff]
      %v237 = vld [vmem:[%s224 + $0x20] sm:$0xff]
      %v238 = vld [vmem:[%s224 + $0x28] sm:$0xff]
      %v239 = vld [vmem:[%s224 + $0x30] sm:$0xff]
      %v240 = vld [vmem:[%s224 + $0x38] sm:$0xff]
      %v241 = vld [vmem:[%s1] sm:$0xff]
      %v242 = vld [vmem:[%s1 + $0x8] sm:$0xff]
      %v243 = vld [vmem:[%s1 + $0x10] sm:$0xff]
      %v244 = vld [vmem:[%s1 + $0x18] sm:$0xff]
      %v245 = vld [vmem:[%s1 + $0x20] sm:$0xff]
      %v246 = vld [vmem:[%s1 + $0x28] sm:$0xff]
      %v247 = vld [vmem:[%s1 + $0x30] sm:$0xff]
      %v248 = vld [vmem:[%s1 + $0x38] sm:$0xff]
      %v249 = vld [vmem:[%s1 + $0x40] sm:$0xff]
      %v250 = vld [vmem:[%s1 + $0x48] sm:$0xff]
      %v251 = vld [vmem:[%s1 + $0x50] sm:$0xff]
      %v252 = vld [vmem:[%s1 + $0x58] sm:$0xff]
      %v253 = vld [vmem:[%s1 + $0x60] sm:$0xff]
      %v254 = vld [vmem:[%s1 + $0x68] sm:$0xff]
      %v255 = vld [vmem:[%s1 + $0x70] sm:$0xff]
      %v256 = vld [vmem:[%s1 + $0x78] sm:$0xff]
      %v257 = vld [vmem:[%s1 + $0x80] sm:$0xff]
      %v258 = vld [vmem:[%s1 + $0x88] sm:$0xff]
      %v259 = vld [vmem:[%s1 + $0x90] sm:$0xff]
      %v260 = vld [vmem:[%s1 + $0x98] sm:$0xff]
      %v261 = vld [vmem:[%s1 + $0xa0] sm:$0xff]
      %v262 = vld [vmem:[%s1 + $0xa8] sm:$0xff]
      %v263 = vld [vmem:[%s1 + $0xb0] sm:$0xff]
      %v264 = vld [vmem:[%s1 + $0xb8] sm:$0xff]
      %v265 = vld [vmem:[%s1 + $0xc0] sm:$0xff]
      %v266 = vld [vmem:[%s1 + $0xc8] sm:$0xff]
      %v267 = vld [vmem:[%s1 + $0xd0] sm:$0xff]
      %v268 = vld [vmem:[%s1 + $0xd8] sm:$0xff]
      %v269 = vld [vmem:[%s1 + $0xe0] sm:$0xff]
      %v270 = vld [vmem:[%s1 + $0xe8] sm:$0xff]
      %v271 = vld [vmem:[%s1 + $0xf0] sm:$0xff]
      %v272 = vld [vmem:[%s1 + $0xf8] sm:$0xff]
      %v273 = vld [vmem:[%s1 + $0x100] sm:$0xff]
      %v274 = vld [vmem:[%s1 + $0x108] sm:$0xff]
      %v275 = vld [vmem:[%s1 + $0x110] sm:$0xff]
      %v276 = vld [vmem:[%s1 + $0x118] sm:$0xff]
      %v277 = vld [vmem:[%s1 + $0x120] sm:$0xff]
      %v278 = vld [vmem:[%s1 + $0x128] sm:$0xff]
      %v279 = vld [vmem:[%s1 + $0x130] sm:$0xff]
      %v280 = vld [vmem:[%s1 + $0x138] sm:$0xff]
      %v281 = vld [vmem:[%s1 + $0x140] sm:$0xff]
      %v282 = vld [vmem:[%s1 + $0x148] sm:$0xff]
      %v283 = vld [vmem:[%s1 + $0x150] sm:$0xff]
      %v284 = vld [vmem:[%s1 + $0x158] sm:$0xff]
      %v285 = vld [vmem:[%s1 + $0x160] sm:$0xff]
      %v286 = vld [vmem:[%s1 + $0x168] sm:$0xff]
      %v287 = vld [vmem:[%s1 + $0x170] sm:$0xff]
      %v288 = vld [vmem:[%s1 + $0x178] sm:$0xff]
      %v289 = vld [vmem:[%s1 + $0x180] sm:$0xff]
      %v290 = vld [vmem:[%s1 + $0x188] sm:$0xff]
      %v291 = vld [vmem:[%s1 + $0x190] sm:$0xff]
      %v292 = vld [vmem:[%s1 + $0x198] sm:$0xff]
      %v293 = vld [vmem:[%s1 + $0x1a0] sm:$0xff]
      %v294 = vld [vmem:[%s1 + $0x1a8] sm:$0xff]
      %v295 = vld [vmem:[%s1 + $0x1b0] sm:$0xff]
      %v296 = vld [vmem:[%s1 + $0x1b8] sm:$0xff]
      %v297 = vld [vmem:[%s1 + $0x1c0] sm:$0xff]
      %v298 = vld [vmem:[%s1 + $0x1c8] sm:$0xff]
      %v299 = vld [vmem:[%s1 + $0x1d0] sm:$0xff]
      %v300 = vld [vmem:[%s1 + $0x1d8] sm:$0xff]
      %v301 = vld [vmem:[%s1 + $0x1e0] sm:$0xff]
      %v302 = vld [vmem:[%s1 + $0x1e8] sm:$0xff]
      %v303 = vld [vmem:[%s1 + $0x1f0] sm:$0xff]
      %v304 = vld [vmem:[%s1 + $0x1f8] sm:$0xff]
      %v305 = vld [vmem:[%s1 + $0x200] sm:$0xff]
      %v306 = vld [vmem:[%s1 + $0x208] sm:$0xff]
      %v307 = vld [vmem:[%s1 + $0x210] sm:$0xff]
      %v308 = vld [vmem:[%s1 + $0x218] sm:$0xff]
      %v309 = vld [vmem:[%s1 + $0x220] sm:$0xff]
      %v310 = vld [vmem:[%s1 + $0x228] sm:$0xff]
      %v311 = vld [vmem:[%s1 + $0x230] sm:$0xff]
      %v312 = vld [vmem:[%s1 + $0x238] sm:$0xff]
      %v313 = vld [vmem:[%s1 + $0x240] sm:$0xff]
      %v314 = vld [vmem:[%s1 + $0x248] sm:$0xff]
      %v315 = vld [vmem:[%s1 + $0x250] sm:$0xff]
      %v316 = vld [vmem:[%s1 + $0x258] sm:$0xff]
      %v317 = vld [vmem:[%s1 + $0x260] sm:$0xff]
      %v318 = vld [vmem:[%s1 + $0x268] sm:$0xff]
      %v319 = vld [vmem:[%s1 + $0x270] sm:$0xff]
      %v320 = vld [vmem:[%s1 + $0x278] sm:$0xff]
      %v321 = vld [vmem:[%s1 + $0x280] sm:$0xff]
      %v322 = vld [vmem:[%s1 + $0x288] sm:$0xff]
      %v323 = vld [vmem:[%s1 + $0x290] sm:$0xff]
      %v324 = vld [vmem:[%s1 + $0x298] sm:$0xff]
      %v325 = vld [vmem:[%s1 + $0x2a0] sm:$0xff]
      %v326 = vld [vmem:[%s1 + $0x2a8] sm:$0xff]
      %v327 = vld [vmem:[%s1 + $0x2b0] sm:$0xff]
      %v328 = vld [vmem:[%s1 + $0x2b8] sm:$0xff]
      %v329 = vld [vmem:[%s1 + $0x2c0] sm:$0xff]
      %v330 = vld [vmem:[%s1 + $0x2c8] sm:$0xff]
      %v331 = vld [vmem:[%s1 + $0x2d0] sm:$0xff]
      %v332 = vld [vmem:[%s1 + $0x2d8] sm:$0xff]
      %v333 = vld [vmem:[%s1 + $0x2e0] sm:$0xff]
      %v334 = vld [vmem:[%s1 + $0x2e8] sm:$0xff]
      %v335 = vld [vmem:[%s1 + $0x2f0] sm:$0xff]
      %v336 = vld [vmem:[%s1 + $0x2f8] sm:$0xff]
      %v337 = vld [vmem:[%s1 + $0x300] sm:$0xff]
      %v338 = vld [vmem:[%s1 + $0x308] sm:$0xff]
      %v339 = vld [vmem:[%s1 + $0x310] sm:$0xff]
      %v340 = vld [vmem:[%s1 + $0x318] sm:$0xff]
      %v341 = vld [vmem:[%s1 + $0x320] sm:$0xff]
      %v342 = vld [vmem:[%s1 + $0x328] sm:$0xff]
      %v343 = vld [vmem:[%s1 + $0x330] sm:$0xff]
      %v344 = vld [vmem:[%s1 + $0x338] sm:$0xff]
      %v345 = vld [vmem:[%s1 + $0x340] sm:$0xff]
      %v346 = vld [vmem:[%s1 + $0x348] sm:$0xff]
      %v347 = vld [vmem:[%s1 + $0x350] sm:$0xff]
      %v348 = vld [vmem:[%s1 + $0x358] sm:$0xff]
      %v349 = vld [vmem:[%s1 + $0x360] sm:$0xff]
      %v350 = vld [vmem:[%s1 + $0x368] sm:$0xff]
      %v351 = vld [vmem:[%s1 + $0x370] sm:$0xff]
      %v352 = vld [vmem:[%s1 + $0x378] sm:$0xff]
      %v353 = vld [vmem:[%s1 + $0x380] sm:$0xff]
      %v354 = vld [vmem:[%s1 + $0x388] sm:$0xff]
      %v355 = vld [vmem:[%s1 + $0x390] sm:$0xff]
      %v356 = vld [vmem:[%s1 + $0x398] sm:$0xff]
      %v357 = vld [vmem:[%s1 + $0x3a0] sm:$0xff]
      %v358 = vld [vmem:[%s1 + $0x3a8] sm:$0xff]
      %v359 = vld [vmem:[%s1 + $0x3b0] sm:$0xff]
      %v360 = vld [vmem:[%s1 + $0x3b8] sm:$0xff]
      %v361 = vld [vmem:[%s1 + $0x3c0] sm:$0xff]
      %v362 = vld [vmem:[%s1 + $0x3c8] sm:$0xff]
      %v363 = vld [vmem:[%s1 + $0x3d0] sm:$0xff]
      %v364 = vld [vmem:[%s1 + $0x3d8] sm:$0xff]
      %v365 = vld [vmem:[%s1 + $0x3e0] sm:$0xff]
      %v366 = vld [vmem:[%s1 + $0x3e8] sm:$0xff]
      %v367 = vld [vmem:[%s1 + $0x3f0] sm:$0xff]
      %v368 = vld [vmem:[%s1 + $0x3f8] sm:$0xff]
      %v369 = vld [vmem:[%s2] sm:$0x3]
      %v371 = vlaneseq
      %v372 = vshrl.u32 %v371, 7
      %v373 = vsub.s32 0, %v372
      %v374 = vrot.slane %v369, %v373
      %v375 = vlaneseq
      %v376 = vshrl.u32 %v375, 7
      %v377 = vsub.s32 1, %v376
      %v378 = vrot.slane %v369, %v377
      %381 = vmatprep.subr.mxu0 %v242
      %382 = vmatpush1.msra.mxu0 %v241
      %383 = vmatprep.subr.mxu0 %v244
      %384 = vmatpush1.msra.mxu0 %v243
      %385 = vmatprep.subr.mxu0 %v246
      %386 = vmatpush1.msra.mxu0 %v245
      %387 = vmatprep.subr.mxu0 %v248
      %388 = vmatpush1.msra.mxu0 %v247
      %389 = vmatprep.subr.mxu0 %v250
      %390 = vmatpush1.msra.mxu0 %v249
      %391 = vmatprep.subr.mxu0 %v252
      %392 = vmatpush1.msra.mxu0 %v251
      %393 = vmatprep.subr.mxu0 %v254
      %394 = vmatpush1.msra.mxu0 %v253
      %395 = vmatprep.subr.mxu0 %v256
      %396 = vmatpush1.msra.mxu0 %v255
      %397 = vmatprep.subr.mxu0 %v258
      %398 = vmatpush1.msra.mxu0 %v257
      %399 = vmatprep.subr.mxu0 %v260
      %400 = vmatpush1.msra.mxu0 %v259
      %401 = vmatprep.subr.mxu0 %v262
      %402 = vmatpush1.msra.mxu0 %v261
      %403 = vmatprep.subr.mxu0 %v264
      %404 = vmatpush1.msra.mxu0 %v263
      %405 = vmatprep.subr.mxu0 %v266
      %406 = vmatpush1.msra.mxu0 %v265
      %407 = vmatprep.subr.mxu0 %v268
      %408 = vmatpush1.msra.mxu0 %v267
      %409 = vmatprep.subr.mxu0 %v270
      %410 = vmatpush1.msra.mxu0 %v269
      %411 = vmatprep.subr.mxu0 %v272
      %412 = vmatpush1.msra.mxu0 %v271
      %413 = vmatprep.subr.mxu0 %v274
      %414 = vmatpush1.msra.mxu0 %v273
      %415 = vmatprep.subr.mxu0 %v276
      %416 = vmatpush1.msra.mxu0 %v275
      %417 = vmatprep.subr.mxu0 %v278
      %418 = vmatpush1.msra.mxu0 %v277
      %419 = vmatprep.subr.mxu0 %v280
      %420 = vmatpush1.msra.mxu0 %v279
      %421 = vmatprep.subr.mxu0 %v282
      %422 = vmatpush1.msra.mxu0 %v281
      %423 = vmatprep.subr.mxu0 %v284
      %424 = vmatpush1.msra.mxu0 %v283
      %425 = vmatprep.subr.mxu0 %v286
      %426 = vmatpush1.msra.mxu0 %v285
      %427 = vmatprep.subr.mxu0 %v288
      %428 = vmatpush1.msra.mxu0 %v287
      %429 = vmatprep.subr.mxu0 %v290
      %430 = vmatpush1.msra.mxu0 %v289
      %431 = vmatprep.subr.mxu0 %v292
      %432 = vmatpush1.msra.mxu0 %v291
      %433 = vmatprep.subr.mxu0 %v294
      %434 = vmatpush1.msra.mxu0 %v293
      %435 = vmatprep.subr.mxu0 %v296
      %436 = vmatpush1.msra.mxu0 %v295
      %437 = vmatprep.subr.mxu0 %v298
      %438 = vmatpush1.msra.mxu0 %v297
      %439 = vmatprep.subr.mxu0 %v300
      %440 = vmatpush1.msra.mxu0 %v299
      %441 = vmatprep.subr.mxu0 %v302
      %442 = vmatpush1.msra.mxu0 %v301
      %443 = vmatprep.subr.mxu0 %v304
      %444 = vmatpush1.msra.mxu0 %v303
      %445 = vmatprep.mubr.f32.mxu0 %v234
      %446 = vmatmul.mubr.f32.gmra.mrb[0].mxu0 %v233
      %v447 = vpop.f32.mrb[0].mxu0
      %v448 = vadd.f32 %v374, %v447
      %v449 = vpop.f32.mrb[0].mxu0
      %v450 = vadd.f32 %v378, %v449
      %451 = vmatprep.mubr.f32.mxu0 %v238
      %452 = vmatmul.mubr.f32.gmra.mrb[0].mxu0 %v237
      %v453 = vpop.f32.mrb[0].mxu0
      %v454 = vadd.f32 %v374, %v453
      %v455 = vpop.f32.mrb[0].mxu0
      %v456 = vadd.f32 %v378, %v455
      %457 = vdwg.mxu0
      %458 = vmatprep.subr.mxu0 %v306
      %459 = vmatpush1.msra.mxu0 %v305
      %460 = vmatprep.subr.mxu0 %v308
      %461 = vmatpush1.msra.mxu0 %v307
      %462 = vmatprep.subr.mxu0 %v310
      %463 = vmatpush1.msra.mxu0 %v309
      %464 = vmatprep.subr.mxu0 %v312
      %465 = vmatpush1.msra.mxu0 %v311
      %466 = vmatprep.subr.mxu0 %v314
      %467 = vmatpush1.msra.mxu0 %v313
      %468 = vmatprep.subr.mxu0 %v316
      %469 = vmatpush1.msra.mxu0 %v315
      %470 = vmatprep.subr.mxu0 %v318
      %471 = vmatpush1.msra.mxu0 %v317
      %472 = vmatprep.subr.mxu0 %v320
      %473 = vmatpush1.msra.mxu0 %v319
      %474 = vmatprep.subr.mxu0 %v322
      %475 = vmatpush1.msra.mxu0 %v321
      %476 = vmatprep.subr.mxu0 %v324
      %477 = vmatpush1.msra.mxu0 %v323
      %478 = vmatprep.subr.mxu0 %v326
      %479 = vmatpush1.msra.mxu0 %v325
      %480 = vmatprep.subr.mxu0 %v328
      %481 = vmatpush1.msra.mxu0 %v327
      %482 = vmatprep.subr.mxu0 %v330
      %483 = vmatpush1.msra.mxu0 %v329
      %484 = vmatprep.subr.mxu0 %v332
      %485 = vmatpush1.msra.mxu0 %v331
      %486 = vmatprep.subr.mxu0 %v334
      %487 = vmatpush1.msra.mxu0 %v333
      %488 = vmatprep.subr.mxu0 %v336
      %489 = vmatpush1.msra.mxu0 %v335
      %490 = vmatprep.subr.mxu0 %v338
      %491 = vmatpush1.msra.mxu0 %v337
      %492 = vmatprep.subr.mxu0 %v340
      %493 = vmatpush1.msra.mxu0 %v339
      %494 = vmatprep.subr.mxu0 %v342
      %495 = vmatpush1.msra.mxu0 %v341
      %496 = vmatprep.subr.mxu0 %v344
      %497 = vmatpush1.msra.mxu0 %v343
      %498 = vmatprep.subr.mxu0 %v346
      %499 = vmatpush1.msra.mxu0 %v345
      %500 = vmatprep.subr.mxu0 %v348
      %501 = vmatpush1.msra.mxu0 %v347
      %502 = vmatprep.subr.mxu0 %v350
      %503 = vmatpush1.msra.mxu0 %v349
      %504 = vmatprep.subr.mxu0 %v352
      %505 = vmatpush1.msra.mxu0 %v351
      %506 = vmatprep.subr.mxu0 %v354
      %507 = vmatpush1.msra.mxu0 %v353
      %508 = vmatprep.subr.mxu0 %v356
      %509 = vmatpush1.msra.mxu0 %v355
      %510 = vmatprep.subr.mxu0 %v358
      %511 = vmatpush1.msra.mxu0 %v357
      %512 = vmatprep.subr.mxu0 %v360
      %513 = vmatpush1.msra.mxu0 %v359
      %514 = vmatprep.subr.mxu0 %v362
      %515 = vmatpush1.msra.mxu0 %v361
      %516 = vmatprep.subr.mxu0 %v364
      %517 = vmatpush1.msra.mxu0 %v363
      %518 = vmatprep.subr.mxu0 %v366
      %519 = vmatpush1.msra.mxu0 %v365
      %520 = vmatprep.subr.mxu0 %v368
      %521 = vmatpush1.msra.mxu0 %v367
      %522 = vmatprep.mubr.f32.mxu0 %v236
      %523 = vmatmul.mubr.f32.gmra.mrb[0].mxu0 %v235
      %v524 = vpop.f32.mrb[0].mxu0
      %v525 = vadd.f32 %v448, %v524
      %v526 = vpop.f32.mrb[0].mxu0
      %v527 = vadd.f32 %v450, %v526
      %528 = vmatprep.mubr.f32.mxu0 %v240
      %529 = vmatmul.mubr.f32.gmra.mrb[0].mxu0 %v239
      %v530 = vpop.f32.mrb[0].mxu0
      %v531 = vadd.f32 %v454, %v530
      %v532 = vpop.f32.mrb[0].mxu0
      %v533 = vadd.f32 %v456, %v532
      %534 = vdwg.mxu0
      %v535 = vmax.f32 %v525, 0.0
      %v536 = vmax.f32 %v527, 0.0
      %v537 = vmax.f32 %v531, 0.0
      %v538 = vmax.f32 %v533, 0.0
      %v539 = vld [vmem:[%s3] sm:$0xff]
      %v540 = vld [vmem:[%s3 + $0x8] sm:$0xff]
      %v541 = vld [vmem:[%s3 + $0x10] sm:$0xff]
      %v542 = vld [vmem:[%s3 + $0x18] sm:$0xff]
      %v543 = vld [vmem:[%s3 + $0x20] sm:$0xff]
      %v544 = vld [vmem:[%s3 + $0x28] sm:$0xff]
      %v545 = vld [vmem:[%s3 + $0x30] sm:$0xff]
      %v546 = vld [vmem:[%s3 + $0x38] sm:$0xff]
      %v547 = vld [vmem:[%s3 + $0x40] sm:$0xff]
      %v548 = vld [vmem:[%s3 + $0x48] sm:$0xff]
      %v549 = vld [vmem:[%s3 + $0x50] sm:$0xff]
      %v550 = vld [vmem:[%s3 + $0x58] sm:$0xff]
      %v551 = vld [vmem:[%s3 + $0x60] sm:$0xff]
      %v552 = vld [vmem:[%s3 + $0x68] sm:$0xff]
      %v553 = vld [vmem:[%s3 + $0x70] sm:$0xff]
      %v554 = vld [vmem:[%s3 + $0x78] sm:$0xff]
      %v555 = vld [vmem:[%s3 + $0x80] sm:$0xff]
      %v556 = vld [vmem:[%s3 + $0x88] sm:$0xff]
      %v557 = vld [vmem:[%s3 + $0x90] sm:$0xff]
      %v558 = vld [vmem:[%s3 + $0x98] sm:$0xff]
      %v559 = vld [vmem:[%s3 + $0xa0] sm:$0xff]
      %v560 = vld [vmem:[%s3 + $0xa8] sm:$0xff]
      %v561 = vld [vmem:[%s3 + $0xb0] sm:$0xff]
      %v562 = vld [vmem:[%s3 + $0xb8] sm:$0xff]
      %v563 = vld [vmem:[%s3 + $0xc0] sm:$0xff]
      %v564 = vld [vmem:[%s3 + $0xc8] sm:$0xff]
      %v565 = vld [vmem:[%s3 + $0xd0] sm:$0xff]
      %v566 = vld [vmem:[%s3 + $0xd8] sm:$0xff]
      %v567 = vld [vmem:[%s3 + $0xe0] sm:$0xff]
      %v568 = vld [vmem:[%s3 + $0xe8] sm:$0xff]
      %v569 = vld [vmem:[%s3 + $0xf0] sm:$0xff]
      %v570 = vld [vmem:[%s3 + $0xf8] sm:$0xff]
      %v571 = vld [vmem:[%s3 + $0x100] sm:$0xff]
      %v572 = vld [vmem:[%s3 + $0x108] sm:$0xff]
      %v573 = vld [vmem:[%s3 + $0x110] sm:$0xff]
      %v574 = vld [vmem:[%s3 + $0x118] sm:$0xff]
      %v575 = vld [vmem:[%s3 + $0x120] sm:$0xff]
      %v576 = vld [vmem:[%s3 + $0x128] sm:$0xff]
      %v577 = vld [vmem:[%s3 + $0x130] sm:$0xff]
      %v578 = vld [vmem:[%s3 + $0x138] sm:$0xff]
      %v579 = vld [vmem:[%s3 + $0x140] sm:$0xff]
      %v580 = vld [vmem:[%s3 + $0x148] sm:$0xff]
      %v581 = vld [vmem:[%s3 + $0x150] sm:$0xff]
      %v582 = vld [vmem:[%s3 + $0x158] sm:$0xff]
      %v583 = vld [vmem:[%s3 + $0x160] sm:$0xff]
      %v584 = vld [vmem:[%s3 + $0x168] sm:$0xff]
      %v585 = vld [vmem:[%s3 + $0x170] sm:$0xff]
      %v586 = vld [vmem:[%s3 + $0x178] sm:$0xff]
      %v587 = vld [vmem:[%s3 + $0x180] sm:$0xff]
      %v588 = vld [vmem:[%s3 + $0x188] sm:$0xff]
      %v589 = vld [vmem:[%s3 + $0x190] sm:$0xff]
      %v590 = vld [vmem:[%s3 + $0x198] sm:$0xff]
      %v591 = vld [vmem:[%s3 + $0x1a0] sm:$0xff]
      %v592 = vld [vmem:[%s3 + $0x1a8] sm:$0xff]
      %v593 = vld [vmem:[%s3 + $0x1b0] sm:$0xff]
      %v594 = vld [vmem:[%s3 + $0x1b8] sm:$0xff]
      %v595 = vld [vmem:[%s3 + $0x1c0] sm:$0xff]
      %v596 = vld [vmem:[%s3 + $0x1c8] sm:$0xff]
      %v597 = vld [vmem:[%s3 + $0x1d0] sm:$0xff]
      %v598 = vld [vmem:[%s3 + $0x1d8] sm:$0xff]
      %v599 = vld [vmem:[%s3 + $0x1e0] sm:$0xff]
      %v600 = vld [vmem:[%s3 + $0x1e8] sm:$0xff]
      %v601 = vld [vmem:[%s3 + $0x1f0] sm:$0xff]
      %v602 = vld [vmem:[%s3 + $0x1f8] sm:$0xff]
      %v603 = vld [vmem:[%s3 + $0x200] sm:$0xff]
      %v604 = vld [vmem:[%s3 + $0x208] sm:$0xff]
      %v605 = vld [vmem:[%s3 + $0x210] sm:$0xff]
      %v606 = vld [vmem:[%s3 + $0x218] sm:$0xff]
      %v607 = vld [vmem:[%s3 + $0x220] sm:$0xff]
      %v608 = vld [vmem:[%s3 + $0x228] sm:$0xff]
      %v609 = vld [vmem:[%s3 + $0x230] sm:$0xff]
      %v610 = vld [vmem:[%s3 + $0x238] sm:$0xff]
      %v611 = vld [vmem:[%s3 + $0x240] sm:$0xff]
      %v612 = vld [vmem:[%s3 + $0x248] sm:$0xff]
      %v613 = vld [vmem:[%s3 + $0x250] sm:$0xff]
      %v614 = vld [vmem:[%s3 + $0x258] sm:$0xff]
      %v615 = vld [vmem:[%s3 + $0x260] sm:$0xff]
      %v616 = vld [vmem:[%s3 + $0x268] sm:$0xff]
      %v617 = vld [vmem:[%s3 + $0x270] sm:$0xff]
      %v618 = vld [vmem:[%s3 + $0x278] sm:$0xff]
      %v619 = vld [vmem:[%s3 + $0x280] sm:$0xff]
      %v620 = vld [vmem:[%s3 + $0x288] sm:$0xff]
      %v621 = vld [vmem:[%s3 + $0x290] sm:$0xff]
      %v622 = vld [vmem:[%s3 + $0x298] sm:$0xff]
      %v623 = vld [vmem:[%s3 + $0x2a0] sm:$0xff]
      %v624 = vld [vmem:[%s3 + $0x2a8] sm:$0xff]
      %v625 = vld [vmem:[%s3 + $0x2b0] sm:$0xff]
      %v626 = vld [vmem:[%s3 + $0x2b8] sm:$0xff]
      %v627 = vld [vmem:[%s3 + $0x2c0] sm:$0xff]
      %v628 = vld [vmem:[%s3 + $0x2c8] sm:$0xff]
      %v629 = vld [vmem:[%s3 + $0x2d0] sm:$0xff]
      %v630 = vld [vmem:[%s3 + $0x2d8] sm:$0xff]
      %v631 = vld [vmem:[%s3 + $0x2e0] sm:$0xff]
      %v632 = vld [vmem:[%s3 + $0x2e8] sm:$0xff]
      %v633 = vld [vmem:[%s3 + $0x2f0] sm:$0xff]
      %v634 = vld [vmem:[%s3 + $0x2f8] sm:$0xff]
      %v635 = vld [vmem:[%s3 + $0x300] sm:$0xff]
      %v636 = vld [vmem:[%s3 + $0x308] sm:$0xff]
      %v637 = vld [vmem:[%s3 + $0x310] sm:$0xff]
      %v638 = vld [vmem:[%s3 + $0x318] sm:$0xff]
      %v639 = vld [vmem:[%s3 + $0x320] sm:$0xff]
      %v640 = vld [vmem:[%s3 + $0x328] sm:$0xff]
      %v641 = vld [vmem:[%s3 + $0x330] sm:$0xff]
      %v642 = vld [vmem:[%s3 + $0x338] sm:$0xff]
      %v643 = vld [vmem:[%s3 + $0x340] sm:$0xff]
      %v644 = vld [vmem:[%s3 + $0x348] sm:$0xff]
      %v645 = vld [vmem:[%s3 + $0x350] sm:$0xff]
      %v646 = vld [vmem:[%s3 + $0x358] sm:$0xff]
      %v647 = vld [vmem:[%s3 + $0x360] sm:$0xff]
      %v648 = vld [vmem:[%s3 + $0x368] sm:$0xff]
      %v649 = vld [vmem:[%s3 + $0x370] sm:$0xff]
      %v650 = vld [vmem:[%s3 + $0x378] sm:$0xff]
      %v651 = vld [vmem:[%s3 + $0x380] sm:$0xff]
      %v652 = vld [vmem:[%s3 + $0x388] sm:$0xff]
      %v653 = vld [vmem:[%s3 + $0x390] sm:$0xff]
      %v654 = vld [vmem:[%s3 + $0x398] sm:$0xff]
      %v655 = vld [vmem:[%s3 + $0x3a0] sm:$0xff]
      %v656 = vld [vmem:[%s3 + $0x3a8] sm:$0xff]
      %v657 = vld [vmem:[%s3 + $0x3b0] sm:$0xff]
      %v658 = vld [vmem:[%s3 + $0x3b8] sm:$0xff]
      %v659 = vld [vmem:[%s3 + $0x3c0] sm:$0xff]
      %v660 = vld [vmem:[%s3 + $0x3c8] sm:$0xff]
      %v661 = vld [vmem:[%s3 + $0x3d0] sm:$0xff]
      %v662 = vld [vmem:[%s3 + $0x3d8] sm:$0xff]
      %v663 = vld [vmem:[%s3 + $0x3e0] sm:$0xff]
      %v664 = vld [vmem:[%s3 + $0x3e8] sm:$0xff]
      %v665 = vld [vmem:[%s3 + $0x3f0] sm:$0xff]
      %v666 = vld [vmem:[%s3 + $0x3f8] sm:$0xff]
      %v667 = vld [vmem:[%s4] sm:$0xf]
      %v669 = vlaneseq
      %v670 = vshrl.u32 %v669, 7
      %v671 = vsub.s32 0, %v670
      %v672 = vrot.slane %v667, %v671
      %v673 = vlaneseq
      %v674 = vshrl.u32 %v673, 7
      %v675 = vsub.s32 1, %v674
      %v676 = vrot.slane %v667, %v675
      %v677 = vlaneseq
      %v678 = vshrl.u32 %v677, 7
      %v679 = vsub.s32 2, %v678
      %v680 = vrot.slane %v667, %v679
      %v681 = vlaneseq
      %v682 = vshrl.u32 %v681, 7
      %v683 = vsub.s32 3, %v682
      %v684 = vrot.slane %v667, %v683
      %689 = vmatprep.subr.mxu0 %v540
      %690 = vmatpush1.msra.mxu0 %v539
      %691 = vmatprep.subr.mxu0 %v544
      %692 = vmatpush1.msra.mxu0 %v543
      %693 = vmatprep.subr.mxu0 %v548
      %694 = vmatpush1.msra.mxu0 %v547
      %695 = vmatprep.subr.mxu0 %v552
      %696 = vmatpush1.msra.mxu0 %v551
      %697 = vmatprep.subr.mxu0 %v556
      %698 = vmatpush1.msra.mxu0 %v555
      %699 = vmatprep.subr.mxu0 %v560
      %700 = vmatpush1.msra.mxu0 %v559
      %701 = vmatprep.subr.mxu0 %v564
      %702 = vmatpush1.msra.mxu0 %v563
      %703 = vmatprep.subr.mxu0 %v568
      %704 = vmatpush1.msra.mxu0 %v567
      %705 = vmatprep.subr.mxu0 %v572
      %706 = vmatpush1.msra.mxu0 %v571
      %707 = vmatprep.subr.mxu0 %v576
      %708 = vmatpush1.msra.mxu0 %v575
      %709 = vmatprep.subr.mxu0 %v580
      %710 = vmatpush1.msra.mxu0 %v579
      %711 = vmatprep.subr.mxu0 %v584
      %712 = vmatpush1.msra.mxu0 %v583
      %713 = vmatprep.subr.mxu0 %v588
      %714 = vmatpush1.msra.mxu0 %v587
      %715 = vmatprep.subr.mxu0 %v592
      %716 = vmatpush1.msra.mxu0 %v591
      %717 = vmatprep.subr.mxu0 %v596
      %718 = vmatpush1.msra.mxu0 %v595
      %719 = vmatprep.subr.mxu0 %v600
      %720 = vmatpush1.msra.mxu0 %v599
      %721 = vmatprep.subr.mxu0 %v604
      %722 = vmatpush1.msra.mxu0 %v603
      %723 = vmatprep.subr.mxu0 %v608
      %724 = vmatpush1.msra.mxu0 %v607
      %725 = vmatprep.subr.mxu0 %v612
      %726 = vmatpush1.msra.mxu0 %v611
      %727 = vmatprep.subr.mxu0 %v616
      %728 = vmatpush1.msra.mxu0 %v615
      %729 = vmatprep.subr.mxu0 %v620
      %730 = vmatpush1.msra.mxu0 %v619
      %731 = vmatprep.subr.mxu0 %v624
      %732 = vmatpush1.msra.mxu0 %v623
      %733 = vmatprep.subr.mxu0 %v628
      %734 = vmatpush1.msra.mxu0 %v627
      %735 = vmatprep.subr.mxu0 %v632
      %736 = vmatpush1.msra.mxu0 %v631
      %737 = vmatprep.subr.mxu0 %v636
      %738 = vmatpush1.msra.mxu0 %v635
      %739 = vmatprep.subr.mxu0 %v640
      %740 = vmatpush1.msra.mxu0 %v639
      %741 = vmatprep.subr.mxu0 %v644
      %742 = vmatpush1.msra.mxu0 %v643
      %743 = vmatprep.subr.mxu0 %v648
      %744 = vmatpush1.msra.mxu0 %v647
      %745 = vmatprep.subr.mxu0 %v652
      %746 = vmatpush1.msra.mxu0 %v651
      %747 = vmatprep.subr.mxu0 %v656
      %748 = vmatpush1.msra.mxu0 %v655
      %749 = vmatprep.subr.mxu0 %v660
      %750 = vmatpush1.msra.mxu0 %v659
      %751 = vmatprep.subr.mxu0 %v664
      %752 = vmatpush1.msra.mxu0 %v663
      %753 = vmatprep.mubr.f32.mxu0 %v536
      %754 = vmatmul.mubr.f32.gmra.mrb[0].mxu0 %v535
      %v755 = vpop.f32.mrb[0].mxu0
      %v756 = vadd.f32 %v672, %v755
      %v757 = vpop.f32.mrb[0].mxu0
      %v758 = vadd.f32 %v676, %v757
      %759 = vmatprep.mubr.f32.mxu0 %v538
      %760 = vmatmul.mubr.f32.gmra.mrb[0].mxu0 %v537
      %v761 = vpop.f32.mrb[0].mxu0
      %v762 = vadd.f32 %v672, %v761
      %v763 = vpop.f32.mrb[0].mxu0
      %v764 = vadd.f32 %v676, %v763
      %765 = vdwg.mxu0
      %766 = vmatprep.subr.mxu0 %v542
      %767 = vmatpush1.msra.mxu0 %v541
      %768 = vmatprep.subr.mxu0 %v546
      %769 = vmatpush1.msra.mxu0 %v545
      %770 = vmatprep.subr.mxu0 %v550
      %771 = vmatpush1.msra.mxu0 %v549
      %772 = vmatprep.subr.mxu0 %v554
      %773 = vmatpush1.msra.mxu0 %v553
      %774 = vmatprep.subr.mxu0 %v558
      %775 = vmatpush1.msra.mxu0 %v557
      %776 = vmatprep.subr.mxu0 %v562
      %777 = vmatpush1.msra.mxu0 %v561
      %778 = vmatprep.subr.mxu0 %v566
      %779 = vmatpush1.msra.mxu0 %v565
      %780 = vmatprep.subr.mxu0 %v570
      %781 = vmatpush1.msra.mxu0 %v569
      %782 = vmatprep.subr.mxu0 %v574
      %783 = vmatpush1.msra.mxu0 %v573
      %784 = vmatprep.subr.mxu0 %v578
      %785 = vmatpush1.msra.mxu0 %v577
      %786 = vmatprep.subr.mxu0 %v582
      %787 = vmatpush1.msra.mxu0 %v581
      %788 = vmatprep.subr.mxu0 %v586
      %789 = vmatpush1.msra.mxu0 %v585
      %790 = vmatprep.subr.mxu0 %v590
      %791 = vmatpush1.msra.mxu0 %v589
      %792 = vmatprep.subr.mxu0 %v594
      %793 = vmatpush1.msra.mxu0 %v593
      %794 = vmatprep.subr.mxu0 %v598
      %795 = vmatpush1.msra.mxu0 %v597
      %796 = vmatprep.subr.mxu0 %v602
      %797 = vmatpush1.msra.mxu0 %v601
      %798 = vmatprep.subr.mxu0 %v606
      %799 = vmatpush1.msra.mxu0 %v605
      %800 = vmatprep.subr.mxu0 %v610
      %801 = vmatpush1.msra.mxu0 %v609
      %802 = vmatprep.subr.mxu0 %v614
      %803 = vmatpush1.msra.mxu0 %v613
      %804 = vmatprep.subr.mxu0 %v618
      %805 = vmatpush1.msra.mxu0 %v617
      %806 = vmatprep.subr.mxu0 %v622
      %807 = vmatpush1.msra.mxu0 %v621
      %808 = vmatprep.subr.mxu0 %v626
      %809 = vmatpush1.msra.mxu0 %v625
      %810 = vmatprep.subr.mxu0 %v630
      %811 = vmatpush1.msra.mxu0 %v629
      %812 = vmatprep.subr.mxu0 %v634
      %813 = vmatpush1.msra.mxu0 %v633
      %814 = vmatprep.subr.mxu0 %v638
      %815 = vmatpush1.msra.mxu0 %v637
      %816 = vmatprep.subr.mxu0 %v642
      %817 = vmatpush1.msra.mxu0 %v641
      %818 = vmatprep.subr.mxu0 %v646
      %819 = vmatpush1.msra.mxu0 %v645
      %820 = vmatprep.subr.mxu0 %v650
      %821 = vmatpush1.msra.mxu0 %v649
      %822 = vmatprep.subr.mxu0 %v654
      %823 = vmatpush1.msra.mxu0 %v653
      %824 = vmatprep.subr.mxu0 %v658
      %825 = vmatpush1.msra.mxu0 %v657
      %826 = vmatprep.subr.mxu0 %v662
      %827 = vmatpush1.msra.mxu0 %v661
      %828 = vmatprep.subr.mxu0 %v666
      %829 = vmatpush1.msra.mxu0 %v665
      %830 = vmatprep.mubr.f32.mxu0 %v536
      %831 = vmatmul.mubr.f32.gmra.mrb[0].mxu0 %v535
      %v832 = vpop.f32.mrb[0].mxu0
      %v833 = vadd.f32 %v680, %v832
      %v834 = vpop.f32.mrb[0].mxu0
      %v835 = vadd.f32 %v684, %v834
      %836 = vmatprep.mubr.f32.mxu0 %v538
      %837 = vmatmul.mubr.f32.gmra.mrb[0].mxu0 %v537
      %v838 = vpop.f32.mrb[0].mxu0
      %v839 = vadd.f32 %v680, %v838
      %v840 = vpop.f32.mrb[0].mxu0
      %v841 = vadd.f32 %v684, %v840
      %842 = vdwg.mxu0
      %v843 = vadd.f32 %v756, %v233
      %v844 = vadd.f32 %v758, %v234
      %v845 = vadd.f32 %v833, %v235
      %v846 = vadd.f32 %v835, %v236
      %v847 = vadd.f32 %v762, %v237
      %v848 = vadd.f32 %v764, %v238
      %v849 = vadd.f32 %v839, %v239
      %v850 = vadd.f32 %v841, %v240
      %v851 = vmax.f32 %v843, 0.0
      %v852 = vmax.f32 %v844, 0.0
      %v853 = vmax.f32 %v845, 0.0
      %v854 = vmax.f32 %v846, 0.0
      %v855 = vmax.f32 %v847, 0.0
      %v856 = vmax.f32 %v848, 0.0
      %v857 = vmax.f32 %v849, 0.0
      %v858 = vmax.f32 %v850, 0.0
      %v859 = vmax.f32 %v851, 0.0
      %v860 = vmax.f32 %v852, 0.0
      %v861 = vmax.f32 %v853, 0.0
      %v862 = vmax.f32 %v854, 0.0
      %v863 = vmax.f32 %v855, 0.0
      %v864 = vmax.f32 %v856, 0.0
      %v865 = vmax.f32 %v857, 0.0
      %v866 = vmax.f32 %v858, 0.0
      %867 = vst [vmem:[%s231] sm:$0xff] %v859
      %868 = vst [vmem:[%s231 + $0x8] sm:$0xff] %v860
      %869 = vst [vmem:[%s231 + $0x10] sm:$0xff] %v861
      %870 = vst [vmem:[%s231 + $0x18] sm:$0xff] %v862
      %871 = vst [vmem:[%s231 + $0x20] sm:$0xff] %v863
      %872 = vst [vmem:[%s231 + $0x28] sm:$0xff] %v864
      %873 = vst [vmem:[%s231 + $0x30] sm:$0xff] %v865
      %874 = vst [vmem:[%s231 + $0x38] sm:$0xff] %v866
      %s875 = smul.u32 2, %s16
      %p876 = scmp.lt.s32.totalorder %s875, 3
      %s877 = scalar_select %p876, %s875, 3
      %s878 = smul.addr %s877, 4
      %s879 = smul.addr %s878, 8
      %s880 = scalar_lea.vmem %s5, %s879
      // Predicated region
      $region41: #{generator1_forward.23} parent=39 // pred_check
        %p881 = pneg %p144
      $region42: #{generator1_forward.23} parent=39 // pred_check_branch
        %883 = sbr.rel (%p881) target = $region44
      $region43: #{generator1_forward.23} parent=39 // pred_region
        %s884 = smul.u32 2, %s16
      $region44: #{generator1_forward.23} parent=39 // pred_fallthru
        _
    $region40: #{generator1_forward.23} parent=5 // pred_fallthru
      _
    %p885 = scmp.le.s32.totalorder 2, %s11
    // Predicated region
    $region45: #{generator1_forward.23} parent=5 // pred_check
      %p886 = pneg %p885
    $region46: #{generator1_forward.23} parent=5 // pred_check_branch
      %888 = sbr.rel (%p886) target = $region48
    $region47: #{generator1_forward.23} parent=5 // pred_region
      %s889 = ssub.s32 %s11, 2
      // Predicated region
      $region49: #{generator1_forward.23} parent=47 // pred_check
        %p890 = pneg %p150
      $region50: #{generator1_forward.23} parent=47 // pred_check_branch
        %892 = sbr.rel (%p890) target = $region52
      $region51: #{generator1_forward.23} parent=47 // pred_region
        %s893 = smul.u32 2, %s17
        %p894 = scmp.lt.s32.totalorder %s893, 3
        %s895 = scalar_select %p894, %s893, 3
        %s896 = smul.addr %s895, 4
        %s897 = smul.addr %s896, 8
        %s898 = scalar_lea.vmem %s5, %s897
      $region52: #{generator1_forward.23} parent=47 // pred_fallthru
        _
    $region48: #{generator1_forward.23} parent=5 // pred_fallthru
      _
  $region6: #{generator1_forward.23} parent=0 // loop_footer
    %s15 = sadd.s32 1, %s11
  $region7: #{generator1_forward.23} parent=0 // loop_footer_branch
    %10 = sbr.rel target = $region3
  $region8: #{generator1_forward.23} parent=0 // loop_exit
    _

// kernel: generator1_forward.24
$region0: #{generator1_forward.24}
  #allocation0 [shape = 'u32[]', space=smem, size = 0x4, offset = 0x4, fixed_abs, tag = 'smem constant byte address 0x4 - core index']
  #allocation1 [shape = 'u32[144,128]{1,0:T(1,128)}', space=vmem, size = 0x12000, scoped, tag = 'internal scratch']
  %s0 = inlined_call_operand.vmem [shape: f32[32,512], index: 0, kind: input, shape index: {}]
  %s1 = inlined_call_operand.vmem [shape: f32[512,384], index: 1, kind: input, shape index: {}]
  %s2 = inlined_call_operand.vmem [shape: f32[1,384], index: 2, kind: input, shape index: {}]
  %s3 = inlined_call_operand.vmem [shape: f32[128,256], index: 3, kind: input, shape index: {}]
  %s4 = inlined_call_operand.vmem [shape: f32[1,256], index: 4, kind: input, shape index: {}]
  %s5 = inlined_call_operand.vmem [shape: f32[32,256], index: 5, kind: output, shape index: {}]
  %s6 = sld [smem:[#allocation0]]
  $region53: #{generator1_forward.24} parent=0
    _
  %s8 = ssub.s32 1, %s6
  %s9 = scalar_select 0, %s8, %s6
  loop: start=0, step=1, limit=4
  $region2: #{generator1_forward.24} parent=0 // loop_pre_header
    _
  $region3: #{generator1_forward.24} parent=0 // loop_header
    %s11 = sphi 0, %s15
    %p12 = scmp.ge.s32.totalorder %s11, 4
    %s21 = sphi 0, %s23
    %s24 = sphi 0, %s21
    %s25 = sphi 0, %s24
    %s41 = sphi 0, %s25
    %s45 = sphi 0, %s45
    %s47 = sphi 0, %s45
    %s48 = sphi 0, %s47
    %s62 = sphi 0, %s48
    %s66 = sphi 0, %s66
    %s68 = sphi 0, %s66
    %s69 = sphi 0, %s68
    %s83 = sphi 0, %s69
    %s87 = sphi 0, %s87
    %s89 = sphi 0, %s87
    %s90 = sphi 0, %s89
    %s104 = sphi 0, %s90
    %s108 = sphi 0, %s108
    %s110 = sphi 0, %s108
    %s111 = sphi 0, %s110
    %s125 = sphi 0, %s111
    %s131 = sphi 0, %s133
    %s134 = sphi 0, %s131
    %s135 = sphi 0, %s134
    %s151 = sphi 0, %s135
  $region4: #{generator1_forward.24} parent=0 // loop_header_branch
    %14 = sbr.rel (%p12) target = $region8
  $region5: #{generator1_forward.24} parent=0 // loop_body
    %s16 = ssub.s32 %s11, 1
    %s17 = ssub.s32 %s11, 2
    %s18 = sadd.s32 %s11, 1
    %s19 = ssub.s32 %s11, %s18
    %p20 = scmp.eq.s32.totalorder %s19, 0
    %s22 = sadd.s32 %s21, 1
    %s23 = scalar_select %p20, %s21, %s22
    %p26 = pneg %p20
    %p27 = scmp.eq.s32.totalorder %s11, 1
    %p28 = por %p26, %p27
    %p29 = scmp.ne.s32.totalorder %s21, %s24
    %p30 = scmp.eq.s32.totalorder %s11, 0
    %p31 = por %p29, %p30
    %p32 = scmp.ne.s32.totalorder %s21, %s24
    %p33 = scmp.eq.s32.totalorder %s16, 1
    %p34 = por %p32, %p33
    %p35 = scmp.ne.s32.totalorder %s24, %s25
    %p36 = scmp.eq.s32.totalorder %s16, 0
    %p37 = por %p35, %p36
    %p38 = scmp.ne.s32.totalorder %s24, %s25
    %p39 = scmp.eq.s32.totalorder %s17, 1
    %p40 = por %p38, %p39
    %p42 = scmp.ne.s32.totalorder %s25, %s41
    %p43 = scmp.eq.s32.totalorder %s17, 0
    %p44 = por %p42, %p43
    %s46 = sadd.s32 %s45, 1
    %p49 = scmp.eq.s32.totalorder %s11, 1
    %p50 = scmp.ne.s32.totalorder %s45, %s47
    %p51 = scmp.eq.s32.totalorder %s11, 0
    %p52 = por %p50, %p51
    %p53 = scmp.ne.s32.totalorder %s45, %s47
    %p54 = scmp.eq.s32.totalorder %s16, 1
    %p55 = por %p53, %p54
    %p56 = scmp.ne.s32.totalorder %s47, %s48
    %p57 = scmp.eq.s32.totalorder %s16, 0
    %p58 = por %p56, %p57
    %p59 = scmp.ne.s32.totalorder %s47, %s48
    %p60 = scmp.eq.s32.totalorder %s17, 1
    %p61 = por %p59, %p60
    %p63 = scmp.ne.s32.totalorder %s48, %s62
    %p64 = scmp.eq.s32.totalorder %s17, 0
    %p65 = por %p63, %p64
    %s67 = sadd.s32 %s66, 1
    %p70 = scmp.eq.s32.totalorder %s11, 1
    %p71 = scmp.ne.s32.totalorder %s66, %s68
    %p72 = scmp.eq.s32.totalorder %s11, 0
    %p73 = por %p71, %p72
    %p74 = scmp.ne.s32.totalorder %s66, %s68
    %p75 = scmp.eq.s32.totalorder %s16, 1
    %p76 = por %p74, %p75
    %p77 = scmp.ne.s32.totalorder %s68, %s69
    %p78 = scmp.eq.s32.totalorder %s16, 0
    %p79 = por %p77, %p78
    %p80 = scmp.ne.s32.totalorder %s68, %s69
    %p81 = scmp.eq.s32.totalorder %s17, 1
    %p82 = por %p80, %p81
    %p84 = scmp.ne.s32.totalorder %s69, %s83
    %p85 = scmp.eq.s32.totalorder %s17, 0
    %p86 = por %p84, %p85
    %s88 = sadd.s32 %s87, 1
    %p91 = scmp.eq.s32.totalorder %s11, 1
    %p92 = scmp.ne.s32.totalorder %s87, %s89
    %p93 = scmp.eq.s32.totalorder %s11, 0
    %p94 = por %p92, %p93
    %p95 = scmp.ne.s32.totalorder %s87, %s89
    %p96 = scmp.eq.s32.totalorder %s16, 1
    %p97 = por %p95, %p96
    %p98 = scmp.ne.s32.totalorder %s89, %s90
    %p99 = scmp.eq.s32.totalorder %s16, 0
    %p100 = por %p98, %p99
    %p101 = scmp.ne.s32.totalorder %s89, %s90
    %p102 = scmp.eq.s32.totalorder %s17, 1
    %p103 = por %p101, %p102
    %p105 = scmp.ne.s32.totalorder %s90, %s104
    %p106 = scmp.eq.s32.totalorder %s17, 0
    %p107 = por %p105, %p106
    %s109 = sadd.s32 %s108, 1
    %p112 = scmp.eq.s32.totalorder %s11, 1
    %p113 = scmp.ne.s32.totalorder %s108, %s110
    %p114 = scmp.eq.s32.totalorder %s11, 0
    %p115 = por %p113, %p114
    %p116 = scmp.ne.s32.totalorder %s108, %s110
    %p117 = scmp.eq.s32.totalorder %s16, 1
    %p118 = por %p116, %p117
    %p119 = scmp.ne.s32.totalorder %s110, %s111
    %p120 = scmp.eq.s32.totalorder %s16, 0
    %p121 = por %p119, %p120
    %p122 = scmp.ne.s32.totalorder %s110, %s111
    %p123 = scmp.eq.s32.totalorder %s17, 1
    %p124 = por %p122, %p123
    %p126 = scmp.ne.s32.totalorder %s111, %s125
    %p127 = scmp.eq.s32.totalorder %s17, 0
    %p128 = por %p126, %p127
    %s129 = ssub.s32 %s11, %s18
    %p130 = scmp.eq.s32.totalorder %s129, 0
    %s132 = sadd.s32 %s131, 1
    %s133 = scalar_select %p130, %s131, %s132
    %p136 = pneg %p130
    %p137 = scmp.eq.s32.totalorder %s11, 1
    %p138 = por %p136, %p137
    %p139 = scmp.ne.s32.totalorder %s131, %s134
    %p140 = scmp.eq.s32.totalorder %s11, 0
    %p141 = por %p139, %p140
    %p142 = scmp.ne.s32.totalorder %s131, %s134
    %p143 = scmp.eq.s32.totalorder %s16, 1
    %p144 = por %p142, %p143
    %p145 = scmp.ne.s32.totalorder %s134, %s135
    %p146 = scmp.eq.s32.totalorder %s16, 0
    %p147 = por %p145, %p146
    %p148 = scmp.ne.s32.totalorder %s134, %s135
    %p149 = scmp.eq.s32.totalorder %s17, 1
    %p150 = por %p148, %p149
    %p152 = scmp.ne.s32.totalorder %s135, %s151
    %p153 = scmp.eq.s32.totalorder %s17, 0
    %p154 = por %p152, %p153
    %p155 = scmp.le.s32.totalorder 1, %s11
    %p156 = scmp.lt.s32.totalorder %s11, 3
    %p157 = pnand %p155, %p156
    %p158 = pneg %p157
    // Predicated region
    $region9: #{generator1_forward.24} parent=5 // pred_check
      _
    $region10: #{generator1_forward.24} parent=5 // pred_check_branch
      %160 = sbr.rel (%p157) target = $region12
    $region11: #{generator1_forward.24} parent=5 // pred_region
      %s161 = ssub.s32 %s11, 1
      // Predicated region
      $region13: #{generator1_forward.24} parent=11 // pred_check
        %p162 = pneg %p58
      $region14: #{generator1_forward.24} parent=11 // pred_check_branch
        %164 = sbr.rel (%p162) target = $region16
      $region15: #{generator1_forward.24} parent=11 // pred_region
        _
      $region16: #{generator1_forward.24} parent=11 // pred_fallthru
        _
      // Predicated region
      $region17: #{generator1_forward.24} parent=11 // pred_check
        %p165 = pneg %p79
      $region18: #{generator1_forward.24} parent=11 // pred_check_branch
        %167 = sbr.rel (%p165) target = $region20
      $region19: #{generator1_forward.24} parent=11 // pred_region
        _
      $region20: #{generator1_forward.24} parent=11 // pred_fallthru
        _
      // Predicated region
      $region21: #{generator1_forward.24} parent=11 // pred_check
        %p168 = pneg %p100
      $region22: #{generator1_forward.24} parent=11 // pred_check_branch
        %170 = sbr.rel (%p168) target = $region24
      $region23: #{generator1_forward.24} parent=11 // pred_region
        _
      $region24: #{generator1_forward.24} parent=11 // pred_fallthru
        _
      // Predicated region
      $region25: #{generator1_forward.24} parent=11 // pred_check
        %p171 = pneg %p121
      $region26: #{generator1_forward.24} parent=11 // pred_check_branch
        %173 = sbr.rel (%p171) target = $region28
      $region27: #{generator1_forward.24} parent=11 // pred_region
        _
      $region28: #{generator1_forward.24} parent=11 // pred_fallthru
        _
    $region12: #{generator1_forward.24} parent=5 // pred_fallthru
      _
    %p174 = scmp.lt.s32.totalorder %s11, 2
    // Predicated region
    $region29: #{generator1_forward.24} parent=5 // pred_check
      %p175 = pneg %p174
    $region30: #{generator1_forward.24} parent=5 // pred_check_branch
      %177 = sbr.rel (%p175) target = $region32
    $region31: #{generator1_forward.24} parent=5 // pred_region
      // Predicated region
      $region33: #{generator1_forward.24} parent=31 // pred_check
        %p178 = pneg %p31
      $region34: #{generator1_forward.24} parent=31 // pred_check_branch
        %180 = sbr.rel (%p178) target = $region36
      $region35: #{generator1_forward.24} parent=31 // pred_region
        %s181 = smul.u32 2, %s11
        %p182 = scmp.lt.s32.totalorder %s181, 3
        %s183 = scalar_select %p182, %s181, 3
        %s184 = smul.addr %s183, 4
        %s185 = smul.addr %s184, 8
        %s186 = scalar_lea.vmem %s0, %s185
        %s187 = smul.u32 2, %s11
      $region36: #{generator1_forward.24} parent=31 // pred_fallthru
        _
    $region32: #{generator1_forward.24} parent=5 // pred_fallthru
      _
    %p188 = scmp.le.s32.totalorder 1, %s11
    %p189 = scmp.lt.s32.totalorder %s11, 3
    %p190 = pnand %p188, %p189
    %p191 = pneg %p190
    // Predicated region
    $region37: #{generator1_forward.24} parent=5 // pred_check
      _
    $region38: #{generator1_forward.24} parent=5 // pred_check_branch
      %193 = sbr.rel (%p190) target = $region40
    $region39: #{generator1_forward.24} parent=5 // pred_region
      %s194 = ssub.s32 %s11, 1
      %s195 = smul.u32 2, %s16
      %p196 = scmp.lt.s32.totalorder %s195, 3
      %s197 = scalar_select %p196, %s195, 3
      %s198 = smul.addr %s197, 4
      %s199 = smul.addr %s198, 8
      %s200 = scalar_lea.vmem %s0, %s199
      %p201 = pneg %p37
      %p202 = pneg %p34
      %p203 = pneg %p58
      %p204 = pneg %p55
      %p205 = pneg %p79
      %p206 = pneg %p76
      %p207 = pneg %p100
      %p208 = pneg %p97
      %p209 = pneg %p121
      %p210 = pneg %p118
      %p211 = pneg %p147
      %p212 = pneg %p144
      %s213 = smul.u32 2, %s16
      %p214 = scmp.lt.s32.totalorder %s213, 3
      %s215 = scalar_select %p214, %s213, 3
      %s216 = smul.addr %s215, 2
      %s217 = smul.addr %s216, 8
      %s218 = scalar_lea.vmem %s5, %s217
      %s219 = smul.u32 2, %s16
      %p220 = scmp.lt.s32.totalorder %s219, 3
      %s221 = scalar_select %p220, %s219, 3
      %s222 = smul.addr %s221, 4
      %s223 = smul.addr %s222, 8
      %s224 = scalar_lea.vmem %s0, %s223
      %s225 = smul.u32 2, %s16
      %s226 = smul.u32 2, %s16
      %p227 = scmp.lt.s32.totalorder %s226, 3
      %s228 = scalar_select %p227, %s226, 3
      %s229 = smul.addr %s228, 2
      %s230 = smul.addr %s229, 8
      %s231 = scalar_lea.vmem %s5, %s230
      %s232 = smul.u32 2, %s16
      %v233 = vld [vmem:[%s224] sm:$0xff]
      %v234 = vld [vmem:[%s224 + $0x8] sm:$0xff]
      %v235 = vld [vmem:[%s224 + $0x10] sm:$0xff]
      %v236 = vld [vmem:[%s224 + $0x18] sm:$0xff]
      %v237 = vld [vmem:[%s224 + $0x20] sm:$0xff]
      %v238 = vld [vmem:[%s224 + $0x28] sm:$0xff]
      %v239 = vld [vmem:[%s224 + $0x30] sm:$0xff]
      %v240 = vld [vmem:[%s224 + $0x38] sm:$0xff]
      %v241 = vld [vmem:[%s1] sm:$0xff]
      %v242 = vld [vmem:[%s1 + $0x8] sm:$0xff]
      %v243 = vld [vmem:[%s1 + $0x10] sm:$0xff]
      %v244 = vld [vmem:[%s1 + $0x18] sm:$0xff]
      %v245 = vld [vmem:[%s1 + $0x20] sm:$0xff]
      %v246 = vld [vmem:[%s1 + $0x28] sm:$0xff]
      %v247 = vld [vmem:[%s1 + $0x30] sm:$0xff]
      %v248 = vld [vmem:[%s1 + $0x38] sm:$0xff]
      %v249 = vld [vmem:[%s1 + $0x40] sm:$0xff]
      %v250 = vld [vmem:[%s1 + $0x48] sm:$0xff]
      %v251 = vld [vmem:[%s1 + $0x50] sm:$0xff]
      %v252 = vld [vmem:[%s1 + $0x58] sm:$0xff]
      %v253 = vld [vmem:[%s1 + $0x60] sm:$0xff]
      %v254 = vld [vmem:[%s1 + $0x68] sm:$0xff]
      %v255 = vld [vmem:[%s1 + $0x70] sm:$0xff]
      %v256 = vld [vmem:[%s1 + $0x78] sm:$0xff]
      %v257 = vld [vmem:[%s1 + $0x80] sm:$0xff]
      %v258 = vld [vmem:[%s1 + $0x88] sm:$0xff]
      %v259 = vld [vmem:[%s1 + $0x90] sm:$0xff]
      %v260 = vld [vmem:[%s1 + $0x98] sm:$0xff]
      %v261 = vld [vmem:[%s1 + $0xa0] sm:$0xff]
      %v262 = vld [vmem:[%s1 + $0xa8] sm:$0xff]
      %v263 = vld [vmem:[%s1 + $0xb0] sm:$0xff]
      %v264 = vld [vmem:[%s1 + $0xb8] sm:$0xff]
      %v265 = vld [vmem:[%s1 + $0xc0] sm:$0xff]
      %v266 = vld [vmem:[%s1 + $0xc8] sm:$0xff]
      %v267 = vld [vmem:[%s1 + $0xd0] sm:$0xff]
      %v268 = vld [vmem:[%s1 + $0xd8] sm:$0xff]
      %v269 = vld [vmem:[%s1 + $0xe0] sm:$0xff]
      %v270 = vld [vmem:[%s1 + $0xe8] sm:$0xff]
      %v271 = vld [vmem:[%s1 + $0xf0] sm:$0xff]
      %v272 = vld [vmem:[%s1 + $0xf8] sm:$0xff]
      %v273 = vld [vmem:[%s1 + $0x100] sm:$0xff]
      %v274 = vld [vmem:[%s1 + $0x108] sm:$0xff]
      %v275 = vld [vmem:[%s1 + $0x110] sm:$0xff]
      %v276 = vld [vmem:[%s1 + $0x118] sm:$0xff]
      %v277 = vld [vmem:[%s1 + $0x120] sm:$0xff]
      %v278 = vld [vmem:[%s1 + $0x128] sm:$0xff]
      %v279 = vld [vmem:[%s1 + $0x130] sm:$0xff]
      %v280 = vld [vmem:[%s1 + $0x138] sm:$0xff]
      %v281 = vld [vmem:[%s1 + $0x140] sm:$0xff]
      %v282 = vld [vmem:[%s1 + $0x148] sm:$0xff]
      %v283 = vld [vmem:[%s1 + $0x150] sm:$0xff]
      %v284 = vld [vmem:[%s1 + $0x158] sm:$0xff]
      %v285 = vld [vmem:[%s1 + $0x160] sm:$0xff]
      %v286 = vld [vmem:[%s1 + $0x168] sm:$0xff]
      %v287 = vld [vmem:[%s1 + $0x170] sm:$0xff]
      %v288 = vld [vmem:[%s1 + $0x178] sm:$0xff]
      %v289 = vld [vmem:[%s1 + $0x180] sm:$0xff]
      %v290 = vld [vmem:[%s1 + $0x188] sm:$0xff]
      %v291 = vld [vmem:[%s1 + $0x190] sm:$0xff]
      %v292 = vld [vmem:[%s1 + $0x198] sm:$0xff]
      %v293 = vld [vmem:[%s1 + $0x1a0] sm:$0xff]
      %v294 = vld [vmem:[%s1 + $0x1a8] sm:$0xff]
      %v295 = vld [vmem:[%s1 + $0x1b0] sm:$0xff]
      %v296 = vld [vmem:[%s1 + $0x1b8] sm:$0xff]
      %v297 = vld [vmem:[%s1 + $0x1c0] sm:$0xff]
      %v298 = vld [vmem:[%s1 + $0x1c8] sm:$0xff]
      %v299 = vld [vmem:[%s1 + $0x1d0] sm:$0xff]
      %v300 = vld [vmem:[%s1 + $0x1d8] sm:$0xff]
      %v301 = vld [vmem:[%s1 + $0x1e0] sm:$0xff]
      %v302 = vld [vmem:[%s1 + $0x1e8] sm:$0xff]
      %v303 = vld [vmem:[%s1 + $0x1f0] sm:$0xff]
      %v304 = vld [vmem:[%s1 + $0x1f8] sm:$0xff]
      %v305 = vld [vmem:[%s1 + $0x200] sm:$0xff]
      %v306 = vld [vmem:[%s1 + $0x208] sm:$0xff]
      %v307 = vld [vmem:[%s1 + $0x210] sm:$0xff]
      %v308 = vld [vmem:[%s1 + $0x218] sm:$0xff]
      %v309 = vld [vmem:[%s1 + $0x220] sm:$0xff]
      %v310 = vld [vmem:[%s1 + $0x228] sm:$0xff]
      %v311 = vld [vmem:[%s1 + $0x230] sm:$0xff]
      %v312 = vld [vmem:[%s1 + $0x238] sm:$0xff]
      %v313 = vld [vmem:[%s1 + $0x240] sm:$0xff]
      %v314 = vld [vmem:[%s1 + $0x248] sm:$0xff]
      %v315 = vld [vmem:[%s1 + $0x250] sm:$0xff]
      %v316 = vld [vmem:[%s1 + $0x258] sm:$0xff]
      %v317 = vld [vmem:[%s1 + $0x260] sm:$0xff]
      %v318 = vld [vmem:[%s1 + $0x268] sm:$0xff]
      %v319 = vld [vmem:[%s1 + $0x270] sm:$0xff]
      %v320 = vld [vmem:[%s1 + $0x278] sm:$0xff]
      %v321 = vld [vmem:[%s1 + $0x280] sm:$0xff]
      %v322 = vld [vmem:[%s1 + $0x288] sm:$0xff]
      %v323 = vld [vmem:[%s1 + $0x290] sm:$0xff]
      %v324 = vld [vmem:[%s1 + $0x298] sm:$0xff]
      %v325 = vld [vmem:[%s1 + $0x2a0] sm:$0xff]
      %v326 = vld [vmem:[%s1 + $0x2a8] sm:$0xff]
      %v327 = vld [vmem:[%s1 + $0x2b0] sm:$0xff]
      %v328 = vld [vmem:[%s1 + $0x2b8] sm:$0xff]
      %v329 = vld [vmem:[%s1 + $0x2c0] sm:$0xff]
      %v330 = vld [vmem:[%s1 + $0x2c8] sm:$0xff]
      %v331 = vld [vmem:[%s1 + $0x2d0] sm:$0xff]
      %v332 = vld [vmem:[%s1 + $0x2d8] sm:$0xff]
      %v333 = vld [vmem:[%s1 + $0x2e0] sm:$0xff]
      %v334 = vld [vmem:[%s1 + $0x2e8] sm:$0xff]
      %v335 = vld [vmem:[%s1 + $0x2f0] sm:$0xff]
      %v336 = vld [vmem:[%s1 + $0x2f8] sm:$0xff]
      %v337 = vld [vmem:[%s1 + $0x300] sm:$0xff]
      %v338 = vld [vmem:[%s1 + $0x308] sm:$0xff]
      %v339 = vld [vmem:[%s1 + $0x310] sm:$0xff]
      %v340 = vld [vmem:[%s1 + $0x318] sm:$0xff]
      %v341 = vld [vmem:[%s1 + $0x320] sm:$0xff]
      %v342 = vld [vmem:[%s1 + $0x328] sm:$0xff]
      %v343 = vld [vmem:[%s1 + $0x330] sm:$0xff]
      %v344 = vld [vmem:[%s1 + $0x338] sm:$0xff]
      %v345 = vld [vmem:[%s1 + $0x340] sm:$0xff]
      %v346 = vld [vmem:[%s1 + $0x348] sm:$0xff]
      %v347 = vld [vmem:[%s1 + $0x350] sm:$0xff]
      %v348 = vld [vmem:[%s1 + $0x358] sm:$0xff]
      %v349 = vld [vmem:[%s1 + $0x360] sm:$0xff]
      %v350 = vld [vmem:[%s1 + $0x368] sm:$0xff]
      %v351 = vld [vmem:[%s1 + $0x370] sm:$0xff]
      %v352 = vld [vmem:[%s1 + $0x378] sm:$0xff]
      %v353 = vld [vmem:[%s1 + $0x380] sm:$0xff]
      %v354 = vld [vmem:[%s1 + $0x388] sm:$0xff]
      %v355 = vld [vmem:[%s1 + $0x390] sm:$0xff]
      %v356 = vld [vmem:[%s1 + $0x398] sm:$0xff]
      %v357 = vld [vmem:[%s1 + $0x3a0] sm:$0xff]
      %v358 = vld [vmem:[%s1 + $0x3a8] sm:$0xff]
      %v359 = vld [vmem:[%s1 + $0x3b0] sm:$0xff]
      %v360 = vld [vmem:[%s1 + $0x3b8] sm:$0xff]
      %v361 = vld [vmem:[%s1 + $0x3c0] sm:$0xff]
      %v362 = vld [vmem:[%s1 + $0x3c8] sm:$0xff]
      %v363 = vld [vmem:[%s1 + $0x3d0] sm:$0xff]
      %v364 = vld [vmem:[%s1 + $0x3d8] sm:$0xff]
      %v365 = vld [vmem:[%s1 + $0x3e0] sm:$0xff]
      %v366 = vld [vmem:[%s1 + $0x3e8] sm:$0xff]
      %v367 = vld [vmem:[%s1 + $0x3f0] sm:$0xff]
      %v368 = vld [vmem:[%s1 + $0x3f8] sm:$0xff]
      %v369 = vld [vmem:[%s1 + $0x400] sm:$0xff]
      %v370 = vld [vmem:[%s1 + $0x408] sm:$0xff]
      %v371 = vld [vmem:[%s1 + $0x410] sm:$0xff]
      %v372 = vld [vmem:[%s1 + $0x418] sm:$0xff]
      %v373 = vld [vmem:[%s1 + $0x420] sm:$0xff]
      %v374 = vld [vmem:[%s1 + $0x428] sm:$0xff]
      %v375 = vld [vmem:[%s1 + $0x430] sm:$0xff]
      %v376 = vld [vmem:[%s1 + $0x438] sm:$0xff]
      %v377 = vld [vmem:[%s1 + $0x440] sm:$0xff]
      %v378 = vld [vmem:[%s1 + $0x448] sm:$0xff]
      %v379 = vld [vmem:[%s1 + $0x450] sm:$0xff]
      %v380 = vld [vmem:[%s1 + $0x458] sm:$0xff]
      %v381 = vld [vmem:[%s1 + $0x460] sm:$0xff]
      %v382 = vld [vmem:[%s1 + $0x468] sm:$0xff]
      %v383 = vld [vmem:[%s1 + $0x470] sm:$0xff]
      %v384 = vld [vmem:[%s1 + $0x478] sm:$0xff]
      %v385 = vld [vmem:[%s1 + $0x480] sm:$0xff]
      %v386 = vld [vmem:[%s1 + $0x488] sm:$0xff]
      %v387 = vld [vmem:[%s1 + $0x490] sm:$0xff]
      %v388 = vld [vmem:[%s1 + $0x498] sm:$0xff]
      %v389 = vld [vmem:[%s1 + $0x4a0] sm:$0xff]
      %v390 = vld [vmem:[%s1 + $0x4a8] sm:$0xff]
      %v391 = vld [vmem:[%s1 + $0x4b0] sm:$0xff]
      %v392 = vld [vmem:[%s1 + $0x4b8] sm:$0xff]
      %v393 = vld [vmem:[%s1 + $0x4c0] sm:$0xff]
      %v394 = vld [vmem:[%s1 + $0x4c8] sm:$0xff]
      %v395 = vld [vmem:[%s1 + $0x4d0] sm:$0xff]
      %v396 = vld [vmem:[%s1 + $0x4d8] sm:$0xff]
      %v397 = vld [vmem:[%s1 + $0x4e0] sm:$0xff]
      %v398 = vld [vmem:[%s1 + $0x4e8] sm:$0xff]
      %v399 = vld [vmem:[%s1 + $0x4f0] sm:$0xff]
      %v400 = vld [vmem:[%s1 + $0x4f8] sm:$0xff]
      %v401 = vld [vmem:[%s1 + $0x500] sm:$0xff]
      %v402 = vld [vmem:[%s1 + $0x508] sm:$0xff]
      %v403 = vld [vmem:[%s1 + $0x510] sm:$0xff]
      %v404 = vld [vmem:[%s1 + $0x518] sm:$0xff]
      %v405 = vld [vmem:[%s1 + $0x520] sm:$0xff]
      %v406 = vld [vmem:[%s1 + $0x528] sm:$0xff]
      %v407 = vld [vmem:[%s1 + $0x530] sm:$0xff]
      %v408 = vld [vmem:[%s1 + $0x538] sm:$0xff]
      %v409 = vld [vmem:[%s1 + $0x540] sm:$0xff]
      %v410 = vld [vmem:[%s1 + $0x548] sm:$0xff]
      %v411 = vld [vmem:[%s1 + $0x550] sm:$0xff]
      %v412 = vld [vmem:[%s1 + $0x558] sm:$0xff]
      %v413 = vld [vmem:[%s1 + $0x560] sm:$0xff]
      %v414 = vld [vmem:[%s1 + $0x568] sm:$0xff]
      %v415 = vld [vmem:[%s1 + $0x570] sm:$0xff]
      %v416 = vld [vmem:[%s1 + $0x578] sm:$0xff]
      %v417 = vld [vmem:[%s1 + $0x580] sm:$0xff]
      %v418 = vld [vmem:[%s1 + $0x588] sm:$0xff]
      %v419 = vld [vmem:[%s1 + $0x590] sm:$0xff]
      %v420 = vld [vmem:[%s1 + $0x598] sm:$0xff]
      %v421 = vld [vmem:[%s1 + $0x5a0] sm:$0xff]
      %v422 = vld [vmem:[%s1 + $0x5a8] sm:$0xff]
      %v423 = vld [vmem:[%s1 + $0x5b0] sm:$0xff]
      %v424 = vld [vmem:[%s1 + $0x5b8] sm:$0xff]
      %v425 = vld [vmem:[%s1 + $0x5c0] sm:$0xff]
      %v426 = vld [vmem:[%s1 + $0x5c8] sm:$0xff]
      %v427 = vld [vmem:[%s1 + $0x5d0] sm:$0xff]
      %v428 = vld [vmem:[%s1 + $0x5d8] sm:$0xff]
      %v429 = vld [vmem:[%s1 + $0x5e0] sm:$0xff]
      %v430 = vld [vmem:[%s1 + $0x5e8] sm:$0xff]
      %v431 = vld [vmem:[%s1 + $0x5f0] sm:$0xff]
      %v432 = vld [vmem:[%s1 + $0x5f8] sm:$0xff]
      %v433 = vld [vmem:[%s2] sm:$0x7]
      %v435 = vlaneseq
      %v436 = vshrl.u32 %v435, 7
      %v437 = vsub.s32 0, %v436
      %v438 = vrot.slane %v433, %v437
      %v439 = vlaneseq
      %v440 = vshrl.u32 %v439, 7
      %v441 = vsub.s32 1, %v440
      %v442 = vrot.slane %v433, %v441
      %v443 = vlaneseq
      %v444 = vshrl.u32 %v443, 7
      %v445 = vsub.s32 2, %v444
      %v446 = vrot.slane %v433, %v445
      %450 = vmatprep.subr.mxu0 %v242
      %451 = vmatpush1.msra.mxu0 %v241
      %452 = vmatprep.subr.mxu0 %v245
      %453 = vmatpush1.msra.mxu0 %v244
      %454 = vmatprep.subr.mxu0 %v248
      %455 = vmatpush1.msra.mxu0 %v247
      %456 = vmatprep.subr.mxu0 %v251
      %457 = vmatpush1.msra.mxu0 %v250
      %458 = vmatprep.subr.mxu0 %v254
      %459 = vmatpush1.msra.mxu0 %v253
      %460 = vmatprep.subr.mxu0 %v257
      %461 = vmatpush1.msra.mxu0 %v256
      %462 = vmatprep.subr.mxu0 %v260
      %463 = vmatpush1.msra.mxu0 %v259
      %464 = vmatprep.subr.mxu0 %v263
      %465 = vmatpush1.msra.mxu0 %v262
      %466 = vmatprep.subr.mxu0 %v266
      %467 = vmatpush1.msra.mxu0 %v265
      %468 = vmatprep.subr.mxu0 %v269
      %469 = vmatpush1.msra.mxu0 %v268
      %470 = vmatprep.subr.mxu0 %v272
      %471 = vmatpush1.msra.mxu0 %v271
      %472 = vmatprep.subr.mxu0 %v275
      %473 = vmatpush1.msra.mxu0 %v274
      %474 = vmatprep.subr.mxu0 %v278
      %475 = vmatpush1.msra.mxu0 %v277
      %476 = vmatprep.subr.mxu0 %v281
      %477 = vmatpush1.msra.mxu0 %v280
      %478 = vmatprep.subr.mxu0 %v284
      %479 = vmatpush1.msra.mxu0 %v283
      %480 = vmatprep.subr.mxu0 %v287
      %481 = vmatpush1.msra.mxu0 %v286
      %482 = vmatprep.subr.mxu0 %v290
      %483 = vmatpush1.msra.mxu0 %v289
      %484 = vmatprep.subr.mxu0 %v293
      %485 = vmatpush1.msra.mxu0 %v292
      %486 = vmatprep.subr.mxu0 %v296
      %487 = vmatpush1.msra.mxu0 %v295
      %488 = vmatprep.subr.mxu0 %v299
      %489 = vmatpush1.msra.mxu0 %v298
      %490 = vmatprep.subr.mxu0 %v302
      %491 = vmatpush1.msra.mxu0 %v301
      %492 = vmatprep.subr.mxu0 %v305
      %493 = vmatpush1.msra.mxu0 %v304
      %494 = vmatprep.subr.mxu0 %v308
      %495 = vmatpush1.msra.mxu0 %v307
      %496 = vmatprep.subr.mxu0 %v311
      %497 = vmatpush1.msra.mxu0 %v310
      %498 = vmatprep.subr.mxu0 %v314
      %499 = vmatpush1.msra.mxu0 %v313
      %500 = vmatprep.subr.mxu0 %v317
      %501 = vmatpush1.msra.mxu0 %v316
      %502 = vmatprep.subr.mxu0 %v320
      %503 = vmatpush1.msra.mxu0 %v319
      %504 = vmatprep.subr.mxu0 %v323
      %505 = vmatpush1.msra.mxu0 %v322
      %506 = vmatprep.subr.mxu0 %v326
      %507 = vmatpush1.msra.mxu0 %v325
      %508 = vmatprep.subr.mxu0 %v329
      %509 = vmatpush1.msra.mxu0 %v328
      %510 = vmatprep.subr.mxu0 %v332
      %511 = vmatpush1.msra.mxu0 %v331
      %512 = vmatprep.subr.mxu0 %v335
      %513 = vmatpush1.msra.mxu0 %v334
      %514 = vmatprep.mubr.f32.mxu0 %v234
      %515 = vmatmul.mubr.f32.gmra.mrb[0].mxu0 %v233
      %v516 = vpop.f32.mrb[0].mxu0
      %v517 = vadd.f32 %v438, %v516
      %v518 = vpop.f32.mrb[0].mxu0
      %v519 = vadd.f32 %v442, %v518
      %520 = vmatprep.mubr.f32.mxu0 %v238
      %521 = vmatmul.mubr.f32.gmra.mrb[0].mxu0 %v237
      %v522 = vpop.f32.mrb[0].mxu0
      %v523 = vadd.f32 %v438, %v522
      %v524 = vpop.f32.mrb[0].mxu0
      %v525 = vadd.f32 %v442, %v524
      %526 = vdwg.mxu0
      %527 = vmatprep.subr.mxu0 %v338
      %528 = vmatpush1.msra.mxu0 %v337
      %529 = vmatprep.subr.mxu0 %v341
      %530 = vmatpush1.msra.mxu0 %v340
      %531 = vmatprep.subr.mxu0 %v344
      %532 = vmatpush1.msra.mxu0 %v343
      %533 = vmatprep.subr.mxu0 %v347
      %534 = vmatpush1.msra.mxu0 %v346
      %535 = vmatprep.subr.mxu0 %v350
      %536 = vmatpush1.msra.mxu0 %v349
      %537 = vmatprep.subr.mxu0 %v353
      %538 = vmatpush1.msra.mxu0 %v352
      %539 = vmatprep.subr.mxu0 %v356
      %540 = vmatpush1.msra.mxu0 %v355
      %541 = vmatprep.subr.mxu0 %v359
      %542 = vmatpush1.msra.mxu0 %v358
      %543 = vmatprep.subr.mxu0 %v362
      %544 = vmatpush1.msra.mxu0 %v361
      %545 = vmatprep.subr.mxu0 %v365
      %546 = vmatpush1.msra.mxu0 %v364
      %547 = vmatprep.subr.mxu0 %v368
      %548 = vmatpush1.msra.mxu0 %v367
      %549 = vmatprep.subr.mxu0 %v371
      %550 = vmatpush1.msra.mxu0 %v370
      %551 = vmatprep.subr.mxu0 %v374
      %552 = vmatpush1.msra.mxu0 %v373
      %553 = vmatprep.subr.mxu0 %v377
      %554 = vmatpush1.msra.mxu0 %v376
      %555 = vmatprep.subr.mxu0 %v380
      %556 = vmatpush1.msra.mxu0 %v379
      %557 = vmatprep.subr.mxu0 %v383
      %558 = vmatpush1.msra.mxu0 %v382
      %559 = vmatprep.subr.mxu0 %v386
      %560 = vmatpush1.msra.mxu0 %v385
      %561 = vmatprep.subr.mxu0 %v389
      %562 = vmatpush1.msra.mxu0 %v388
      %563 = vmatprep.subr.mxu0 %v392
      %564 = vmatpush1.msra.mxu0 %v391
      %565 = vmatprep.subr.mxu0 %v395
      %566 = vmatpush1.msra.mxu0 %v394
      %567 = vmatprep.subr.mxu0 %v398
      %568 = vmatpush1.msra.mxu0 %v397
      %569 = vmatprep.subr.mxu0 %v401
      %570 = vmatpush1.msra.mxu0 %v400
      %571 = vmatprep.subr.mxu0 %v404
      %572 = vmatpush1.msra.mxu0 %v403
      %573 = vmatprep.subr.mxu0 %v407
      %574 = vmatpush1.msra.mxu0 %v406
      %575 = vmatprep.subr.mxu0 %v410
      %576 = vmatpush1.msra.mxu0 %v409
      %577 = vmatprep.subr.mxu0 %v413
      %578 = vmatpush1.msra.mxu0 %v412
      %579 = vmatprep.subr.mxu0 %v416
      %580 = vmatpush1.msra.mxu0 %v415
      %581 = vmatprep.subr.mxu0 %v419
      %582 = vmatpush1.msra.mxu0 %v418
      %583 = vmatprep.subr.mxu0 %v422
      %584 = vmatpush1.msra.mxu0 %v421
      %585 = vmatprep.subr.mxu0 %v425
      %586 = vmatpush1.msra.mxu0 %v424
      %587 = vmatprep.subr.mxu0 %v428
      %588 = vmatpush1.msra.mxu0 %v427
      %589 = vmatprep.subr.mxu0 %v431
      %590 = vmatpush1.msra.mxu0 %v430
      %591 = vmatprep.mubr.f32.mxu0 %v236
      %592 = vmatmul.mubr.f32.gmra.mrb[0].mxu0 %v235
      %v593 = vpop.f32.mrb[0].mxu0
      %v594 = vadd.f32 %v517, %v593
      %v595 = vpop.f32.mrb[0].mxu0
      %v596 = vadd.f32 %v519, %v595
      %597 = vmatprep.mubr.f32.mxu0 %v240
      %598 = vmatmul.mubr.f32.gmra.mrb[0].mxu0 %v239
      %v599 = vpop.f32.mrb[0].mxu0
      %v600 = vadd.f32 %v523, %v599
      %v601 = vpop.f32.mrb[0].mxu0
      %v602 = vadd.f32 %v525, %v601
      %603 = vdwg.mxu0
      %604 = vmatprep.subr.mxu0 0.0
      %605 = vmatpush1.msra.mxu0 %v243
      %606 = vmatprep.subr.mxu0 0.0
      %607 = vmatpush1.msra.mxu0 %v246
      %608 = vmatprep.subr.mxu0 0.0
      %609 = vmatpush1.msra.mxu0 %v249
      %610 = vmatprep.subr.mxu0 0.0
      %611 = vmatpush1.msra.mxu0 %v252
      %612 = vmatprep.subr.mxu0 0.0
      %613 = vmatpush1.msra.mxu0 %v255
      %614 = vmatprep.subr.mxu0 0.0
      %615 = vmatpush1.msra.mxu0 %v258
      %616 = vmatprep.subr.mxu0 0.0
      %617 = vmatpush1.msra.mxu0 %v261
      %618 = vmatprep.subr.mxu0 0.0
      %619 = vmatpush1.msra.mxu0 %v264
      %620 = vmatprep.subr.mxu0 0.0
      %621 = vmatpush1.msra.mxu0 %v267
      %622 = vmatprep.subr.mxu0 0.0
      %623 = vmatpush1.msra.mxu0 %v270
      %624 = vmatprep.subr.mxu0 0.0
      %625 = vmatpush1.msra.mxu0 %v273
      %626 = vmatprep.subr.mxu0 0.0
      %627 = vmatpush1.msra.mxu0 %v276
      %628 = vmatprep.subr.mxu0 0.0
      %629 = vmatpush1.msra.mxu0 %v279
      %630 = vmatprep.subr.mxu0 0.0
      %631 = vmatpush1.msra.mxu0 %v282
      %632 = vmatprep.subr.mxu0 0.0
      %633 = vmatpush1.msra.mxu0 %v285
      %634 = vmatprep.subr.mxu0 0.0
      %635 = vmatpush1.msra.mxu0 %v288
      %636 = vmatprep.subr.mxu0 0.0
      %637 = vmatpush1.msra.mxu0 %v291
      %638 = vmatprep.subr.mxu0 0.0
      %639 = vmatpush1.msra.mxu0 %v294
      %640 = vmatprep.subr.mxu0 0.0
      %641 = vmatpush1.msra.mxu0 %v297
      %642 = vmatprep.subr.mxu0 0.0
      %643 = vmatpush1.msra.mxu0 %v300
      %644 = vmatprep.subr.mxu0 0.0
      %645 = vmatpush1.msra.mxu0 %v303
      %646 = vmatprep.subr.mxu0 0.0
      %647 = vmatpush1.msra.mxu0 %v306
      %648 = vmatprep.subr.mxu0 0.0
      %649 = vmatpush1.msra.mxu0 %v309
      %650 = vmatprep.subr.mxu0 0.0
      %651 = vmatpush1.msra.mxu0 %v312
      %652 = vmatprep.subr.mxu0 0.0
      %653 = vmatpush1.msra.mxu0 %v315
      %654 = vmatprep.subr.mxu0 0.0
      %655 = vmatpush1.msra.mxu0 %v318
      %656 = vmatprep.subr.mxu0 0.0
      %657 = vmatpush1.msra.mxu0 %v321
      %658 = vmatprep.subr.mxu0 0.0
      %659 = vmatpush1.msra.mxu0 %v324
      %660 = vmatprep.subr.mxu0 0.0
      %661 = vmatpush1.msra.mxu0 %v327
      %662 = vmatprep.subr.mxu0 0.0
      %663 = vmatpush1.msra.mxu0 %v330
      %664 = vmatprep.subr.mxu0 0.0
      %665 = vmatpush1.msra.mxu0 %v333
      %666 = vmatprep.subr.mxu0 0.0
      %667 = vmatpush1.msra.mxu0 %v336
      %668 = vmatprep.mubr.f32.mxu0 %v234
      %669 = vmatmul.mubr.f32.gmra.mrb[0].mxu0 %v233
      %v670 = vpop.f32.mrb[0].mxu0
      %v671 = vadd.f32 %v446, %v670
      %v672 = vpop.f32.mrb[0].mxu0
      %673 = vmatprep.mubr.f32.mxu0 %v238
      %674 = vmatmul.mubr.f32.gmra.mrb[0].mxu0 %v237
      %v675 = vpop.f32.mrb[0].mxu0
      %v676 = vadd.f32 %v446, %v675
      %v677 = vpop.f32.mrb[0].mxu0
      %678 = vdwg.mxu0
      %679 = vmatprep.subr.mxu0 0.0
      %680 = vmatpush1.msra.mxu0 %v339
      %681 = vmatprep.subr.mxu0 0.0
      %682 = vmatpush1.msra.mxu0 %v342
      %683 = vmatprep.subr.mxu0 0.0
      %684 = vmatpush1.msra.mxu0 %v345
      %685 = vmatprep.subr.mxu0 0.0
      %686 = vmatpush1.msra.mxu0 %v348
      %687 = vmatprep.subr.mxu0 0.0
      %688 = vmatpush1.msra.mxu0 %v351
      %689 = vmatprep.subr.mxu0 0.0
      %690 = vmatpush1.msra.mxu0 %v354
      %691 = vmatprep.subr.mxu0 0.0
      %692 = vmatpush1.msra.mxu0 %v357
      %693 = vmatprep.subr.mxu0 0.0
      %694 = vmatpush1.msra.mxu0 %v360
      %695 = vmatprep.subr.mxu0 0.0
      %696 = vmatpush1.msra.mxu0 %v363
      %697 = vmatprep.subr.mxu0 0.0
      %698 = vmatpush1.msra.mxu0 %v366
      %699 = vmatprep.subr.mxu0 0.0
      %700 = vmatpush1.msra.mxu0 %v369
      %701 = vmatprep.subr.mxu0 0.0
      %702 = vmatpush1.msra.mxu0 %v372
      %703 = vmatprep.subr.mxu0 0.0
      %704 = vmatpush1.msra.mxu0 %v375
      %705 = vmatprep.subr.mxu0 0.0
      %706 = vmatpush1.msra.mxu0 %v378
      %707 = vmatprep.subr.mxu0 0.0
      %708 = vmatpush1.msra.mxu0 %v381
      %709 = vmatprep.subr.mxu0 0.0
      %710 = vmatpush1.msra.mxu0 %v384
      %711 = vmatprep.subr.mxu0 0.0
      %712 = vmatpush1.msra.mxu0 %v387
      %713 = vmatprep.subr.mxu0 0.0
      %714 = vmatpush1.msra.mxu0 %v390
      %715 = vmatprep.subr.mxu0 0.0
      %716 = vmatpush1.msra.mxu0 %v393
      %717 = vmatprep.subr.mxu0 0.0
      %718 = vmatpush1.msra.mxu0 %v396
      %719 = vmatprep.subr.mxu0 0.0
      %720 = vmatpush1.msra.mxu0 %v399
      %721 = vmatprep.subr.mxu0 0.0
      %722 = vmatpush1.msra.mxu0 %v402
      %723 = vmatprep.subr.mxu0 0.0
      %724 = vmatpush1.msra.mxu0 %v405
      %725 = vmatprep.subr.mxu0 0.0
      %726 = vmatpush1.msra.mxu0 %v408
      %727 = vmatprep.subr.mxu0 0.0
      %728 = vmatpush1.msra.mxu0 %v411
      %729 = vmatprep.subr.mxu0 0.0
      %730 = vmatpush1.msra.mxu0 %v414
      %731 = vmatprep.subr.mxu0 0.0
      %732 = vmatpush1.msra.mxu0 %v417
      %733 = vmatprep.subr.mxu0 0.0
      %734 = vmatpush1.msra.mxu0 %v420
      %735 = vmatprep.subr.mxu0 0.0
      %736 = vmatpush1.msra.mxu0 %v423
      %737 = vmatprep.subr.mxu0 0.0
      %738 = vmatpush1.msra.mxu0 %v426
      %739 = vmatprep.subr.mxu0 0.0
      %740 = vmatpush1.msra.mxu0 %v429
      %741 = vmatprep.subr.mxu0 0.0
      %742 = vmatpush1.msra.mxu0 %v432
      %743 = vmatprep.mubr.f32.mxu0 %v236
      %744 = vmatmul.mubr.f32.gmra.mrb[0].mxu0 %v235
      %v745 = vpop.f32.mrb[0].mxu0
      %v746 = vadd.f32 %v671, %v745
      %v747 = vpop.f32.mrb[0].mxu0
      %748 = vmatprep.mubr.f32.mxu0 %v240
      %749 = vmatmul.mubr.f32.gmra.mrb[0].mxu0 %v239
      %v750 = vpop.f32.mrb[0].mxu0
      %v751 = vadd.f32 %v676, %v750
      %v752 = vpop.f32.mrb[0].mxu0
      %753 = vdwg.mxu0
      %v754 = vmax.f32 %v594, 0.0
      %v755 = vmax.f32 %v600, 0.0
      %v756 = vld [vmem:[%s3] sm:$0xff]
      %v757 = vld [vmem:[%s3 + $0x8] sm:$0xff]
      %v758 = vld [vmem:[%s3 + $0x10] sm:$0xff]
      %v759 = vld [vmem:[%s3 + $0x18] sm:$0xff]
      %v760 = vld [vmem:[%s3 + $0x20] sm:$0xff]
      %v761 = vld [vmem:[%s3 + $0x28] sm:$0xff]
      %v762 = vld [vmem:[%s3 + $0x30] sm:$0xff]
      %v763 = vld [vmem:[%s3 + $0x38] sm:$0xff]
      %v764 = vld [vmem:[%s3 + $0x40] sm:$0xff]
      %v765 = vld [vmem:[%s3 + $0x48] sm:$0xff]
      %v766 = vld [vmem:[%s3 + $0x50] sm:$0xff]
      %v767 = vld [vmem:[%s3 + $0x58] sm:$0xff]
      %v768 = vld [vmem:[%s3 + $0x60] sm:$0xff]
      %v769 = vld [vmem:[%s3 + $0x68] sm:$0xff]
      %v770 = vld [vmem:[%s3 + $0x70] sm:$0xff]
      %v771 = vld [vmem:[%s3 + $0x78] sm:$0xff]
      %v772 = vld [vmem:[%s3 + $0x80] sm:$0xff]
      %v773 = vld [vmem:[%s3 + $0x88] sm:$0xff]
      %v774 = vld [vmem:[%s3 + $0x90] sm:$0xff]
      %v775 = vld [vmem:[%s3 + $0x98] sm:$0xff]
      %v776 = vld [vmem:[%s3 + $0xa0] sm:$0xff]
      %v777 = vld [vmem:[%s3 + $0xa8] sm:$0xff]
      %v778 = vld [vmem:[%s3 + $0xb0] sm:$0xff]
      %v779 = vld [vmem:[%s3 + $0xb8] sm:$0xff]
      %v780 = vld [vmem:[%s3 + $0xc0] sm:$0xff]
      %v781 = vld [vmem:[%s3 + $0xc8] sm:$0xff]
      %v782 = vld [vmem:[%s3 + $0xd0] sm:$0xff]
      %v783 = vld [vmem:[%s3 + $0xd8] sm:$0xff]
      %v784 = vld [vmem:[%s3 + $0xe0] sm:$0xff]
      %v785 = vld [vmem:[%s3 + $0xe8] sm:$0xff]
      %v786 = vld [vmem:[%s3 + $0xf0] sm:$0xff]
      %v787 = vld [vmem:[%s3 + $0xf8] sm:$0xff]
      %v788 = vld [vmem:[%s4] sm:$0x3]
      %v790 = vlaneseq
      %v791 = vshrl.u32 %v790, 7
      %v792 = vsub.s32 0, %v791
      %v793 = vrot.slane %v788, %v792
      %v794 = vlaneseq
      %v795 = vshrl.u32 %v794, 7
      %v796 = vsub.s32 1, %v795
      %v797 = vrot.slane %v788, %v796
      %800 = vmatprep.subr.mxu0 %v757
      %801 = vmatpush1.msra.mxu0 %v756
      %802 = vmatprep.subr.mxu0 %v759
      %803 = vmatpush1.msra.mxu0 %v758
      %804 = vmatprep.subr.mxu0 %v761
      %805 = vmatpush1.msra.mxu0 %v760
      %806 = vmatprep.subr.mxu0 %v763
      %807 = vmatpush1.msra.mxu0 %v762
      %808 = vmatprep.subr.mxu0 %v765
      %809 = vmatpush1.msra.mxu0 %v764
      %810 = vmatprep.subr.mxu0 %v767
      %811 = vmatpush1.msra.mxu0 %v766
      %812 = vmatprep.subr.mxu0 %v769
      %813 = vmatpush1.msra.mxu0 %v768
      %814 = vmatprep.subr.mxu0 %v771
      %815 = vmatpush1.msra.mxu0 %v770
      %816 = vmatprep.subr.mxu0 %v773
      %817 = vmatpush1.msra.mxu0 %v772
      %818 = vmatprep.subr.mxu0 %v775
      %819 = vmatpush1.msra.mxu0 %v774
      %820 = vmatprep.subr.mxu0 %v777
      %821 = vmatpush1.msra.mxu0 %v776
      %822 = vmatprep.subr.mxu0 %v779
      %823 = vmatpush1.msra.mxu0 %v778
      %824 = vmatprep.subr.mxu0 %v781
      %825 = vmatpush1.msra.mxu0 %v780
      %826 = vmatprep.subr.mxu0 %v783
      %827 = vmatpush1.msra.mxu0 %v782
      %828 = vmatprep.subr.mxu0 %v785
      %829 = vmatpush1.msra.mxu0 %v784
      %830 = vmatprep.subr.mxu0 %v787
      %831 = vmatpush1.msra.mxu0 %v786
      %832 = vmatprep.subr.mxu0 0.0
      %833 = vmatpush1.msra.mxu0 0.0
      %834 = vmatprep.subr.mxu0 0.0
      %835 = vmatpush1.msra.mxu0 0.0
      %836 = vmatprep.subr.mxu0 0.0
      %837 = vmatpush1.msra.mxu0 0.0
      %838 = vmatprep.subr.mxu0 0.0
      %839 = vmatpush1.msra.mxu0 0.0
      %840 = vmatprep.subr.mxu0 0.0
      %841 = vmatpush1.msra.mxu0 0.0
      %842 = vmatprep.subr.mxu0 0.0
      %843 = vmatpush1.msra.mxu0 0.0
      %844 = vmatprep.subr.mxu0 0.0
      %845 = vmatpush1.msra.mxu0 0.0
      %846 = vmatprep.subr.mxu0 0.0
      %847 = vmatpush1.msra.mxu0 0.0
      %848 = vmatprep.subr.mxu0 0.0
      %849 = vmatpush1.msra.mxu0 0.0
      %850 = vmatprep.subr.mxu0 0.0
      %851 = vmatpush1.msra.mxu0 0.0
      %852 = vmatprep.subr.mxu0 0.0
      %853 = vmatpush1.msra.mxu0 0.0
      %854 = vmatprep.subr.mxu0 0.0
      %855 = vmatpush1.msra.mxu0 0.0
      %856 = vmatprep.subr.mxu0 0.0
      %857 = vmatpush1.msra.mxu0 0.0
      %858 = vmatprep.subr.mxu0 0.0
      %859 = vmatpush1.msra.mxu0 0.0
      %860 = vmatprep.subr.mxu0 0.0
      %861 = vmatpush1.msra.mxu0 0.0
      %862 = vmatprep.subr.mxu0 0.0
      %863 = vmatpush1.msra.mxu0 0.0
      %864 = vmatprep.mubr.f32.mxu0 0.0
      %865 = vmatmul.mubr.f32.gmra.mrb[0].mxu0 %v754
      %v866 = vpop.f32.mrb[0].mxu0
      %v867 = vadd.f32 %v793, %v866
      %v868 = vpop.f32.mrb[0].mxu0
      %v869 = vadd.f32 %v797, %v868
      %870 = vmatprep.mubr.f32.mxu0 0.0
      %871 = vmatmul.mubr.f32.gmra.mrb[0].mxu0 %v755
      %v872 = vpop.f32.mrb[0].mxu0
      %v873 = vadd.f32 %v793, %v872
      %v874 = vpop.f32.mrb[0].mxu0
      %v875 = vadd.f32 %v797, %v874
      %876 = vdwg.mxu0
      %v877 = vadd.f32 %v867, %v596
      %v878 = vadd.f32 %v869, %v746
      %v879 = vadd.f32 %v873, %v602
      %v880 = vadd.f32 %v875, %v751
      %v881 = vmax.f32 %v877, 0.0
      %v882 = vmax.f32 %v878, 0.0
      %v883 = vmax.f32 %v879, 0.0
      %v884 = vmax.f32 %v880, 0.0
      %v885 = vmax.f32 %v881, 0.0
      %v886 = vmax.f32 %v882, 0.0
      %v887 = vmax.f32 %v883, 0.0
      %v888 = vmax.f32 %v884, 0.0
      %889 = vst [vmem:[%s231] sm:$0xff] %v885
      %890 = vst [vmem:[%s231 + $0x8] sm:$0xff] %v886
      %891 = vst [vmem:[%s231 + $0x10] sm:$0xff] %v887
      %892 = vst [vmem:[%s231 + $0x18] sm:$0xff] %v888
      %s893 = smul.u32 2, %s16
      %p894 = scmp.lt.s32.totalorder %s893, 3
      %s895 = scalar_select %p894, %s893, 3
      %s896 = smul.addr %s895, 2
      %s897 = smul.addr %s896, 8
      %s898 = scalar_lea.vmem %s5, %s897
      // Predicated region
      $region41: #{generator1_forward.24} parent=39 // pred_check
        %p899 = pneg %p144
      $region42: #{generator1_forward.24} parent=39 // pred_check_branch
        %901 = sbr.rel (%p899) target = $region44
      $region43: #{generator1_forward.24} parent=39 // pred_region
        %s902 = smul.u32 2, %s16
      $region44: #{generator1_forward.24} parent=39 // pred_fallthru
        _
    $region40: #{generator1_forward.24} parent=5 // pred_fallthru
      _
    %p903 = scmp.le.s32.totalorder 2, %s11
    // Predicated region
    $region45: #{generator1_forward.24} parent=5 // pred_check
      %p904 = pneg %p903
    $region46: #{generator1_forward.24} parent=5 // pred_check_branch
      %906 = sbr.rel (%p904) target = $region48
    $region47: #{generator1_forward.24} parent=5 // pred_region
      %s907 = ssub.s32 %s11, 2
      // Predicated region
      $region49: #{generator1_forward.24} parent=47 // pred_check
        %p908 = pneg %p150
      $region50: #{generator1_forward.24} parent=47 // pred_check_branch
        %910 = sbr.rel (%p908) target = $region52
      $region51: #{generator1_forward.24} parent=47 // pred_region
        %s911 = smul.u32 2, %s17
        %p912 = scmp.lt.s32.totalorder %s911, 3
        %s913 = scalar_select %p912, %s911, 3
        %s914 = smul.addr %s913, 2
        %s915 = smul.addr %s914, 8
        %s916 = scalar_lea.vmem %s5, %s915
      $region52: #{generator1_forward.24} parent=47 // pred_fallthru
        _
    $region48: #{generator1_forward.24} parent=5 // pred_fallthru
      _
  $region6: #{generator1_forward.24} parent=0 // loop_footer
    %s15 = sadd.s32 1, %s11
  $region7: #{generator1_forward.24} parent=0 // loop_footer_branch
    %10 = sbr.rel target = $region3
  $region8: #{generator1_forward.24} parent=0 // loop_exit
    _

// kernel: generator1_forward.26
$region0: #{generator1_forward.26}
  #allocation0 [shape = 'u32[]', space=smem, size = 0x4, offset = 0x4, fixed_abs, tag = 'smem constant byte address 0x4 - core index']
  #allocation1 [shape = 'u32[144,128]{1,0:T(1,128)}', space=vmem, size = 0x12000, scoped, tag = 'internal scratch']
  %s0 = inlined_call_operand.vmem [shape: f32[32,512], index: 0, kind: input, shape index: {}]
  %s1 = inlined_call_operand.vmem [shape: f32[512,128], index: 1, kind: input, shape index: {}]
  %s2 = inlined_call_operand.vmem [shape: f32[1,128], index: 2, kind: input, shape index: {}]
  %s3 = inlined_call_operand.vmem [shape: f32[32,128], index: 3, kind: output, shape index: {}]
  %s4 = sld [smem:[#allocation0]]
  $region45: #{generator1_forward.26} parent=0
    _
  %s6 = ssub.s32 1, %s4
  %s7 = scalar_select 0, %s6, %s4
  loop: start=0, step=1, limit=4
  $region2: #{generator1_forward.26} parent=0 // loop_pre_header
    _
  $region3: #{generator1_forward.26} parent=0 // loop_header
    %s9 = sphi 0, %s13
    %p10 = scmp.ge.s32.totalorder %s9, 4
    %s19 = sphi 0, %s21
    %s22 = sphi 0, %s19
    %s23 = sphi 0, %s22
    %s39 = sphi 0, %s23
    %s43 = sphi 0, %s43
    %s45 = sphi 0, %s43
    %s46 = sphi 0, %s45
    %s60 = sphi 0, %s46
    %s64 = sphi 0, %s64
    %s66 = sphi 0, %s64
    %s67 = sphi 0, %s66
    %s81 = sphi 0, %s67
    %s87 = sphi 0, %s89
    %s90 = sphi 0, %s87
    %s91 = sphi 0, %s90
    %s107 = sphi 0, %s91
  $region4: #{generator1_forward.26} parent=0 // loop_header_branch
    %12 = sbr.rel (%p10) target = $region8
  $region5: #{generator1_forward.26} parent=0 // loop_body
    %s14 = ssub.s32 %s9, 1
    %s15 = ssub.s32 %s9, 2
    %s16 = sadd.s32 %s9, 1
    %s17 = ssub.s32 %s9, %s16
    %p18 = scmp.eq.s32.totalorder %s17, 0
    %s20 = sadd.s32 %s19, 1
    %s21 = scalar_select %p18, %s19, %s20
    %p24 = pneg %p18
    %p25 = scmp.eq.s32.totalorder %s9, 1
    %p26 = por %p24, %p25
    %p27 = scmp.ne.s32.totalorder %s19, %s22
    %p28 = scmp.eq.s32.totalorder %s9, 0
    %p29 = por %p27, %p28
    %p30 = scmp.ne.s32.totalorder %s19, %s22
    %p31 = scmp.eq.s32.totalorder %s14, 1
    %p32 = por %p30, %p31
    %p33 = scmp.ne.s32.totalorder %s22, %s23
    %p34 = scmp.eq.s32.totalorder %s14, 0
    %p35 = por %p33, %p34
    %p36 = scmp.ne.s32.totalorder %s22, %s23
    %p37 = scmp.eq.s32.totalorder %s15, 1
    %p38 = por %p36, %p37
    %p40 = scmp.ne.s32.totalorder %s23, %s39
    %p41 = scmp.eq.s32.totalorder %s15, 0
    %p42 = por %p40, %p41
    %s44 = sadd.s32 %s43, 1
    %p47 = scmp.eq.s32.totalorder %s9, 1
    %p48 = scmp.ne.s32.totalorder %s43, %s45
    %p49 = scmp.eq.s32.totalorder %s9, 0
    %p50 = por %p48, %p49
    %p51 = scmp.ne.s32.totalorder %s43, %s45
    %p52 = scmp.eq.s32.totalorder %s14, 1
    %p53 = por %p51, %p52
    %p54 = scmp.ne.s32.totalorder %s45, %s46
    %p55 = scmp.eq.s32.totalorder %s14, 0
    %p56 = por %p54, %p55
    %p57 = scmp.ne.s32.totalorder %s45, %s46
    %p58 = scmp.eq.s32.totalorder %s15, 1
    %p59 = por %p57, %p58
    %p61 = scmp.ne.s32.totalorder %s46, %s60
    %p62 = scmp.eq.s32.totalorder %s15, 0
    %p63 = por %p61, %p62
    %s65 = sadd.s32 %s64, 1
    %p68 = scmp.eq.s32.totalorder %s9, 1
    %p69 = scmp.ne.s32.totalorder %s64, %s66
    %p70 = scmp.eq.s32.totalorder %s9, 0
    %p71 = por %p69, %p70
    %p72 = scmp.ne.s32.totalorder %s64, %s66
    %p73 = scmp.eq.s32.totalorder %s14, 1
    %p74 = por %p72, %p73
    %p75 = scmp.ne.s32.totalorder %s66, %s67
    %p76 = scmp.eq.s32.totalorder %s14, 0
    %p77 = por %p75, %p76
    %p78 = scmp.ne.s32.totalorder %s66, %s67
    %p79 = scmp.eq.s32.totalorder %s15, 1
    %p80 = por %p78, %p79
    %p82 = scmp.ne.s32.totalorder %s67, %s81
    %p83 = scmp.eq.s32.totalorder %s15, 0
    %p84 = por %p82, %p83
    %s85 = ssub.s32 %s9, %s16
    %p86 = scmp.eq.s32.totalorder %s85, 0
    %s88 = sadd.s32 %s87, 1
    %s89 = scalar_select %p86, %s87, %s88
    %p92 = pneg %p86
    %p93 = scmp.eq.s32.totalorder %s9, 1
    %p94 = por %p92, %p93
    %p95 = scmp.ne.s32.totalorder %s87, %s90
    %p96 = scmp.eq.s32.totalorder %s9, 0
    %p97 = por %p95, %p96
    %p98 = scmp.ne.s32.totalorder %s87, %s90
    %p99 = scmp.eq.s32.totalorder %s14, 1
    %p100 = por %p98, %p99
    %p101 = scmp.ne.s32.totalorder %s90, %s91
    %p102 = scmp.eq.s32.totalorder %s14, 0
    %p103 = por %p101, %p102
    %p104 = scmp.ne.s32.totalorder %s90, %s91
    %p105 = scmp.eq.s32.totalorder %s15, 1
    %p106 = por %p104, %p105
    %p108 = scmp.ne.s32.totalorder %s91, %s107
    %p109 = scmp.eq.s32.totalorder %s15, 0
    %p110 = por %p108, %p109
    %p111 = scmp.le.s32.totalorder 1, %s9
    %p112 = scmp.lt.s32.totalorder %s9, 3
    %p113 = pnand %p111, %p112
    %p114 = pneg %p113
    // Predicated region
    $region9: #{generator1_forward.26} parent=5 // pred_check
      _
    $region10: #{generator1_forward.26} parent=5 // pred_check_branch
      %116 = sbr.rel (%p113) target = $region12
    $region11: #{generator1_forward.26} parent=5 // pred_region
      %s117 = ssub.s32 %s9, 1
      // Predicated region
      $region13: #{generator1_forward.26} parent=11 // pred_check
        %p118 = pneg %p56
      $region14: #{generator1_forward.26} parent=11 // pred_check_branch
        %120 = sbr.rel (%p118) target = $region16
      $region15: #{generator1_forward.26} parent=11 // pred_region
        _
      $region16: #{generator1_forward.26} parent=11 // pred_fallthru
        _
      // Predicated region
      $region17: #{generator1_forward.26} parent=11 // pred_check
        %p121 = pneg %p77
      $region18: #{generator1_forward.26} parent=11 // pred_check_branch
        %123 = sbr.rel (%p121) target = $region20
      $region19: #{generator1_forward.26} parent=11 // pred_region
        _
      $region20: #{generator1_forward.26} parent=11 // pred_fallthru
        _
    $region12: #{generator1_forward.26} parent=5 // pred_fallthru
      _
    %p124 = scmp.lt.s32.totalorder %s9, 2
    // Predicated region
    $region21: #{generator1_forward.26} parent=5 // pred_check
      %p125 = pneg %p124
    $region22: #{generator1_forward.26} parent=5 // pred_check_branch
      %127 = sbr.rel (%p125) target = $region24
    $region23: #{generator1_forward.26} parent=5 // pred_region
      // Predicated region
      $region25: #{generator1_forward.26} parent=23 // pred_check
        %p128 = pneg %p29
      $region26: #{generator1_forward.26} parent=23 // pred_check_branch
        %130 = sbr.rel (%p128) target = $region28
      $region27: #{generator1_forward.26} parent=23 // pred_region
        %s131 = smul.u32 2, %s9
        %p132 = scmp.lt.s32.totalorder %s131, 3
        %s133 = scalar_select %p132, %s131, 3
        %s134 = smul.addr %s133, 4
        %s135 = smul.addr %s134, 8
        %s136 = scalar_lea.vmem %s0, %s135
        %s137 = smul.u32 2, %s9
      $region28: #{generator1_forward.26} parent=23 // pred_fallthru
        _
    $region24: #{generator1_forward.26} parent=5 // pred_fallthru
      _
    %p138 = scmp.le.s32.totalorder 1, %s9
    %p139 = scmp.lt.s32.totalorder %s9, 3
    %p140 = pnand %p138, %p139
    %p141 = pneg %p140
    // Predicated region
    $region29: #{generator1_forward.26} parent=5 // pred_check
      _
    $region30: #{generator1_forward.26} parent=5 // pred_check_branch
      %143 = sbr.rel (%p140) target = $region32
    $region31: #{generator1_forward.26} parent=5 // pred_region
      %s144 = ssub.s32 %s9, 1
      %s145 = smul.u32 2, %s14
      %p146 = scmp.lt.s32.totalorder %s145, 3
      %s147 = scalar_select %p146, %s145, 3
      %s148 = smul.addr %s147, 4
      %s149 = smul.addr %s148, 8
      %s150 = scalar_lea.vmem %s0, %s149
      %p151 = pneg %p35
      %p152 = pneg %p32
      %p153 = pneg %p56
      %p154 = pneg %p53
      %p155 = pneg %p77
      %p156 = pneg %p74
      %p157 = pneg %p103
      %p158 = pneg %p100
      %s159 = smul.u32 2, %s14
      %p160 = scmp.lt.s32.totalorder %s159, 3
      %s161 = scalar_select %p160, %s159, 3
      %s162 = smul.addr %s161, 8
      %s163 = scalar_lea.vmem %s3, %s162
      %s164 = smul.u32 2, %s14
      %p165 = scmp.lt.s32.totalorder %s164, 3
      %s166 = scalar_select %p165, %s164, 3
      %s167 = smul.addr %s166, 4
      %s168 = smul.addr %s167, 8
      %s169 = scalar_lea.vmem %s0, %s168
      %s170 = smul.u32 2, %s14
      %s171 = smul.u32 2, %s14
      %p172 = scmp.lt.s32.totalorder %s171, 3
      %s173 = scalar_select %p172, %s171, 3
      %s174 = smul.addr %s173, 8
      %s175 = scalar_lea.vmem %s3, %s174
      %s176 = smul.u32 2, %s14
      %v177 = vld [vmem:[%s169] sm:$0xff]
      %v178 = vld [vmem:[%s169 + $0x8] sm:$0xff]
      %v179 = vld [vmem:[%s169 + $0x10] sm:$0xff]
      %v180 = vld [vmem:[%s169 + $0x18] sm:$0xff]
      %v181 = vld [vmem:[%s169 + $0x20] sm:$0xff]
      %v182 = vld [vmem:[%s169 + $0x28] sm:$0xff]
      %v183 = vld [vmem:[%s169 + $0x30] sm:$0xff]
      %v184 = vld [vmem:[%s169 + $0x38] sm:$0xff]
      %v185 = vld [vmem:[%s1] sm:$0xff]
      %v186 = vld [vmem:[%s1 + $0x8] sm:$0xff]
      %v187 = vld [vmem:[%s1 + $0x10] sm:$0xff]
      %v188 = vld [vmem:[%s1 + $0x18] sm:$0xff]
      %v189 = vld [vmem:[%s1 + $0x20] sm:$0xff]
      %v190 = vld [vmem:[%s1 + $0x28] sm:$0xff]
      %v191 = vld [vmem:[%s1 + $0x30] sm:$0xff]
      %v192 = vld [vmem:[%s1 + $0x38] sm:$0xff]
      %v193 = vld [vmem:[%s1 + $0x40] sm:$0xff]
      %v194 = vld [vmem:[%s1 + $0x48] sm:$0xff]
      %v195 = vld [vmem:[%s1 + $0x50] sm:$0xff]
      %v196 = vld [vmem:[%s1 + $0x58] sm:$0xff]
      %v197 = vld [vmem:[%s1 + $0x60] sm:$0xff]
      %v198 = vld [vmem:[%s1 + $0x68] sm:$0xff]
      %v199 = vld [vmem:[%s1 + $0x70] sm:$0xff]
      %v200 = vld [vmem:[%s1 + $0x78] sm:$0xff]
      %v201 = vld [vmem:[%s1 + $0x80] sm:$0xff]
      %v202 = vld [vmem:[%s1 + $0x88] sm:$0xff]
      %v203 = vld [vmem:[%s1 + $0x90] sm:$0xff]
      %v204 = vld [vmem:[%s1 + $0x98] sm:$0xff]
      %v205 = vld [vmem:[%s1 + $0xa0] sm:$0xff]
      %v206 = vld [vmem:[%s1 + $0xa8] sm:$0xff]
      %v207 = vld [vmem:[%s1 + $0xb0] sm:$0xff]
      %v208 = vld [vmem:[%s1 + $0xb8] sm:$0xff]
      %v209 = vld [vmem:[%s1 + $0xc0] sm:$0xff]
      %v210 = vld [vmem:[%s1 + $0xc8] sm:$0xff]
      %v211 = vld [vmem:[%s1 + $0xd0] sm:$0xff]
      %v212 = vld [vmem:[%s1 + $0xd8] sm:$0xff]
      %v213 = vld [vmem:[%s1 + $0xe0] sm:$0xff]
      %v214 = vld [vmem:[%s1 + $0xe8] sm:$0xff]
      %v215 = vld [vmem:[%s1 + $0xf0] sm:$0xff]
      %v216 = vld [vmem:[%s1 + $0xf8] sm:$0xff]
      %v217 = vld [vmem:[%s1 + $0x100] sm:$0xff]
      %v218 = vld [vmem:[%s1 + $0x108] sm:$0xff]
      %v219 = vld [vmem:[%s1 + $0x110] sm:$0xff]
      %v220 = vld [vmem:[%s1 + $0x118] sm:$0xff]
      %v221 = vld [vmem:[%s1 + $0x120] sm:$0xff]
      %v222 = vld [vmem:[%s1 + $0x128] sm:$0xff]
      %v223 = vld [vmem:[%s1 + $0x130] sm:$0xff]
      %v224 = vld [vmem:[%s1 + $0x138] sm:$0xff]
      %v225 = vld [vmem:[%s1 + $0x140] sm:$0xff]
      %v226 = vld [vmem:[%s1 + $0x148] sm:$0xff]
      %v227 = vld [vmem:[%s1 + $0x150] sm:$0xff]
      %v228 = vld [vmem:[%s1 + $0x158] sm:$0xff]
      %v229 = vld [vmem:[%s1 + $0x160] sm:$0xff]
      %v230 = vld [vmem:[%s1 + $0x168] sm:$0xff]
      %v231 = vld [vmem:[%s1 + $0x170] sm:$0xff]
      %v232 = vld [vmem:[%s1 + $0x178] sm:$0xff]
      %v233 = vld [vmem:[%s1 + $0x180] sm:$0xff]
      %v234 = vld [vmem:[%s1 + $0x188] sm:$0xff]
      %v235 = vld [vmem:[%s1 + $0x190] sm:$0xff]
      %v236 = vld [vmem:[%s1 + $0x198] sm:$0xff]
      %v237 = vld [vmem:[%s1 + $0x1a0] sm:$0xff]
      %v238 = vld [vmem:[%s1 + $0x1a8] sm:$0xff]
      %v239 = vld [vmem:[%s1 + $0x1b0] sm:$0xff]
      %v240 = vld [vmem:[%s1 + $0x1b8] sm:$0xff]
      %v241 = vld [vmem:[%s1 + $0x1c0] sm:$0xff]
      %v242 = vld [vmem:[%s1 + $0x1c8] sm:$0xff]
      %v243 = vld [vmem:[%s1 + $0x1d0] sm:$0xff]
      %v244 = vld [vmem:[%s1 + $0x1d8] sm:$0xff]
      %v245 = vld [vmem:[%s1 + $0x1e0] sm:$0xff]
      %v246 = vld [vmem:[%s1 + $0x1e8] sm:$0xff]
      %v247 = vld [vmem:[%s1 + $0x1f0] sm:$0xff]
      %v248 = vld [vmem:[%s1 + $0x1f8] sm:$0xff]
      %v249 = vld [vmem:[%s2] sm:$0x1]
      %v251 = vlaneseq
      %v252 = vshrl.u32 %v251, 7
      %v253 = vsub.s32 0, %v252
      %v254 = vrot.slane %v249, %v253
      %256 = vmatprep.subr.mxu0 0.0
      %257 = vmatpush1.msra.mxu0 %v185
      %258 = vmatprep.subr.mxu0 0.0
      %259 = vmatpush1.msra.mxu0 %v186
      %260 = vmatprep.subr.mxu0 0.0
      %261 = vmatpush1.msra.mxu0 %v187
      %262 = vmatprep.subr.mxu0 0.0
      %263 = vmatpush1.msra.mxu0 %v188
      %264 = vmatprep.subr.mxu0 0.0
      %265 = vmatpush1.msra.mxu0 %v189
      %266 = vmatprep.subr.mxu0 0.0
      %267 = vmatpush1.msra.mxu0 %v190
      %268 = vmatprep.subr.mxu0 0.0
      %269 = vmatpush1.msra.mxu0 %v191
      %270 = vmatprep.subr.mxu0 0.0
      %271 = vmatpush1.msra.mxu0 %v192
      %272 = vmatprep.subr.mxu0 0.0
      %273 = vmatpush1.msra.mxu0 %v193
      %274 = vmatprep.subr.mxu0 0.0
      %275 = vmatpush1.msra.mxu0 %v194
      %276 = vmatprep.subr.mxu0 0.0
      %277 = vmatpush1.msra.mxu0 %v195
      %278 = vmatprep.subr.mxu0 0.0
      %279 = vmatpush1.msra.mxu0 %v196
      %280 = vmatprep.subr.mxu0 0.0
      %281 = vmatpush1.msra.mxu0 %v197
      %282 = vmatprep.subr.mxu0 0.0
      %283 = vmatpush1.msra.mxu0 %v198
      %284 = vmatprep.subr.mxu0 0.0
      %285 = vmatpush1.msra.mxu0 %v199
      %286 = vmatprep.subr.mxu0 0.0
      %287 = vmatpush1.msra.mxu0 %v200
      %288 = vmatprep.subr.mxu0 0.0
      %289 = vmatpush1.msra.mxu0 %v201
      %290 = vmatprep.subr.mxu0 0.0
      %291 = vmatpush1.msra.mxu0 %v202
      %292 = vmatprep.subr.mxu0 0.0
      %293 = vmatpush1.msra.mxu0 %v203
      %294 = vmatprep.subr.mxu0 0.0
      %295 = vmatpush1.msra.mxu0 %v204
      %296 = vmatprep.subr.mxu0 0.0
      %297 = vmatpush1.msra.mxu0 %v205
      %298 = vmatprep.subr.mxu0 0.0
      %299 = vmatpush1.msra.mxu0 %v206
      %300 = vmatprep.subr.mxu0 0.0
      %301 = vmatpush1.msra.mxu0 %v207
      %302 = vmatprep.subr.mxu0 0.0
      %303 = vmatpush1.msra.mxu0 %v208
      %304 = vmatprep.subr.mxu0 0.0
      %305 = vmatpush1.msra.mxu0 %v209
      %306 = vmatprep.subr.mxu0 0.0
      %307 = vmatpush1.msra.mxu0 %v210
      %308 = vmatprep.subr.mxu0 0.0
      %309 = vmatpush1.msra.mxu0 %v211
      %310 = vmatprep.subr.mxu0 0.0
      %311 = vmatpush1.msra.mxu0 %v212
      %312 = vmatprep.subr.mxu0 0.0
      %313 = vmatpush1.msra.mxu0 %v213
      %314 = vmatprep.subr.mxu0 0.0
      %315 = vmatpush1.msra.mxu0 %v214
      %316 = vmatprep.subr.mxu0 0.0
      %317 = vmatpush1.msra.mxu0 %v215
      %318 = vmatprep.subr.mxu0 0.0
      %319 = vmatpush1.msra.mxu0 %v216
      %320 = vmatprep.mubr.f32.mxu0 %v178
      %321 = vmatmul.mubr.f32.gmra.mrb[0].mxu0 %v177
      %v322 = vpop.f32.mrb[0].mxu0
      %v323 = vadd.f32 %v254, %v322
      %v324 = vpop.f32.mrb[0].mxu0
      %325 = vmatprep.mubr.f32.mxu0 %v182
      %326 = vmatmul.mubr.f32.gmra.mrb[0].mxu0 %v181
      %v327 = vpop.f32.mrb[0].mxu0
      %v328 = vadd.f32 %v254, %v327
      %v329 = vpop.f32.mrb[0].mxu0
      %330 = vdwg.mxu0
      %331 = vmatprep.subr.mxu0 0.0
      %332 = vmatpush1.msra.mxu0 %v217
      %333 = vmatprep.subr.mxu0 0.0
      %334 = vmatpush1.msra.mxu0 %v218
      %335 = vmatprep.subr.mxu0 0.0
      %336 = vmatpush1.msra.mxu0 %v219
      %337 = vmatprep.subr.mxu0 0.0
      %338 = vmatpush1.msra.mxu0 %v220
      %339 = vmatprep.subr.mxu0 0.0
      %340 = vmatpush1.msra.mxu0 %v221
      %341 = vmatprep.subr.mxu0 0.0
      %342 = vmatpush1.msra.mxu0 %v222
      %343 = vmatprep.subr.mxu0 0.0
      %344 = vmatpush1.msra.mxu0 %v223
      %345 = vmatprep.subr.mxu0 0.0
      %346 = vmatpush1.msra.mxu0 %v224
      %347 = vmatprep.subr.mxu0 0.0
      %348 = vmatpush1.msra.mxu0 %v225
      %349 = vmatprep.subr.mxu0 0.0
      %350 = vmatpush1.msra.mxu0 %v226
      %351 = vmatprep.subr.mxu0 0.0
      %352 = vmatpush1.msra.mxu0 %v227
      %353 = vmatprep.subr.mxu0 0.0
      %354 = vmatpush1.msra.mxu0 %v228
      %355 = vmatprep.subr.mxu0 0.0
      %356 = vmatpush1.msra.mxu0 %v229
      %357 = vmatprep.subr.mxu0 0.0
      %358 = vmatpush1.msra.mxu0 %v230
      %359 = vmatprep.subr.mxu0 0.0
      %360 = vmatpush1.msra.mxu0 %v231
      %361 = vmatprep.subr.mxu0 0.0
      %362 = vmatpush1.msra.mxu0 %v232
      %363 = vmatprep.subr.mxu0 0.0
      %364 = vmatpush1.msra.mxu0 %v233
      %365 = vmatprep.subr.mxu0 0.0
      %366 = vmatpush1.msra.mxu0 %v234
      %367 = vmatprep.subr.mxu0 0.0
      %368 = vmatpush1.msra.mxu0 %v235
      %369 = vmatprep.subr.mxu0 0.0
      %370 = vmatpush1.msra.mxu0 %v236
      %371 = vmatprep.subr.mxu0 0.0
      %372 = vmatpush1.msra.mxu0 %v237
      %373 = vmatprep.subr.mxu0 0.0
      %374 = vmatpush1.msra.mxu0 %v238
      %375 = vmatprep.subr.mxu0 0.0
      %376 = vmatpush1.msra.mxu0 %v239
      %377 = vmatprep.subr.mxu0 0.0
      %378 = vmatpush1.msra.mxu0 %v240
      %379 = vmatprep.subr.mxu0 0.0
      %380 = vmatpush1.msra.mxu0 %v241
      %381 = vmatprep.subr.mxu0 0.0
      %382 = vmatpush1.msra.mxu0 %v242
      %383 = vmatprep.subr.mxu0 0.0
      %384 = vmatpush1.msra.mxu0 %v243
      %385 = vmatprep.subr.mxu0 0.0
      %386 = vmatpush1.msra.mxu0 %v244
      %387 = vmatprep.subr.mxu0 0.0
      %388 = vmatpush1.msra.mxu0 %v245
      %389 = vmatprep.subr.mxu0 0.0
      %390 = vmatpush1.msra.mxu0 %v246
      %391 = vmatprep.subr.mxu0 0.0
      %392 = vmatpush1.msra.mxu0 %v247
      %393 = vmatprep.subr.mxu0 0.0
      %394 = vmatpush1.msra.mxu0 %v248
      %395 = vmatprep.mubr.f32.mxu0 %v180
      %396 = vmatmul.mubr.f32.gmra.mrb[0].mxu0 %v179
      %v397 = vpop.f32.mrb[0].mxu0
      %v398 = vadd.f32 %v323, %v397
      %v399 = vpop.f32.mrb[0].mxu0
      %400 = vmatprep.mubr.f32.mxu0 %v184
      %401 = vmatmul.mubr.f32.gmra.mrb[0].mxu0 %v183
      %v402 = vpop.f32.mrb[0].mxu0
      %v403 = vadd.f32 %v328, %v402
      %v404 = vpop.f32.mrb[0].mxu0
      %405 = vdwg.mxu0
      %v406 = vmax.f32 %v398, 0.0
      %v407 = vmax.f32 %v403, 0.0
      %408 = vst [vmem:[%s175] sm:$0xff] %v406
      %409 = vst [vmem:[%s175 + $0x8] sm:$0xff] %v407
      %s410 = smul.u32 2, %s14
      %p411 = scmp.lt.s32.totalorder %s410, 3
      %s412 = scalar_select %p411, %s410, 3
      %s413 = smul.addr %s412, 8
      %s414 = scalar_lea.vmem %s3, %s413
      // Predicated region
      $region33: #{generator1_forward.26} parent=31 // pred_check
        %p415 = pneg %p100
      $region34: #{generator1_forward.26} parent=31 // pred_check_branch
        %417 = sbr.rel (%p415) target = $region36
      $region35: #{generator1_forward.26} parent=31 // pred_region
        %s418 = smul.u32 2, %s14
      $region36: #{generator1_forward.26} parent=31 // pred_fallthru
        _
    $region32: #{generator1_forward.26} parent=5 // pred_fallthru
      _
    %p419 = scmp.le.s32.totalorder 2, %s9
    // Predicated region
    $region37: #{generator1_forward.26} parent=5 // pred_check
      %p420 = pneg %p419
    $region38: #{generator1_forward.26} parent=5 // pred_check_branch
      %422 = sbr.rel (%p420) target = $region40
    $region39: #{generator1_forward.26} parent=5 // pred_region
      %s423 = ssub.s32 %s9, 2
      // Predicated region
      $region41: #{generator1_forward.26} parent=39 // pred_check
        %p424 = pneg %p106
      $region42: #{generator1_forward.26} parent=39 // pred_check_branch
        %426 = sbr.rel (%p424) target = $region44
      $region43: #{generator1_forward.26} parent=39 // pred_region
        %s427 = smul.u32 2, %s15
        %p428 = scmp.lt.s32.totalorder %s427, 3
        %s429 = scalar_select %p428, %s427, 3
        %s430 = smul.addr %s429, 8
        %s431 = scalar_lea.vmem %s3, %s430
      $region44: #{generator1_forward.26} parent=39 // pred_fallthru
        _
    $region40: #{generator1_forward.26} parent=5 // pred_fallthru
      _
  $region6: #{generator1_forward.26} parent=0 // loop_footer
    %s13 = sadd.s32 1, %s9
  $region7: #{generator1_forward.26} parent=0 // loop_footer_branch
    %8 = sbr.rel target = $region3
  $region8: #{generator1_forward.26} parent=0 // loop_exit
    _

// kernel: generator1_forward.25
$region0: #{generator1_forward.25}
  #allocation0 [shape = 'u32[]', space=smem, size = 0x4, offset = 0x4, fixed_abs, tag = 'smem constant byte address 0x4 - core index']
  #allocation1 [shape = 'u32[144,128]{1,0:T(1,128)}', space=vmem, size = 0x12000, scoped, tag = 'internal scratch']
  %s0 = inlined_call_operand.vmem [shape: f32[32,256], index: 0, kind: input, shape index: {}]
  %s1 = inlined_call_operand.vmem [shape: f32[256,512], index: 1, kind: input, shape index: {}]
  %s2 = inlined_call_operand.vmem [shape: f32[1,512], index: 2, kind: input, shape index: {}]
  %s3 = inlined_call_operand.vmem [shape: f32[32,512], index: 3, kind: output, shape index: {}]
  %s4 = sld [smem:[#allocation0]]
  $region45: #{generator1_forward.25} parent=0
    _
  %s6 = ssub.s32 1, %s4
  %s7 = scalar_select 0, %s6, %s4
  loop: start=0, step=1, limit=4
  $region2: #{generator1_forward.25} parent=0 // loop_pre_header
    _
  $region3: #{generator1_forward.25} parent=0 // loop_header
    %s9 = sphi 0, %s13
    %p10 = scmp.ge.s32.totalorder %s9, 4
    %s19 = sphi 0, %s21
    %s22 = sphi 0, %s19
    %s23 = sphi 0, %s22
    %s39 = sphi 0, %s23
    %s43 = sphi 0, %s43
    %s45 = sphi 0, %s43
    %s46 = sphi 0, %s45
    %s60 = sphi 0, %s46
    %s64 = sphi 0, %s64
    %s66 = sphi 0, %s64
    %s67 = sphi 0, %s66
    %s81 = sphi 0, %s67
    %s87 = sphi 0, %s89
    %s90 = sphi 0, %s87
    %s91 = sphi 0, %s90
    %s107 = sphi 0, %s91
  $region4: #{generator1_forward.25} parent=0 // loop_header_branch
    %12 = sbr.rel (%p10) target = $region8
  $region5: #{generator1_forward.25} parent=0 // loop_body
    %s14 = ssub.s32 %s9, 1
    %s15 = ssub.s32 %s9, 2
    %s16 = sadd.s32 %s9, 1
    %s17 = ssub.s32 %s9, %s16
    %p18 = scmp.eq.s32.totalorder %s17, 0
    %s20 = sadd.s32 %s19, 1
    %s21 = scalar_select %p18, %s19, %s20
    %p24 = pneg %p18
    %p25 = scmp.eq.s32.totalorder %s9, 1
    %p26 = por %p24, %p25
    %p27 = scmp.ne.s32.totalorder %s19, %s22
    %p28 = scmp.eq.s32.totalorder %s9, 0
    %p29 = por %p27, %p28
    %p30 = scmp.ne.s32.totalorder %s19, %s22
    %p31 = scmp.eq.s32.totalorder %s14, 1
    %p32 = por %p30, %p31
    %p33 = scmp.ne.s32.totalorder %s22, %s23
    %p34 = scmp.eq.s32.totalorder %s14, 0
    %p35 = por %p33, %p34
    %p36 = scmp.ne.s32.totalorder %s22, %s23
    %p37 = scmp.eq.s32.totalorder %s15, 1
    %p38 = por %p36, %p37
    %p40 = scmp.ne.s32.totalorder %s23, %s39
    %p41 = scmp.eq.s32.totalorder %s15, 0
    %p42 = por %p40, %p41
    %s44 = sadd.s32 %s43, 1
    %p47 = scmp.eq.s32.totalorder %s9, 1
    %p48 = scmp.ne.s32.totalorder %s43, %s45
    %p49 = scmp.eq.s32.totalorder %s9, 0
    %p50 = por %p48, %p49
    %p51 = scmp.ne.s32.totalorder %s43, %s45
    %p52 = scmp.eq.s32.totalorder %s14, 1
    %p53 = por %p51, %p52
    %p54 = scmp.ne.s32.totalorder %s45, %s46
    %p55 = scmp.eq.s32.totalorder %s14, 0
    %p56 = por %p54, %p55
    %p57 = scmp.ne.s32.totalorder %s45, %s46
    %p58 = scmp.eq.s32.totalorder %s15, 1
    %p59 = por %p57, %p58
    %p61 = scmp.ne.s32.totalorder %s46, %s60
    %p62 = scmp.eq.s32.totalorder %s15, 0
    %p63 = por %p61, %p62
    %s65 = sadd.s32 %s64, 1
    %p68 = scmp.eq.s32.totalorder %s9, 1
    %p69 = scmp.ne.s32.totalorder %s64, %s66
    %p70 = scmp.eq.s32.totalorder %s9, 0
    %p71 = por %p69, %p70
    %p72 = scmp.ne.s32.totalorder %s64, %s66
    %p73 = scmp.eq.s32.totalorder %s14, 1
    %p74 = por %p72, %p73
    %p75 = scmp.ne.s32.totalorder %s66, %s67
    %p76 = scmp.eq.s32.totalorder %s14, 0
    %p77 = por %p75, %p76
    %p78 = scmp.ne.s32.totalorder %s66, %s67
    %p79 = scmp.eq.s32.totalorder %s15, 1
    %p80 = por %p78, %p79
    %p82 = scmp.ne.s32.totalorder %s67, %s81
    %p83 = scmp.eq.s32.totalorder %s15, 0
    %p84 = por %p82, %p83
    %s85 = ssub.s32 %s9, %s16
    %p86 = scmp.eq.s32.totalorder %s85, 0
    %s88 = sadd.s32 %s87, 1
    %s89 = scalar_select %p86, %s87, %s88
    %p92 = pneg %p86
    %p93 = scmp.eq.s32.totalorder %s9, 1
    %p94 = por %p92, %p93
    %p95 = scmp.ne.s32.totalorder %s87, %s90
    %p96 = scmp.eq.s32.totalorder %s9, 0
    %p97 = por %p95, %p96
    %p98 = scmp.ne.s32.totalorder %s87, %s90
    %p99 = scmp.eq.s32.totalorder %s14, 1
    %p100 = por %p98, %p99
    %p101 = scmp.ne.s32.totalorder %s90, %s91
    %p102 = scmp.eq.s32.totalorder %s14, 0
    %p103 = por %p101, %p102
    %p104 = scmp.ne.s32.totalorder %s90, %s91
    %p105 = scmp.eq.s32.totalorder %s15, 1
    %p106 = por %p104, %p105
    %p108 = scmp.ne.s32.totalorder %s91, %s107
    %p109 = scmp.eq.s32.totalorder %s15, 0
    %p110 = por %p108, %p109
    %p111 = scmp.le.s32.totalorder 1, %s9
    %p112 = scmp.lt.s32.totalorder %s9, 3
    %p113 = pnand %p111, %p112
    %p114 = pneg %p113
    // Predicated region
    $region9: #{generator1_forward.25} parent=5 // pred_check
      _
    $region10: #{generator1_forward.25} parent=5 // pred_check_branch
      %116 = sbr.rel (%p113) target = $region12
    $region11: #{generator1_forward.25} parent=5 // pred_region
      %s117 = ssub.s32 %s9, 1
      // Predicated region
      $region13: #{generator1_forward.25} parent=11 // pred_check
        %p118 = pneg %p56
      $region14: #{generator1_forward.25} parent=11 // pred_check_branch
        %120 = sbr.rel (%p118) target = $region16
      $region15: #{generator1_forward.25} parent=11 // pred_region
        _
      $region16: #{generator1_forward.25} parent=11 // pred_fallthru
        _
      // Predicated region
      $region17: #{generator1_forward.25} parent=11 // pred_check
        %p121 = pneg %p77
      $region18: #{generator1_forward.25} parent=11 // pred_check_branch
        %123 = sbr.rel (%p121) target = $region20
      $region19: #{generator1_forward.25} parent=11 // pred_region
        _
      $region20: #{generator1_forward.25} parent=11 // pred_fallthru
        _
    $region12: #{generator1_forward.25} parent=5 // pred_fallthru
      _
    %p124 = scmp.lt.s32.totalorder %s9, 2
    // Predicated region
    $region21: #{generator1_forward.25} parent=5 // pred_check
      %p125 = pneg %p124
    $region22: #{generator1_forward.25} parent=5 // pred_check_branch
      %127 = sbr.rel (%p125) target = $region24
    $region23: #{generator1_forward.25} parent=5 // pred_region
      // Predicated region
      $region25: #{generator1_forward.25} parent=23 // pred_check
        %p128 = pneg %p29
      $region26: #{generator1_forward.25} parent=23 // pred_check_branch
        %130 = sbr.rel (%p128) target = $region28
      $region27: #{generator1_forward.25} parent=23 // pred_region
        %s131 = smul.u32 2, %s9
        %p132 = scmp.lt.s32.totalorder %s131, 3
        %s133 = scalar_select %p132, %s131, 3
        %s134 = smul.addr %s133, 2
        %s135 = smul.addr %s134, 8
        %s136 = scalar_lea.vmem %s0, %s135
        %s137 = smul.u32 2, %s9
      $region28: #{generator1_forward.25} parent=23 // pred_fallthru
        _
    $region24: #{generator1_forward.25} parent=5 // pred_fallthru
      _
    %p138 = scmp.le.s32.totalorder 1, %s9
    %p139 = scmp.lt.s32.totalorder %s9, 3
    %p140 = pnand %p138, %p139
    %p141 = pneg %p140
    // Predicated region
    $region29: #{generator1_forward.25} parent=5 // pred_check
      _
    $region30: #{generator1_forward.25} parent=5 // pred_check_branch
      %143 = sbr.rel (%p140) target = $region32
    $region31: #{generator1_forward.25} parent=5 // pred_region
      %s144 = ssub.s32 %s9, 1
      %s145 = smul.u32 2, %s14
      %p146 = scmp.lt.s32.totalorder %s145, 3
      %s147 = scalar_select %p146, %s145, 3
      %s148 = smul.addr %s147, 2
      %s149 = smul.addr %s148, 8
      %s150 = scalar_lea.vmem %s0, %s149
      %p151 = pneg %p35
      %p152 = pneg %p32
      %p153 = pneg %p56
      %p154 = pneg %p53
      %p155 = pneg %p77
      %p156 = pneg %p74
      %p157 = pneg %p103
      %p158 = pneg %p100
      %s159 = smul.u32 2, %s14
      %p160 = scmp.lt.s32.totalorder %s159, 3
      %s161 = scalar_select %p160, %s159, 3
      %s162 = smul.addr %s161, 4
      %s163 = smul.addr %s162, 8
      %s164 = scalar_lea.vmem %s3, %s163
      %s165 = smul.u32 2, %s14
      %p166 = scmp.lt.s32.totalorder %s165, 3
      %s167 = scalar_select %p166, %s165, 3
      %s168 = smul.addr %s167, 2
      %s169 = smul.addr %s168, 8
      %s170 = scalar_lea.vmem %s0, %s169
      %s171 = smul.u32 2, %s14
      %s172 = smul.u32 2, %s14
      %p173 = scmp.lt.s32.totalorder %s172, 3
      %s174 = scalar_select %p173, %s172, 3
      %s175 = smul.addr %s174, 4
      %s176 = smul.addr %s175, 8
      %s177 = scalar_lea.vmem %s3, %s176
      %s178 = smul.u32 2, %s14
      %v179 = vld [vmem:[%s170] sm:$0xff]
      %v180 = vld [vmem:[%s170 + $0x8] sm:$0xff]
      %v181 = vld [vmem:[%s170 + $0x10] sm:$0xff]
      %v182 = vld [vmem:[%s170 + $0x18] sm:$0xff]
      %v183 = vld [vmem:[%s1] sm:$0xff]
      %v184 = vld [vmem:[%s1 + $0x8] sm:$0xff]
      %v185 = vld [vmem:[%s1 + $0x10] sm:$0xff]
      %v186 = vld [vmem:[%s1 + $0x18] sm:$0xff]
      %v187 = vld [vmem:[%s1 + $0x20] sm:$0xff]
      %v188 = vld [vmem:[%s1 + $0x28] sm:$0xff]
      %v189 = vld [vmem:[%s1 + $0x30] sm:$0xff]
      %v190 = vld [vmem:[%s1 + $0x38] sm:$0xff]
      %v191 = vld [vmem:[%s1 + $0x40] sm:$0xff]
      %v192 = vld [vmem:[%s1 + $0x48] sm:$0xff]
      %v193 = vld [vmem:[%s1 + $0x50] sm:$0xff]
      %v194 = vld [vmem:[%s1 + $0x58] sm:$0xff]
      %v195 = vld [vmem:[%s1 + $0x60] sm:$0xff]
      %v196 = vld [vmem:[%s1 + $0x68] sm:$0xff]
      %v197 = vld [vmem:[%s1 + $0x70] sm:$0xff]
      %v198 = vld [vmem:[%s1 + $0x78] sm:$0xff]
      %v199 = vld [vmem:[%s1 + $0x80] sm:$0xff]
      %v200 = vld [vmem:[%s1 + $0x88] sm:$0xff]
      %v201 = vld [vmem:[%s1 + $0x90] sm:$0xff]
      %v202 = vld [vmem:[%s1 + $0x98] sm:$0xff]
      %v203 = vld [vmem:[%s1 + $0xa0] sm:$0xff]
      %v204 = vld [vmem:[%s1 + $0xa8] sm:$0xff]
      %v205 = vld [vmem:[%s1 + $0xb0] sm:$0xff]
      %v206 = vld [vmem:[%s1 + $0xb8] sm:$0xff]
      %v207 = vld [vmem:[%s1 + $0xc0] sm:$0xff]
      %v208 = vld [vmem:[%s1 + $0xc8] sm:$0xff]
      %v209 = vld [vmem:[%s1 + $0xd0] sm:$0xff]
      %v210 = vld [vmem:[%s1 + $0xd8] sm:$0xff]
      %v211 = vld [vmem:[%s1 + $0xe0] sm:$0xff]
      %v212 = vld [vmem:[%s1 + $0xe8] sm:$0xff]
      %v213 = vld [vmem:[%s1 + $0xf0] sm:$0xff]
      %v214 = vld [vmem:[%s1 + $0xf8] sm:$0xff]
      %v215 = vld [vmem:[%s1 + $0x100] sm:$0xff]
      %v216 = vld [vmem:[%s1 + $0x108] sm:$0xff]
      %v217 = vld [vmem:[%s1 + $0x110] sm:$0xff]
      %v218 = vld [vmem:[%s1 + $0x118] sm:$0xff]
      %v219 = vld [vmem:[%s1 + $0x120] sm:$0xff]
      %v220 = vld [vmem:[%s1 + $0x128] sm:$0xff]
      %v221 = vld [vmem:[%s1 + $0x130] sm:$0xff]
      %v222 = vld [vmem:[%s1 + $0x138] sm:$0xff]
      %v223 = vld [vmem:[%s1 + $0x140] sm:$0xff]
      %v224 = vld [vmem:[%s1 + $0x148] sm:$0xff]
      %v225 = vld [vmem:[%s1 + $0x150] sm:$0xff]
      %v226 = vld [vmem:[%s1 + $0x158] sm:$0xff]
      %v227 = vld [vmem:[%s1 + $0x160] sm:$0xff]
      %v228 = vld [vmem:[%s1 + $0x168] sm:$0xff]
      %v229 = vld [vmem:[%s1 + $0x170] sm:$0xff]
      %v230 = vld [vmem:[%s1 + $0x178] sm:$0xff]
      %v231 = vld [vmem:[%s1 + $0x180] sm:$0xff]
      %v232 = vld [vmem:[%s1 + $0x188] sm:$0xff]
      %v233 = vld [vmem:[%s1 + $0x190] sm:$0xff]
      %v234 = vld [vmem:[%s1 + $0x198] sm:$0xff]
      %v235 = vld [vmem:[%s1 + $0x1a0] sm:$0xff]
      %v236 = vld [vmem:[%s1 + $0x1a8] sm:$0xff]
      %v237 = vld [vmem:[%s1 + $0x1b0] sm:$0xff]
      %v238 = vld [vmem:[%s1 + $0x1b8] sm:$0xff]
      %v239 = vld [vmem:[%s1 + $0x1c0] sm:$0xff]
      %v240 = vld [vmem:[%s1 + $0x1c8] sm:$0xff]
      %v241 = vld [vmem:[%s1 + $0x1d0] sm:$0xff]
      %v242 = vld [vmem:[%s1 + $0x1d8] sm:$0xff]
      %v243 = vld [vmem:[%s1 + $0x1e0] sm:$0xff]
      %v244 = vld [vmem:[%s1 + $0x1e8] sm:$0xff]
      %v245 = vld [vmem:[%s1 + $0x1f0] sm:$0xff]
      %v246 = vld [vmem:[%s1 + $0x1f8] sm:$0xff]
      %v247 = vld [vmem:[%s1 + $0x200] sm:$0xff]
      %v248 = vld [vmem:[%s1 + $0x208] sm:$0xff]
      %v249 = vld [vmem:[%s1 + $0x210] sm:$0xff]
      %v250 = vld [vmem:[%s1 + $0x218] sm:$0xff]
      %v251 = vld [vmem:[%s1 + $0x220] sm:$0xff]
      %v252 = vld [vmem:[%s1 + $0x228] sm:$0xff]
      %v253 = vld [vmem:[%s1 + $0x230] sm:$0xff]
      %v254 = vld [vmem:[%s1 + $0x238] sm:$0xff]
      %v255 = vld [vmem:[%s1 + $0x240] sm:$0xff]
      %v256 = vld [vmem:[%s1 + $0x248] sm:$0xff]
      %v257 = vld [vmem:[%s1 + $0x250] sm:$0xff]
      %v258 = vld [vmem:[%s1 + $0x258] sm:$0xff]
      %v259 = vld [vmem:[%s1 + $0x260] sm:$0xff]
      %v260 = vld [vmem:[%s1 + $0x268] sm:$0xff]
      %v261 = vld [vmem:[%s1 + $0x270] sm:$0xff]
      %v262 = vld [vmem:[%s1 + $0x278] sm:$0xff]
      %v263 = vld [vmem:[%s1 + $0x280] sm:$0xff]
      %v264 = vld [vmem:[%s1 + $0x288] sm:$0xff]
      %v265 = vld [vmem:[%s1 + $0x290] sm:$0xff]
      %v266 = vld [vmem:[%s1 + $0x298] sm:$0xff]
      %v267 = vld [vmem:[%s1 + $0x2a0] sm:$0xff]
      %v268 = vld [vmem:[%s1 + $0x2a8] sm:$0xff]
      %v269 = vld [vmem:[%s1 + $0x2b0] sm:$0xff]
      %v270 = vld [vmem:[%s1 + $0x2b8] sm:$0xff]
      %v271 = vld [vmem:[%s1 + $0x2c0] sm:$0xff]
      %v272 = vld [vmem:[%s1 + $0x2c8] sm:$0xff]
      %v273 = vld [vmem:[%s1 + $0x2d0] sm:$0xff]
      %v274 = vld [vmem:[%s1 + $0x2d8] sm:$0xff]
      %v275 = vld [vmem:[%s1 + $0x2e0] sm:$0xff]
      %v276 = vld [vmem:[%s1 + $0x2e8] sm:$0xff]
      %v277 = vld [vmem:[%s1 + $0x2f0] sm:$0xff]
      %v278 = vld [vmem:[%s1 + $0x2f8] sm:$0xff]
      %v279 = vld [vmem:[%s1 + $0x300] sm:$0xff]
      %v280 = vld [vmem:[%s1 + $0x308] sm:$0xff]
      %v281 = vld [vmem:[%s1 + $0x310] sm:$0xff]
      %v282 = vld [vmem:[%s1 + $0x318] sm:$0xff]
      %v283 = vld [vmem:[%s1 + $0x320] sm:$0xff]
      %v284 = vld [vmem:[%s1 + $0x328] sm:$0xff]
      %v285 = vld [vmem:[%s1 + $0x330] sm:$0xff]
      %v286 = vld [vmem:[%s1 + $0x338] sm:$0xff]
      %v287 = vld [vmem:[%s1 + $0x340] sm:$0xff]
      %v288 = vld [vmem:[%s1 + $0x348] sm:$0xff]
      %v289 = vld [vmem:[%s1 + $0x350] sm:$0xff]
      %v290 = vld [vmem:[%s1 + $0x358] sm:$0xff]
      %v291 = vld [vmem:[%s1 + $0x360] sm:$0xff]
      %v292 = vld [vmem:[%s1 + $0x368] sm:$0xff]
      %v293 = vld [vmem:[%s1 + $0x370] sm:$0xff]
      %v294 = vld [vmem:[%s1 + $0x378] sm:$0xff]
      %v295 = vld [vmem:[%s1 + $0x380] sm:$0xff]
      %v296 = vld [vmem:[%s1 + $0x388] sm:$0xff]
      %v297 = vld [vmem:[%s1 + $0x390] sm:$0xff]
      %v298 = vld [vmem:[%s1 + $0x398] sm:$0xff]
      %v299 = vld [vmem:[%s1 + $0x3a0] sm:$0xff]
      %v300 = vld [vmem:[%s1 + $0x3a8] sm:$0xff]
      %v301 = vld [vmem:[%s1 + $0x3b0] sm:$0xff]
      %v302 = vld [vmem:[%s1 + $0x3b8] sm:$0xff]
      %v303 = vld [vmem:[%s1 + $0x3c0] sm:$0xff]
      %v304 = vld [vmem:[%s1 + $0x3c8] sm:$0xff]
      %v305 = vld [vmem:[%s1 + $0x3d0] sm:$0xff]
      %v306 = vld [vmem:[%s1 + $0x3d8] sm:$0xff]
      %v307 = vld [vmem:[%s1 + $0x3e0] sm:$0xff]
      %v308 = vld [vmem:[%s1 + $0x3e8] sm:$0xff]
      %v309 = vld [vmem:[%s1 + $0x3f0] sm:$0xff]
      %v310 = vld [vmem:[%s1 + $0x3f8] sm:$0xff]
      %v311 = vld [vmem:[%s2] sm:$0xf]
      %v313 = vlaneseq
      %v314 = vshrl.u32 %v313, 7
      %v315 = vsub.s32 0, %v314
      %v316 = vrot.slane %v311, %v315
      %v317 = vlaneseq
      %v318 = vshrl.u32 %v317, 7
      %v319 = vsub.s32 1, %v318
      %v320 = vrot.slane %v311, %v319
      %v321 = vlaneseq
      %v322 = vshrl.u32 %v321, 7
      %v323 = vsub.s32 2, %v322
      %v324 = vrot.slane %v311, %v323
      %v325 = vlaneseq
      %v326 = vshrl.u32 %v325, 7
      %v327 = vsub.s32 3, %v326
      %v328 = vrot.slane %v311, %v327
      %333 = vmatprep.subr.mxu0 %v184
      %334 = vmatpush1.msra.mxu0 %v183
      %335 = vmatprep.subr.mxu0 %v188
      %336 = vmatpush1.msra.mxu0 %v187
      %337 = vmatprep.subr.mxu0 %v192
      %338 = vmatpush1.msra.mxu0 %v191
      %339 = vmatprep.subr.mxu0 %v196
      %340 = vmatpush1.msra.mxu0 %v195
      %341 = vmatprep.subr.mxu0 %v200
      %342 = vmatpush1.msra.mxu0 %v199
      %343 = vmatprep.subr.mxu0 %v204
      %344 = vmatpush1.msra.mxu0 %v203
      %345 = vmatprep.subr.mxu0 %v208
      %346 = vmatpush1.msra.mxu0 %v207
      %347 = vmatprep.subr.mxu0 %v212
      %348 = vmatpush1.msra.mxu0 %v211
      %349 = vmatprep.subr.mxu0 %v216
      %350 = vmatpush1.msra.mxu0 %v215
      %351 = vmatprep.subr.mxu0 %v220
      %352 = vmatpush1.msra.mxu0 %v219
      %353 = vmatprep.subr.mxu0 %v224
      %354 = vmatpush1.msra.mxu0 %v223
      %355 = vmatprep.subr.mxu0 %v228
      %356 = vmatpush1.msra.mxu0 %v227
      %357 = vmatprep.subr.mxu0 %v232
      %358 = vmatpush1.msra.mxu0 %v231
      %359 = vmatprep.subr.mxu0 %v236
      %360 = vmatpush1.msra.mxu0 %v235
      %361 = vmatprep.subr.mxu0 %v240
      %362 = vmatpush1.msra.mxu0 %v239
      %363 = vmatprep.subr.mxu0 %v244
      %364 = vmatpush1.msra.mxu0 %v243
      %365 = vmatprep.subr.mxu0 %v248
      %366 = vmatpush1.msra.mxu0 %v247
      %367 = vmatprep.subr.mxu0 %v252
      %368 = vmatpush1.msra.mxu0 %v251
      %369 = vmatprep.subr.mxu0 %v256
      %370 = vmatpush1.msra.mxu0 %v255
      %371 = vmatprep.subr.mxu0 %v260
      %372 = vmatpush1.msra.mxu0 %v259
      %373 = vmatprep.subr.mxu0 %v264
      %374 = vmatpush1.msra.mxu0 %v263
      %375 = vmatprep.subr.mxu0 %v268
      %376 = vmatpush1.msra.mxu0 %v267
      %377 = vmatprep.subr.mxu0 %v272
      %378 = vmatpush1.msra.mxu0 %v271
      %379 = vmatprep.subr.mxu0 %v276
      %380 = vmatpush1.msra.mxu0 %v275
      %381 = vmatprep.subr.mxu0 %v280
      %382 = vmatpush1.msra.mxu0 %v279
      %383 = vmatprep.subr.mxu0 %v284
      %384 = vmatpush1.msra.mxu0 %v283
      %385 = vmatprep.subr.mxu0 %v288
      %386 = vmatpush1.msra.mxu0 %v287
      %387 = vmatprep.subr.mxu0 %v292
      %388 = vmatpush1.msra.mxu0 %v291
      %389 = vmatprep.subr.mxu0 %v296
      %390 = vmatpush1.msra.mxu0 %v295
      %391 = vmatprep.subr.mxu0 %v300
      %392 = vmatpush1.msra.mxu0 %v299
      %393 = vmatprep.subr.mxu0 %v304
      %394 = vmatpush1.msra.mxu0 %v303
      %395 = vmatprep.subr.mxu0 %v308
      %396 = vmatpush1.msra.mxu0 %v307
      %397 = vmatprep.mubr.f32.mxu0 %v180
      %398 = vmatmul.mubr.f32.gmra.mrb[0].mxu0 %v179
      %v399 = vpop.f32.mrb[0].mxu0
      %v400 = vadd.f32 %v316, %v399
      %v401 = vpop.f32.mrb[0].mxu0
      %v402 = vadd.f32 %v320, %v401
      %403 = vmatprep.mubr.f32.mxu0 %v182
      %404 = vmatmul.mubr.f32.gmra.mrb[0].mxu0 %v181
      %v405 = vpop.f32.mrb[0].mxu0
      %v406 = vadd.f32 %v316, %v405
      %v407 = vpop.f32.mrb[0].mxu0
      %v408 = vadd.f32 %v320, %v407
      %409 = vdwg.mxu0
      %410 = vmatprep.subr.mxu0 %v186
      %411 = vmatpush1.msra.mxu0 %v185
      %412 = vmatprep.subr.mxu0 %v190
      %413 = vmatpush1.msra.mxu0 %v189
      %414 = vmatprep.subr.mxu0 %v194
      %415 = vmatpush1.msra.mxu0 %v193
      %416 = vmatprep.subr.mxu0 %v198
      %417 = vmatpush1.msra.mxu0 %v197
      %418 = vmatprep.subr.mxu0 %v202
      %419 = vmatpush1.msra.mxu0 %v201
      %420 = vmatprep.subr.mxu0 %v206
      %421 = vmatpush1.msra.mxu0 %v205
      %422 = vmatprep.subr.mxu0 %v210
      %423 = vmatpush1.msra.mxu0 %v209
      %424 = vmatprep.subr.mxu0 %v214
      %425 = vmatpush1.msra.mxu0 %v213
      %426 = vmatprep.subr.mxu0 %v218
      %427 = vmatpush1.msra.mxu0 %v217
      %428 = vmatprep.subr.mxu0 %v222
      %429 = vmatpush1.msra.mxu0 %v221
      %430 = vmatprep.subr.mxu0 %v226
      %431 = vmatpush1.msra.mxu0 %v225
      %432 = vmatprep.subr.mxu0 %v230
      %433 = vmatpush1.msra.mxu0 %v229
      %434 = vmatprep.subr.mxu0 %v234
      %435 = vmatpush1.msra.mxu0 %v233
      %436 = vmatprep.subr.mxu0 %v238
      %437 = vmatpush1.msra.mxu0 %v237
      %438 = vmatprep.subr.mxu0 %v242
      %439 = vmatpush1.msra.mxu0 %v241
      %440 = vmatprep.subr.mxu0 %v246
      %441 = vmatpush1.msra.mxu0 %v245
      %442 = vmatprep.subr.mxu0 %v250
      %443 = vmatpush1.msra.mxu0 %v249
      %444 = vmatprep.subr.mxu0 %v254
      %445 = vmatpush1.msra.mxu0 %v253
      %446 = vmatprep.subr.mxu0 %v258
      %447 = vmatpush1.msra.mxu0 %v257
      %448 = vmatprep.subr.mxu0 %v262
      %449 = vmatpush1.msra.mxu0 %v261
      %450 = vmatprep.subr.mxu0 %v266
      %451 = vmatpush1.msra.mxu0 %v265
      %452 = vmatprep.subr.mxu0 %v270
      %453 = vmatpush1.msra.mxu0 %v269
      %454 = vmatprep.subr.mxu0 %v274
      %455 = vmatpush1.msra.mxu0 %v273
      %456 = vmatprep.subr.mxu0 %v278
      %457 = vmatpush1.msra.mxu0 %v277
      %458 = vmatprep.subr.mxu0 %v282
      %459 = vmatpush1.msra.mxu0 %v281
      %460 = vmatprep.subr.mxu0 %v286
      %461 = vmatpush1.msra.mxu0 %v285
      %462 = vmatprep.subr.mxu0 %v290
      %463 = vmatpush1.msra.mxu0 %v289
      %464 = vmatprep.subr.mxu0 %v294
      %465 = vmatpush1.msra.mxu0 %v293
      %466 = vmatprep.subr.mxu0 %v298
      %467 = vmatpush1.msra.mxu0 %v297
      %468 = vmatprep.subr.mxu0 %v302
      %469 = vmatpush1.msra.mxu0 %v301
      %470 = vmatprep.subr.mxu0 %v306
      %471 = vmatpush1.msra.mxu0 %v305
      %472 = vmatprep.subr.mxu0 %v310
      %473 = vmatpush1.msra.mxu0 %v309
      %474 = vmatprep.mubr.f32.mxu0 %v180
      %475 = vmatmul.mubr.f32.gmra.mrb[0].mxu0 %v179
      %v476 = vpop.f32.mrb[0].mxu0
      %v477 = vadd.f32 %v324, %v476
      %v478 = vpop.f32.mrb[0].mxu0
      %v479 = vadd.f32 %v328, %v478
      %480 = vmatprep.mubr.f32.mxu0 %v182
      %481 = vmatmul.mubr.f32.gmra.mrb[0].mxu0 %v181
      %v482 = vpop.f32.mrb[0].mxu0
      %v483 = vadd.f32 %v324, %v482
      %v484 = vpop.f32.mrb[0].mxu0
      %v485 = vadd.f32 %v328, %v484
      %486 = vdwg.mxu0
      %v487 = vmax.f32 %v400, 0.0
      %v488 = vmax.f32 %v402, 0.0
      %v489 = vmax.f32 %v477, 0.0
      %v490 = vmax.f32 %v479, 0.0
      %v491 = vmax.f32 %v406, 0.0
      %v492 = vmax.f32 %v408, 0.0
      %v493 = vmax.f32 %v483, 0.0
      %v494 = vmax.f32 %v485, 0.0
      %495 = vst [vmem:[%s177] sm:$0xff] %v487
      %496 = vst [vmem:[%s177 + $0x8] sm:$0xff] %v488
      %497 = vst [vmem:[%s177 + $0x10] sm:$0xff] %v489
      %498 = vst [vmem:[%s177 + $0x18] sm:$0xff] %v490
      %499 = vst [vmem:[%s177 + $0x20] sm:$0xff] %v491
      %500 = vst [vmem:[%s177 + $0x28] sm:$0xff] %v492
      %501 = vst [vmem:[%s177 + $0x30] sm:$0xff] %v493
      %502 = vst [vmem:[%s177 + $0x38] sm:$0xff] %v494
      %s503 = smul.u32 2, %s14
      %p504 = scmp.lt.s32.totalorder %s503, 3
      %s505 = scalar_select %p504, %s503, 3
      %s506 = smul.addr %s505, 4
      %s507 = smul.addr %s506, 8
      %s508 = scalar_lea.vmem %s3, %s507
      // Predicated region
      $region33: #{generator1_forward.25} parent=31 // pred_check
        %p509 = pneg %p100
      $region34: #{generator1_forward.25} parent=31 // pred_check_branch
        %511 = sbr.rel (%p509) target = $region36
      $region35: #{generator1_forward.25} parent=31 // pred_region
        %s512 = smul.u32 2, %s14
      $region36: #{generator1_forward.25} parent=31 // pred_fallthru
        _
    $region32: #{generator1_forward.25} parent=5 // pred_fallthru
      _
    %p513 = scmp.le.s32.totalorder 2, %s9
    // Predicated region
    $region37: #{generator1_forward.25} parent=5 // pred_check
      %p514 = pneg %p513
    $region38: #{generator1_forward.25} parent=5 // pred_check_branch
      %516 = sbr.rel (%p514) target = $region40
    $region39: #{generator1_forward.25} parent=5 // pred_region
      %s517 = ssub.s32 %s9, 2
      // Predicated region
      $region41: #{generator1_forward.25} parent=39 // pred_check
        %p518 = pneg %p106
      $region42: #{generator1_forward.25} parent=39 // pred_check_branch
        %520 = sbr.rel (%p518) target = $region44
      $region43: #{generator1_forward.25} parent=39 // pred_region
        %s521 = smul.u32 2, %s15
        %p522 = scmp.lt.s32.totalorder %s521, 3
        %s523 = scalar_select %p522, %s521, 3
        %s524 = smul.addr %s523, 4
        %s525 = smul.addr %s524, 8
        %s526 = scalar_lea.vmem %s3, %s525
      $region44: #{generator1_forward.25} parent=39 // pred_fallthru
        _
    $region40: #{generator1_forward.25} parent=5 // pred_fallthru
      _
  $region6: #{generator1_forward.25} parent=0 // loop_footer
    %s13 = sadd.s32 1, %s9
  $region7: #{generator1_forward.25} parent=0 // loop_footer_branch
    %8 = sbr.rel target = $region3
  $region8: #{generator1_forward.25} parent=0 // loop_exit
    _

// kernel: custom-call
$region0: #{custom-call}
  %s0 = inlined_call_operand.vmem [shape: f32[32,4], index: 0, kind: input, shape index: {}]
  %s1 = inlined_call_operand.vmem [shape: f32[32,4], index: 1, kind: input, shape index: {}]
  %s2 = inlined_call_operand.vmem [shape: c64[32,4], index: 2, kind: output, shape index: {}]
  %s4 = scalar_lea.vmem %s2, 32
  %v5 = vld [vmem:[%s0] sm:$0xff]
  %6 = vst [vmem:[%s2] sm:$0xff] %v5
  %s7 = scalar_lea.vmem %s2, 8
  %s8 = scalar_lea.vmem %s0, 8
  %v9 = vld [vmem:[%s8] sm:$0xff]
  %10 = vst [vmem:[%s7] sm:$0xff] %v9
  %s11 = scalar_lea.vmem %s2, 16
  %s12 = scalar_lea.vmem %s0, 16
  %v13 = vld [vmem:[%s12] sm:$0xff]
  %14 = vst [vmem:[%s11] sm:$0xff] %v13
  %s15 = scalar_lea.vmem %s2, 24
  %s16 = scalar_lea.vmem %s0, 24
  %v17 = vld [vmem:[%s16] sm:$0xff]
  %18 = vst [vmem:[%s15] sm:$0xff] %v17
  %v19 = vld [vmem:[%s1] sm:$0xff]
  %20 = vst [vmem:[%s4] sm:$0xff] %v19
  %s21 = scalar_lea.vmem %s4, 8
  %s22 = scalar_lea.vmem %s1, 8
  %v23 = vld [vmem:[%s22] sm:$0xff]
  %24 = vst [vmem:[%s21] sm:$0xff] %v23
  %s25 = scalar_lea.vmem %s4, 16
  %s26 = scalar_lea.vmem %s1, 16
  %v27 = vld [vmem:[%s26] sm:$0xff]
  %28 = vst [vmem:[%s25] sm:$0xff] %v27
  %s29 = scalar_lea.vmem %s4, 24
  %s30 = scalar_lea.vmem %s1, 24
  %v31 = vld [vmem:[%s30] sm:$0xff]
  %32 = vst [vmem:[%s29] sm:$0xff] %v31

// kernel: generator1_forward.27
$region0: #{generator1_forward.27}
  #allocation0 [shape = 'u32[]', space=smem, size = 0x4, offset = 0x4, fixed_abs, tag = 'smem constant byte address 0x4 - core index']
  #allocation1 [shape = 'u32[144,128]{1,0:T(1,128)}', space=vmem, size = 0x12000, scoped, tag = 'internal scratch']
  %s0 = inlined_call_operand.vmem [shape: f32[32,128], index: 0, kind: input, shape index: {}]
  %s1 = inlined_call_operand.vmem [shape: f32[128,4], index: 1, kind: input, shape index: {}]
  %s2 = inlined_call_operand.vmem [shape: f32[1,4], index: 2, kind: input, shape index: {}]
  %s3 = inlined_call_operand.vmem [shape: f32[32,4], index: 3, kind: output, shape index: {0}]
  %s4 = inlined_call_operand.vmem [shape: f32[32,4], index: 4, kind: output, shape index: {1}]
  %5 = xla_tuple %s3, %s4
  %s6 = sld [smem:[#allocation0]]
  $region53: #{generator1_forward.27} parent=0
    _
  %s8 = ssub.s32 1, %s6
  %s9 = scalar_select 0, %s8, %s6
  loop: start=0, step=1, limit=4
  $region2: #{generator1_forward.27} parent=0 // loop_pre_header
    _
  $region3: #{generator1_forward.27} parent=0 // loop_header
    %s11 = sphi 0, %s15
    %p12 = scmp.ge.s32.totalorder %s11, 4
    %s21 = sphi 0, %s23
    %s24 = sphi 0, %s21
    %s25 = sphi 0, %s24
    %s41 = sphi 0, %s25
    %s45 = sphi 0, %s45
    %s47 = sphi 0, %s45
    %s48 = sphi 0, %s47
    %s62 = sphi 0, %s48
    %s66 = sphi 0, %s66
    %s68 = sphi 0, %s66
    %s69 = sphi 0, %s68
    %s83 = sphi 0, %s69
    %s89 = sphi 0, %s91
    %s92 = sphi 0, %s89
    %s93 = sphi 0, %s92
    %s109 = sphi 0, %s93
    %s115 = sphi 0, %s117
    %s118 = sphi 0, %s115
    %s119 = sphi 0, %s118
    %s135 = sphi 0, %s119
  $region4: #{generator1_forward.27} parent=0 // loop_header_branch
    %14 = sbr.rel (%p12) target = $region8
  $region5: #{generator1_forward.27} parent=0 // loop_body
    %s16 = ssub.s32 %s11, 1
    %s17 = ssub.s32 %s11, 2
    %s18 = sadd.s32 %s11, 1
    %s19 = ssub.s32 %s11, %s18
    %p20 = scmp.eq.s32.totalorder %s19, 0
    %s22 = sadd.s32 %s21, 1
    %s23 = scalar_select %p20, %s21, %s22
    %p26 = pneg %p20
    %p27 = scmp.eq.s32.totalorder %s11, 1
    %p28 = por %p26, %p27
    %p29 = scmp.ne.s32.totalorder %s21, %s24
    %p30 = scmp.eq.s32.totalorder %s11, 0
    %p31 = por %p29, %p30
    %p32 = scmp.ne.s32.totalorder %s21, %s24
    %p33 = scmp.eq.s32.totalorder %s16, 1
    %p34 = por %p32, %p33
    %p35 = scmp.ne.s32.totalorder %s24, %s25
    %p36 = scmp.eq.s32.totalorder %s16, 0
    %p37 = por %p35, %p36
    %p38 = scmp.ne.s32.totalorder %s24, %s25
    %p39 = scmp.eq.s32.totalorder %s17, 1
    %p40 = por %p38, %p39
    %p42 = scmp.ne.s32.totalorder %s25, %s41
    %p43 = scmp.eq.s32.totalorder %s17, 0
    %p44 = por %p42, %p43
    %s46 = sadd.s32 %s45, 1
    %p49 = scmp.eq.s32.totalorder %s11, 1
    %p50 = scmp.ne.s32.totalorder %s45, %s47
    %p51 = scmp.eq.s32.totalorder %s11, 0
    %p52 = por %p50, %p51
    %p53 = scmp.ne.s32.totalorder %s45, %s47
    %p54 = scmp.eq.s32.totalorder %s16, 1
    %p55 = por %p53, %p54
    %p56 = scmp.ne.s32.totalorder %s47, %s48
    %p57 = scmp.eq.s32.totalorder %s16, 0
    %p58 = por %p56, %p57
    %p59 = scmp.ne.s32.totalorder %s47, %s48
    %p60 = scmp.eq.s32.totalorder %s17, 1
    %p61 = por %p59, %p60
    %p63 = scmp.ne.s32.totalorder %s48, %s62
    %p64 = scmp.eq.s32.totalorder %s17, 0
    %p65 = por %p63, %p64
    %s67 = sadd.s32 %s66, 1
    %p70 = scmp.eq.s32.totalorder %s11, 1
    %p71 = scmp.ne.s32.totalorder %s66, %s68
    %p72 = scmp.eq.s32.totalorder %s11, 0
    %p73 = por %p71, %p72
    %p74 = scmp.ne.s32.totalorder %s66, %s68
    %p75 = scmp.eq.s32.totalorder %s16, 1
    %p76 = por %p74, %p75
    %p77 = scmp.ne.s32.totalorder %s68, %s69
    %p78 = scmp.eq.s32.totalorder %s16, 0
    %p79 = por %p77, %p78
    %p80 = scmp.ne.s32.totalorder %s68, %s69
    %p81 = scmp.eq.s32.totalorder %s17, 1
    %p82 = por %p80, %p81
    %p84 = scmp.ne.s32.totalorder %s69, %s83
    %p85 = scmp.eq.s32.totalorder %s17, 0
    %p86 = por %p84, %p85
    %s87 = ssub.s32 %s11, %s18
    %p88 = scmp.eq.s32.totalorder %s87, 0
    %s90 = sadd.s32 %s89, 1
    %s91 = scalar_select %p88, %s89, %s90
    %p94 = pneg %p88
    %p95 = scmp.eq.s32.totalorder %s11, 1
    %p96 = por %p94, %p95
    %p97 = scmp.ne.s32.totalorder %s89, %s92
    %p98 = scmp.eq.s32.totalorder %s11, 0
    %p99 = por %p97, %p98
    %p100 = scmp.ne.s32.totalorder %s89, %s92
    %p101 = scmp.eq.s32.totalorder %s16, 1
    %p102 = por %p100, %p101
    %p103 = scmp.ne.s32.totalorder %s92, %s93
    %p104 = scmp.eq.s32.totalorder %s16, 0
    %p105 = por %p103, %p104
    %p106 = scmp.ne.s32.totalorder %s92, %s93
    %p107 = scmp.eq.s32.totalorder %s17, 1
    %p108 = por %p106, %p107
    %p110 = scmp.ne.s32.totalorder %s93, %s109
    %p111 = scmp.eq.s32.totalorder %s17, 0
    %p112 = por %p110, %p111
    %s113 = ssub.s32 %s11, %s18
    %p114 = scmp.eq.s32.totalorder %s113, 0
    %s116 = sadd.s32 %s115, 1
    %s117 = scalar_select %p114, %s115, %s116
    %p120 = pneg %p114
    %p121 = scmp.eq.s32.totalorder %s11, 1
    %p122 = por %p120, %p121
    %p123 = scmp.ne.s32.totalorder %s115, %s118
    %p124 = scmp.eq.s32.totalorder %s11, 0
    %p125 = por %p123, %p124
    %p126 = scmp.ne.s32.totalorder %s115, %s118
    %p127 = scmp.eq.s32.totalorder %s16, 1
    %p128 = por %p126, %p127
    %p129 = scmp.ne.s32.totalorder %s118, %s119
    %p130 = scmp.eq.s32.totalorder %s16, 0
    %p131 = por %p129, %p130
    %p132 = scmp.ne.s32.totalorder %s118, %s119
    %p133 = scmp.eq.s32.totalorder %s17, 1
    %p134 = por %p132, %p133
    %p136 = scmp.ne.s32.totalorder %s119, %s135
    %p137 = scmp.eq.s32.totalorder %s17, 0
    %p138 = por %p136, %p137
    %p139 = scmp.le.s32.totalorder 1, %s11
    %p140 = scmp.lt.s32.totalorder %s11, 3
    %p141 = pnand %p139, %p140
    %p142 = pneg %p141
    // Predicated region
    $region9: #{generator1_forward.27} parent=5 // pred_check
      _
    $region10: #{generator1_forward.27} parent=5 // pred_check_branch
      %144 = sbr.rel (%p141) target = $region12
    $region11: #{generator1_forward.27} parent=5 // pred_region
      %s145 = ssub.s32 %s11, 1
      // Predicated region
      $region13: #{generator1_forward.27} parent=11 // pred_check
        %p146 = pneg %p58
      $region14: #{generator1_forward.27} parent=11 // pred_check_branch
        %148 = sbr.rel (%p146) target = $region16
      $region15: #{generator1_forward.27} parent=11 // pred_region
        _
      $region16: #{generator1_forward.27} parent=11 // pred_fallthru
        _
      // Predicated region
      $region17: #{generator1_forward.27} parent=11 // pred_check
        %p149 = pneg %p79
      $region18: #{generator1_forward.27} parent=11 // pred_check_branch
        %151 = sbr.rel (%p149) target = $region20
      $region19: #{generator1_forward.27} parent=11 // pred_region
        _
      $region20: #{generator1_forward.27} parent=11 // pred_fallthru
        _
    $region12: #{generator1_forward.27} parent=5 // pred_fallthru
      _
    %p152 = scmp.lt.s32.totalorder %s11, 2
    // Predicated region
    $region21: #{generator1_forward.27} parent=5 // pred_check
      %p153 = pneg %p152
    $region22: #{generator1_forward.27} parent=5 // pred_check_branch
      %155 = sbr.rel (%p153) target = $region24
    $region23: #{generator1_forward.27} parent=5 // pred_region
      // Predicated region
      $region25: #{generator1_forward.27} parent=23 // pred_check
        %p156 = pneg %p31
      $region26: #{generator1_forward.27} parent=23 // pred_check_branch
        %158 = sbr.rel (%p156) target = $region28
      $region27: #{generator1_forward.27} parent=23 // pred_region
        %s159 = smul.u32 2, %s11
        %p160 = scmp.lt.s32.totalorder %s159, 3
        %s161 = scalar_select %p160, %s159, 3
        %s162 = smul.addr %s161, 8
        %s163 = scalar_lea.vmem %s0, %s162
        %s164 = smul.u32 2, %s11
      $region28: #{generator1_forward.27} parent=23 // pred_fallthru
        _
    $region24: #{generator1_forward.27} parent=5 // pred_fallthru
      _
    %p165 = scmp.le.s32.totalorder 1, %s11
    %p166 = scmp.lt.s32.totalorder %s11, 3
    %p167 = pnand %p165, %p166
    %p168 = pneg %p167
    // Predicated region
    $region29: #{generator1_forward.27} parent=5 // pred_check
      _
    $region30: #{generator1_forward.27} parent=5 // pred_check_branch
      %170 = sbr.rel (%p167) target = $region32
    $region31: #{generator1_forward.27} parent=5 // pred_region
      %s171 = ssub.s32 %s11, 1
      %s172 = smul.u32 2, %s16
      %p173 = scmp.lt.s32.totalorder %s172, 3
      %s174 = scalar_select %p173, %s172, 3
      %s175 = smul.addr %s174, 8
      %s176 = scalar_lea.vmem %s0, %s175
      %p177 = pneg %p37
      %p178 = pneg %p34
      %p179 = pneg %p58
      %p180 = pneg %p55
      %p181 = pneg %p79
      %p182 = pneg %p76
      %p183 = pneg %p105
      %p184 = pneg %p102
      %s185 = smul.u32 2, %s16
      %p186 = scmp.lt.s32.totalorder %s185, 3
      %s187 = scalar_select %p186, %s185, 3
      %s188 = smul.addr %s187, 8
      %s189 = scalar_lea.vmem %s3, %s188
      %p190 = pneg %p131
      %p191 = pneg %p128
      %s192 = smul.u32 2, %s16
      %p193 = scmp.lt.s32.totalorder %s192, 3
      %s194 = scalar_select %p193, %s192, 3
      %s195 = smul.addr %s194, 8
      %s196 = scalar_lea.vmem %s4, %s195
      %s197 = smul.u32 2, %s16
      %p198 = scmp.lt.s32.totalorder %s197, 3
      %s199 = scalar_select %p198, %s197, 3
      %s200 = smul.addr %s199, 8
      %s201 = scalar_lea.vmem %s0, %s200
      %s202 = smul.u32 2, %s16
      %s203 = smul.u32 2, %s16
      %p204 = scmp.lt.s32.totalorder %s203, 3
      %s205 = scalar_select %p204, %s203, 3
      %s206 = smul.addr %s205, 8
      %s207 = scalar_lea.vmem %s3, %s206
      %s208 = smul.u32 2, %s16
      %s209 = smul.u32 2, %s16
      %p210 = scmp.lt.s32.totalorder %s209, 3
      %s211 = scalar_select %p210, %s209, 3
      %s212 = smul.addr %s211, 8
      %s213 = scalar_lea.vmem %s4, %s212
      %s214 = smul.u32 2, %s16
      %v215 = vld [vmem:[%s201] sm:$0xff]
      %v216 = vld [vmem:[%s201 + $0x8] sm:$0xff]
      %v217 = vld [vmem:[%s1] sm:$0xff]
      %v218 = vld [vmem:[%s1 + $0x8] sm:$0xff]
      %v219 = vld [vmem:[%s1 + $0x10] sm:$0xff]
      %v220 = vld [vmem:[%s1 + $0x18] sm:$0xff]
      %v221 = vld [vmem:[%s1 + $0x20] sm:$0xff]
      %v222 = vld [vmem:[%s1 + $0x28] sm:$0xff]
      %v223 = vld [vmem:[%s1 + $0x30] sm:$0xff]
      %v224 = vld [vmem:[%s1 + $0x38] sm:$0xff]
      %v225 = vld [vmem:[%s1 + $0x40] sm:$0xff]
      %v226 = vld [vmem:[%s1 + $0x48] sm:$0xff]
      %v227 = vld [vmem:[%s1 + $0x50] sm:$0xff]
      %v228 = vld [vmem:[%s1 + $0x58] sm:$0xff]
      %v229 = vld [vmem:[%s1 + $0x60] sm:$0xff]
      %v230 = vld [vmem:[%s1 + $0x68] sm:$0xff]
      %v231 = vld [vmem:[%s1 + $0x70] sm:$0xff]
      %v232 = vld [vmem:[%s1 + $0x78] sm:$0xff]
      %v233 = vld [vmem:[%s2] sm:$0x1]
      %v235 = vlaneseq
      %v236 = vshrl.u32 %v235, 7
      %v237 = vsub.s32 0, %v236
      %v238 = vrot.slane %v233, %v237
      %240 = vmatprep.subr.mxu0 0.0
      %241 = vmatpush1.msra.mxu0 %v217
      %242 = vmatprep.subr.mxu0 0.0
      %243 = vmatpush1.msra.mxu0 %v218
      %244 = vmatprep.subr.mxu0 0.0
      %245 = vmatpush1.msra.mxu0 %v219
      %246 = vmatprep.subr.mxu0 0.0
      %247 = vmatpush1.msra.mxu0 %v220
      %248 = vmatprep.subr.mxu0 0.0
      %249 = vmatpush1.msra.mxu0 %v221
      %250 = vmatprep.subr.mxu0 0.0
      %251 = vmatpush1.msra.mxu0 %v222
      %252 = vmatprep.subr.mxu0 0.0
      %253 = vmatpush1.msra.mxu0 %v223
      %254 = vmatprep.subr.mxu0 0.0
      %255 = vmatpush1.msra.mxu0 %v224
      %256 = vmatprep.subr.mxu0 0.0
      %257 = vmatpush1.msra.mxu0 %v225
      %258 = vmatprep.subr.mxu0 0.0
      %259 = vmatpush1.msra.mxu0 %v226
      %260 = vmatprep.subr.mxu0 0.0
      %261 = vmatpush1.msra.mxu0 %v227
      %262 = vmatprep.subr.mxu0 0.0
      %263 = vmatpush1.msra.mxu0 %v228
      %264 = vmatprep.subr.mxu0 0.0
      %265 = vmatpush1.msra.mxu0 %v229
      %266 = vmatprep.subr.mxu0 0.0
      %267 = vmatpush1.msra.mxu0 %v230
      %268 = vmatprep.subr.mxu0 0.0
      %269 = vmatpush1.msra.mxu0 %v231
      %270 = vmatprep.subr.mxu0 0.0
      %271 = vmatpush1.msra.mxu0 %v232
      %272 = vmatprep.subr.mxu0 0.0
      %273 = vmatpush1.msra.mxu0 0.0
      %274 = vmatprep.subr.mxu0 0.0
      %275 = vmatpush1.msra.mxu0 0.0
      %276 = vmatprep.subr.mxu0 0.0
      %277 = vmatpush1.msra.mxu0 0.0
      %278 = vmatprep.subr.mxu0 0.0
      %279 = vmatpush1.msra.mxu0 0.0
      %280 = vmatprep.subr.mxu0 0.0
      %281 = vmatpush1.msra.mxu0 0.0
      %282 = vmatprep.subr.mxu0 0.0
      %283 = vmatpush1.msra.mxu0 0.0
      %284 = vmatprep.subr.mxu0 0.0
      %285 = vmatpush1.msra.mxu0 0.0
      %286 = vmatprep.subr.mxu0 0.0
      %287 = vmatpush1.msra.mxu0 0.0
      %288 = vmatprep.subr.mxu0 0.0
      %289 = vmatpush1.msra.mxu0 0.0
      %290 = vmatprep.subr.mxu0 0.0
      %291 = vmatpush1.msra.mxu0 0.0
      %292 = vmatprep.subr.mxu0 0.0
      %293 = vmatpush1.msra.mxu0 0.0
      %294 = vmatprep.subr.mxu0 0.0
      %295 = vmatpush1.msra.mxu0 0.0
      %296 = vmatprep.subr.mxu0 0.0
      %297 = vmatpush1.msra.mxu0 0.0
      %298 = vmatprep.subr.mxu0 0.0
      %299 = vmatpush1.msra.mxu0 0.0
      %300 = vmatprep.subr.mxu0 0.0
      %301 = vmatpush1.msra.mxu0 0.0
      %302 = vmatprep.subr.mxu0 0.0
      %303 = vmatpush1.msra.mxu0 0.0
      %304 = vmatprep.mubr.f32.mxu0 0.0
      %305 = vmatmul.mubr.f32.gmra.mrb[0].mxu0 %v215
      %v306 = vpop.f32.mrb[0].mxu0
      %v307 = vadd.f32 %v238, %v306
      %v308 = vpop.f32.mrb[0].mxu0
      %309 = vmatprep.mubr.f32.mxu0 0.0
      %310 = vmatmul.mubr.f32.gmra.mrb[0].mxu0 %v216
      %v311 = vpop.f32.mrb[0].mxu0
      %v312 = vadd.f32 %v238, %v311
      %v313 = vpop.f32.mrb[0].mxu0
      %314 = vdwg.mxu0
      %v315 = vtanh.pop %v307
      %v316 = vtanh.pop %v312
      %v317 = vadd.f32 %v315, 1.0
      %v318 = vadd.f32 %v316, 1.0
      %v319 = vmul.f32 %v317, 1.5
      %v320 = vmul.f32 %v318, 1.5
      %v321 = vadd.f32 %v319, 1.0
      %v322 = vadd.f32 %v320, 1.0
      %vm323 = vcmask 31744
      %324 = vst.msk [vmem:[%s207] sm:$0xff] %vm323, %v321
      %325 = vst.msk [vmem:[%s207 + $0x8] sm:$0xff] %vm323, %v322
      %v326 = vmul.f32 %v317, 0.25
      %v327 = vmul.f32 %v318, 0.25
      %328 = vst.msk [vmem:[%s213] sm:$0xff] %vm323, %v326
      %329 = vst.msk [vmem:[%s213 + $0x8] sm:$0xff] %vm323, %v327
      %s330 = smul.u32 2, %s16
      %p331 = scmp.lt.s32.totalorder %s330, 3
      %s332 = scalar_select %p331, %s330, 3
      %s333 = smul.addr %s332, 8
      %s334 = scalar_lea.vmem %s3, %s333
      %s335 = smul.u32 2, %s16
      %p336 = scmp.lt.s32.totalorder %s335, 3
      %s337 = scalar_select %p336, %s335, 3
      %s338 = smul.addr %s337, 8
      %s339 = scalar_lea.vmem %s4, %s338
      // Predicated region
      $region33: #{generator1_forward.27} parent=31 // pred_check
        %p340 = pneg %p102
      $region34: #{generator1_forward.27} parent=31 // pred_check_branch
        %342 = sbr.rel (%p340) target = $region36
      $region35: #{generator1_forward.27} parent=31 // pred_region
        %s343 = smul.u32 2, %s16
      $region36: #{generator1_forward.27} parent=31 // pred_fallthru
        _
      // Predicated region
      $region37: #{generator1_forward.27} parent=31 // pred_check
        %p344 = pneg %p128
      $region38: #{generator1_forward.27} parent=31 // pred_check_branch
        %346 = sbr.rel (%p344) target = $region40
      $region39: #{generator1_forward.27} parent=31 // pred_region
        %s347 = smul.u32 2, %s16
      $region40: #{generator1_forward.27} parent=31 // pred_fallthru
        _
    $region32: #{generator1_forward.27} parent=5 // pred_fallthru
      _
    %p348 = scmp.le.s32.totalorder 2, %s11
    // Predicated region
    $region41: #{generator1_forward.27} parent=5 // pred_check
      %p349 = pneg %p348
    $region42: #{generator1_forward.27} parent=5 // pred_check_branch
      %351 = sbr.rel (%p349) target = $region44
    $region43: #{generator1_forward.27} parent=5 // pred_region
      %s352 = ssub.s32 %s11, 2
      // Predicated region
      $region45: #{generator1_forward.27} parent=43 // pred_check
        %p353 = pneg %p108
      $region46: #{generator1_forward.27} parent=43 // pred_check_branch
        %355 = sbr.rel (%p353) target = $region48
      $region47: #{generator1_forward.27} parent=43 // pred_region
        %s356 = smul.u32 2, %s17
        %p357 = scmp.lt.s32.totalorder %s356, 3
        %s358 = scalar_select %p357, %s356, 3
        %s359 = smul.addr %s358, 8
        %s360 = scalar_lea.vmem %s3, %s359
      $region48: #{generator1_forward.27} parent=43 // pred_fallthru
        _
      // Predicated region
      $region49: #{generator1_forward.27} parent=43 // pred_check
        %p361 = pneg %p134
      $region50: #{generator1_forward.27} parent=43 // pred_check_branch
        %363 = sbr.rel (%p361) target = $region52
      $region51: #{generator1_forward.27} parent=43 // pred_region
        %s364 = smul.u32 2, %s17
        %p365 = scmp.lt.s32.totalorder %s364, 3
        %s366 = scalar_select %p365, %s364, 3
        %s367 = smul.addr %s366, 8
        %s368 = scalar_lea.vmem %s4, %s367
      $region52: #{generator1_forward.27} parent=43 // pred_fallthru
        _
    $region44: #{generator1_forward.27} parent=5 // pred_fallthru
      _
  $region6: #{generator1_forward.27} parent=0 // loop_footer
    %s15 = sadd.s32 1, %s11
  $region7: #{generator1_forward.27} parent=0 // loop_footer_branch
    %10 = sbr.rel target = $region3
  $region8: #{generator1_forward.27} parent=0 // loop_exit
    _

</llo_original>
